<compile_context>
chip_gen: v7x
topology: tpu7x:2x2x1
jax: 0.10.0
libtpu: 0.0.40
codegen_flags: <defaults>
</compile_context>

<pallas_src>
import functools

import jax
import jax.numpy as jnp
from jax.experimental import pallas as pl
from jax.experimental.pallas import tpu as pltpu

_BN_EPS = 1e-5


def _round_up(x, m):
    return (x + m - 1) // m * m


def _pick_tile(mp, cap=512):
    """Largest row tile (multiple of 8, <= cap) that divides mp."""
    for t in (512, 256, 128, 64, 32, 16, 8):
        if t <= cap and mp % t == 0:
            return t
    return mp


# ----------------------------------------------------------------------------
# Kernel 1: full-K matmul tile + per-tile BatchNorm statistics
# ----------------------------------------------------------------------------
def _mm_stats_kernel(a_ref, b_ref, y_ref, stat_ref):
    y = jnp.dot(a_ref[...], b_ref[...], preferred_element_type=jnp.float32)
    y_ref[...] = y
    s1 = jnp.sum(y, axis=0, keepdims=True)        # (1, Np)  column sum
    s2 = jnp.sum(y * y, axis=0, keepdims=True)    # (1, Np)  column sum of squares
    row = jax.lax.broadcasted_iota(jnp.int32, (8, y.shape[1]), 0)
    stat_ref[...] = jnp.where(row == 0, s1, jnp.where(row == 1, s2, 0.0))


def pallas_matmul_stats(a, b):
    """(M, K) @ (K, Np) -> (y (Mp, Np) f32, col_sum (Np,), col_sumsq (Np,)).

    Full-K blocks (no K padding / no reduction grid axis); rows padded to a
    multiple of 8 with zeros (zero rows contribute nothing to the statistics).
    """
    M, K = a.shape
    _, Np = b.shape
    Mp = _round_up(M, 8)
    if Mp != M:
        a = jnp.pad(a, ((0, Mp - M), (0, 0)))
    tm = _pick_tile(Mp)
    gm = Mp // tm

    y, stats = pl.pallas_call(
        _mm_stats_kernel,
        out_shape=(jax.ShapeDtypeStruct((Mp, Np), jnp.float32),
                   jax.ShapeDtypeStruct((gm * 8, Np), jnp.float32)),
        grid_spec=pltpu.PrefetchScalarGridSpec(
            num_scalar_prefetch=0,
            grid=(gm,),
            in_specs=[pl.BlockSpec((tm, K), lambda i: (i, 0)),
                      pl.BlockSpec((K, Np), lambda i: (0, 0))],
            out_specs=[pl.BlockSpec((tm, Np), lambda i: (i, 0)),
                       pl.BlockSpec((8, Np), lambda i: (i, 0))]),
        compiler_params=pltpu.CompilerParams(
            dimension_semantics=("parallel",)),
    )(a.astype(jnp.float32), b.astype(jnp.float32))

    st = stats.reshape(gm, 8, Np)
    col_sum = jnp.sum(st[:, 0, :], axis=0)
    col_sumsq = jnp.sum(st[:, 1, :], axis=0)
    return y, col_sum, col_sumsq


# ----------------------------------------------------------------------------
# Kernel 2: lane-dense fused BatchNorm (folded to scale/shift) + ReLU
# ----------------------------------------------------------------------------
def _bn_relu_kernel(x_ref, scale_ref, shift_ref, o_ref):
    o_ref[...] = jnp.maximum(x_ref[...] * scale_ref[...] + shift_ref[...], 0.0)


def pallas_bn_relu(y, scale, shift):
    Mp, Np = y.shape
    tm = _pick_tile(Mp)
    return pl.pallas_call(
        _bn_relu_kernel,
        out_shape=jax.ShapeDtypeStruct((Mp, Np), jnp.float32),
        grid_spec=pltpu.PrefetchScalarGridSpec(
            num_scalar_prefetch=0,
            grid=(Mp // tm,),
            in_specs=[pl.BlockSpec((tm, Np), lambda i: (i, 0)),
                      pl.BlockSpec((1, Np), lambda i: (0, 0)),
                      pl.BlockSpec((1, Np), lambda i: (0, 0))],
            out_specs=pl.BlockSpec((tm, Np), lambda i: (i, 0))),
        compiler_params=pltpu.CompilerParams(
            dimension_semantics=("parallel",)),
    )(y, scale.reshape(1, Np).astype(jnp.float32),
      shift.reshape(1, Np).astype(jnp.float32))


# ----------------------------------------------------------------------------
# Conv2d(3x3, stride 2, pad 1) + train-mode BatchNorm2d + ReLU, NHWC in/out
# ----------------------------------------------------------------------------
def conv_bn_relu_nhwc(x, w, gamma, beta, stride=2, pad=1):
    """x: (Bn, H, W, >=Cin) NHWC (extra lanes are zero padding and get sliced off).
    Returns (Bn, Hout, Wout, 128) NHWC with real channels in [..., :Cout]."""
    Cout, Cin, KH, KW = w.shape
    x = x[..., :Cin]
    Bn, H, W, _ = x.shape
    Hout = (H + 2 * pad - KH) // stride + 1
    Wout = (W + 2 * pad - KW) // stride + 1

    xp = jnp.pad(x, ((0, 0), (pad, pad), (pad, pad), (0, 0)))
    cols = []
    for kh in range(KH):
        for kw in range(KW):
            cols.append(xp[:, kh:kh + stride * Hout:stride,
                           kw:kw + stride * Wout:stride, :])
    # patch columns ordered (kh, kw, cin)
    patches = jnp.stack(cols, axis=3).reshape(Bn * Hout * Wout, KH * KW * Cin)
    # torch weight (Cout, Cin, KH, KW) -> (kh, kw, cin) rows x Cout cols
    w2 = jnp.transpose(w, (2, 3, 1, 0)).reshape(KH * KW * Cin, Cout)
    Np = _round_up(Cout, 128)
    w2 = jnp.pad(w2, ((0, 0), (0, Np - Cout)))

    M = Bn * Hout * Wout
    # Conv bias omitted: train-mode BatchNorm is invariant to a per-channel shift.
    y, s1, s2 = pallas_matmul_stats(patches, w2)

    mean = s1 / M
    var = jnp.maximum(s2 / M - mean * mean, 0.0)
    gamma_p = jnp.pad(gamma, (0, Np - Cout))   # zero gamma on padded lanes -> scale 0
    beta_p = jnp.pad(beta, (0, Np - Cout))
    scale = gamma_p / jnp.sqrt(var + _BN_EPS)
    shift = beta_p - mean * scale

    y = pallas_bn_relu(y, scale, shift)
    return y[:M].reshape(Bn, Hout, Wout, Np)


# ----------------------------------------------------------------------------
# Kernel 3: fused fc1 + BatchNorm1d(train) + ReLU + fc2 "head"
# ----------------------------------------------------------------------------
def _head_kernel(x_ref, w1_ref, g1_ref, b1_ref, w2_ref, b2_ref, o_ref):
    rows = x_ref.shape[0]
    y = jnp.dot(x_ref[...], w1_ref[...], preferred_element_type=jnp.float32)
    mean = jnp.sum(y, axis=0, keepdims=True) / rows
    var = jnp.maximum(jnp.sum(y * y, axis=0, keepdims=True) / rows - mean * mean, 0.0)
    scale = g1_ref[...] / jnp.sqrt(var + _BN_EPS)
    shift = b1_ref[...] - mean * scale
    yb = jnp.maximum(y * scale + shift, 0.0)
    o_ref[...] = (jnp.dot(yb, w2_ref[...], preferred_element_type=jnp.float32)
                  + b2_ref[...])


def pallas_head(flat, w1_t, g1, b1, w2_t, b2):
    Mn, K = flat.shape
    hid = w1_t.shape[1]
    code = w2_t.shape[1]
    return pl.pallas_call(
        _head_kernel,
        out_shape=jax.ShapeDtypeStruct((Mn, code), jnp.float32),
        grid_spec=pltpu.PrefetchScalarGridSpec(
            num_scalar_prefetch=0,
            grid=(1,),
            in_specs=[pl.BlockSpec((Mn, K), lambda i: (0, 0)),
                      pl.BlockSpec((K, hid), lambda i: (0, 0)),
                      pl.BlockSpec((1, hid), lambda i: (0, 0)),
                      pl.BlockSpec((1, hid), lambda i: (0, 0)),
                      pl.BlockSpec((hid, code), lambda i: (0, 0)),
                      pl.BlockSpec((1, code), lambda i: (0, 0))],
            out_specs=pl.BlockSpec((Mn, code), lambda i: (0, 0))),
    )(flat.astype(jnp.float32), w1_t.astype(jnp.float32),
      g1.reshape(1, -1), b1.reshape(1, -1),
      w2_t.astype(jnp.float32), b2.reshape(1, -1))


# ----------------------------------------------------------------------------
# Kernel 4: fused GRU recurrence (all N steps) + pred + predmotion (BN1d + Linear)
# ----------------------------------------------------------------------------
def _gru_pred_kernel(feat_ref, wih_ref, whh_ref, bih_ref, bhh_ref,
                     pw_ref, pb_ref, bng_ref, bnb_ref, pmw_ref, pmb_ref,
                     out_ref, ctx_ref):
    N, B, code = feat_ref.shape
    top = whh_ref.shape[0]
    wih = wih_ref[...]      # (code, 3*top)
    whh = whh_ref[...]      # (top, 3*top)
    bih = bih_ref[...]      # (1, 3*top)
    bhh = bhh_ref[...]      # (1, 3*top)
    pw = pw_ref[...]        # (top, code)
    pb = pb_ref[...]        # (1, code)

    h = jnp.zeros((B, top), jnp.float32)
    pi = jnp.zeros((B, code), jnp.float32)
    for i in range(N):      # N is small & static -> full unroll, weights stay resident
        zi = feat_ref[i]                         # (B, code)
        si = 0.1 * pi + 0.9 * zi
        gi = jnp.dot(si, wih, preferred_element_type=jnp.float32) + bih
        gh = jnp.dot(h, whh, preferred_element_type=jnp.float32) + bhh
        r = jax.nn.sigmoid(gi[:, :top] + gh[:, :top])
        z = jax.nn.sigmoid(gi[:, top:2 * top] + gh[:, top:2 * top])
        n = jnp.tanh(gi[:, 2 * top:] + r * gh[:, 2 * top:])
        h = (1.0 - z) * n + z * h
        pi = jnp.dot(h, pw, preferred_element_type=jnp.float32) + pb

    ctx_ref[...] = h

    # predmotion: BatchNorm1d (train-mode stats over the B rows) + Linear(top, 6)
    mean = jnp.sum(h, axis=0, keepdims=True) / B
    var = jnp.maximum(jnp.sum(h * h, axis=0, keepdims=True) / B - mean * mean, 0.0)
    scale = bng_ref[...] / jnp.sqrt(var + _BN_EPS)
    shift = bnb_ref[...] - mean * scale
    hb = h * scale + shift
    out_ref[...] = (jnp.dot(hb, pmw_ref[...], preferred_element_type=jnp.float32)
                    + pmb_ref[...])


def pallas_gru_predmotion(feat_nbc, p, code_size, top_size):
    N, B, code = feat_nbc.shape
    top = top_size
    np_out = 128                                   # lane-padded width of the 6-way head
    wih_t = p["gru_w_ih"].T                        # (code, 3*top)
    whh_t = p["gru_w_hh"].T                        # (top, 3*top)
    pw_t = p["pred_w"].T                           # (top, code)
    pmw_t = jnp.pad(p["pm_w"].T, ((0, 0), (0, np_out - p["pm_w"].shape[0])))
    pmb = jnp.pad(p["pm_b"], (0, np_out - p["pm_b"].shape[0])).reshape(1, np_out)

    out_pad, ctx = pl.pallas_call(
        _gru_pred_kernel,
        out_shape=(jax.ShapeDtypeStruct((B, np_out), jnp.float32),
                   jax.ShapeDtypeStruct((B, top), jnp.float32)),
        grid_spec=pltpu.PrefetchScalarGridSpec(
            num_scalar_prefetch=0,
            grid=(1,),
            in_specs=[pl.BlockSpec((N, B, code), lambda i: (0, 0, 0)),
                      pl.BlockSpec((code, 3 * top), lambda i: (0, 0)),
                      pl.BlockSpec((top, 3 * top), lambda i: (0, 0)),
                      pl.BlockSpec((1, 3 * top), lambda i: (0, 0)),
                      pl.BlockSpec((1, 3 * top), lambda i: (0, 0)),
                      pl.BlockSpec((top, code), lambda i: (0, 0)),
                      pl.BlockSpec((1, code), lambda i: (0, 0)),
                      pl.BlockSpec((1, top), lambda i: (0, 0)),
                      pl.BlockSpec((1, top), lambda i: (0, 0)),
                      pl.BlockSpec((top, np_out), lambda i: (0, 0)),
                      pl.BlockSpec((1, np_out), lambda i: (0, 0))],
            out_specs=[pl.BlockSpec((B, np_out), lambda i: (0, 0)),
                       pl.BlockSpec((B, top), lambda i: (0, 0))]),
    )(feat_nbc.astype(jnp.float32), wih_t, whh_t,
      p["gru_b_ih"].reshape(1, -1), p["gru_b_hh"].reshape(1, -1),
      pw_t, p["pred_b"].reshape(1, -1),
      p["bnm_g"].reshape(1, -1), p["bnm_b"].reshape(1, -1),
      pmw_t, pmb)
    return out_pad[:, :6], ctx


# ----------------------------------------------------------------------------
# Parameters (deterministic synthetic init, shapes match the torch module)
# ----------------------------------------------------------------------------
def _orthogonal(key, shape):
    a = jax.random.normal(key, shape, jnp.float32)
    q, r = jnp.linalg.qr(a)
    sign = jnp.sign(jnp.diagonal(r))
    sign = jnp.where(sign == 0, 1.0, sign)
    return q * sign[None, :]


def init_params(key, code_size=256, top_size=256):
    ks = iter(jax.random.split(key, 20))
    p = {}
    conv_io = [(3, 16), (16, 32), (32, 64), (64, 64)]
    for i, (ci, co) in enumerate(conv_io):
        p[f"conv{i}_w"] = 0.05 * jax.random.normal(next(ks), (co, ci, 3, 3), jnp.float32)
        # conv biases exist in the torch module but are no-ops under train-mode BN
        p[f"conv{i}_b"] = 0.01 * jax.random.normal(next(ks), (co,), jnp.float32)
        p[f"bn{i}_g"] = jnp.ones((co,), jnp.float32)
        p[f"bn{i}_b"] = jnp.zeros((co,), jnp.float32)
    p["fc1_w"] = 0.05 * jax.random.normal(next(ks), (256, 64 * 4 * 4), jnp.float32)
    p["fc1_b"] = jnp.zeros((256,), jnp.float32)      # no-op under train-mode BN1d
    p["bnf_g"] = jnp.ones((256,), jnp.float32)
    p["bnf_b"] = jnp.zeros((256,), jnp.float32)
    p["fc2_w"] = 0.05 * jax.random.normal(next(ks), (code_size, 256), jnp.float32)
    p["fc2_b"] = jnp.zeros((code_size,), jnp.float32)
    # GRU: orthogonal weights, zero biases (matches _initialize_weights on self.gar)
    p["gru_w_ih"] = _orthogonal(next(ks), (3 * top_size, code_size))
    p["gru_w_hh"] = _orthogonal(next(ks), (3 * top_size, top_size))
    p["gru_b_ih"] = jnp.zeros((3 * top_size,), jnp.float32)
    p["gru_b_hh"] = jnp.zeros((3 * top_size,), jnp.float32)
    p["pred_w"] = 0.05 * jax.random.normal(next(ks), (code_size, top_size), jnp.float32)
    p["pred_b"] = jnp.zeros((code_size,), jnp.float32)
    p["bnm_g"] = jnp.ones((top_size,), jnp.float32)
    p["bnm_b"] = jnp.zeros((top_size,), jnp.float32)
    p["pm_w"] = 0.05 * jax.random.normal(next(ks), (6, top_size), jnp.float32)
    p["pm_b"] = jnp.zeros((6,), jnp.float32)
    return p


# ----------------------------------------------------------------------------
# Forward pass (mirrors motion_CPC_1layer_1d_static_rep.forward)
# ----------------------------------------------------------------------------
def forward(params, block, code_size=256, top_size=256):
    B, N, C, H, W = block.shape
    x = block.reshape(B * N, C, H, W).astype(jnp.float32)
    x = jnp.transpose(x, (0, 2, 3, 1))          # NHWC once; stays NHWC between convs

    # genc: 4 x (conv -> BN(train stats) -> ReLU)
    for i in range(4):
        x = conv_bn_relu_nhwc(x, params[f"conv{i}_w"],
                              params[f"bn{i}_g"], params[f"bn{i}_b"])

    # nn.Flatten flattens the NCHW tensor ((c, h, w) order); the tensor is tiny here.
    c4 = params["conv3_w"].shape[0]
    flat = jnp.transpose(x[..., :c4], (0, 3, 1, 2)).reshape(B * N, -1)  # (B*N, 1024)

    # fc1 (+BN1d train +ReLU) + fc2, fused in one kernel (fc1 bias dropped: BN-invariant)
    feature = pallas_head(flat, params["fc1_w"].T, params["bnf_g"], params["bnf_b"],
                          params["fc2_w"].T, params["fc2_b"])
    feat_nbc = feature.reshape(B, N, code_size).transpose(1, 0, 2)      # (N, B, code)

    # Fused recurrence: si = 0.1*pi + 0.9*zi ; h = GRU(si, h) ; pi = pred(h);
    # then predmotion(BN1d + Linear) on the final hidden state.
    output, context = pallas_gru_predmotion(feat_nbc, params, code_size, top_size)
    return [output, context]


if __name__ == "__main__":
    key = jax.random.PRNGKey(0)
    pkey, xkey = jax.random.split(key)
    params = init_params(pkey)

    # H = W = 64 is required by Linear(64*4*4, 256) after 4 stride-2 convs.
    B, N = 2, 4
    block = jax.random.normal(xkey, (B, N, 3, 64, 64), jnp.float32)

    fwd = jax.jit(functools.partial(forward, code_size=256, top_size=256))
    output, context = fwd(params, block)
    jax.block_until_ready((output, context))

    assert output.shape == (B, 6) and context.shape == (B, 256)
    assert output.dtype == jnp.float32 and context.dtype == jnp.float32
    print("KERNEL_OK")
</pallas_src>

<mosaic_0001>
module attributes {stable_mosaic.version = 11 : i64} {
  func.func @_mm_stats_kernel(%arg0: i32, %arg1: memref<512x27xf32, #tpu.memory_space<vmem>>, %arg2: memref<27x128xf32, #tpu.memory_space<vmem>>, %arg3: memref<512x128xf32, #tpu.memory_space<vmem>>, %arg4: memref<8x128xf32, #tpu.memory_space<vmem>>) attributes {dimension_semantics = [#tpu.dimension_semantics<parallel>], iteration_bounds = array<i64: 16>, scalar_prefetch = 0 : i64, scratch_operands = 0 : i64, tpu.core_type = #tpu.core_type<tc>, window_params = [{transform_indices = @transform_0, window_bounds = array<i64: 512, 27>}, {pipeline_mode = #tpu.pipeline_mode<synchronous>, transform_indices = @transform_1, window_bounds = array<i64: 27, 128>}, {transform_indices = @transform_2, window_bounds = array<i64: 512, 128>}, {transform_indices = @transform_3, window_bounds = array<i64: 8, 128>}]} {
    %c0 = arith.constant 0 : index
    %c0_0 = arith.constant 0 : index
    %0 = vector.load %arg1[%c0, %c0_0] : memref<512x27xf32, #tpu.memory_space<vmem>>, vector<512x27xf32>
    %c0_1 = arith.constant 0 : index
    %c0_2 = arith.constant 0 : index
    %1 = vector.load %arg2[%c0_1, %c0_2] : memref<27x128xf32, #tpu.memory_space<vmem>>, vector<27x128xf32>
    %cst = arith.constant dense<0.000000e+00> : vector<512x128xf32>
    %2 = tpu.matmul %0, %1, %cst {dimension_numbers = #tpu.dot_dimension_numbers<[1], [0], [0], [1], [0, 0, 1, 1], [], []>} : vector<512x27xf32>, vector<27x128xf32>, vector<512x128xf32> -> vector<512x128xf32>
    %c0_3 = arith.constant 0 : index
    %c0_4 = arith.constant 0 : index
    %3 = vector.load %arg3[%c0_3, %c0_4] : memref<512x128xf32, #tpu.memory_space<vmem>>, vector<512x128xf32>
    tpu.vector_store %arg3[%c0_3, %c0_4], %2 {strides = array<i32>} : memref<512x128xf32, #tpu.memory_space<vmem>>, vector<512x128xf32>,
    %cst_5 = arith.constant dense<0.000000e+00> : vector<128xf32>
    %4 = vector.multi_reduction <add>, %2, %cst_5 [0] : vector<512x128xf32> to vector<128xf32>
    %5 = vector.shape_cast %4 : vector<128xf32> to vector<1x128xf32>
    %6 = arith.mulf %2, %2 : vector<512x128xf32>
    %cst_6 = arith.constant dense<0.000000e+00> : vector<128xf32>
    %7 = vector.multi_reduction <add>, %6, %cst_6 [0] : vector<512x128xf32> to vector<128xf32>
    %8 = vector.shape_cast %7 : vector<128xf32> to vector<1x128xf32>
    %9 = tpu.iota {dimensions = array<i32: 0>} : vector<8x128xi32>
    %c0_i32 = arith.constant 0 : i32
    %10 = vector.broadcast %c0_i32 : i32 to vector<8x128xi32>
    %11 = arith.cmpi eq, %9, %10 : vector<8x128xi32>
    %c1_i32 = arith.constant 1 : i32
    %12 = vector.broadcast %c1_i32 : i32 to vector<8x128xi32>
    %13 = arith.cmpi eq, %9, %12 : vector<8x128xi32>
    %cst_7 = arith.constant 0.000000e+00 : f32
    %14 = vector.shape_cast %8 : vector<1x128xf32> to vector<1x128xf32>
    %15 = vector.broadcast %14 : vector<1x128xf32> to vector<8x128xf32>
    %16 = vector.broadcast %cst_7 : f32 to vector<8x128xf32>
    %17 = arith.select %13, %15, %16 : vector<8x128xi1>, vector<8x128xf32>
    %18 = vector.shape_cast %5 : vector<1x128xf32> to vector<1x128xf32>
    %19 = vector.broadcast %18 : vector<1x128xf32> to vector<8x128xf32>
    %20 = arith.select %11, %19, %17 : vector<8x128xi1>, vector<8x128xf32>
    %c0_8 = arith.constant 0 : index
    %c0_9 = arith.constant 0 : index
    %21 = vector.load %arg4[%c0_8, %c0_9] : memref<8x128xf32, #tpu.memory_space<vmem>>, vector<8x128xf32>
    tpu.vector_store %arg4[%c0_8, %c0_9], %20 {strides = array<i32>} : memref<8x128xf32, #tpu.memory_space<vmem>>, vector<8x128xf32>,
    return
  }
  func.func @transform_0(%arg0: i32) -> (i32, i32) {
    %c0_i32 = arith.constant 0 : i32
    %c0_i32_0 = arith.constant 0 : i32
    return %arg0, %c0_i32 : i32, i32
  }
  func.func @transform_1(%arg0: i32) -> (i32, i32) {
    %c0_i32 = arith.constant 0 : i32
    %c0_i32_0 = arith.constant 0 : i32
    %c0_i32_1 = arith.constant 0 : i32
    return %c0_i32, %c0_i32_0 : i32, i32
  }
  func.func @transform_2(%arg0: i32) -> (i32, i32) {
    %c0_i32 = arith.constant 0 : i32
    %c0_i32_0 = arith.constant 0 : i32
    return %arg0, %c0_i32 : i32, i32
  }
  func.func @transform_3(%arg0: i32) -> (i32, i32) {
    %c0_i32 = arith.constant 0 : i32
    %c0_i32_0 = arith.constant 0 : i32
    return %arg0, %c0_i32 : i32, i32
  }
}

module attributes {stable_mosaic.version = 11 : i64} {
  func.func @_bn_relu_kernel(%arg0: i32, %arg1: memref<512x128xf32, #tpu.memory_space<vmem>>, %arg2: memref<1x128xf32, #tpu.memory_space<vmem>>, %arg3: memref<1x128xf32, #tpu.memory_space<vmem>>, %arg4: memref<512x128xf32, #tpu.memory_space<vmem>>) attributes {dimension_semantics = [#tpu.dimension_semantics<parallel>], iteration_bounds = array<i64: 16>, scalar_prefetch = 0 : i64, scratch_operands = 0 : i64, tpu.core_type = #tpu.core_type<tc>, window_params = [{transform_indices = @transform_0, window_bounds = array<i64: 512, 128>}, {pipeline_mode = #tpu.pipeline_mode<synchronous>, transform_indices = @transform_1, window_bounds = array<i64: 1, 128>}, {pipeline_mode = #tpu.pipeline_mode<synchronous>, transform_indices = @transform_2, window_bounds = array<i64: 1, 128>}, {transform_indices = @transform_3, window_bounds = array<i64: 512, 128>}]} {
    %c0 = arith.constant 0 : index
    %c0_0 = arith.constant 0 : index
    %0 = vector.load %arg1[%c0, %c0_0] : memref<512x128xf32, #tpu.memory_space<vmem>>, vector<512x128xf32>
    %c0_1 = arith.constant 0 : index
    %c0_2 = arith.constant 0 : index
    %1 = vector.load %arg2[%c0_1, %c0_2] : memref<1x128xf32, #tpu.memory_space<vmem>>, vector<1x128xf32>
    %2 = vector.broadcast %1 : vector<1x128xf32> to vector<512x128xf32>
    %3 = arith.mulf %0, %2 : vector<512x128xf32>
    %c0_3 = arith.constant 0 : index
    %c0_4 = arith.constant 0 : index
    %4 = vector.load %arg3[%c0_3, %c0_4] : memref<1x128xf32, #tpu.memory_space<vmem>>, vector<1x128xf32>
    %5 = vector.broadcast %4 : vector<1x128xf32> to vector<512x128xf32>
    %6 = arith.addf %3, %5 : vector<512x128xf32>
    %cst = arith.constant 0.000000e+00 : f32
    %7 = vector.broadcast %cst : f32 to vector<512x128xf32>
    %8 = arith.maximumf %6, %7 : vector<512x128xf32>
    %c0_5 = arith.constant 0 : index
    %c0_6 = arith.constant 0 : index
    %9 = vector.load %arg4[%c0_5, %c0_6] : memref<512x128xf32, #tpu.memory_space<vmem>>, vector<512x128xf32>
    tpu.vector_store %arg4[%c0_5, %c0_6], %8 {strides = array<i32>} : memref<512x128xf32, #tpu.memory_space<vmem>>, vector<512x128xf32>,
    return
  }
  func.func @transform_0(%arg0: i32) -> (i32, i32) {
    %c0_i32 = arith.constant 0 : i32
    %c0_i32_0 = arith.constant 0 : i32
    return %arg0, %c0_i32 : i32, i32
  }
  func.func @transform_1(%arg0: i32) -> (i32, i32) {
    %c0_i32 = arith.constant 0 : i32
    %c0_i32_0 = arith.constant 0 : i32
    %c0_i32_1 = arith.constant 0 : i32
    return %c0_i32, %c0_i32_0 : i32, i32
  }
  func.func @transform_2(%arg0: i32) -> (i32, i32) {
    %c0_i32 = arith.constant 0 : i32
    %c0_i32_0 = arith.constant 0 : i32
    %c0_i32_1 = arith.constant 0 : i32
    return %c0_i32, %c0_i32_0 : i32, i32
  }
  func.func @transform_3(%arg0: i32) -> (i32, i32) {
    %c0_i32 = arith.constant 0 : i32
    %c0_i32_0 = arith.constant 0 : i32
    return %arg0, %c0_i32 : i32, i32
  }
}

module attributes {stable_mosaic.version = 11 : i64} {
  func.func @_mm_stats_kernel(%arg0: i32, %arg1: memref<512x144xf32, #tpu.memory_space<vmem>>, %arg2: memref<144x128xf32, #tpu.memory_space<vmem>>, %arg3: memref<512x128xf32, #tpu.memory_space<vmem>>, %arg4: memref<8x128xf32, #tpu.memory_space<vmem>>) attributes {dimension_semantics = [#tpu.dimension_semantics<parallel>], iteration_bounds = array<i64: 4>, scalar_prefetch = 0 : i64, scratch_operands = 0 : i64, tpu.core_type = #tpu.core_type<tc>, window_params = [{transform_indices = @transform_0, window_bounds = array<i64: 512, 144>}, {pipeline_mode = #tpu.pipeline_mode<synchronous>, transform_indices = @transform_1, window_bounds = array<i64: 144, 128>}, {transform_indices = @transform_2, window_bounds = array<i64: 512, 128>}, {transform_indices = @transform_3, window_bounds = array<i64: 8, 128>}]} {
    %c0 = arith.constant 0 : index
    %c0_0 = arith.constant 0 : index
    %0 = vector.load %arg1[%c0, %c0_0] : memref<512x144xf32, #tpu.memory_space<vmem>>, vector<512x144xf32>
    %c0_1 = arith.constant 0 : index
    %c0_2 = arith.constant 0 : index
    %1 = vector.load %arg2[%c0_1, %c0_2] : memref<144x128xf32, #tpu.memory_space<vmem>>, vector<144x128xf32>
    %cst = arith.constant dense<0.000000e+00> : vector<512x128xf32>
    %2 = tpu.matmul %0, %1, %cst {dimension_numbers = #tpu.dot_dimension_numbers<[1], [0], [0], [1], [0, 0, 1, 1], [], []>} : vector<512x144xf32>, vector<144x128xf32>, vector<512x128xf32> -> vector<512x128xf32>
    %c0_3 = arith.constant 0 : index
    %c0_4 = arith.constant 0 : index
    %3 = vector.load %arg3[%c0_3, %c0_4] : memref<512x128xf32, #tpu.memory_space<vmem>>, vector<512x128xf32>
    tpu.vector_store %arg3[%c0_3, %c0_4], %2 {strides = array<i32>} : memref<512x128xf32, #tpu.memory_space<vmem>>, vector<512x128xf32>,
    %cst_5 = arith.constant dense<0.000000e+00> : vector<128xf32>
    %4 = vector.multi_reduction <add>, %2, %cst_5 [0] : vector<512x128xf32> to vector<128xf32>
    %5 = vector.shape_cast %4 : vector<128xf32> to vector<1x128xf32>
    %6 = arith.mulf %2, %2 : vector<512x128xf32>
    %cst_6 = arith.constant dense<0.000000e+00> : vector<128xf32>
    %7 = vector.multi_reduction <add>, %6, %cst_6 [0] : vector<512x128xf32> to vector<128xf32>
    %8 = vector.shape_cast %7 : vector<128xf32> to vector<1x128xf32>
    %9 = tpu.iota {dimensions = array<i32: 0>} : vector<8x128xi32>
    %c0_i32 = arith.constant 0 : i32
    %10 = vector.broadcast %c0_i32 : i32 to vector<8x128xi32>
    %11 = arith.cmpi eq, %9, %10 : vector<8x128xi32>
    %c1_i32 = arith.constant 1 : i32
    %12 = vector.broadcast %c1_i32 : i32 to vector<8x128xi32>
    %13 = arith.cmpi eq, %9, %12 : vector<8x128xi32>
    %cst_7 = arith.constant 0.000000e+00 : f32
    %14 = vector.shape_cast %8 : vector<1x128xf32> to vector<1x128xf32>
    %15 = vector.broadcast %14 : vector<1x128xf32> to vector<8x128xf32>
    %16 = vector.broadcast %cst_7 : f32 to vector<8x128xf32>
    %17 = arith.select %13, %15, %16 : vector<8x128xi1>, vector<8x128xf32>
    %18 = vector.shape_cast %5 : vector<1x128xf32> to vector<1x128xf32>
    %19 = vector.broadcast %18 : vector<1x128xf32> to vector<8x128xf32>
    %20 = arith.select %11, %19, %17 : vector<8x128xi1>, vector<8x128xf32>
    %c0_8 = arith.constant 0 : index
    %c0_9 = arith.constant 0 : index
    %21 = vector.load %arg4[%c0_8, %c0_9] : memref<8x128xf32, #tpu.memory_space<vmem>>, vector<8x128xf32>
    tpu.vector_store %arg4[%c0_8, %c0_9], %20 {strides = array<i32>} : memref<8x128xf32, #tpu.memory_space<vmem>>, vector<8x128xf32>,
    return
  }
  func.func @transform_0(%arg0: i32) -> (i32, i32) {
    %c0_i32 = arith.constant 0 : i32
    %c0_i32_0 = arith.constant 0 : i32
    return %arg0, %c0_i32 : i32, i32
  }
  func.func @transform_1(%arg0: i32) -> (i32, i32) {
    %c0_i32 = arith.constant 0 : i32
    %c0_i32_0 = arith.constant 0 : i32
    %c0_i32_1 = arith.constant 0 : i32
    return %c0_i32, %c0_i32_0 : i32, i32
  }
  func.func @transform_2(%arg0: i32) -> (i32, i32) {
    %c0_i32 = arith.constant 0 : i32
    %c0_i32_0 = arith.constant 0 : i32
    return %arg0, %c0_i32 : i32, i32
  }
  func.func @transform_3(%arg0: i32) -> (i32, i32) {
    %c0_i32 = arith.constant 0 : i32
    %c0_i32_0 = arith.constant 0 : i32
    return %arg0, %c0_i32 : i32, i32
  }
}

module attributes {stable_mosaic.version = 11 : i64} {
  func.func @_bn_relu_kernel(%arg0: i32, %arg1: memref<512x128xf32, #tpu.memory_space<vmem>>, %arg2: memref<1x128xf32, #tpu.memory_space<vmem>>, %arg3: memref<1x128xf32, #tpu.memory_space<vmem>>, %arg4: memref<512x128xf32, #tpu.memory_space<vmem>>) attributes {dimension_semantics = [#tpu.dimension_semantics<parallel>], iteration_bounds = array<i64: 4>, scalar_prefetch = 0 : i64, scratch_operands = 0 : i64, tpu.core_type = #tpu.core_type<tc>, window_params = [{transform_indices = @transform_0, window_bounds = array<i64: 512, 128>}, {pipeline_mode = #tpu.pipeline_mode<synchronous>, transform_indices = @transform_1, window_bounds = array<i64: 1, 128>}, {pipeline_mode = #tpu.pipeline_mode<synchronous>, transform_indices = @transform_2, window_bounds = array<i64: 1, 128>}, {transform_indices = @transform_3, window_bounds = array<i64: 512, 128>}]} {
    %c0 = arith.constant 0 : index
    %c0_0 = arith.constant 0 : index
    %0 = vector.load %arg1[%c0, %c0_0] : memref<512x128xf32, #tpu.memory_space<vmem>>, vector<512x128xf32>
    %c0_1 = arith.constant 0 : index
    %c0_2 = arith.constant 0 : index
    %1 = vector.load %arg2[%c0_1, %c0_2] : memref<1x128xf32, #tpu.memory_space<vmem>>, vector<1x128xf32>
    %2 = vector.broadcast %1 : vector<1x128xf32> to vector<512x128xf32>
    %3 = arith.mulf %0, %2 : vector<512x128xf32>
    %c0_3 = arith.constant 0 : index
    %c0_4 = arith.constant 0 : index
    %4 = vector.load %arg3[%c0_3, %c0_4] : memref<1x128xf32, #tpu.memory_space<vmem>>, vector<1x128xf32>
    %5 = vector.broadcast %4 : vector<1x128xf32> to vector<512x128xf32>
    %6 = arith.addf %3, %5 : vector<512x128xf32>
    %cst = arith.constant 0.000000e+00 : f32
    %7 = vector.broadcast %cst : f32 to vector<512x128xf32>
    %8 = arith.maximumf %6, %7 : vector<512x128xf32>
    %c0_5 = arith.constant 0 : index
    %c0_6 = arith.constant 0 : index
    %9 = vector.load %arg4[%c0_5, %c0_6] : memref<512x128xf32, #tpu.memory_space<vmem>>, vector<512x128xf32>
    tpu.vector_store %arg4[%c0_5, %c0_6], %8 {strides = array<i32>} : memref<512x128xf32, #tpu.memory_space<vmem>>, vector<512x128xf32>,
    return
  }
  func.func @transform_0(%arg0: i32) -> (i32, i32) {
    %c0_i32 = arith.constant 0 : i32
    %c0_i32_0 = arith.constant 0 : i32
    return %arg0, %c0_i32 : i32, i32
  }
  func.func @transform_1(%arg0: i32) -> (i32, i32) {
    %c0_i32 = arith.constant 0 : i32
    %c0_i32_0 = arith.constant 0 : i32
    %c0_i32_1 = arith.constant 0 : i32
    return %c0_i32, %c0_i32_0 : i32, i32
  }
  func.func @transform_2(%arg0: i32) -> (i32, i32) {
    %c0_i32 = arith.constant 0 : i32
    %c0_i32_0 = arith.constant 0 : i32
    %c0_i32_1 = arith.constant 0 : i32
    return %c0_i32, %c0_i32_0 : i32, i32
  }
  func.func @transform_3(%arg0: i32) -> (i32, i32) {
    %c0_i32 = arith.constant 0 : i32
    %c0_i32_0 = arith.constant 0 : i32
    return %arg0, %c0_i32 : i32, i32
  }
}

module attributes {stable_mosaic.version = 11 : i64} {
  func.func @_mm_stats_kernel(%arg0: i32, %arg1: memref<512x288xf32, #tpu.memory_space<vmem>>, %arg2: memref<288x128xf32, #tpu.memory_space<vmem>>, %arg3: memref<512x128xf32, #tpu.memory_space<vmem>>, %arg4: memref<8x128xf32, #tpu.memory_space<vmem>>) attributes {dimension_semantics = [#tpu.dimension_semantics<parallel>], iteration_bounds = array<i64: 1>, scalar_prefetch = 0 : i64, scratch_operands = 0 : i64, tpu.core_type = #tpu.core_type<tc>, window_params = [{transform_indices = @transform_0, window_bounds = array<i64: 512, 288>}, {pipeline_mode = #tpu.pipeline_mode<synchronous>, transform_indices = @transform_1, window_bounds = array<i64: 288, 128>}, {transform_indices = @transform_2, window_bounds = array<i64: 512, 128>}, {transform_indices = @transform_3, window_bounds = array<i64: 8, 128>}]} {
    %c0 = arith.constant 0 : index
    %c0_0 = arith.constant 0 : index
    %0 = vector.load %arg1[%c0, %c0_0] : memref<512x288xf32, #tpu.memory_space<vmem>>, vector<512x288xf32>
    %c0_1 = arith.constant 0 : index
    %c0_2 = arith.constant 0 : index
    %1 = vector.load %arg2[%c0_1, %c0_2] : memref<288x128xf32, #tpu.memory_space<vmem>>, vector<288x128xf32>
    %cst = arith.constant dense<0.000000e+00> : vector<512x128xf32>
    %2 = tpu.matmul %0, %1, %cst {dimension_numbers = #tpu.dot_dimension_numbers<[1], [0], [0], [1], [0, 0, 1, 1], [], []>} : vector<512x288xf32>, vector<288x128xf32>, vector<512x128xf32> -> vector<512x128xf32>
    %c0_3 = arith.constant 0 : index
    %c0_4 = arith.constant 0 : index
    %3 = vector.load %arg3[%c0_3, %c0_4] : memref<512x128xf32, #tpu.memory_space<vmem>>, vector<512x128xf32>
    tpu.vector_store %arg3[%c0_3, %c0_4], %2 {strides = array<i32>} : memref<512x128xf32, #tpu.memory_space<vmem>>, vector<512x128xf32>,
    %cst_5 = arith.constant dense<0.000000e+00> : vector<128xf32>
    %4 = vector.multi_reduction <add>, %2, %cst_5 [0] : vector<512x128xf32> to vector<128xf32>
    %5 = vector.shape_cast %4 : vector<128xf32> to vector<1x128xf32>
    %6 = arith.mulf %2, %2 : vector<512x128xf32>
    %cst_6 = arith.constant dense<0.000000e+00> : vector<128xf32>
    %7 = vector.multi_reduction <add>, %6, %cst_6 [0] : vector<512x128xf32> to vector<128xf32>
    %8 = vector.shape_cast %7 : vector<128xf32> to vector<1x128xf32>
    %9 = tpu.iota {dimensions = array<i32: 0>} : vector<8x128xi32>
    %c0_i32 = arith.constant 0 : i32
    %10 = vector.broadcast %c0_i32 : i32 to vector<8x128xi32>
    %11 = arith.cmpi eq, %9, %10 : vector<8x128xi32>
    %c1_i32 = arith.constant 1 : i32
    %12 = vector.broadcast %c1_i32 : i32 to vector<8x128xi32>
    %13 = arith.cmpi eq, %9, %12 : vector<8x128xi32>
    %cst_7 = arith.constant 0.000000e+00 : f32
    %14 = vector.shape_cast %8 : vector<1x128xf32> to vector<1x128xf32>
    %15 = vector.broadcast %14 : vector<1x128xf32> to vector<8x128xf32>
    %16 = vector.broadcast %cst_7 : f32 to vector<8x128xf32>
    %17 = arith.select %13, %15, %16 : vector<8x128xi1>, vector<8x128xf32>
    %18 = vector.shape_cast %5 : vector<1x128xf32> to vector<1x128xf32>
    %19 = vector.broadcast %18 : vector<1x128xf32> to vector<8x128xf32>
    %20 = arith.select %11, %19, %17 : vector<8x128xi1>, vector<8x128xf32>
    %c0_8 = arith.constant 0 : index
    %c0_9 = arith.constant 0 : index
    %21 = vector.load %arg4[%c0_8, %c0_9] : memref<8x128xf32, #tpu.memory_space<vmem>>, vector<8x128xf32>
    tpu.vector_store %arg4[%c0_8, %c0_9], %20 {strides = array<i32>} : memref<8x128xf32, #tpu.memory_space<vmem>>, vector<8x128xf32>,
    return
  }
  func.func @transform_0(%arg0: i32) -> (i32, i32) {
    %c0_i32 = arith.constant 0 : i32
    %c0_i32_0 = arith.constant 0 : i32
    return %arg0, %c0_i32 : i32, i32
  }
  func.func @transform_1(%arg0: i32) -> (i32, i32) {
    %c0_i32 = arith.constant 0 : i32
    %c0_i32_0 = arith.constant 0 : i32
    %c0_i32_1 = arith.constant 0 : i32
    return %c0_i32, %c0_i32_0 : i32, i32
  }
  func.func @transform_2(%arg0: i32) -> (i32, i32) {
    %c0_i32 = arith.constant 0 : i32
    %c0_i32_0 = arith.constant 0 : i32
    return %arg0, %c0_i32 : i32, i32
  }
  func.func @transform_3(%arg0: i32) -> (i32, i32) {
    %c0_i32 = arith.constant 0 : i32
    %c0_i32_0 = arith.constant 0 : i32
    return %arg0, %c0_i32 : i32, i32
  }
}

module attributes {stable_mosaic.version = 11 : i64} {
  func.func @_bn_relu_kernel(%arg0: i32, %arg1: memref<512x128xf32, #tpu.memory_space<vmem>>, %arg2: memref<1x128xf32, #tpu.memory_space<vmem>>, %arg3: memref<1x128xf32, #tpu.memory_space<vmem>>, %arg4: memref<512x128xf32, #tpu.memory_space<vmem>>) attributes {dimension_semantics = [#tpu.dimension_semantics<parallel>], iteration_bounds = array<i64: 1>, scalar_prefetch = 0 : i64, scratch_operands = 0 : i64, tpu.core_type = #tpu.core_type<tc>, window_params = [{transform_indices = @transform_0, window_bounds = array<i64: 512, 128>}, {pipeline_mode = #tpu.pipeline_mode<synchronous>, transform_indices = @transform_1, window_bounds = array<i64: 1, 128>}, {pipeline_mode = #tpu.pipeline_mode<synchronous>, transform_indices = @transform_2, window_bounds = array<i64: 1, 128>}, {transform_indices = @transform_3, window_bounds = array<i64: 512, 128>}]} {
    %c0 = arith.constant 0 : index
    %c0_0 = arith.constant 0 : index
    %0 = vector.load %arg1[%c0, %c0_0] : memref<512x128xf32, #tpu.memory_space<vmem>>, vector<512x128xf32>
    %c0_1 = arith.constant 0 : index
    %c0_2 = arith.constant 0 : index
    %1 = vector.load %arg2[%c0_1, %c0_2] : memref<1x128xf32, #tpu.memory_space<vmem>>, vector<1x128xf32>
    %2 = vector.broadcast %1 : vector<1x128xf32> to vector<512x128xf32>
    %3 = arith.mulf %0, %2 : vector<512x128xf32>
    %c0_3 = arith.constant 0 : index
    %c0_4 = arith.constant 0 : index
    %4 = vector.load %arg3[%c0_3, %c0_4] : memref<1x128xf32, #tpu.memory_space<vmem>>, vector<1x128xf32>
    %5 = vector.broadcast %4 : vector<1x128xf32> to vector<512x128xf32>
    %6 = arith.addf %3, %5 : vector<512x128xf32>
    %cst = arith.constant 0.000000e+00 : f32
    %7 = vector.broadcast %cst : f32 to vector<512x128xf32>
    %8 = arith.maximumf %6, %7 : vector<512x128xf32>
    %c0_5 = arith.constant 0 : index
    %c0_6 = arith.constant 0 : index
    %9 = vector.load %arg4[%c0_5, %c0_6] : memref<512x128xf32, #tpu.memory_space<vmem>>, vector<512x128xf32>
    tpu.vector_store %arg4[%c0_5, %c0_6], %8 {strides = array<i32>} : memref<512x128xf32, #tpu.memory_space<vmem>>, vector<512x128xf32>,
    return
  }
  func.func @transform_0(%arg0: i32) -> (i32, i32) {
    %c0_i32 = arith.constant 0 : i32
    %c0_i32_0 = arith.constant 0 : i32
    return %arg0, %c0_i32 : i32, i32
  }
  func.func @transform_1(%arg0: i32) -> (i32, i32) {
    %c0_i32 = arith.constant 0 : i32
    %c0_i32_0 = arith.constant 0 : i32
    %c0_i32_1 = arith.constant 0 : i32
    return %c0_i32, %c0_i32_0 : i32, i32
  }
  func.func @transform_2(%arg0: i32) -> (i32, i32) {
    %c0_i32 = arith.constant 0 : i32
    %c0_i32_0 = arith.constant 0 : i32
    %c0_i32_1 = arith.constant 0 : i32
    return %c0_i32, %c0_i32_0 : i32, i32
  }
  func.func @transform_3(%arg0: i32) -> (i32, i32) {
    %c0_i32 = arith.constant 0 : i32
    %c0_i32_0 = arith.constant 0 : i32
    return %arg0, %c0_i32 : i32, i32
  }
}

module attributes {stable_mosaic.version = 11 : i64} {
  func.func @_mm_stats_kernel(%arg0: i32, %arg1: memref<128x576xf32, #tpu.memory_space<vmem>>, %arg2: memref<576x128xf32, #tpu.memory_space<vmem>>, %arg3: memref<128x128xf32, #tpu.memory_space<vmem>>, %arg4: memref<8x128xf32, #tpu.memory_space<vmem>>) attributes {dimension_semantics = [#tpu.dimension_semantics<parallel>], iteration_bounds = array<i64: 1>, scalar_prefetch = 0 : i64, scratch_operands = 0 : i64, tpu.core_type = #tpu.core_type<tc>, window_params = [{transform_indices = @transform_0, window_bounds = array<i64: 128, 576>}, {pipeline_mode = #tpu.pipeline_mode<synchronous>, transform_indices = @transform_1, window_bounds = array<i64: 576, 128>}, {transform_indices = @transform_2, window_bounds = array<i64: 128, 128>}, {transform_indices = @transform_3, window_bounds = array<i64: 8, 128>}]} {
    %c0 = arith.constant 0 : index
    %c0_0 = arith.constant 0 : index
    %0 = vector.load %arg1[%c0, %c0_0] : memref<128x576xf32, #tpu.memory_space<vmem>>, vector<128x576xf32>
    %c0_1 = arith.constant 0 : index
    %c0_2 = arith.constant 0 : index
    %1 = vector.load %arg2[%c0_1, %c0_2] : memref<576x128xf32, #tpu.memory_space<vmem>>, vector<576x128xf32>
    %cst = arith.constant dense<0.000000e+00> : vector<128x128xf32>
    %2 = tpu.matmul %0, %1, %cst {dimension_numbers = #tpu.dot_dimension_numbers<[1], [0], [0], [1], [0, 0, 1, 1], [], []>} : vector<128x576xf32>, vector<576x128xf32>, vector<128x128xf32> -> vector<128x128xf32>
    %c0_3 = arith.constant 0 : index
    %c0_4 = arith.constant 0 : index
    %3 = vector.load %arg3[%c0_3, %c0_4] : memref<128x128xf32, #tpu.memory_space<vmem>>, vector<128x128xf32>
    tpu.vector_store %arg3[%c0_3, %c0_4], %2 {strides = array<i32>} : memref<128x128xf32, #tpu.memory_space<vmem>>, vector<128x128xf32>,
    %cst_5 = arith.constant dense<0.000000e+00> : vector<128xf32>
    %4 = vector.multi_reduction <add>, %2, %cst_5 [0] : vector<128x128xf32> to vector<128xf32>
    %5 = vector.shape_cast %4 : vector<128xf32> to vector<1x128xf32>
    %6 = arith.mulf %2, %2 : vector<128x128xf32>
    %cst_6 = arith.constant dense<0.000000e+00> : vector<128xf32>
    %7 = vector.multi_reduction <add>, %6, %cst_6 [0] : vector<128x128xf32> to vector<128xf32>
    %8 = vector.shape_cast %7 : vector<128xf32> to vector<1x128xf32>
    %9 = tpu.iota {dimensions = array<i32: 0>} : vector<8x128xi32>
    %c0_i32 = arith.constant 0 : i32
    %10 = vector.broadcast %c0_i32 : i32 to vector<8x128xi32>
    %11 = arith.cmpi eq, %9, %10 : vector<8x128xi32>
    %c1_i32 = arith.constant 1 : i32
    %12 = vector.broadcast %c1_i32 : i32 to vector<8x128xi32>
    %13 = arith.cmpi eq, %9, %12 : vector<8x128xi32>
    %cst_7 = arith.constant 0.000000e+00 : f32
    %14 = vector.shape_cast %8 : vector<1x128xf32> to vector<1x128xf32>
    %15 = vector.broadcast %14 : vector<1x128xf32> to vector<8x128xf32>
    %16 = vector.broadcast %cst_7 : f32 to vector<8x128xf32>
    %17 = arith.select %13, %15, %16 : vector<8x128xi1>, vector<8x128xf32>
    %18 = vector.shape_cast %5 : vector<1x128xf32> to vector<1x128xf32>
    %19 = vector.broadcast %18 : vector<1x128xf32> to vector<8x128xf32>
    %20 = arith.select %11, %19, %17 : vector<8x128xi1>, vector<8x128xf32>
    %c0_8 = arith.constant 0 : index
    %c0_9 = arith.constant 0 : index
    %21 = vector.load %arg4[%c0_8, %c0_9] : memref<8x128xf32, #tpu.memory_space<vmem>>, vector<8x128xf32>
    tpu.vector_store %arg4[%c0_8, %c0_9], %20 {strides = array<i32>} : memref<8x128xf32, #tpu.memory_space<vmem>>, vector<8x128xf32>,
    return
  }
  func.func @transform_0(%arg0: i32) -> (i32, i32) {
    %c0_i32 = arith.constant 0 : i32
    %c0_i32_0 = arith.constant 0 : i32
    return %arg0, %c0_i32 : i32, i32
  }
  func.func @transform_1(%arg0: i32) -> (i32, i32) {
    %c0_i32 = arith.constant 0 : i32
    %c0_i32_0 = arith.constant 0 : i32
    %c0_i32_1 = arith.constant 0 : i32
    return %c0_i32, %c0_i32_0 : i32, i32
  }
  func.func @transform_2(%arg0: i32) -> (i32, i32) {
    %c0_i32 = arith.constant 0 : i32
    %c0_i32_0 = arith.constant 0 : i32
    return %arg0, %c0_i32 : i32, i32
  }
  func.func @transform_3(%arg0: i32) -> (i32, i32) {
    %c0_i32 = arith.constant 0 : i32
    %c0_i32_0 = arith.constant 0 : i32
    return %arg0, %c0_i32 : i32, i32
  }
}

module attributes {stable_mosaic.version = 11 : i64} {
  func.func @_bn_relu_kernel(%arg0: i32, %arg1: memref<128x128xf32, #tpu.memory_space<vmem>>, %arg2: memref<1x128xf32, #tpu.memory_space<vmem>>, %arg3: memref<1x128xf32, #tpu.memory_space<vmem>>, %arg4: memref<128x128xf32, #tpu.memory_space<vmem>>) attributes {dimension_semantics = [#tpu.dimension_semantics<parallel>], iteration_bounds = array<i64: 1>, scalar_prefetch = 0 : i64, scratch_operands = 0 : i64, tpu.core_type = #tpu.core_type<tc>, window_params = [{transform_indices = @transform_0, window_bounds = array<i64: 128, 128>}, {pipeline_mode = #tpu.pipeline_mode<synchronous>, transform_indices = @transform_1, window_bounds = array<i64: 1, 128>}, {pipeline_mode = #tpu.pipeline_mode<synchronous>, transform_indices = @transform_2, window_bounds = array<i64: 1, 128>}, {transform_indices = @transform_3, window_bounds = array<i64: 128, 128>}]} {
    %c0 = arith.constant 0 : index
    %c0_0 = arith.constant 0 : index
    %0 = vector.load %arg1[%c0, %c0_0] : memref<128x128xf32, #tpu.memory_space<vmem>>, vector<128x128xf32>
    %c0_1 = arith.constant 0 : index
    %c0_2 = arith.constant 0 : index
    %1 = vector.load %arg2[%c0_1, %c0_2] : memref<1x128xf32, #tpu.memory_space<vmem>>, vector<1x128xf32>
    %2 = vector.broadcast %1 : vector<1x128xf32> to vector<128x128xf32>
    %3 = arith.mulf %0, %2 : vector<128x128xf32>
    %c0_3 = arith.constant 0 : index
    %c0_4 = arith.constant 0 : index
    %4 = vector.load %arg3[%c0_3, %c0_4] : memref<1x128xf32, #tpu.memory_space<vmem>>, vector<1x128xf32>
    %5 = vector.broadcast %4 : vector<1x128xf32> to vector<128x128xf32>
    %6 = arith.addf %3, %5 : vector<128x128xf32>
    %cst = arith.constant 0.000000e+00 : f32
    %7 = vector.broadcast %cst : f32 to vector<128x128xf32>
    %8 = arith.maximumf %6, %7 : vector<128x128xf32>
    %c0_5 = arith.constant 0 : index
    %c0_6 = arith.constant 0 : index
    %9 = vector.load %arg4[%c0_5, %c0_6] : memref<128x128xf32, #tpu.memory_space<vmem>>, vector<128x128xf32>
    tpu.vector_store %arg4[%c0_5, %c0_6], %8 {strides = array<i32>} : memref<128x128xf32, #tpu.memory_space<vmem>>, vector<128x128xf32>,
    return
  }
  func.func @transform_0(%arg0: i32) -> (i32, i32) {
    %c0_i32 = arith.constant 0 : i32
    %c0_i32_0 = arith.constant 0 : i32
    return %arg0, %c0_i32 : i32, i32
  }
  func.func @transform_1(%arg0: i32) -> (i32, i32) {
    %c0_i32 = arith.constant 0 : i32
    %c0_i32_0 = arith.constant 0 : i32
    %c0_i32_1 = arith.constant 0 : i32
    return %c0_i32, %c0_i32_0 : i32, i32
  }
  func.func @transform_2(%arg0: i32) -> (i32, i32) {
    %c0_i32 = arith.constant 0 : i32
    %c0_i32_0 = arith.constant 0 : i32
    %c0_i32_1 = arith.constant 0 : i32
    return %c0_i32, %c0_i32_0 : i32, i32
  }
  func.func @transform_3(%arg0: i32) -> (i32, i32) {
    %c0_i32 = arith.constant 0 : i32
    %c0_i32_0 = arith.constant 0 : i32
    return %arg0, %c0_i32 : i32, i32
  }
}

module attributes {stable_mosaic.version = 11 : i64} {
  func.func @_head_kernel(%arg0: i32, %arg1: memref<8x1024xf32, #tpu.memory_space<vmem>>, %arg2: memref<1024x256xf32, #tpu.memory_space<vmem>>, %arg3: memref<1x256xf32, #tpu.memory_space<vmem>>, %arg4: memref<1x256xf32, #tpu.memory_space<vmem>>, %arg5: memref<256x256xf32, #tpu.memory_space<vmem>>, %arg6: memref<1x256xf32, #tpu.memory_space<vmem>>, %arg7: memref<8x256xf32, #tpu.memory_space<vmem>>) attributes {dimension_semantics = [#tpu.dimension_semantics<arbitrary>], iteration_bounds = array<i64: 1>, scalar_prefetch = 0 : i64, scratch_operands = 0 : i64, tpu.core_type = #tpu.core_type<tc>, window_params = [{pipeline_mode = #tpu.pipeline_mode<synchronous>, transform_indices = @transform_0, window_bounds = array<i64: 8, 1024>}, {pipeline_mode = #tpu.pipeline_mode<synchronous>, transform_indices = @transform_1, window_bounds = array<i64: 1024, 256>}, {pipeline_mode = #tpu.pipeline_mode<synchronous>, transform_indices = @transform_2, window_bounds = array<i64: 1, 256>}, {pipeline_mode = #tpu.pipeline_mode<synchronous>, transform_indices = @transform_3, window_bounds = array<i64: 1, 256>}, {pipeline_mode = #tpu.pipeline_mode<synchronous>, transform_indices = @transform_4, window_bounds = array<i64: 256, 256>}, {pipeline_mode = #tpu.pipeline_mode<synchronous>, transform_indices = @transform_5, window_bounds = array<i64: 1, 256>}, {pipeline_mode = #tpu.pipeline_mode<synchronous>, transform_indices = @transform_6, window_bounds = array<i64: 8, 256>}]} {
    %c0 = arith.constant 0 : index
    %c0_0 = arith.constant 0 : index
    %0 = vector.load %arg1[%c0, %c0_0] : memref<8x1024xf32, #tpu.memory_space<vmem>>, vector<8x1024xf32>
    %c0_1 = arith.constant 0 : index
    %c0_2 = arith.constant 0 : index
    %1 = vector.load %arg2[%c0_1, %c0_2] : memref<1024x256xf32, #tpu.memory_space<vmem>>, vector<1024x256xf32>
    %cst = arith.constant dense<0.000000e+00> : vector<8x256xf32>
    %2 = tpu.matmul %0, %1, %cst {dimension_numbers = #tpu.dot_dimension_numbers<[1], [0], [0], [1], [0, 0, 1, 1], [], []>} : vector<8x1024xf32>, vector<1024x256xf32>, vector<8x256xf32> -> vector<8x256xf32>
    %cst_3 = arith.constant dense<0.000000e+00> : vector<256xf32>
    %3 = vector.multi_reduction <add>, %2, %cst_3 [0] : vector<8x256xf32> to vector<256xf32>
    %4 = vector.shape_cast %3 : vector<256xf32> to vector<1x256xf32>
    %cst_4 = arith.constant 8.000000e+00 : f32
    %5 = vector.broadcast %cst_4 : f32 to vector<1x256xf32>
    %6 = arith.divf %4, %5 : vector<1x256xf32>
    %7 = arith.mulf %2, %2 : vector<8x256xf32>
    %cst_5 = arith.constant dense<0.000000e+00> : vector<256xf32>
    %8 = vector.multi_reduction <add>, %7, %cst_5 [0] : vector<8x256xf32> to vector<256xf32>
    %9 = vector.shape_cast %8 : vector<256xf32> to vector<1x256xf32>
    %cst_6 = arith.constant 8.000000e+00 : f32
    %10 = vector.broadcast %cst_6 : f32 to vector<1x256xf32>
    %11 = arith.divf %9, %10 : vector<1x256xf32>
    %12 = arith.mulf %6, %6 : vector<1x256xf32>
    %13 = arith.subf %11, %12 : vector<1x256xf32>
    %cst_7 = arith.constant 0.000000e+00 : f32
    %14 = vector.broadcast %cst_7 : f32 to vector<1x256xf32>
    %15 = arith.maximumf %13, %14 : vector<1x256xf32>
    %c0_8 = arith.constant 0 : index
    %c0_9 = arith.constant 0 : index
    %16 = vector.load %arg3[%c0_8, %c0_9] : memref<1x256xf32, #tpu.memory_space<vmem>>, vector<1x256xf32>
    %cst_10 = arith.constant 9.99999974E-6 : f32
    %17 = vector.broadcast %cst_10 : f32 to vector<1x256xf32>
    %18 = arith.addf %15, %17 : vector<1x256xf32>
    %19 = math.sqrt %18 : vector<1x256xf32>
    %20 = arith.divf %16, %19 : vector<1x256xf32>
    %c0_11 = arith.constant 0 : index
    %c0_12 = arith.constant 0 : index
    %21 = vector.load %arg4[%c0_11, %c0_12] : memref<1x256xf32, #tpu.memory_space<vmem>>, vector<1x256xf32>
    %22 = arith.mulf %6, %20 : vector<1x256xf32>
    %23 = arith.subf %21, %22 : vector<1x256xf32>
    %24 = vector.broadcast %20 : vector<1x256xf32> to vector<8x256xf32>
    %25 = arith.mulf %2, %24 : vector<8x256xf32>
    %26 = vector.broadcast %23 : vector<1x256xf32> to vector<8x256xf32>
    %27 = arith.addf %25, %26 : vector<8x256xf32>
    %cst_13 = arith.constant 0.000000e+00 : f32
    %28 = vector.broadcast %cst_13 : f32 to vector<8x256xf32>
    %29 = arith.maximumf %27, %28 : vector<8x256xf32>
    %c0_14 = arith.constant 0 : index
    %c0_15 = arith.constant 0 : index
    %30 = vector.load %arg5[%c0_14, %c0_15] : memref<256x256xf32, #tpu.memory_space<vmem>>, vector<256x256xf32>
    %cst_16 = arith.constant dense<0.000000e+00> : vector<8x256xf32>
    %31 = tpu.matmul %29, %30, %cst_16 {dimension_numbers = #tpu.dot_dimension_numbers<[1], [0], [0], [1], [0, 0, 1, 1], [], []>} : vector<8x256xf32>, vector<256x256xf32>, vector<8x256xf32> -> vector<8x256xf32>
    %c0_17 = arith.constant 0 : index
    %c0_18 = arith.constant 0 : index
    %32 = vector.load %arg6[%c0_17, %c0_18] : memref<1x256xf32, #tpu.memory_space<vmem>>, vector<1x256xf32>
    %33 = vector.broadcast %32 : vector<1x256xf32> to vector<8x256xf32>
    %34 = arith.addf %31, %33 : vector<8x256xf32>
    %c0_19 = arith.constant 0 : index
    %c0_20 = arith.constant 0 : index
    %35 = vector.load %arg7[%c0_19, %c0_20] : memref<8x256xf32, #tpu.memory_space<vmem>>, vector<8x256xf32>
    tpu.vector_store %arg7[%c0_19, %c0_20], %34 {strides = array<i32>} : memref<8x256xf32, #tpu.memory_space<vmem>>, vector<8x256xf32>,
    return
  }
  func.func @transform_0(%arg0: i32) -> (i32, i32) {
    %c0_i32 = arith.constant 0 : i32
    %c0_i32_0 = arith.constant 0 : i32
    %c0_i32_1 = arith.constant 0 : i32
    return %c0_i32, %c0_i32_0 : i32, i32
  }
  func.func @transform_1(%arg0: i32) -> (i32, i32) {
    %c0_i32 = arith.constant 0 : i32
    %c0_i32_0 = arith.constant 0 : i32
    %c0_i32_1 = arith.constant 0 : i32
    return %c0_i32, %c0_i32_0 : i32, i32
  }
  func.func @transform_2(%arg0: i32) -> (i32, i32) {
    %c0_i32 = arith.constant 0 : i32
    %c0_i32_0 = arith.constant 0 : i32
    %c0_i32_1 = arith.constant 0 : i32
    return %c0_i32, %c0_i32_0 : i32, i32
  }
  func.func @transform_3(%arg0: i32) -> (i32, i32) {
    %c0_i32 = arith.constant 0 : i32
    %c0_i32_0 = arith.constant 0 : i32
    %c0_i32_1 = arith.constant 0 : i32
    return %c0_i32, %c0_i32_0 : i32, i32
  }
  func.func @transform_4(%arg0: i32) -> (i32, i32) {
    %c0_i32 = arith.constant 0 : i32
    %c0_i32_0 = arith.constant 0 : i32
    %c0_i32_1 = arith.constant 0 : i32
    return %c0_i32, %c0_i32_0 : i32, i32
  }
  func.func @transform_5(%arg0: i32) -> (i32, i32) {
    %c0_i32 = arith.constant 0 : i32
    %c0_i32_0 = arith.constant 0 : i32
    %c0_i32_1 = arith.constant 0 : i32
    return %c0_i32, %c0_i32_0 : i32, i32
  }
  func.func @transform_6(%arg0: i32) -> (i32, i32) {
    %c0_i32 = arith.constant 0 : i32
    %c0_i32_0 = arith.constant 0 : i32
    %c0_i32_1 = arith.constant 0 : i32
    return %c0_i32, %c0_i32_0 : i32, i32
  }
}

module attributes {stable_mosaic.version = 11 : i64} {
  func.func @_gru_pred_kernel(%arg0: i32, %arg1: memref<4x2x256xf32, #tpu.memory_space<vmem>>, %arg2: memref<256x768xf32, #tpu.memory_space<vmem>>, %arg3: memref<256x768xf32, #tpu.memory_space<vmem>>, %arg4: memref<1x768xf32, #tpu.memory_space<vmem>>, %arg5: memref<1x768xf32, #tpu.memory_space<vmem>>, %arg6: memref<256x256xf32, #tpu.memory_space<vmem>>, %arg7: memref<1x256xf32, #tpu.memory_space<vmem>>, %arg8: memref<1x256xf32, #tpu.memory_space<vmem>>, %arg9: memref<1x256xf32, #tpu.memory_space<vmem>>, %arg10: memref<256x128xf32, #tpu.memory_space<vmem>>, %arg11: memref<1x128xf32, #tpu.memory_space<vmem>>, %arg12: memref<2x128xf32, #tpu.memory_space<vmem>>, %arg13: memref<2x256xf32, #tpu.memory_space<vmem>>) attributes {dimension_semantics = [#tpu.dimension_semantics<arbitrary>], iteration_bounds = array<i64: 1>, scalar_prefetch = 0 : i64, scratch_operands = 0 : i64, tpu.core_type = #tpu.core_type<tc>, window_params = [{pipeline_mode = #tpu.pipeline_mode<synchronous>, transform_indices = @transform_0, window_bounds = array<i64: 4, 2, 256>}, {pipeline_mode = #tpu.pipeline_mode<synchronous>, transform_indices = @transform_1, window_bounds = array<i64: 256, 768>}, {pipeline_mode = #tpu.pipeline_mode<synchronous>, transform_indices = @transform_2, window_bounds = array<i64: 256, 768>}, {pipeline_mode = #tpu.pipeline_mode<synchronous>, transform_indices = @transform_3, window_bounds = array<i64: 1, 768>}, {pipeline_mode = #tpu.pipeline_mode<synchronous>, transform_indices = @transform_4, window_bounds = array<i64: 1, 768>}, {pipeline_mode = #tpu.pipeline_mode<synchronous>, transform_indices = @transform_5, window_bounds = array<i64: 256, 256>}, {pipeline_mode = #tpu.pipeline_mode<synchronous>, transform_indices = @transform_6, window_bounds = array<i64: 1, 256>}, {pipeline_mode = #tpu.pipeline_mode<synchronous>, transform_indices = @transform_7, window_bounds = array<i64: 1, 256>}, {pipeline_mode = #tpu.pipeline_mode<synchronous>, transform_indices = @transform_8, window_bounds = array<i64: 1, 256>}, {pipeline_mode = #tpu.pipeline_mode<synchronous>, transform_indices = @transform_9, window_bounds = array<i64: 256, 128>}, {pipeline_mode = #tpu.pipeline_mode<synchronous>, transform_indices = @transform_10, window_bounds = array<i64: 1, 128>}, {pipeline_mode = #tpu.pipeline_mode<synchronous>, transform_indices = @transform_11, window_bounds = array<i64: 2, 128>}, {pipeline_mode = #tpu.pipeline_mode<synchronous>, transform_indices = @transform_12, window_bounds = array<i64: 2, 256>}]} {
    %c0 = arith.constant 0 : index
    %c0_0 = arith.constant 0 : index
    %0 = vector.load %arg2[%c0, %c0_0] : memref<256x768xf32, #tpu.memory_space<vmem>>, vector<256x768xf32>
    %c0_1 = arith.constant 0 : index
    %c0_2 = arith.constant 0 : index
    %1 = vector.load %arg3[%c0_1, %c0_2] : memref<256x768xf32, #tpu.memory_space<vmem>>, vector<256x768xf32>
    %c0_3 = arith.constant 0 : index
    %c0_4 = arith.constant 0 : index
    %2 = vector.load %arg4[%c0_3, %c0_4] : memref<1x768xf32, #tpu.memory_space<vmem>>, vector<1x768xf32>
    %c0_5 = arith.constant 0 : index
    %c0_6 = arith.constant 0 : index
    %3 = vector.load %arg5[%c0_5, %c0_6] : memref<1x768xf32, #tpu.memory_space<vmem>>, vector<1x768xf32>
    %c0_7 = arith.constant 0 : index
    %c0_8 = arith.constant 0 : index
    %4 = vector.load %arg6[%c0_7, %c0_8] : memref<256x256xf32, #tpu.memory_space<vmem>>, vector<256x256xf32>
    %c0_9 = arith.constant 0 : index
    %c0_10 = arith.constant 0 : index
    %5 = vector.load %arg7[%c0_9, %c0_10] : memref<1x256xf32, #tpu.memory_space<vmem>>, vector<1x256xf32>
    %cst = arith.constant 0.000000e+00 : f32
    %6 = vector.broadcast %cst : f32 to vector<2x256xf32>
    %cst_11 = arith.constant 0.000000e+00 : f32
    %7 = vector.broadcast %cst_11 : f32 to vector<2x256xf32>
    %c0_12 = arith.constant 0 : index
    %c0_13 = arith.constant 0 : index
    %c0_14 = arith.constant 0 : index
    %8 = vector.load %arg1[%c0_12, %c0_13, %c0_14] : memref<4x2x256xf32, #tpu.memory_space<vmem>>, vector<1x2x256xf32>
    %9 = vector.shape_cast %8 : vector<1x2x256xf32> to vector<2x256xf32>
    %cst_15 = arith.constant 1.000000e-01 : f32
    %10 = vector.broadcast %cst_15 : f32 to vector<2x256xf32>
    %11 = arith.mulf %10, %7 : vector<2x256xf32>
    %cst_16 = arith.constant 0.899999976 : f32
    %12 = vector.broadcast %cst_16 : f32 to vector<2x256xf32>
    %13 = arith.mulf %12, %9 : vector<2x256xf32>
    %14 = arith.addf %11, %13 : vector<2x256xf32>
    %cst_17 = arith.constant dense<0.000000e+00> : vector<2x768xf32>
    %15 = tpu.matmul %14, %0, %cst_17 {dimension_numbers = #tpu.dot_dimension_numbers<[1], [0], [0], [1], [0, 0, 1, 1], [], []>} : vector<2x256xf32>, vector<256x768xf32>, vector<2x768xf32> -> vector<2x768xf32>
    %16 = vector.broadcast %2 : vector<1x768xf32> to vector<2x768xf32>
    %17 = arith.addf %15, %16 : vector<2x768xf32>
    %cst_18 = arith.constant dense<0.000000e+00> : vector<2x768xf32>
    %18 = tpu.matmul %6, %1, %cst_18 {dimension_numbers = #tpu.dot_dimension_numbers<[1], [0], [0], [1], [0, 0, 1, 1], [], []>} : vector<2x256xf32>, vector<256x768xf32>, vector<2x768xf32> -> vector<2x768xf32>
    %19 = vector.broadcast %3 : vector<1x768xf32> to vector<2x768xf32>
    %20 = arith.addf %18, %19 : vector<2x768xf32>
    %21 = vector.extract_strided_slice %17 {offsets = [0, 0], sizes = [2, 256], strides = [1, 1]} : vector<2x768xf32> to vector<2x256xf32>
    %22 = vector.extract_strided_slice %20 {offsets = [0, 0], sizes = [2, 256], strides = [1, 1]} : vector<2x768xf32> to vector<2x256xf32>
    %23 = arith.addf %21, %22 : vector<2x256xf32>
    %24 = arith.negf %23 : vector<2x256xf32>
    %25 = math.exp %24 : vector<2x256xf32>
    %cst_19 = arith.constant 1.000000e+00 : f32
    %26 = vector.broadcast %cst_19 : f32 to vector<2x256xf32>
    %27 = arith.addf %26, %25 : vector<2x256xf32>
    %28 = arith.divf %26, %27 : vector<2x256xf32>
    %29 = vector.extract_strided_slice %17 {offsets = [0, 256], sizes = [2, 256], strides = [1, 1]} : vector<2x768xf32> to vector<2x256xf32>
    %30 = vector.extract_strided_slice %20 {offsets = [0, 256], sizes = [2, 256], strides = [1, 1]} : vector<2x768xf32> to vector<2x256xf32>
    %31 = arith.addf %29, %30 : vector<2x256xf32>
    %32 = arith.negf %31 : vector<2x256xf32>
    %33 = math.exp %32 : vector<2x256xf32>
    %cst_20 = arith.constant 1.000000e+00 : f32
    %34 = vector.broadcast %cst_20 : f32 to vector<2x256xf32>
    %35 = arith.addf %34, %33 : vector<2x256xf32>
    %36 = arith.divf %34, %35 : vector<2x256xf32>
    %37 = vector.extract_strided_slice %17 {offsets = [0, 512], sizes = [2, 256], strides = [1, 1]} : vector<2x768xf32> to vector<2x256xf32>
    %38 = vector.extract_strided_slice %20 {offsets = [0, 512], sizes = [2, 256], strides = [1, 1]} : vector<2x768xf32> to vector<2x256xf32>
    %39 = arith.mulf %28, %38 : vector<2x256xf32>
    %40 = arith.addf %37, %39 : vector<2x256xf32>
    %41 = math.tanh %40 : vector<2x256xf32>
    %cst_21 = arith.constant 1.000000e+00 : f32
    %42 = vector.broadcast %cst_21 : f32 to vector<2x256xf32>
    %43 = arith.subf %42, %36 : vector<2x256xf32>
    %44 = arith.mulf %43, %41 : vector<2x256xf32>
    %45 = arith.mulf %36, %6 : vector<2x256xf32>
    %46 = arith.addf %44, %45 : vector<2x256xf32>
    %cst_22 = arith.constant dense<0.000000e+00> : vector<2x256xf32>
    %47 = tpu.matmul %46, %4, %cst_22 {dimension_numbers = #tpu.dot_dimension_numbers<[1], [0], [0], [1], [0, 0, 1, 1], [], []>} : vector<2x256xf32>, vector<256x256xf32>, vector<2x256xf32> -> vector<2x256xf32>
    %48 = vector.broadcast %5 : vector<1x256xf32> to vector<2x256xf32>
    %49 = arith.addf %47, %48 : vector<2x256xf32>
    %c1 = arith.constant 1 : index
    %c0_23 = arith.constant 0 : index
    %c0_24 = arith.constant 0 : index
    %50 = vector.load %arg1[%c1, %c0_23, %c0_24] : memref<4x2x256xf32, #tpu.memory_space<vmem>>, vector<1x2x256xf32>
    %51 = vector.shape_cast %50 : vector<1x2x256xf32> to vector<2x256xf32>
    %cst_25 = arith.constant 1.000000e-01 : f32
    %52 = vector.broadcast %cst_25 : f32 to vector<2x256xf32>
    %53 = arith.mulf %52, %49 : vector<2x256xf32>
    %cst_26 = arith.constant 0.899999976 : f32
    %54 = vector.broadcast %cst_26 : f32 to vector<2x256xf32>
    %55 = arith.mulf %54, %51 : vector<2x256xf32>
    %56 = arith.addf %53, %55 : vector<2x256xf32>
    %cst_27 = arith.constant dense<0.000000e+00> : vector<2x768xf32>
    %57 = tpu.matmul %56, %0, %cst_27 {dimension_numbers = #tpu.dot_dimension_numbers<[1], [0], [0], [1], [0, 0, 1, 1], [], []>} : vector<2x256xf32>, vector<256x768xf32>, vector<2x768xf32> -> vector<2x768xf32>
    %58 = vector.broadcast %2 : vector<1x768xf32> to vector<2x768xf32>
    %59 = arith.addf %57, %58 : vector<2x768xf32>
    %cst_28 = arith.constant dense<0.000000e+00> : vector<2x768xf32>
    %60 = tpu.matmul %46, %1, %cst_28 {dimension_numbers = #tpu.dot_dimension_numbers<[1], [0], [0], [1], [0, 0, 1, 1], [], []>} : vector<2x256xf32>, vector<256x768xf32>, vector<2x768xf32> -> vector<2x768xf32>
    %61 = vector.broadcast %3 : vector<1x768xf32> to vector<2x768xf32>
    %62 = arith.addf %60, %61 : vector<2x768xf32>
    %63 = vector.extract_strided_slice %59 {offsets = [0, 0], sizes = [2, 256], strides = [1, 1]} : vector<2x768xf32> to vector<2x256xf32>
    %64 = vector.extract_strided_slice %62 {offsets = [0, 0], sizes = [2, 256], strides = [1, 1]} : vector<2x768xf32> to vector<2x256xf32>
    %65 = arith.addf %63, %64 : vector<2x256xf32>
    %66 = arith.negf %65 : vector<2x256xf32>
    %67 = math.exp %66 : vector<2x256xf32>
    %cst_29 = arith.constant 1.000000e+00 : f32
    %68 = vector.broadcast %cst_29 : f32 to vector<2x256xf32>
    %69 = arith.addf %68, %67 : vector<2x256xf32>
    %70 = arith.divf %68, %69 : vector<2x256xf32>
    %71 = vector.extract_strided_slice %59 {offsets = [0, 256], sizes = [2, 256], strides = [1, 1]} : vector<2x768xf32> to vector<2x256xf32>
    %72 = vector.extract_strided_slice %62 {offsets = [0, 256], sizes = [2, 256], strides = [1, 1]} : vector<2x768xf32> to vector<2x256xf32>
    %73 = arith.addf %71, %72 : vector<2x256xf32>
    %74 = arith.negf %73 : vector<2x256xf32>
    %75 = math.exp %74 : vector<2x256xf32>
    %cst_30 = arith.constant 1.000000e+00 : f32
    %76 = vector.broadcast %cst_30 : f32 to vector<2x256xf32>
    %77 = arith.addf %76, %75 : vector<2x256xf32>
    %78 = arith.divf %76, %77 : vector<2x256xf32>
    %79 = vector.extract_strided_slice %59 {offsets = [0, 512], sizes = [2, 256], strides = [1, 1]} : vector<2x768xf32> to vector<2x256xf32>
    %80 = vector.extract_strided_slice %62 {offsets = [0, 512], sizes = [2, 256], strides = [1, 1]} : vector<2x768xf32> to vector<2x256xf32>
    %81 = arith.mulf %70, %80 : vector<2x256xf32>
    %82 = arith.addf %79, %81 : vector<2x256xf32>
    %83 = math.tanh %82 : vector<2x256xf32>
    %cst_31 = arith.constant 1.000000e+00 : f32
    %84 = vector.broadcast %cst_31 : f32 to vector<2x256xf32>
    %85 = arith.subf %84, %78 : vector<2x256xf32>
    %86 = arith.mulf %85, %83 : vector<2x256xf32>
    %87 = arith.mulf %78, %46 : vector<2x256xf32>
    %88 = arith.addf %86, %87 : vector<2x256xf32>
    %cst_32 = arith.constant dense<0.000000e+00> : vector<2x256xf32>
    %89 = tpu.matmul %88, %4, %cst_32 {dimension_numbers = #tpu.dot_dimension_numbers<[1], [0], [0], [1], [0, 0, 1, 1], [], []>} : vector<2x256xf32>, vector<256x256xf32>, vector<2x256xf32> -> vector<2x256xf32>
    %90 = vector.broadcast %5 : vector<1x256xf32> to vector<2x256xf32>
    %91 = arith.addf %89, %90 : vector<2x256xf32>
    %c2 = arith.constant 2 : index
    %c0_33 = arith.constant 0 : index
    %c0_34 = arith.constant 0 : index
    %92 = vector.load %arg1[%c2, %c0_33, %c0_34] : memref<4x2x256xf32, #tpu.memory_space<vmem>>, vector<1x2x256xf32>
    %93 = vector.shape_cast %92 : vector<1x2x256xf32> to vector<2x256xf32>
    %cst_35 = arith.constant 1.000000e-01 : f32
    %94 = vector.broadcast %cst_35 : f32 to vector<2x256xf32>
    %95 = arith.mulf %94, %91 : vector<2x256xf32>
    %cst_36 = arith.constant 0.899999976 : f32
    %96 = vector.broadcast %cst_36 : f32 to vector<2x256xf32>
    %97 = arith.mulf %96, %93 : vector<2x256xf32>
    %98 = arith.addf %95, %97 : vector<2x256xf32>
    %cst_37 = arith.constant dense<0.000000e+00> : vector<2x768xf32>
    %99 = tpu.matmul %98, %0, %cst_37 {dimension_numbers = #tpu.dot_dimension_numbers<[1], [0], [0], [1], [0, 0, 1, 1], [], []>} : vector<2x256xf32>, vector<256x768xf32>, vector<2x768xf32> -> vector<2x768xf32>
    %100 = vector.broadcast %2 : vector<1x768xf32> to vector<2x768xf32>
    %101 = arith.addf %99, %100 : vector<2x768xf32>
    %cst_38 = arith.constant dense<0.000000e+00> : vector<2x768xf32>
    %102 = tpu.matmul %88, %1, %cst_38 {dimension_numbers = #tpu.dot_dimension_numbers<[1], [0], [0], [1], [0, 0, 1, 1], [], []>} : vector<2x256xf32>, vector<256x768xf32>, vector<2x768xf32> -> vector<2x768xf32>
    %103 = vector.broadcast %3 : vector<1x768xf32> to vector<2x768xf32>
    %104 = arith.addf %102, %103 : vector<2x768xf32>
    %105 = vector.extract_strided_slice %101 {offsets = [0, 0], sizes = [2, 256], strides = [1, 1]} : vector<2x768xf32> to vector<2x256xf32>
    %106 = vector.extract_strided_slice %104 {offsets = [0, 0], sizes = [2, 256], strides = [1, 1]} : vector<2x768xf32> to vector<2x256xf32>
    %107 = arith.addf %105, %106 : vector<2x256xf32>
    %108 = arith.negf %107 : vector<2x256xf32>
    %109 = math.exp %108 : vector<2x256xf32>
    %cst_39 = arith.constant 1.000000e+00 : f32
    %110 = vector.broadcast %cst_39 : f32 to vector<2x256xf32>
    %111 = arith.addf %110, %109 : vector<2x256xf32>
    %112 = arith.divf %110, %111 : vector<2x256xf32>
    %113 = vector.extract_strided_slice %101 {offsets = [0, 256], sizes = [2, 256], strides = [1, 1]} : vector<2x768xf32> to vector<2x256xf32>
    %114 = vector.extract_strided_slice %104 {offsets = [0, 256], sizes = [2, 256], strides = [1, 1]} : vector<2x768xf32> to vector<2x256xf32>
    %115 = arith.addf %113, %114 : vector<2x256xf32>
    %116 = arith.negf %115 : vector<2x256xf32>
    %117 = math.exp %116 : vector<2x256xf32>
    %cst_40 = arith.constant 1.000000e+00 : f32
    %118 = vector.broadcast %cst_40 : f32 to vector<2x256xf32>
    %119 = arith.addf %118, %117 : vector<2x256xf32>
    %120 = arith.divf %118, %119 : vector<2x256xf32>
    %121 = vector.extract_strided_slice %101 {offsets = [0, 512], sizes = [2, 256], strides = [1, 1]} : vector<2x768xf32> to vector<2x256xf32>
    %122 = vector.extract_strided_slice %104 {offsets = [0, 512], sizes = [2, 256], strides = [1, 1]} : vector<2x768xf32> to vector<2x256xf32>
    %123 = arith.mulf %112, %122 : vector<2x256xf32>
    %124 = arith.addf %121, %123 : vector<2x256xf32>
    %125 = math.tanh %124 : vector<2x256xf32>
    %cst_41 = arith.constant 1.000000e+00 : f32
    %126 = vector.broadcast %cst_41 : f32 to vector<2x256xf32>
    %127 = arith.subf %126, %120 : vector<2x256xf32>
    %128 = arith.mulf %127, %125 : vector<2x256xf32>
    %129 = arith.mulf %120, %88 : vector<2x256xf32>
    %130 = arith.addf %128, %129 : vector<2x256xf32>
    %cst_42 = arith.constant dense<0.000000e+00> : vector<2x256xf32>
    %131 = tpu.matmul %130, %4, %cst_42 {dimension_numbers = #tpu.dot_dimension_numbers<[1], [0], [0], [1], [0, 0, 1, 1], [], []>} : vector<2x256xf32>, vector<256x256xf32>, vector<2x256xf32> -> vector<2x256xf32>
    %132 = vector.broadcast %5 : vector<1x256xf32> to vector<2x256xf32>
    %133 = arith.addf %131, %132 : vector<2x256xf32>
    %c3 = arith.constant 3 : index
    %c0_43 = arith.constant 0 : index
    %c0_44 = arith.constant 0 : index
    %134 = vector.load %arg1[%c3, %c0_43, %c0_44] : memref<4x2x256xf32, #tpu.memory_space<vmem>>, vector<1x2x256xf32>
    %135 = vector.shape_cast %134 : vector<1x2x256xf32> to vector<2x256xf32>
    %cst_45 = arith.constant 1.000000e-01 : f32
    %136 = vector.broadcast %cst_45 : f32 to vector<2x256xf32>
    %137 = arith.mulf %136, %133 : vector<2x256xf32>
    %cst_46 = arith.constant 0.899999976 : f32
    %138 = vector.broadcast %cst_46 : f32 to vector<2x256xf32>
    %139 = arith.mulf %138, %135 : vector<2x256xf32>
    %140 = arith.addf %137, %139 : vector<2x256xf32>
    %cst_47 = arith.constant dense<0.000000e+00> : vector<2x768xf32>
    %141 = tpu.matmul %140, %0, %cst_47 {dimension_numbers = #tpu.dot_dimension_numbers<[1], [0], [0], [1], [0, 0, 1, 1], [], []>} : vector<2x256xf32>, vector<256x768xf32>, vector<2x768xf32> -> vector<2x768xf32>
    %142 = vector.broadcast %2 : vector<1x768xf32> to vector<2x768xf32>
    %143 = arith.addf %141, %142 : vector<2x768xf32>
    %cst_48 = arith.constant dense<0.000000e+00> : vector<2x768xf32>
    %144 = tpu.matmul %130, %1, %cst_48 {dimension_numbers = #tpu.dot_dimension_numbers<[1], [0], [0], [1], [0, 0, 1, 1], [], []>} : vector<2x256xf32>, vector<256x768xf32>, vector<2x768xf32> -> vector<2x768xf32>
    %145 = vector.broadcast %3 : vector<1x768xf32> to vector<2x768xf32>
    %146 = arith.addf %144, %145 : vector<2x768xf32>
    %147 = vector.extract_strided_slice %143 {offsets = [0, 0], sizes = [2, 256], strides = [1, 1]} : vector<2x768xf32> to vector<2x256xf32>
    %148 = vector.extract_strided_slice %146 {offsets = [0, 0], sizes = [2, 256], strides = [1, 1]} : vector<2x768xf32> to vector<2x256xf32>
    %149 = arith.addf %147, %148 : vector<2x256xf32>
    %150 = arith.negf %149 : vector<2x256xf32>
    %151 = math.exp %150 : vector<2x256xf32>
    %cst_49 = arith.constant 1.000000e+00 : f32
    %152 = vector.broadcast %cst_49 : f32 to vector<2x256xf32>
    %153 = arith.addf %152, %151 : vector<2x256xf32>
    %154 = arith.divf %152, %153 : vector<2x256xf32>
    %155 = vector.extract_strided_slice %143 {offsets = [0, 256], sizes = [2, 256], strides = [1, 1]} : vector<2x768xf32> to vector<2x256xf32>
    %156 = vector.extract_strided_slice %146 {offsets = [0, 256], sizes = [2, 256], strides = [1, 1]} : vector<2x768xf32> to vector<2x256xf32>
    %157 = arith.addf %155, %156 : vector<2x256xf32>
    %158 = arith.negf %157 : vector<2x256xf32>
    %159 = math.exp %158 : vector<2x256xf32>
    %cst_50 = arith.constant 1.000000e+00 : f32
    %160 = vector.broadcast %cst_50 : f32 to vector<2x256xf32>
    %161 = arith.addf %160, %159 : vector<2x256xf32>
    %162 = arith.divf %160, %161 : vector<2x256xf32>
    %163 = vector.extract_strided_slice %143 {offsets = [0, 512], sizes = [2, 256], strides = [1, 1]} : vector<2x768xf32> to vector<2x256xf32>
    %164 = vector.extract_strided_slice %146 {offsets = [0, 512], sizes = [2, 256], strides = [1, 1]} : vector<2x768xf32> to vector<2x256xf32>
    %165 = arith.mulf %154, %164 : vector<2x256xf32>
    %166 = arith.addf %163, %165 : vector<2x256xf32>
    %167 = math.tanh %166 : vector<2x256xf32>
    %cst_51 = arith.constant 1.000000e+00 : f32
    %168 = vector.broadcast %cst_51 : f32 to vector<2x256xf32>
    %169 = arith.subf %168, %162 : vector<2x256xf32>
    %170 = arith.mulf %169, %167 : vector<2x256xf32>
    %171 = arith.mulf %162, %130 : vector<2x256xf32>
    %172 = arith.addf %170, %171 : vector<2x256xf32>
    %c0_52 = arith.constant 0 : index
    %c0_53 = arith.constant 0 : index
    %173 = vector.load %arg13[%c0_52, %c0_53] : memref<2x256xf32, #tpu.memory_space<vmem>>, vector<2x256xf32>
    tpu.vector_store %arg13[%c0_52, %c0_53], %172 {strides = array<i32>} : memref<2x256xf32, #tpu.memory_space<vmem>>, vector<2x256xf32>,
    %cst_54 = arith.constant dense<0.000000e+00> : vector<256xf32>
    %174 = vector.multi_reduction <add>, %172, %cst_54 [0] : vector<2x256xf32> to vector<256xf32>
    %175 = vector.shape_cast %174 : vector<256xf32> to vector<1x256xf32>
    %cst_55 = arith.constant 2.000000e+00 : f32
    %176 = vector.broadcast %cst_55 : f32 to vector<1x256xf32>
    %177 = arith.divf %175, %176 : vector<1x256xf32>
    %178 = arith.mulf %172, %172 : vector<2x256xf32>
    %cst_56 = arith.constant dense<0.000000e+00> : vector<256xf32>
    %179 = vector.multi_reduction <add>, %178, %cst_56 [0] : vector<2x256xf32> to vector<256xf32>
    %180 = vector.shape_cast %179 : vector<256xf32> to vector<1x256xf32>
    %cst_57 = arith.constant 2.000000e+00 : f32
    %181 = vector.broadcast %cst_57 : f32 to vector<1x256xf32>
    %182 = arith.divf %180, %181 : vector<1x256xf32>
    %183 = arith.mulf %177, %177 : vector<1x256xf32>
    %184 = arith.subf %182, %183 : vector<1x256xf32>
    %cst_58 = arith.constant 0.000000e+00 : f32
    %185 = vector.broadcast %cst_58 : f32 to vector<1x256xf32>
    %186 = arith.maximumf %184, %185 : vector<1x256xf32>
    %c0_59 = arith.constant 0 : index
    %c0_60 = arith.constant 0 : index
    %187 = vector.load %arg8[%c0_59, %c0_60] : memref<1x256xf32, #tpu.memory_space<vmem>>, vector<1x256xf32>
    %cst_61 = arith.constant 9.99999974E-6 : f32
    %188 = vector.broadcast %cst_61 : f32 to vector<1x256xf32>
    %189 = arith.addf %186, %188 : vector<1x256xf32>
    %190 = math.sqrt %189 : vector<1x256xf32>
    %191 = arith.divf %187, %190 : vector<1x256xf32>
    %c0_62 = arith.constant 0 : index
    %c0_63 = arith.constant 0 : index
    %192 = vector.load %arg9[%c0_62, %c0_63] : memref<1x256xf32, #tpu.memory_space<vmem>>, vector<1x256xf32>
    %193 = arith.mulf %177, %191 : vector<1x256xf32>
    %194 = arith.subf %192, %193 : vector<1x256xf32>
    %195 = vector.broadcast %191 : vector<1x256xf32> to vector<2x256xf32>
    %196 = arith.mulf %172, %195 : vector<2x256xf32>
    %197 = vector.broadcast %194 : vector<1x256xf32> to vector<2x256xf32>
    %198 = arith.addf %196, %197 : vector<2x256xf32>
    %c0_64 = arith.constant 0 : index
    %c0_65 = arith.constant 0 : index
    %199 = vector.load %arg10[%c0_64, %c0_65] : memref<256x128xf32, #tpu.memory_space<vmem>>, vector<256x128xf32>
    %cst_66 = arith.constant dense<0.000000e+00> : vector<2x128xf32>
    %200 = tpu.matmul %198, %199, %cst_66 {dimension_numbers = #tpu.dot_dimension_numbers<[1], [0], [0], [1], [0, 0, 1, 1], [], []>} : vector<2x256xf32>, vector<256x128xf32>, vector<2x128xf32> -> vector<2x128xf32>
    %c0_67 = arith.constant 0 : index
    %c0_68 = arith.constant 0 : index
    %201 = vector.load %arg11[%c0_67, %c0_68] : memref<1x128xf32, #tpu.memory_space<vmem>>, vector<1x128xf32>
    %202 = vector.broadcast %201 : vector<1x128xf32> to vector<2x128xf32>
    %203 = arith.addf %200, %202 : vector<2x128xf32>
    %c0_69 = arith.constant 0 : index
    %c0_70 = arith.constant 0 : index
    %204 = vector.load %arg12[%c0_69, %c0_70] : memref<2x128xf32, #tpu.memory_space<vmem>>, vector<2x128xf32>
    tpu.vector_store %arg12[%c0_69, %c0_70], %203 {strides = array<i32>} : memref<2x128xf32, #tpu.memory_space<vmem>>, vector<2x128xf32>,
    return
  }
  func.func @transform_0(%arg0: i32) -> (i32, i32, i32) {
    %c0_i32 = arith.constant 0 : i32
    %c0_i32_0 = arith.constant 0 : i32
    %c0_i32_1 = arith.constant 0 : i32
    %c0_i32_2 = arith.constant 0 : i32
    return %c0_i32, %c0_i32_0, %c0_i32_1 : i32, i32, i32
  }
  func.func @transform_1(%arg0: i32) -> (i32, i32) {
    %c0_i32 = arith.constant 0 : i32
    %c0_i32_0 = arith.constant 0 : i32
    %c0_i32_1 = arith.constant 0 : i32
    return %c0_i32, %c0_i32_0 : i32, i32
  }
  func.func @transform_2(%arg0: i32) -> (i32, i32) {
    %c0_i32 = arith.constant 0 : i32
    %c0_i32_0 = arith.constant 0 : i32
    %c0_i32_1 = arith.constant 0 : i32
    return %c0_i32, %c0_i32_0 : i32, i32
  }
  func.func @transform_3(%arg0: i32) -> (i32, i32) {
    %c0_i32 = arith.constant 0 : i32
    %c0_i32_0 = arith.constant 0 : i32
    %c0_i32_1 = arith.constant 0 : i32
    return %c0_i32, %c0_i32_0 : i32, i32
  }
  func.func @transform_4(%arg0: i32) -> (i32, i32) {
    %c0_i32 = arith.constant 0 : i32
    %c0_i32_0 = arith.constant 0 : i32
    %c0_i32_1 = arith.constant 0 : i32
    return %c0_i32, %c0_i32_0 : i32, i32
  }
  func.func @transform_5(%arg0: i32) -> (i32, i32) {
    %c0_i32 = arith.constant 0 : i32
    %c0_i32_0 = arith.constant 0 : i32
    %c0_i32_1 = arith.constant 0 : i32
    return %c0_i32, %c0_i32_0 : i32, i32
  }
  func.func @transform_6(%arg0: i32) -> (i32, i32) {
    %c0_i32 = arith.constant 0 : i32
    %c0_i32_0 = arith.constant 0 : i32
    %c0_i32_1 = arith.constant 0 : i32
    return %c0_i32, %c0_i32_0 : i32, i32
  }
  func.func @transform_7(%arg0: i32) -> (i32, i32) {
    %c0_i32 = arith.constant 0 : i32
    %c0_i32_0 = arith.constant 0 : i32
    %c0_i32_1 = arith.constant 0 : i32
    return %c0_i32, %c0_i32_0 : i32, i32
  }
  func.func @transform_8(%arg0: i32) -> (i32, i32) {
    %c0_i32 = arith.constant 0 : i32
    %c0_i32_0 = arith.constant 0 : i32
    %c0_i32_1 = arith.constant 0 : i32
    return %c0_i32, %c0_i32_0 : i32, i32
  }
  func.func @transform_9(%arg0: i32) -> (i32, i32) {
    %c0_i32 = arith.constant 0 : i32
    %c0_i32_0 = arith.constant 0 : i32
    %c0_i32_1 = arith.constant 0 : i32
    return %c0_i32, %c0_i32_0 : i32, i32
  }
  func.func @transform_10(%arg0: i32) -> (i32, i32) {
    %c0_i32 = arith.constant 0 : i32
    %c0_i32_0 = arith.constant 0 : i32
    %c0_i32_1 = arith.constant 0 : i32
    return %c0_i32, %c0_i32_0 : i32, i32
  }
  func.func @transform_11(%arg0: i32) -> (i32, i32) {
    %c0_i32 = arith.constant 0 : i32
    %c0_i32_0 = arith.constant 0 : i32
    %c0_i32_1 = arith.constant 0 : i32
    return %c0_i32, %c0_i32_0 : i32, i32
  }
  func.func @transform_12(%arg0: i32) -> (i32, i32) {
    %c0_i32 = arith.constant 0 : i32
    %c0_i32_0 = arith.constant 0 : i32
    %c0_i32_1 = arith.constant 0 : i32
    return %c0_i32, %c0_i32_0 : i32, i32
  }
}

</mosaic_0001>

<llo_original>
// kernel: forward.10
$region0: #{forward.10}
  #allocation0 [shape = 'u32[]', space=smem, size = 0x4, offset = 0x4, fixed_abs, tag = 'smem constant byte address 0x4 - core index']
  #allocation1 [shape = 'u32[144,128]{1,0:T(1,128)}', space=vmem, size = 0x12000, scoped, tag = 'internal scratch']
  %s0 = inlined_call_operand.vmem [shape: f32[8192,27], index: 0, kind: input, shape index: {}]
  %s1 = inlined_call_operand.vmem [shape: f32[27,128], index: 1, kind: input, shape index: {}]
  %s2 = inlined_call_operand.vmem [shape: f32[8192,128], index: 2, kind: output, shape index: {0}]
  %s3 = inlined_call_operand.vmem [shape: f32[128,128], index: 3, kind: output, shape index: {1}]
  %4 = xla_tuple %s2, %s3
  %s5 = sld [smem:[#allocation0]]
  $region49: #{forward.10} parent=0
    _
  %s7 = ssub.s32 1, %s5
  %s8 = scalar_select 0, %s7, %s5
  loop: start=0, step=1, limit=18
  $region2: #{forward.10} parent=0 // loop_pre_header
    _
  $region3: #{forward.10} parent=0 // loop_header
    %s10 = sphi 0, %s14
    %p11 = scmp.ge.s32.totalorder %s10, 18
    %s20 = sphi 0, %s22
    %s23 = sphi 0, %s20
    %s24 = sphi 0, %s23
    %s40 = sphi 0, %s24
    %s44 = sphi 0, %s44
    %s46 = sphi 0, %s44
    %s47 = sphi 0, %s46
    %s61 = sphi 0, %s47
    %s67 = sphi 0, %s69
    %s70 = sphi 0, %s67
    %s71 = sphi 0, %s70
    %s87 = sphi 0, %s71
    %s93 = sphi 0, %s95
    %s96 = sphi 0, %s93
    %s97 = sphi 0, %s96
    %s113 = sphi 0, %s97
  $region4: #{forward.10} parent=0 // loop_header_branch
    %13 = sbr.rel (%p11) target = $region8
  $region5: #{forward.10} parent=0 // loop_body
    %s15 = ssub.s32 %s10, 1
    %s16 = ssub.s32 %s10, 2
    %s17 = sadd.s32 %s10, 1
    %s18 = ssub.s32 %s10, %s17
    %p19 = scmp.eq.s32.totalorder %s18, 0
    %s21 = sadd.s32 %s20, 1
    %s22 = scalar_select %p19, %s20, %s21
    %p25 = pneg %p19
    %p26 = scmp.eq.s32.totalorder %s10, 15
    %p27 = por %p25, %p26
    %p28 = scmp.ne.s32.totalorder %s20, %s23
    %p29 = scmp.eq.s32.totalorder %s10, 0
    %p30 = por %p28, %p29
    %p31 = scmp.ne.s32.totalorder %s20, %s23
    %p32 = scmp.eq.s32.totalorder %s15, 15
    %p33 = por %p31, %p32
    %p34 = scmp.ne.s32.totalorder %s23, %s24
    %p35 = scmp.eq.s32.totalorder %s15, 0
    %p36 = por %p34, %p35
    %p37 = scmp.ne.s32.totalorder %s23, %s24
    %p38 = scmp.eq.s32.totalorder %s16, 15
    %p39 = por %p37, %p38
    %p41 = scmp.ne.s32.totalorder %s24, %s40
    %p42 = scmp.eq.s32.totalorder %s16, 0
    %p43 = por %p41, %p42
    %s45 = sadd.s32 %s44, 1
    %p48 = scmp.eq.s32.totalorder %s10, 15
    %p49 = scmp.ne.s32.totalorder %s44, %s46
    %p50 = scmp.eq.s32.totalorder %s10, 0
    %p51 = por %p49, %p50
    %p52 = scmp.ne.s32.totalorder %s44, %s46
    %p53 = scmp.eq.s32.totalorder %s15, 15
    %p54 = por %p52, %p53
    %p55 = scmp.ne.s32.totalorder %s46, %s47
    %p56 = scmp.eq.s32.totalorder %s15, 0
    %p57 = por %p55, %p56
    %p58 = scmp.ne.s32.totalorder %s46, %s47
    %p59 = scmp.eq.s32.totalorder %s16, 15
    %p60 = por %p58, %p59
    %p62 = scmp.ne.s32.totalorder %s47, %s61
    %p63 = scmp.eq.s32.totalorder %s16, 0
    %p64 = por %p62, %p63
    %s65 = ssub.s32 %s10, %s17
    %p66 = scmp.eq.s32.totalorder %s65, 0
    %s68 = sadd.s32 %s67, 1
    %s69 = scalar_select %p66, %s67, %s68
    %p72 = pneg %p66
    %p73 = scmp.eq.s32.totalorder %s10, 15
    %p74 = por %p72, %p73
    %p75 = scmp.ne.s32.totalorder %s67, %s70
    %p76 = scmp.eq.s32.totalorder %s10, 0
    %p77 = por %p75, %p76
    %p78 = scmp.ne.s32.totalorder %s67, %s70
    %p79 = scmp.eq.s32.totalorder %s15, 15
    %p80 = por %p78, %p79
    %p81 = scmp.ne.s32.totalorder %s70, %s71
    %p82 = scmp.eq.s32.totalorder %s15, 0
    %p83 = por %p81, %p82
    %p84 = scmp.ne.s32.totalorder %s70, %s71
    %p85 = scmp.eq.s32.totalorder %s16, 15
    %p86 = por %p84, %p85
    %p88 = scmp.ne.s32.totalorder %s71, %s87
    %p89 = scmp.eq.s32.totalorder %s16, 0
    %p90 = por %p88, %p89
    %s91 = ssub.s32 %s10, %s17
    %p92 = scmp.eq.s32.totalorder %s91, 0
    %s94 = sadd.s32 %s93, 1
    %s95 = scalar_select %p92, %s93, %s94
    %p98 = pneg %p92
    %p99 = scmp.eq.s32.totalorder %s10, 15
    %p100 = por %p98, %p99
    %p101 = scmp.ne.s32.totalorder %s93, %s96
    %p102 = scmp.eq.s32.totalorder %s10, 0
    %p103 = por %p101, %p102
    %p104 = scmp.ne.s32.totalorder %s93, %s96
    %p105 = scmp.eq.s32.totalorder %s15, 15
    %p106 = por %p104, %p105
    %p107 = scmp.ne.s32.totalorder %s96, %s97
    %p108 = scmp.eq.s32.totalorder %s15, 0
    %p109 = por %p107, %p108
    %p110 = scmp.ne.s32.totalorder %s96, %s97
    %p111 = scmp.eq.s32.totalorder %s16, 15
    %p112 = por %p110, %p111
    %p114 = scmp.ne.s32.totalorder %s97, %s113
    %p115 = scmp.eq.s32.totalorder %s16, 0
    %p116 = por %p114, %p115
    %p117 = scmp.le.s32.totalorder 1, %s10
    %p118 = scmp.lt.s32.totalorder %s10, 17
    %p119 = pnand %p117, %p118
    %p120 = pneg %p119
    // Predicated region
    $region9: #{forward.10} parent=5 // pred_check
      _
    $region10: #{forward.10} parent=5 // pred_check_branch
      %122 = sbr.rel (%p119) target = $region12
    $region11: #{forward.10} parent=5 // pred_region
      %s123 = ssub.s32 %s10, 1
      // Predicated region
      $region13: #{forward.10} parent=11 // pred_check
        %p124 = pneg %p57
      $region14: #{forward.10} parent=11 // pred_check_branch
        %126 = sbr.rel (%p124) target = $region16
      $region15: #{forward.10} parent=11 // pred_region
        _
      $region16: #{forward.10} parent=11 // pred_fallthru
        _
    $region12: #{forward.10} parent=5 // pred_fallthru
      _
    %p127 = scmp.lt.s32.totalorder %s10, 16
    // Predicated region
    $region17: #{forward.10} parent=5 // pred_check
      %p128 = pneg %p127
    $region18: #{forward.10} parent=5 // pred_check_branch
      %130 = sbr.rel (%p128) target = $region20
    $region19: #{forward.10} parent=5 // pred_region
      // Predicated region
      $region21: #{forward.10} parent=19 // pred_check
        %p131 = pneg %p30
      $region22: #{forward.10} parent=19 // pred_check_branch
        %133 = sbr.rel (%p131) target = $region24
      $region23: #{forward.10} parent=19 // pred_region
        %s134 = smul.u32 64, %s10
        %p135 = scmp.lt.s32.totalorder %s134, 1023
        %s136 = scalar_select %p135, %s134, 1023
        %s137 = smul.addr %s136, 8
        %s138 = scalar_lea.vmem %s0, %s137
        %s139 = smul.u32 64, %s10
      $region24: #{forward.10} parent=19 // pred_fallthru
        _
    $region20: #{forward.10} parent=5 // pred_fallthru
      _
    %p140 = scmp.le.s32.totalorder 1, %s10
    %p141 = scmp.lt.s32.totalorder %s10, 17
    %p142 = pnand %p140, %p141
    %p143 = pneg %p142
    // Predicated region
    $region25: #{forward.10} parent=5 // pred_check
      _
    $region26: #{forward.10} parent=5 // pred_check_branch
      %145 = sbr.rel (%p142) target = $region28
    $region27: #{forward.10} parent=5 // pred_region
      %s146 = ssub.s32 %s10, 1
      %s147 = smul.u32 64, %s15
      %p148 = scmp.lt.s32.totalorder %s147, 1023
      %s149 = scalar_select %p148, %s147, 1023
      %s150 = smul.addr %s149, 8
      %s151 = scalar_lea.vmem %s0, %s150
      %p152 = pneg %p36
      %p153 = pneg %p33
      %p154 = pneg %p57
      %p155 = pneg %p54
      %p156 = pneg %p83
      %p157 = pneg %p80
      %s158 = smul.u32 64, %s15
      %p159 = scmp.lt.s32.totalorder %s158, 1023
      %s160 = scalar_select %p159, %s158, 1023
      %s161 = smul.addr %s160, 8
      %s162 = scalar_lea.vmem %s2, %s161
      %p163 = pneg %p109
      %p164 = pneg %p106
      %p165 = scmp.lt.s32.totalorder %s15, 15
      %s166 = scalar_select %p165, %s15, 15
      %s167 = smul.addr %s166, 8
      %s168 = scalar_lea.vmem %s3, %s167
      %s169 = smul.u32 64, %s15
      %p170 = scmp.lt.s32.totalorder %s169, 1023
      %s171 = scalar_select %p170, %s169, 1023
      %s172 = smul.addr %s171, 8
      %s173 = scalar_lea.vmem %s0, %s172
      %s174 = smul.u32 64, %s15
      %s175 = smul.u32 64, %s15
      %p176 = scmp.lt.s32.totalorder %s175, 1023
      %s177 = scalar_select %p176, %s175, 1023
      %s178 = smul.addr %s177, 8
      %s179 = scalar_lea.vmem %s2, %s178
      %s180 = smul.u32 64, %s15
      %p181 = scmp.lt.s32.totalorder %s15, 15
      %s182 = scalar_select %p181, %s15, 15
      %s183 = smul.addr %s182, 8
      %s184 = scalar_lea.vmem %s3, %s183
      %v185 = vld [vmem:[%s173] sm:$0xff]
      %v186 = vld [vmem:[%s173 + $0x8] sm:$0xff]
      %v187 = vld [vmem:[%s173 + $0x10] sm:$0xff]
      %v188 = vld [vmem:[%s173 + $0x18] sm:$0xff]
      %v189 = vld [vmem:[%s173 + $0x20] sm:$0xff]
      %v190 = vld [vmem:[%s173 + $0x28] sm:$0xff]
      %v191 = vld [vmem:[%s173 + $0x30] sm:$0xff]
      %v192 = vld [vmem:[%s173 + $0x38] sm:$0xff]
      %v193 = vld [vmem:[%s173 + $0x40] sm:$0xff]
      %v194 = vld [vmem:[%s173 + $0x48] sm:$0xff]
      %v195 = vld [vmem:[%s173 + $0x50] sm:$0xff]
      %v196 = vld [vmem:[%s173 + $0x58] sm:$0xff]
      %v197 = vld [vmem:[%s173 + $0x60] sm:$0xff]
      %v198 = vld [vmem:[%s173 + $0x68] sm:$0xff]
      %v199 = vld [vmem:[%s173 + $0x70] sm:$0xff]
      %v200 = vld [vmem:[%s173 + $0x78] sm:$0xff]
      %v201 = vld [vmem:[%s173 + $0x80] sm:$0xff]
      %v202 = vld [vmem:[%s173 + $0x88] sm:$0xff]
      %v203 = vld [vmem:[%s173 + $0x90] sm:$0xff]
      %v204 = vld [vmem:[%s173 + $0x98] sm:$0xff]
      %v205 = vld [vmem:[%s173 + $0xa0] sm:$0xff]
      %v206 = vld [vmem:[%s173 + $0xa8] sm:$0xff]
      %v207 = vld [vmem:[%s173 + $0xb0] sm:$0xff]
      %v208 = vld [vmem:[%s173 + $0xb8] sm:$0xff]
      %v209 = vld [vmem:[%s173 + $0xc0] sm:$0xff]
      %v210 = vld [vmem:[%s173 + $0xc8] sm:$0xff]
      %v211 = vld [vmem:[%s173 + $0xd0] sm:$0xff]
      %v212 = vld [vmem:[%s173 + $0xd8] sm:$0xff]
      %v213 = vld [vmem:[%s173 + $0xe0] sm:$0xff]
      %v214 = vld [vmem:[%s173 + $0xe8] sm:$0xff]
      %v215 = vld [vmem:[%s173 + $0xf0] sm:$0xff]
      %v216 = vld [vmem:[%s173 + $0xf8] sm:$0xff]
      %v217 = vld [vmem:[%s173 + $0x100] sm:$0xff]
      %v218 = vld [vmem:[%s173 + $0x108] sm:$0xff]
      %v219 = vld [vmem:[%s173 + $0x110] sm:$0xff]
      %v220 = vld [vmem:[%s173 + $0x118] sm:$0xff]
      %v221 = vld [vmem:[%s173 + $0x120] sm:$0xff]
      %v222 = vld [vmem:[%s173 + $0x128] sm:$0xff]
      %v223 = vld [vmem:[%s173 + $0x130] sm:$0xff]
      %v224 = vld [vmem:[%s173 + $0x138] sm:$0xff]
      %v225 = vld [vmem:[%s173 + $0x140] sm:$0xff]
      %v226 = vld [vmem:[%s173 + $0x148] sm:$0xff]
      %v227 = vld [vmem:[%s173 + $0x150] sm:$0xff]
      %v228 = vld [vmem:[%s173 + $0x158] sm:$0xff]
      %v229 = vld [vmem:[%s173 + $0x160] sm:$0xff]
      %v230 = vld [vmem:[%s173 + $0x168] sm:$0xff]
      %v231 = vld [vmem:[%s173 + $0x170] sm:$0xff]
      %v232 = vld [vmem:[%s173 + $0x178] sm:$0xff]
      %v233 = vld [vmem:[%s173 + $0x180] sm:$0xff]
      %v234 = vld [vmem:[%s173 + $0x188] sm:$0xff]
      %v235 = vld [vmem:[%s173 + $0x190] sm:$0xff]
      %v236 = vld [vmem:[%s173 + $0x198] sm:$0xff]
      %v237 = vld [vmem:[%s173 + $0x1a0] sm:$0xff]
      %v238 = vld [vmem:[%s173 + $0x1a8] sm:$0xff]
      %v239 = vld [vmem:[%s173 + $0x1b0] sm:$0xff]
      %v240 = vld [vmem:[%s173 + $0x1b8] sm:$0xff]
      %v241 = vld [vmem:[%s173 + $0x1c0] sm:$0xff]
      %v242 = vld [vmem:[%s173 + $0x1c8] sm:$0xff]
      %v243 = vld [vmem:[%s173 + $0x1d0] sm:$0xff]
      %v244 = vld [vmem:[%s173 + $0x1d8] sm:$0xff]
      %v245 = vld [vmem:[%s173 + $0x1e0] sm:$0xff]
      %v246 = vld [vmem:[%s173 + $0x1e8] sm:$0xff]
      %v247 = vld [vmem:[%s173 + $0x1f0] sm:$0xff]
      %v248 = vld [vmem:[%s173 + $0x1f8] sm:$0xff]
      %v249 = vld [vmem:[%s1] sm:$0xff]
      %v250 = vld [vmem:[%s1 + $0x8] sm:$0xff]
      %v251 = vld [vmem:[%s1 + $0x10] sm:$0xff]
      %v252 = vld [vmem:[%s1 + $0x18] sm:$0x7]
      %vm253 = vcmask 220160
      %v255 = vsel %vm253, %v185, 0
      %v258 = vsel %vm253, %v186, 0
      %v261 = vsel %vm253, %v187, 0
      %v264 = vsel %vm253, %v188, 0
      %v267 = vsel %vm253, %v189, 0
      %v270 = vsel %vm253, %v190, 0
      %v273 = vsel %vm253, %v191, 0
      %v276 = vsel %vm253, %v192, 0
      %v279 = vsel %vm253, %v193, 0
      %v282 = vsel %vm253, %v194, 0
      %v285 = vsel %vm253, %v195, 0
      %v288 = vsel %vm253, %v196, 0
      %v291 = vsel %vm253, %v197, 0
      %v294 = vsel %vm253, %v198, 0
      %v297 = vsel %vm253, %v199, 0
      %v300 = vsel %vm253, %v200, 0
      %v303 = vsel %vm253, %v201, 0
      %v306 = vsel %vm253, %v202, 0
      %v309 = vsel %vm253, %v203, 0
      %v312 = vsel %vm253, %v204, 0
      %v315 = vsel %vm253, %v205, 0
      %v318 = vsel %vm253, %v206, 0
      %v321 = vsel %vm253, %v207, 0
      %v324 = vsel %vm253, %v208, 0
      %v327 = vsel %vm253, %v209, 0
      %v330 = vsel %vm253, %v210, 0
      %v333 = vsel %vm253, %v211, 0
      %v336 = vsel %vm253, %v212, 0
      %v339 = vsel %vm253, %v213, 0
      %v342 = vsel %vm253, %v214, 0
      %v345 = vsel %vm253, %v215, 0
      %v348 = vsel %vm253, %v216, 0
      %v351 = vsel %vm253, %v217, 0
      %v354 = vsel %vm253, %v218, 0
      %v357 = vsel %vm253, %v219, 0
      %v360 = vsel %vm253, %v220, 0
      %v363 = vsel %vm253, %v221, 0
      %v366 = vsel %vm253, %v222, 0
      %v369 = vsel %vm253, %v223, 0
      %v372 = vsel %vm253, %v224, 0
      %v375 = vsel %vm253, %v225, 0
      %v378 = vsel %vm253, %v226, 0
      %v381 = vsel %vm253, %v227, 0
      %v384 = vsel %vm253, %v228, 0
      %v387 = vsel %vm253, %v229, 0
      %v390 = vsel %vm253, %v230, 0
      %v393 = vsel %vm253, %v231, 0
      %v396 = vsel %vm253, %v232, 0
      %v399 = vsel %vm253, %v233, 0
      %v402 = vsel %vm253, %v234, 0
      %v405 = vsel %vm253, %v235, 0
      %v408 = vsel %vm253, %v236, 0
      %v411 = vsel %vm253, %v237, 0
      %v414 = vsel %vm253, %v238, 0
      %v417 = vsel %vm253, %v239, 0
      %v420 = vsel %vm253, %v240, 0
      %v423 = vsel %vm253, %v241, 0
      %v426 = vsel %vm253, %v242, 0
      %v429 = vsel %vm253, %v243, 0
      %v432 = vsel %vm253, %v244, 0
      %v435 = vsel %vm253, %v245, 0
      %v438 = vsel %vm253, %v246, 0
      %v441 = vsel %vm253, %v247, 0
      %v444 = vsel %vm253, %v248, 0
      %vm446 = vcmask 1042432
      %v448 = vsel %vm446, %v252, 0
      %450 = vmatprep.subr.mxu0 0.0
      %451 = vmatpush1.msra.mxu0 %v249
      %452 = vmatprep.subr.mxu0 0.0
      %453 = vmatpush1.msra.mxu0 %v250
      %454 = vmatprep.subr.mxu0 0.0
      %455 = vmatpush1.msra.mxu0 %v251
      %456 = vmatprep.subr.mxu0 0.0
      %457 = vmatpush1.msra.mxu0 %v448
      %458 = vmatprep.subr.mxu0 0.0
      %459 = vmatpush1.msra.mxu0 0.0
      %460 = vmatprep.subr.mxu0 0.0
      %461 = vmatpush1.msra.mxu0 0.0
      %462 = vmatprep.subr.mxu0 0.0
      %463 = vmatpush1.msra.mxu0 0.0
      %464 = vmatprep.subr.mxu0 0.0
      %465 = vmatpush1.msra.mxu0 0.0
      %466 = vmatprep.subr.mxu0 0.0
      %467 = vmatpush1.msra.mxu0 0.0
      %468 = vmatprep.subr.mxu0 0.0
      %469 = vmatpush1.msra.mxu0 0.0
      %470 = vmatprep.subr.mxu0 0.0
      %471 = vmatpush1.msra.mxu0 0.0
      %472 = vmatprep.subr.mxu0 0.0
      %473 = vmatpush1.msra.mxu0 0.0
      %474 = vmatprep.subr.mxu0 0.0
      %475 = vmatpush1.msra.mxu0 0.0
      %476 = vmatprep.subr.mxu0 0.0
      %477 = vmatpush1.msra.mxu0 0.0
      %478 = vmatprep.subr.mxu0 0.0
      %479 = vmatpush1.msra.mxu0 0.0
      %480 = vmatprep.subr.mxu0 0.0
      %481 = vmatpush1.msra.mxu0 0.0
      %482 = vmatprep.subr.mxu0 0.0
      %483 = vmatpush1.msra.mxu0 0.0
      %484 = vmatprep.subr.mxu0 0.0
      %485 = vmatpush1.msra.mxu0 0.0
      %486 = vmatprep.subr.mxu0 0.0
      %487 = vmatpush1.msra.mxu0 0.0
      %488 = vmatprep.subr.mxu0 0.0
      %489 = vmatpush1.msra.mxu0 0.0
      %490 = vmatprep.subr.mxu0 0.0
      %491 = vmatpush1.msra.mxu0 0.0
      %492 = vmatprep.subr.mxu0 0.0
      %493 = vmatpush1.msra.mxu0 0.0
      %494 = vmatprep.subr.mxu0 0.0
      %495 = vmatpush1.msra.mxu0 0.0
      %496 = vmatprep.subr.mxu0 0.0
      %497 = vmatpush1.msra.mxu0 0.0
      %498 = vmatprep.subr.mxu0 0.0
      %499 = vmatpush1.msra.mxu0 0.0
      %500 = vmatprep.subr.mxu0 0.0
      %501 = vmatpush1.msra.mxu0 0.0
      %502 = vmatprep.subr.mxu0 0.0
      %503 = vmatpush1.msra.mxu0 0.0
      %504 = vmatprep.subr.mxu0 0.0
      %505 = vmatpush1.msra.mxu0 0.0
      %506 = vmatprep.subr.mxu0 0.0
      %507 = vmatpush1.msra.mxu0 0.0
      %508 = vmatprep.subr.mxu0 0.0
      %509 = vmatpush1.msra.mxu0 0.0
      %510 = vmatprep.subr.mxu0 0.0
      %511 = vmatpush1.msra.mxu0 0.0
      %512 = vmatprep.subr.mxu0 0.0
      %513 = vmatpush1.msra.mxu0 0.0
      %514 = vmatprep.mubr.f32.mxu0 0.0
      %515 = vmatmul.mubr.f32.gmra.mrb[0].mxu0 %v255
      %v516 = vpop.f32.mrb[0].mxu0
      %v517 = vadd.f32 0.0, %v516
      %v518 = vpop.f32.mrb[0].mxu0
      %519 = vmatprep.mubr.f32.mxu0 0.0
      %520 = vmatmul.mubr.f32.gmra.mrb[0].mxu0 %v258
      %v521 = vpop.f32.mrb[0].mxu0
      %v522 = vadd.f32 0.0, %v521
      %v523 = vpop.f32.mrb[0].mxu0
      %524 = vmatprep.mubr.f32.mxu0 0.0
      %525 = vmatmul.mubr.f32.gmra.mrb[0].mxu0 %v261
      %v526 = vpop.f32.mrb[0].mxu0
      %v527 = vadd.f32 0.0, %v526
      %v528 = vpop.f32.mrb[0].mxu0
      %529 = vmatprep.mubr.f32.mxu0 0.0
      %530 = vmatmul.mubr.f32.gmra.mrb[0].mxu0 %v264
      %v531 = vpop.f32.mrb[0].mxu0
      %v532 = vadd.f32 0.0, %v531
      %v533 = vpop.f32.mrb[0].mxu0
      %534 = vmatprep.mubr.f32.mxu0 0.0
      %535 = vmatmul.mubr.f32.gmra.mrb[0].mxu0 %v267
      %v536 = vpop.f32.mrb[0].mxu0
      %v537 = vadd.f32 0.0, %v536
      %v538 = vpop.f32.mrb[0].mxu0
      %539 = vmatprep.mubr.f32.mxu0 0.0
      %540 = vmatmul.mubr.f32.gmra.mrb[0].mxu0 %v270
      %v541 = vpop.f32.mrb[0].mxu0
      %v542 = vadd.f32 0.0, %v541
      %v543 = vpop.f32.mrb[0].mxu0
      %544 = vmatprep.mubr.f32.mxu0 0.0
      %545 = vmatmul.mubr.f32.gmra.mrb[0].mxu0 %v273
      %v546 = vpop.f32.mrb[0].mxu0
      %v547 = vadd.f32 0.0, %v546
      %v548 = vpop.f32.mrb[0].mxu0
      %549 = vmatprep.mubr.f32.mxu0 0.0
      %550 = vmatmul.mubr.f32.gmra.mrb[0].mxu0 %v276
      %v551 = vpop.f32.mrb[0].mxu0
      %v552 = vadd.f32 0.0, %v551
      %v553 = vpop.f32.mrb[0].mxu0
      %554 = vmatprep.mubr.f32.mxu0 0.0
      %555 = vmatmul.mubr.f32.gmra.mrb[0].mxu0 %v279
      %v556 = vpop.f32.mrb[0].mxu0
      %v557 = vadd.f32 0.0, %v556
      %v558 = vpop.f32.mrb[0].mxu0
      %559 = vmatprep.mubr.f32.mxu0 0.0
      %560 = vmatmul.mubr.f32.gmra.mrb[0].mxu0 %v282
      %v561 = vpop.f32.mrb[0].mxu0
      %v562 = vadd.f32 0.0, %v561
      %v563 = vpop.f32.mrb[0].mxu0
      %564 = vmatprep.mubr.f32.mxu0 0.0
      %565 = vmatmul.mubr.f32.gmra.mrb[0].mxu0 %v285
      %v566 = vpop.f32.mrb[0].mxu0
      %v567 = vadd.f32 0.0, %v566
      %v568 = vpop.f32.mrb[0].mxu0
      %569 = vmatprep.mubr.f32.mxu0 0.0
      %570 = vmatmul.mubr.f32.gmra.mrb[0].mxu0 %v288
      %v571 = vpop.f32.mrb[0].mxu0
      %v572 = vadd.f32 0.0, %v571
      %v573 = vpop.f32.mrb[0].mxu0
      %574 = vmatprep.mubr.f32.mxu0 0.0
      %575 = vmatmul.mubr.f32.gmra.mrb[0].mxu0 %v291
      %v576 = vpop.f32.mrb[0].mxu0
      %v577 = vadd.f32 0.0, %v576
      %v578 = vpop.f32.mrb[0].mxu0
      %579 = vmatprep.mubr.f32.mxu0 0.0
      %580 = vmatmul.mubr.f32.gmra.mrb[0].mxu0 %v294
      %v581 = vpop.f32.mrb[0].mxu0
      %v582 = vadd.f32 0.0, %v581
      %v583 = vpop.f32.mrb[0].mxu0
      %584 = vmatprep.mubr.f32.mxu0 0.0
      %585 = vmatmul.mubr.f32.gmra.mrb[0].mxu0 %v297
      %v586 = vpop.f32.mrb[0].mxu0
      %v587 = vadd.f32 0.0, %v586
      %v588 = vpop.f32.mrb[0].mxu0
      %589 = vmatprep.mubr.f32.mxu0 0.0
      %590 = vmatmul.mubr.f32.gmra.mrb[0].mxu0 %v300
      %v591 = vpop.f32.mrb[0].mxu0
      %v592 = vadd.f32 0.0, %v591
      %v593 = vpop.f32.mrb[0].mxu0
      %594 = vmatprep.mubr.f32.mxu0 0.0
      %595 = vmatmul.mubr.f32.gmra.mrb[0].mxu0 %v303
      %v596 = vpop.f32.mrb[0].mxu0
      %v597 = vadd.f32 0.0, %v596
      %v598 = vpop.f32.mrb[0].mxu0
      %599 = vmatprep.mubr.f32.mxu0 0.0
      %600 = vmatmul.mubr.f32.gmra.mrb[0].mxu0 %v306
      %v601 = vpop.f32.mrb[0].mxu0
      %v602 = vadd.f32 0.0, %v601
      %v603 = vpop.f32.mrb[0].mxu0
      %604 = vmatprep.mubr.f32.mxu0 0.0
      %605 = vmatmul.mubr.f32.gmra.mrb[0].mxu0 %v309
      %v606 = vpop.f32.mrb[0].mxu0
      %v607 = vadd.f32 0.0, %v606
      %v608 = vpop.f32.mrb[0].mxu0
      %609 = vmatprep.mubr.f32.mxu0 0.0
      %610 = vmatmul.mubr.f32.gmra.mrb[0].mxu0 %v312
      %v611 = vpop.f32.mrb[0].mxu0
      %v612 = vadd.f32 0.0, %v611
      %v613 = vpop.f32.mrb[0].mxu0
      %614 = vmatprep.mubr.f32.mxu0 0.0
      %615 = vmatmul.mubr.f32.gmra.mrb[0].mxu0 %v315
      %v616 = vpop.f32.mrb[0].mxu0
      %v617 = vadd.f32 0.0, %v616
      %v618 = vpop.f32.mrb[0].mxu0
      %619 = vmatprep.mubr.f32.mxu0 0.0
      %620 = vmatmul.mubr.f32.gmra.mrb[0].mxu0 %v318
      %v621 = vpop.f32.mrb[0].mxu0
      %v622 = vadd.f32 0.0, %v621
      %v623 = vpop.f32.mrb[0].mxu0
      %624 = vmatprep.mubr.f32.mxu0 0.0
      %625 = vmatmul.mubr.f32.gmra.mrb[0].mxu0 %v321
      %v626 = vpop.f32.mrb[0].mxu0
      %v627 = vadd.f32 0.0, %v626
      %v628 = vpop.f32.mrb[0].mxu0
      %629 = vmatprep.mubr.f32.mxu0 0.0
      %630 = vmatmul.mubr.f32.gmra.mrb[0].mxu0 %v324
      %v631 = vpop.f32.mrb[0].mxu0
      %v632 = vadd.f32 0.0, %v631
      %v633 = vpop.f32.mrb[0].mxu0
      %634 = vmatprep.mubr.f32.mxu0 0.0
      %635 = vmatmul.mubr.f32.gmra.mrb[0].mxu0 %v327
      %v636 = vpop.f32.mrb[0].mxu0
      %v637 = vadd.f32 0.0, %v636
      %v638 = vpop.f32.mrb[0].mxu0
      %639 = vmatprep.mubr.f32.mxu0 0.0
      %640 = vmatmul.mubr.f32.gmra.mrb[0].mxu0 %v330
      %v641 = vpop.f32.mrb[0].mxu0
      %v642 = vadd.f32 0.0, %v641
      %v643 = vpop.f32.mrb[0].mxu0
      %644 = vmatprep.mubr.f32.mxu0 0.0
      %645 = vmatmul.mubr.f32.gmra.mrb[0].mxu0 %v333
      %v646 = vpop.f32.mrb[0].mxu0
      %v647 = vadd.f32 0.0, %v646
      %v648 = vpop.f32.mrb[0].mxu0
      %649 = vmatprep.mubr.f32.mxu0 0.0
      %650 = vmatmul.mubr.f32.gmra.mrb[0].mxu0 %v336
      %v651 = vpop.f32.mrb[0].mxu0
      %v652 = vadd.f32 0.0, %v651
      %v653 = vpop.f32.mrb[0].mxu0
      %654 = vmatprep.mubr.f32.mxu0 0.0
      %655 = vmatmul.mubr.f32.gmra.mrb[0].mxu0 %v339
      %v656 = vpop.f32.mrb[0].mxu0
      %v657 = vadd.f32 0.0, %v656
      %v658 = vpop.f32.mrb[0].mxu0
      %659 = vmatprep.mubr.f32.mxu0 0.0
      %660 = vmatmul.mubr.f32.gmra.mrb[0].mxu0 %v342
      %v661 = vpop.f32.mrb[0].mxu0
      %v662 = vadd.f32 0.0, %v661
      %v663 = vpop.f32.mrb[0].mxu0
      %664 = vmatprep.mubr.f32.mxu0 0.0
      %665 = vmatmul.mubr.f32.gmra.mrb[0].mxu0 %v345
      %v666 = vpop.f32.mrb[0].mxu0
      %v667 = vadd.f32 0.0, %v666
      %v668 = vpop.f32.mrb[0].mxu0
      %669 = vmatprep.mubr.f32.mxu0 0.0
      %670 = vmatmul.mubr.f32.gmra.mrb[0].mxu0 %v348
      %v671 = vpop.f32.mrb[0].mxu0
      %v672 = vadd.f32 0.0, %v671
      %v673 = vpop.f32.mrb[0].mxu0
      %674 = vmatprep.mubr.f32.mxu0 0.0
      %675 = vmatmul.mubr.f32.gmra.mrb[0].mxu0 %v351
      %v676 = vpop.f32.mrb[0].mxu0
      %v677 = vadd.f32 0.0, %v676
      %v678 = vpop.f32.mrb[0].mxu0
      %679 = vmatprep.mubr.f32.mxu0 0.0
      %680 = vmatmul.mubr.f32.gmra.mrb[0].mxu0 %v354
      %v681 = vpop.f32.mrb[0].mxu0
      %v682 = vadd.f32 0.0, %v681
      %v683 = vpop.f32.mrb[0].mxu0
      %684 = vmatprep.mubr.f32.mxu0 0.0
      %685 = vmatmul.mubr.f32.gmra.mrb[0].mxu0 %v357
      %v686 = vpop.f32.mrb[0].mxu0
      %v687 = vadd.f32 0.0, %v686
      %v688 = vpop.f32.mrb[0].mxu0
      %689 = vmatprep.mubr.f32.mxu0 0.0
      %690 = vmatmul.mubr.f32.gmra.mrb[0].mxu0 %v360
      %v691 = vpop.f32.mrb[0].mxu0
      %v692 = vadd.f32 0.0, %v691
      %v693 = vpop.f32.mrb[0].mxu0
      %694 = vmatprep.mubr.f32.mxu0 0.0
      %695 = vmatmul.mubr.f32.gmra.mrb[0].mxu0 %v363
      %v696 = vpop.f32.mrb[0].mxu0
      %v697 = vadd.f32 0.0, %v696
      %v698 = vpop.f32.mrb[0].mxu0
      %699 = vmatprep.mubr.f32.mxu0 0.0
      %700 = vmatmul.mubr.f32.gmra.mrb[0].mxu0 %v366
      %v701 = vpop.f32.mrb[0].mxu0
      %v702 = vadd.f32 0.0, %v701
      %v703 = vpop.f32.mrb[0].mxu0
      %704 = vmatprep.mubr.f32.mxu0 0.0
      %705 = vmatmul.mubr.f32.gmra.mrb[0].mxu0 %v369
      %v706 = vpop.f32.mrb[0].mxu0
      %v707 = vadd.f32 0.0, %v706
      %v708 = vpop.f32.mrb[0].mxu0
      %709 = vmatprep.mubr.f32.mxu0 0.0
      %710 = vmatmul.mubr.f32.gmra.mrb[0].mxu0 %v372
      %v711 = vpop.f32.mrb[0].mxu0
      %v712 = vadd.f32 0.0, %v711
      %v713 = vpop.f32.mrb[0].mxu0
      %714 = vmatprep.mubr.f32.mxu0 0.0
      %715 = vmatmul.mubr.f32.gmra.mrb[0].mxu0 %v375
      %v716 = vpop.f32.mrb[0].mxu0
      %v717 = vadd.f32 0.0, %v716
      %v718 = vpop.f32.mrb[0].mxu0
      %719 = vmatprep.mubr.f32.mxu0 0.0
      %720 = vmatmul.mubr.f32.gmra.mrb[0].mxu0 %v378
      %v721 = vpop.f32.mrb[0].mxu0
      %v722 = vadd.f32 0.0, %v721
      %v723 = vpop.f32.mrb[0].mxu0
      %724 = vmatprep.mubr.f32.mxu0 0.0
      %725 = vmatmul.mubr.f32.gmra.mrb[0].mxu0 %v381
      %v726 = vpop.f32.mrb[0].mxu0
      %v727 = vadd.f32 0.0, %v726
      %v728 = vpop.f32.mrb[0].mxu0
      %729 = vmatprep.mubr.f32.mxu0 0.0
      %730 = vmatmul.mubr.f32.gmra.mrb[0].mxu0 %v384
      %v731 = vpop.f32.mrb[0].mxu0
      %v732 = vadd.f32 0.0, %v731
      %v733 = vpop.f32.mrb[0].mxu0
      %734 = vmatprep.mubr.f32.mxu0 0.0
      %735 = vmatmul.mubr.f32.gmra.mrb[0].mxu0 %v387
      %v736 = vpop.f32.mrb[0].mxu0
      %v737 = vadd.f32 0.0, %v736
      %v738 = vpop.f32.mrb[0].mxu0
      %739 = vmatprep.mubr.f32.mxu0 0.0
      %740 = vmatmul.mubr.f32.gmra.mrb[0].mxu0 %v390
      %v741 = vpop.f32.mrb[0].mxu0
      %v742 = vadd.f32 0.0, %v741
      %v743 = vpop.f32.mrb[0].mxu0
      %744 = vmatprep.mubr.f32.mxu0 0.0
      %745 = vmatmul.mubr.f32.gmra.mrb[0].mxu0 %v393
      %v746 = vpop.f32.mrb[0].mxu0
      %v747 = vadd.f32 0.0, %v746
      %v748 = vpop.f32.mrb[0].mxu0
      %749 = vmatprep.mubr.f32.mxu0 0.0
      %750 = vmatmul.mubr.f32.gmra.mrb[0].mxu0 %v396
      %v751 = vpop.f32.mrb[0].mxu0
      %v752 = vadd.f32 0.0, %v751
      %v753 = vpop.f32.mrb[0].mxu0
      %754 = vmatprep.mubr.f32.mxu0 0.0
      %755 = vmatmul.mubr.f32.gmra.mrb[0].mxu0 %v399
      %v756 = vpop.f32.mrb[0].mxu0
      %v757 = vadd.f32 0.0, %v756
      %v758 = vpop.f32.mrb[0].mxu0
      %759 = vmatprep.mubr.f32.mxu0 0.0
      %760 = vmatmul.mubr.f32.gmra.mrb[0].mxu0 %v402
      %v761 = vpop.f32.mrb[0].mxu0
      %v762 = vadd.f32 0.0, %v761
      %v763 = vpop.f32.mrb[0].mxu0
      %764 = vmatprep.mubr.f32.mxu0 0.0
      %765 = vmatmul.mubr.f32.gmra.mrb[0].mxu0 %v405
      %v766 = vpop.f32.mrb[0].mxu0
      %v767 = vadd.f32 0.0, %v766
      %v768 = vpop.f32.mrb[0].mxu0
      %769 = vmatprep.mubr.f32.mxu0 0.0
      %770 = vmatmul.mubr.f32.gmra.mrb[0].mxu0 %v408
      %v771 = vpop.f32.mrb[0].mxu0
      %v772 = vadd.f32 0.0, %v771
      %v773 = vpop.f32.mrb[0].mxu0
      %774 = vmatprep.mubr.f32.mxu0 0.0
      %775 = vmatmul.mubr.f32.gmra.mrb[0].mxu0 %v411
      %v776 = vpop.f32.mrb[0].mxu0
      %v777 = vadd.f32 0.0, %v776
      %v778 = vpop.f32.mrb[0].mxu0
      %779 = vmatprep.mubr.f32.mxu0 0.0
      %780 = vmatmul.mubr.f32.gmra.mrb[0].mxu0 %v414
      %v781 = vpop.f32.mrb[0].mxu0
      %v782 = vadd.f32 0.0, %v781
      %v783 = vpop.f32.mrb[0].mxu0
      %784 = vmatprep.mubr.f32.mxu0 0.0
      %785 = vmatmul.mubr.f32.gmra.mrb[0].mxu0 %v417
      %v786 = vpop.f32.mrb[0].mxu0
      %v787 = vadd.f32 0.0, %v786
      %v788 = vpop.f32.mrb[0].mxu0
      %789 = vmatprep.mubr.f32.mxu0 0.0
      %790 = vmatmul.mubr.f32.gmra.mrb[0].mxu0 %v420
      %v791 = vpop.f32.mrb[0].mxu0
      %v792 = vadd.f32 0.0, %v791
      %v793 = vpop.f32.mrb[0].mxu0
      %794 = vmatprep.mubr.f32.mxu0 0.0
      %795 = vmatmul.mubr.f32.gmra.mrb[0].mxu0 %v423
      %v796 = vpop.f32.mrb[0].mxu0
      %v797 = vadd.f32 0.0, %v796
      %v798 = vpop.f32.mrb[0].mxu0
      %799 = vmatprep.mubr.f32.mxu0 0.0
      %800 = vmatmul.mubr.f32.gmra.mrb[0].mxu0 %v426
      %v801 = vpop.f32.mrb[0].mxu0
      %v802 = vadd.f32 0.0, %v801
      %v803 = vpop.f32.mrb[0].mxu0
      %804 = vmatprep.mubr.f32.mxu0 0.0
      %805 = vmatmul.mubr.f32.gmra.mrb[0].mxu0 %v429
      %v806 = vpop.f32.mrb[0].mxu0
      %v807 = vadd.f32 0.0, %v806
      %v808 = vpop.f32.mrb[0].mxu0
      %809 = vmatprep.mubr.f32.mxu0 0.0
      %810 = vmatmul.mubr.f32.gmra.mrb[0].mxu0 %v432
      %v811 = vpop.f32.mrb[0].mxu0
      %v812 = vadd.f32 0.0, %v811
      %v813 = vpop.f32.mrb[0].mxu0
      %814 = vmatprep.mubr.f32.mxu0 0.0
      %815 = vmatmul.mubr.f32.gmra.mrb[0].mxu0 %v435
      %v816 = vpop.f32.mrb[0].mxu0
      %v817 = vadd.f32 0.0, %v816
      %v818 = vpop.f32.mrb[0].mxu0
      %819 = vmatprep.mubr.f32.mxu0 0.0
      %820 = vmatmul.mubr.f32.gmra.mrb[0].mxu0 %v438
      %v821 = vpop.f32.mrb[0].mxu0
      %v822 = vadd.f32 0.0, %v821
      %v823 = vpop.f32.mrb[0].mxu0
      %824 = vmatprep.mubr.f32.mxu0 0.0
      %825 = vmatmul.mubr.f32.gmra.mrb[0].mxu0 %v441
      %v826 = vpop.f32.mrb[0].mxu0
      %v827 = vadd.f32 0.0, %v826
      %v828 = vpop.f32.mrb[0].mxu0
      %829 = vmatprep.mubr.f32.mxu0 0.0
      %830 = vmatmul.mubr.f32.gmra.mrb[0].mxu0 %v444
      %v831 = vpop.f32.mrb[0].mxu0
      %v832 = vadd.f32 0.0, %v831
      %v833 = vpop.f32.mrb[0].mxu0
      %834 = vdwg.mxu0
      %835 = vst [vmem:[%s179] sm:$0xff] %v517
      %836 = vst [vmem:[%s179 + $0x8] sm:$0xff] %v522
      %837 = vst [vmem:[%s179 + $0x10] sm:$0xff] %v527
      %838 = vst [vmem:[%s179 + $0x18] sm:$0xff] %v532
      %839 = vst [vmem:[%s179 + $0x20] sm:$0xff] %v537
      %840 = vst [vmem:[%s179 + $0x28] sm:$0xff] %v542
      %841 = vst [vmem:[%s179 + $0x30] sm:$0xff] %v547
      %842 = vst [vmem:[%s179 + $0x38] sm:$0xff] %v552
      %843 = vst [vmem:[%s179 + $0x40] sm:$0xff] %v557
      %844 = vst [vmem:[%s179 + $0x48] sm:$0xff] %v562
      %845 = vst [vmem:[%s179 + $0x50] sm:$0xff] %v567
      %846 = vst [vmem:[%s179 + $0x58] sm:$0xff] %v572
      %847 = vst [vmem:[%s179 + $0x60] sm:$0xff] %v577
      %848 = vst [vmem:[%s179 + $0x68] sm:$0xff] %v582
      %849 = vst [vmem:[%s179 + $0x70] sm:$0xff] %v587
      %850 = vst [vmem:[%s179 + $0x78] sm:$0xff] %v592
      %851 = vst [vmem:[%s179 + $0x80] sm:$0xff] %v597
      %852 = vst [vmem:[%s179 + $0x88] sm:$0xff] %v602
      %853 = vst [vmem:[%s179 + $0x90] sm:$0xff] %v607
      %854 = vst [vmem:[%s179 + $0x98] sm:$0xff] %v612
      %855 = vst [vmem:[%s179 + $0xa0] sm:$0xff] %v617
      %856 = vst [vmem:[%s179 + $0xa8] sm:$0xff] %v622
      %857 = vst [vmem:[%s179 + $0xb0] sm:$0xff] %v627
      %858 = vst [vmem:[%s179 + $0xb8] sm:$0xff] %v632
      %859 = vst [vmem:[%s179 + $0xc0] sm:$0xff] %v637
      %860 = vst [vmem:[%s179 + $0xc8] sm:$0xff] %v642
      %861 = vst [vmem:[%s179 + $0xd0] sm:$0xff] %v647
      %862 = vst [vmem:[%s179 + $0xd8] sm:$0xff] %v652
      %863 = vst [vmem:[%s179 + $0xe0] sm:$0xff] %v657
      %864 = vst [vmem:[%s179 + $0xe8] sm:$0xff] %v662
      %865 = vst [vmem:[%s179 + $0xf0] sm:$0xff] %v667
      %866 = vst [vmem:[%s179 + $0xf8] sm:$0xff] %v672
      %867 = vst [vmem:[%s179 + $0x100] sm:$0xff] %v677
      %868 = vst [vmem:[%s179 + $0x108] sm:$0xff] %v682
      %869 = vst [vmem:[%s179 + $0x110] sm:$0xff] %v687
      %870 = vst [vmem:[%s179 + $0x118] sm:$0xff] %v692
      %871 = vst [vmem:[%s179 + $0x120] sm:$0xff] %v697
      %872 = vst [vmem:[%s179 + $0x128] sm:$0xff] %v702
      %873 = vst [vmem:[%s179 + $0x130] sm:$0xff] %v707
      %874 = vst [vmem:[%s179 + $0x138] sm:$0xff] %v712
      %875 = vst [vmem:[%s179 + $0x140] sm:$0xff] %v717
      %876 = vst [vmem:[%s179 + $0x148] sm:$0xff] %v722
      %877 = vst [vmem:[%s179 + $0x150] sm:$0xff] %v727
      %878 = vst [vmem:[%s179 + $0x158] sm:$0xff] %v732
      %879 = vst [vmem:[%s179 + $0x160] sm:$0xff] %v737
      %880 = vst [vmem:[%s179 + $0x168] sm:$0xff] %v742
      %881 = vst [vmem:[%s179 + $0x170] sm:$0xff] %v747
      %882 = vst [vmem:[%s179 + $0x178] sm:$0xff] %v752
      %883 = vst [vmem:[%s179 + $0x180] sm:$0xff] %v757
      %884 = vst [vmem:[%s179 + $0x188] sm:$0xff] %v762
      %885 = vst [vmem:[%s179 + $0x190] sm:$0xff] %v767
      %886 = vst [vmem:[%s179 + $0x198] sm:$0xff] %v772
      %887 = vst [vmem:[%s179 + $0x1a0] sm:$0xff] %v777
      %888 = vst [vmem:[%s179 + $0x1a8] sm:$0xff] %v782
      %889 = vst [vmem:[%s179 + $0x1b0] sm:$0xff] %v787
      %890 = vst [vmem:[%s179 + $0x1b8] sm:$0xff] %v792
      %891 = vst [vmem:[%s179 + $0x1c0] sm:$0xff] %v797
      %892 = vst [vmem:[%s179 + $0x1c8] sm:$0xff] %v802
      %893 = vst [vmem:[%s179 + $0x1d0] sm:$0xff] %v807
      %894 = vst [vmem:[%s179 + $0x1d8] sm:$0xff] %v812
      %895 = vst [vmem:[%s179 + $0x1e0] sm:$0xff] %v817
      %896 = vst [vmem:[%s179 + $0x1e8] sm:$0xff] %v822
      %897 = vst [vmem:[%s179 + $0x1f0] sm:$0xff] %v827
      %898 = vst [vmem:[%s179 + $0x1f8] sm:$0xff] %v832
      %v899 = vadd.f32 %v517, %v522
      %v900 = vadd.f32 %v899, %v527
      %v901 = vadd.f32 %v900, %v532
      %v902 = vadd.f32 %v901, %v537
      %v903 = vadd.f32 %v902, %v542
      %v904 = vadd.f32 %v903, %v547
      %v905 = vadd.f32 %v904, %v552
      %v906 = vadd.f32 %v905, %v557
      %v907 = vadd.f32 %v906, %v562
      %v908 = vadd.f32 %v907, %v567
      %v909 = vadd.f32 %v908, %v572
      %v910 = vadd.f32 %v909, %v577
      %v911 = vadd.f32 %v910, %v582
      %v912 = vadd.f32 %v911, %v587
      %v913 = vadd.f32 %v912, %v592
      %v914 = vadd.f32 %v913, %v597
      %v915 = vadd.f32 %v914, %v602
      %v916 = vadd.f32 %v915, %v607
      %v917 = vadd.f32 %v916, %v612
      %v918 = vadd.f32 %v917, %v617
      %v919 = vadd.f32 %v918, %v622
      %v920 = vadd.f32 %v919, %v627
      %v921 = vadd.f32 %v920, %v632
      %v922 = vadd.f32 %v921, %v637
      %v923 = vadd.f32 %v922, %v642
      %v924 = vadd.f32 %v923, %v647
      %v925 = vadd.f32 %v924, %v652
      %v926 = vadd.f32 %v925, %v657
      %v927 = vadd.f32 %v926, %v662
      %v928 = vadd.f32 %v927, %v667
      %v929 = vadd.f32 %v928, %v672
      %v930 = vadd.f32 %v929, %v677
      %v931 = vadd.f32 %v930, %v682
      %v932 = vadd.f32 %v931, %v687
      %v933 = vadd.f32 %v932, %v692
      %v934 = vadd.f32 %v933, %v697
      %v935 = vadd.f32 %v934, %v702
      %v936 = vadd.f32 %v935, %v707
      %v937 = vadd.f32 %v936, %v712
      %v938 = vadd.f32 %v937, %v717
      %v939 = vadd.f32 %v938, %v722
      %v940 = vadd.f32 %v939, %v727
      %v941 = vadd.f32 %v940, %v732
      %v942 = vadd.f32 %v941, %v737
      %v943 = vadd.f32 %v942, %v742
      %v944 = vadd.f32 %v943, %v747
      %v945 = vadd.f32 %v944, %v752
      %v946 = vadd.f32 %v945, %v757
      %v947 = vadd.f32 %v946, %v762
      %v948 = vadd.f32 %v947, %v767
      %v949 = vadd.f32 %v948, %v772
      %v950 = vadd.f32 %v949, %v777
      %v951 = vadd.f32 %v950, %v782
      %v952 = vadd.f32 %v951, %v787
      %v953 = vadd.f32 %v952, %v792
      %v954 = vadd.f32 %v953, %v797
      %v955 = vadd.f32 %v954, %v802
      %v956 = vadd.f32 %v955, %v807
      %v957 = vadd.f32 %v956, %v812
      %v958 = vadd.f32 %v957, %v817
      %v959 = vadd.f32 %v958, %v822
      %v960 = vadd.f32 %v959, %v827
      %v961 = vadd.f32 %v960, %v832
      %v962 = vrot.slane %v961, 4
      %v963 = vadd.f32 %v961, %v962
      %v964 = vrot.slane %v963, 2
      %v965 = vadd.f32 %v963, %v964
      %v966 = vrot.slane %v965, 1
      %v967 = vadd.f32 %v965, %v966
      %v968 = vmul.f32 %v517, %v517
      %v969 = vmul.f32 %v522, %v522
      %v970 = vmul.f32 %v527, %v527
      %v971 = vmul.f32 %v532, %v532
      %v972 = vmul.f32 %v537, %v537
      %v973 = vmul.f32 %v542, %v542
      %v974 = vmul.f32 %v547, %v547
      %v975 = vmul.f32 %v552, %v552
      %v976 = vmul.f32 %v557, %v557
      %v977 = vmul.f32 %v562, %v562
      %v978 = vmul.f32 %v567, %v567
      %v979 = vmul.f32 %v572, %v572
      %v980 = vmul.f32 %v577, %v577
      %v981 = vmul.f32 %v582, %v582
      %v982 = vmul.f32 %v587, %v587
      %v983 = vmul.f32 %v592, %v592
      %v984 = vmul.f32 %v597, %v597
      %v985 = vmul.f32 %v602, %v602
      %v986 = vmul.f32 %v607, %v607
      %v987 = vmul.f32 %v612, %v612
      %v988 = vmul.f32 %v617, %v617
      %v989 = vmul.f32 %v622, %v622
      %v990 = vmul.f32 %v627, %v627
      %v991 = vmul.f32 %v632, %v632
      %v992 = vmul.f32 %v637, %v637
      %v993 = vmul.f32 %v642, %v642
      %v994 = vmul.f32 %v647, %v647
      %v995 = vmul.f32 %v652, %v652
      %v996 = vmul.f32 %v657, %v657
      %v997 = vmul.f32 %v662, %v662
      %v998 = vmul.f32 %v667, %v667
      %v999 = vmul.f32 %v672, %v672
      %v1000 = vmul.f32 %v677, %v677
      %v1001 = vmul.f32 %v682, %v682
      %v1002 = vmul.f32 %v687, %v687
      %v1003 = vmul.f32 %v692, %v692
      %v1004 = vmul.f32 %v697, %v697
      %v1005 = vmul.f32 %v702, %v702
      %v1006 = vmul.f32 %v707, %v707
      %v1007 = vmul.f32 %v712, %v712
      %v1008 = vmul.f32 %v717, %v717
      %v1009 = vmul.f32 %v722, %v722
      %v1010 = vmul.f32 %v727, %v727
      %v1011 = vmul.f32 %v732, %v732
      %v1012 = vmul.f32 %v737, %v737
      %v1013 = vmul.f32 %v742, %v742
      %v1014 = vmul.f32 %v747, %v747
      %v1015 = vmul.f32 %v752, %v752
      %v1016 = vmul.f32 %v757, %v757
      %v1017 = vmul.f32 %v762, %v762
      %v1018 = vmul.f32 %v767, %v767
      %v1019 = vmul.f32 %v772, %v772
      %v1020 = vmul.f32 %v777, %v777
      %v1021 = vmul.f32 %v782, %v782
      %v1022 = vmul.f32 %v787, %v787
      %v1023 = vmul.f32 %v792, %v792
      %v1024 = vmul.f32 %v797, %v797
      %v1025 = vmul.f32 %v802, %v802
      %v1026 = vmul.f32 %v807, %v807
      %v1027 = vmul.f32 %v812, %v812
      %v1028 = vmul.f32 %v817, %v817
      %v1029 = vmul.f32 %v822, %v822
      %v1030 = vmul.f32 %v827, %v827
      %v1031 = vmul.f32 %v832, %v832
      %v1032 = vadd.f32 %v968, %v969
      %v1033 = vadd.f32 %v1032, %v970
      %v1034 = vadd.f32 %v1033, %v971
      %v1035 = vadd.f32 %v1034, %v972
      %v1036 = vadd.f32 %v1035, %v973
      %v1037 = vadd.f32 %v1036, %v974
      %v1038 = vadd.f32 %v1037, %v975
      %v1039 = vadd.f32 %v1038, %v976
      %v1040 = vadd.f32 %v1039, %v977
      %v1041 = vadd.f32 %v1040, %v978
      %v1042 = vadd.f32 %v1041, %v979
      %v1043 = vadd.f32 %v1042, %v980
      %v1044 = vadd.f32 %v1043, %v981
      %v1045 = vadd.f32 %v1044, %v982
      %v1046 = vadd.f32 %v1045, %v983
      %v1047 = vadd.f32 %v1046, %v984
      %v1048 = vadd.f32 %v1047, %v985
      %v1049 = vadd.f32 %v1048, %v986
      %v1050 = vadd.f32 %v1049, %v987
      %v1051 = vadd.f32 %v1050, %v988
      %v1052 = vadd.f32 %v1051, %v989
      %v1053 = vadd.f32 %v1052, %v990
      %v1054 = vadd.f32 %v1053, %v991
      %v1055 = vadd.f32 %v1054, %v992
      %v1056 = vadd.f32 %v1055, %v993
      %v1057 = vadd.f32 %v1056, %v994
      %v1058 = vadd.f32 %v1057, %v995
      %v1059 = vadd.f32 %v1058, %v996
      %v1060 = vadd.f32 %v1059, %v997
      %v1061 = vadd.f32 %v1060, %v998
      %v1062 = vadd.f32 %v1061, %v999
      %v1063 = vadd.f32 %v1062, %v1000
      %v1064 = vadd.f32 %v1063, %v1001
      %v1065 = vadd.f32 %v1064, %v1002
      %v1066 = vadd.f32 %v1065, %v1003
      %v1067 = vadd.f32 %v1066, %v1004
      %v1068 = vadd.f32 %v1067, %v1005
      %v1069 = vadd.f32 %v1068, %v1006
      %v1070 = vadd.f32 %v1069, %v1007
      %v1071 = vadd.f32 %v1070, %v1008
      %v1072 = vadd.f32 %v1071, %v1009
      %v1073 = vadd.f32 %v1072, %v1010
      %v1074 = vadd.f32 %v1073, %v1011
      %v1075 = vadd.f32 %v1074, %v1012
      %v1076 = vadd.f32 %v1075, %v1013
      %v1077 = vadd.f32 %v1076, %v1014
      %v1078 = vadd.f32 %v1077, %v1015
      %v1079 = vadd.f32 %v1078, %v1016
      %v1080 = vadd.f32 %v1079, %v1017
      %v1081 = vadd.f32 %v1080, %v1018
      %v1082 = vadd.f32 %v1081, %v1019
      %v1083 = vadd.f32 %v1082, %v1020
      %v1084 = vadd.f32 %v1083, %v1021
      %v1085 = vadd.f32 %v1084, %v1022
      %v1086 = vadd.f32 %v1085, %v1023
      %v1087 = vadd.f32 %v1086, %v1024
      %v1088 = vadd.f32 %v1087, %v1025
      %v1089 = vadd.f32 %v1088, %v1026
      %v1090 = vadd.f32 %v1089, %v1027
      %v1091 = vadd.f32 %v1090, %v1028
      %v1092 = vadd.f32 %v1091, %v1029
      %v1093 = vadd.f32 %v1092, %v1030
      %v1094 = vadd.f32 %v1093, %v1031
      %v1095 = vrot.slane %v1094, 4
      %v1096 = vadd.f32 %v1094, %v1095
      %v1097 = vrot.slane %v1096, 2
      %v1098 = vadd.f32 %v1096, %v1097
      %v1099 = vrot.slane %v1098, 1
      %v1100 = vadd.f32 %v1098, %v1099
      %v1101 = vlaneseq
      %v1102 = vshrl.u32 %v1101, 7
      %vm1103 = vcmp.eq.s32.totalorder %v1102, 0
      %vm1104 = vcmp.eq.s32.totalorder %v1102, 1
      %v1105 = vsel %vm1104, %v1100, 0.0
      %v1106 = vsel %vm1103, %v967, %v1105
      %1107 = vst [vmem:[%s184] sm:$0xff] %v1106
      %s1108 = smul.u32 64, %s15
      %p1109 = scmp.lt.s32.totalorder %s1108, 1023
      %s1110 = scalar_select %p1109, %s1108, 1023
      %s1111 = smul.addr %s1110, 8
      %s1112 = scalar_lea.vmem %s2, %s1111
      %p1113 = scmp.lt.s32.totalorder %s15, 15
      %s1114 = scalar_select %p1113, %s15, 15
      %s1115 = smul.addr %s1114, 8
      %s1116 = scalar_lea.vmem %s3, %s1115
      // Predicated region
      $region29: #{forward.10} parent=27 // pred_check
        %p1117 = pneg %p80
      $region30: #{forward.10} parent=27 // pred_check_branch
        %1119 = sbr.rel (%p1117) target = $region32
      $region31: #{forward.10} parent=27 // pred_region
        %s1120 = smul.u32 64, %s15
      $region32: #{forward.10} parent=27 // pred_fallthru
        _
      // Predicated region
      $region33: #{forward.10} parent=27 // pred_check
        %p1121 = pneg %p106
      $region34: #{forward.10} parent=27 // pred_check_branch
        %1123 = sbr.rel (%p1121) target = $region36
      $region35: #{forward.10} parent=27 // pred_region
        _
      $region36: #{forward.10} parent=27 // pred_fallthru
        _
    $region28: #{forward.10} parent=5 // pred_fallthru
      _
    %p1124 = scmp.le.s32.totalorder 2, %s10
    // Predicated region
    $region37: #{forward.10} parent=5 // pred_check
      %p1125 = pneg %p1124
    $region38: #{forward.10} parent=5 // pred_check_branch
      %1127 = sbr.rel (%p1125) target = $region40
    $region39: #{forward.10} parent=5 // pred_region
      %s1128 = ssub.s32 %s10, 2
      // Predicated region
      $region41: #{forward.10} parent=39 // pred_check
        %p1129 = pneg %p86
      $region42: #{forward.10} parent=39 // pred_check_branch
        %1131 = sbr.rel (%p1129) target = $region44
      $region43: #{forward.10} parent=39 // pred_region
        %s1132 = smul.u32 64, %s16
        %p1133 = scmp.lt.s32.totalorder %s1132, 1023
        %s1134 = scalar_select %p1133, %s1132, 1023
        %s1135 = smul.addr %s1134, 8
        %s1136 = scalar_lea.vmem %s2, %s1135
      $region44: #{forward.10} parent=39 // pred_fallthru
        _
      // Predicated region
      $region45: #{forward.10} parent=39 // pred_check
        %p1137 = pneg %p112
      $region46: #{forward.10} parent=39 // pred_check_branch
        %1139 = sbr.rel (%p1137) target = $region48
      $region47: #{forward.10} parent=39 // pred_region
        %p1140 = scmp.lt.s32.totalorder %s16, 15
        %s1141 = scalar_select %p1140, %s16, 15
        %s1142 = smul.addr %s1141, 8
        %s1143 = scalar_lea.vmem %s3, %s1142
      $region48: #{forward.10} parent=39 // pred_fallthru
        _
    $region40: #{forward.10} parent=5 // pred_fallthru
      _
  $region6: #{forward.10} parent=0 // loop_footer
    %s14 = sadd.s32 1, %s10
  $region7: #{forward.10} parent=0 // loop_footer_branch
    %9 = sbr.rel target = $region3
  $region8: #{forward.10} parent=0 // loop_exit
    _

// kernel: forward.11
$region0: #{forward.11}
  #allocation0 [shape = 'u32[]', space=smem, size = 0x4, offset = 0x4, fixed_abs, tag = 'smem constant byte address 0x4 - core index']
  #allocation1 [shape = 'u32[144,128]{1,0:T(1,128)}', space=vmem, size = 0x12000, scoped, tag = 'internal scratch']
  %s0 = inlined_call_operand.vmem [shape: f32[8192,128], index: 0, kind: input, shape index: {}]
  %s1 = inlined_call_operand.vmem [shape: f32[1,128], index: 1, kind: input, shape index: {}]
  %s2 = inlined_call_operand.vmem [shape: f32[1,128], index: 2, kind: input, shape index: {}]
  %s3 = inlined_call_operand.vmem [shape: f32[8192,128], index: 3, kind: output, shape index: {}]
  %s4 = sld [smem:[#allocation0]]
  $region45: #{forward.11} parent=0
    _
  %s6 = ssub.s32 1, %s4
  %s7 = scalar_select 0, %s6, %s4
  loop: start=0, step=1, limit=18
  $region2: #{forward.11} parent=0 // loop_pre_header
    _
  $region3: #{forward.11} parent=0 // loop_header
    %s9 = sphi 0, %s13
    %p10 = scmp.ge.s32.totalorder %s9, 18
    %s19 = sphi 0, %s21
    %s22 = sphi 0, %s19
    %s23 = sphi 0, %s22
    %s39 = sphi 0, %s23
    %s43 = sphi 0, %s43
    %s45 = sphi 0, %s43
    %s46 = sphi 0, %s45
    %s60 = sphi 0, %s46
    %s64 = sphi 0, %s64
    %s66 = sphi 0, %s64
    %s67 = sphi 0, %s66
    %s81 = sphi 0, %s67
    %s87 = sphi 0, %s89
    %s90 = sphi 0, %s87
    %s91 = sphi 0, %s90
    %s107 = sphi 0, %s91
  $region4: #{forward.11} parent=0 // loop_header_branch
    %12 = sbr.rel (%p10) target = $region8
  $region5: #{forward.11} parent=0 // loop_body
    %s14 = ssub.s32 %s9, 1
    %s15 = ssub.s32 %s9, 2
    %s16 = sadd.s32 %s9, 1
    %s17 = ssub.s32 %s9, %s16
    %p18 = scmp.eq.s32.totalorder %s17, 0
    %s20 = sadd.s32 %s19, 1
    %s21 = scalar_select %p18, %s19, %s20
    %p24 = pneg %p18
    %p25 = scmp.eq.s32.totalorder %s9, 15
    %p26 = por %p24, %p25
    %p27 = scmp.ne.s32.totalorder %s19, %s22
    %p28 = scmp.eq.s32.totalorder %s9, 0
    %p29 = por %p27, %p28
    %p30 = scmp.ne.s32.totalorder %s19, %s22
    %p31 = scmp.eq.s32.totalorder %s14, 15
    %p32 = por %p30, %p31
    %p33 = scmp.ne.s32.totalorder %s22, %s23
    %p34 = scmp.eq.s32.totalorder %s14, 0
    %p35 = por %p33, %p34
    %p36 = scmp.ne.s32.totalorder %s22, %s23
    %p37 = scmp.eq.s32.totalorder %s15, 15
    %p38 = por %p36, %p37
    %p40 = scmp.ne.s32.totalorder %s23, %s39
    %p41 = scmp.eq.s32.totalorder %s15, 0
    %p42 = por %p40, %p41
    %s44 = sadd.s32 %s43, 1
    %p47 = scmp.eq.s32.totalorder %s9, 15
    %p48 = scmp.ne.s32.totalorder %s43, %s45
    %p49 = scmp.eq.s32.totalorder %s9, 0
    %p50 = por %p48, %p49
    %p51 = scmp.ne.s32.totalorder %s43, %s45
    %p52 = scmp.eq.s32.totalorder %s14, 15
    %p53 = por %p51, %p52
    %p54 = scmp.ne.s32.totalorder %s45, %s46
    %p55 = scmp.eq.s32.totalorder %s14, 0
    %p56 = por %p54, %p55
    %p57 = scmp.ne.s32.totalorder %s45, %s46
    %p58 = scmp.eq.s32.totalorder %s15, 15
    %p59 = por %p57, %p58
    %p61 = scmp.ne.s32.totalorder %s46, %s60
    %p62 = scmp.eq.s32.totalorder %s15, 0
    %p63 = por %p61, %p62
    %s65 = sadd.s32 %s64, 1
    %p68 = scmp.eq.s32.totalorder %s9, 15
    %p69 = scmp.ne.s32.totalorder %s64, %s66
    %p70 = scmp.eq.s32.totalorder %s9, 0
    %p71 = por %p69, %p70
    %p72 = scmp.ne.s32.totalorder %s64, %s66
    %p73 = scmp.eq.s32.totalorder %s14, 15
    %p74 = por %p72, %p73
    %p75 = scmp.ne.s32.totalorder %s66, %s67
    %p76 = scmp.eq.s32.totalorder %s14, 0
    %p77 = por %p75, %p76
    %p78 = scmp.ne.s32.totalorder %s66, %s67
    %p79 = scmp.eq.s32.totalorder %s15, 15
    %p80 = por %p78, %p79
    %p82 = scmp.ne.s32.totalorder %s67, %s81
    %p83 = scmp.eq.s32.totalorder %s15, 0
    %p84 = por %p82, %p83
    %s85 = ssub.s32 %s9, %s16
    %p86 = scmp.eq.s32.totalorder %s85, 0
    %s88 = sadd.s32 %s87, 1
    %s89 = scalar_select %p86, %s87, %s88
    %p92 = pneg %p86
    %p93 = scmp.eq.s32.totalorder %s9, 15
    %p94 = por %p92, %p93
    %p95 = scmp.ne.s32.totalorder %s87, %s90
    %p96 = scmp.eq.s32.totalorder %s9, 0
    %p97 = por %p95, %p96
    %p98 = scmp.ne.s32.totalorder %s87, %s90
    %p99 = scmp.eq.s32.totalorder %s14, 15
    %p100 = por %p98, %p99
    %p101 = scmp.ne.s32.totalorder %s90, %s91
    %p102 = scmp.eq.s32.totalorder %s14, 0
    %p103 = por %p101, %p102
    %p104 = scmp.ne.s32.totalorder %s90, %s91
    %p105 = scmp.eq.s32.totalorder %s15, 15
    %p106 = por %p104, %p105
    %p108 = scmp.ne.s32.totalorder %s91, %s107
    %p109 = scmp.eq.s32.totalorder %s15, 0
    %p110 = por %p108, %p109
    %p111 = scmp.le.s32.totalorder 1, %s9
    %p112 = scmp.lt.s32.totalorder %s9, 17
    %p113 = pnand %p111, %p112
    %p114 = pneg %p113
    // Predicated region
    $region9: #{forward.11} parent=5 // pred_check
      _
    $region10: #{forward.11} parent=5 // pred_check_branch
      %116 = sbr.rel (%p113) target = $region12
    $region11: #{forward.11} parent=5 // pred_region
      %s117 = ssub.s32 %s9, 1
      // Predicated region
      $region13: #{forward.11} parent=11 // pred_check
        %p118 = pneg %p56
      $region14: #{forward.11} parent=11 // pred_check_branch
        %120 = sbr.rel (%p118) target = $region16
      $region15: #{forward.11} parent=11 // pred_region
        _
      $region16: #{forward.11} parent=11 // pred_fallthru
        _
      // Predicated region
      $region17: #{forward.11} parent=11 // pred_check
        %p121 = pneg %p77
      $region18: #{forward.11} parent=11 // pred_check_branch
        %123 = sbr.rel (%p121) target = $region20
      $region19: #{forward.11} parent=11 // pred_region
        _
      $region20: #{forward.11} parent=11 // pred_fallthru
        _
    $region12: #{forward.11} parent=5 // pred_fallthru
      _
    %p124 = scmp.lt.s32.totalorder %s9, 16
    // Predicated region
    $region21: #{forward.11} parent=5 // pred_check
      %p125 = pneg %p124
    $region22: #{forward.11} parent=5 // pred_check_branch
      %127 = sbr.rel (%p125) target = $region24
    $region23: #{forward.11} parent=5 // pred_region
      // Predicated region
      $region25: #{forward.11} parent=23 // pred_check
        %p128 = pneg %p29
      $region26: #{forward.11} parent=23 // pred_check_branch
        %130 = sbr.rel (%p128) target = $region28
      $region27: #{forward.11} parent=23 // pred_region
        %s131 = smul.u32 64, %s9
        %p132 = scmp.lt.s32.totalorder %s131, 1023
        %s133 = scalar_select %p132, %s131, 1023
        %s134 = smul.addr %s133, 8
        %s135 = scalar_lea.vmem %s0, %s134
        %s136 = smul.u32 64, %s9
      $region28: #{forward.11} parent=23 // pred_fallthru
        _
    $region24: #{forward.11} parent=5 // pred_fallthru
      _
    %p137 = scmp.le.s32.totalorder 1, %s9
    %p138 = scmp.lt.s32.totalorder %s9, 17
    %p139 = pnand %p137, %p138
    %p140 = pneg %p139
    // Predicated region
    $region29: #{forward.11} parent=5 // pred_check
      _
    $region30: #{forward.11} parent=5 // pred_check_branch
      %142 = sbr.rel (%p139) target = $region32
    $region31: #{forward.11} parent=5 // pred_region
      %s143 = ssub.s32 %s9, 1
      %s144 = smul.u32 64, %s14
      %p145 = scmp.lt.s32.totalorder %s144, 1023
      %s146 = scalar_select %p145, %s144, 1023
      %s147 = smul.addr %s146, 8
      %s148 = scalar_lea.vmem %s0, %s147
      %p149 = pneg %p35
      %p150 = pneg %p32
      %p151 = pneg %p56
      %p152 = pneg %p53
      %p153 = pneg %p77
      %p154 = pneg %p74
      %p155 = pneg %p103
      %p156 = pneg %p100
      %s157 = smul.u32 64, %s14
      %p158 = scmp.lt.s32.totalorder %s157, 1023
      %s159 = scalar_select %p158, %s157, 1023
      %s160 = smul.addr %s159, 8
      %s161 = scalar_lea.vmem %s3, %s160
      %s162 = smul.u32 64, %s14
      %p163 = scmp.lt.s32.totalorder %s162, 1023
      %s164 = scalar_select %p163, %s162, 1023
      %s165 = smul.addr %s164, 8
      %s166 = scalar_lea.vmem %s0, %s165
      %s167 = smul.u32 64, %s14
      %s168 = smul.u32 64, %s14
      %p169 = scmp.lt.s32.totalorder %s168, 1023
      %s170 = scalar_select %p169, %s168, 1023
      %s171 = smul.addr %s170, 8
      %s172 = scalar_lea.vmem %s3, %s171
      %s173 = smul.u32 64, %s14
      %v174 = vld [vmem:[%s166] sm:$0xff]
      %v175 = vld [vmem:[%s166 + $0x8] sm:$0xff]
      %v176 = vld [vmem:[%s166 + $0x10] sm:$0xff]
      %v177 = vld [vmem:[%s166 + $0x18] sm:$0xff]
      %v178 = vld [vmem:[%s166 + $0x20] sm:$0xff]
      %v179 = vld [vmem:[%s166 + $0x28] sm:$0xff]
      %v180 = vld [vmem:[%s166 + $0x30] sm:$0xff]
      %v181 = vld [vmem:[%s166 + $0x38] sm:$0xff]
      %v182 = vld [vmem:[%s166 + $0x40] sm:$0xff]
      %v183 = vld [vmem:[%s166 + $0x48] sm:$0xff]
      %v184 = vld [vmem:[%s166 + $0x50] sm:$0xff]
      %v185 = vld [vmem:[%s166 + $0x58] sm:$0xff]
      %v186 = vld [vmem:[%s166 + $0x60] sm:$0xff]
      %v187 = vld [vmem:[%s166 + $0x68] sm:$0xff]
      %v188 = vld [vmem:[%s166 + $0x70] sm:$0xff]
      %v189 = vld [vmem:[%s166 + $0x78] sm:$0xff]
      %v190 = vld [vmem:[%s166 + $0x80] sm:$0xff]
      %v191 = vld [vmem:[%s166 + $0x88] sm:$0xff]
      %v192 = vld [vmem:[%s166 + $0x90] sm:$0xff]
      %v193 = vld [vmem:[%s166 + $0x98] sm:$0xff]
      %v194 = vld [vmem:[%s166 + $0xa0] sm:$0xff]
      %v195 = vld [vmem:[%s166 + $0xa8] sm:$0xff]
      %v196 = vld [vmem:[%s166 + $0xb0] sm:$0xff]
      %v197 = vld [vmem:[%s166 + $0xb8] sm:$0xff]
      %v198 = vld [vmem:[%s166 + $0xc0] sm:$0xff]
      %v199 = vld [vmem:[%s166 + $0xc8] sm:$0xff]
      %v200 = vld [vmem:[%s166 + $0xd0] sm:$0xff]
      %v201 = vld [vmem:[%s166 + $0xd8] sm:$0xff]
      %v202 = vld [vmem:[%s166 + $0xe0] sm:$0xff]
      %v203 = vld [vmem:[%s166 + $0xe8] sm:$0xff]
      %v204 = vld [vmem:[%s166 + $0xf0] sm:$0xff]
      %v205 = vld [vmem:[%s166 + $0xf8] sm:$0xff]
      %v206 = vld [vmem:[%s166 + $0x100] sm:$0xff]
      %v207 = vld [vmem:[%s166 + $0x108] sm:$0xff]
      %v208 = vld [vmem:[%s166 + $0x110] sm:$0xff]
      %v209 = vld [vmem:[%s166 + $0x118] sm:$0xff]
      %v210 = vld [vmem:[%s166 + $0x120] sm:$0xff]
      %v211 = vld [vmem:[%s166 + $0x128] sm:$0xff]
      %v212 = vld [vmem:[%s166 + $0x130] sm:$0xff]
      %v213 = vld [vmem:[%s166 + $0x138] sm:$0xff]
      %v214 = vld [vmem:[%s166 + $0x140] sm:$0xff]
      %v215 = vld [vmem:[%s166 + $0x148] sm:$0xff]
      %v216 = vld [vmem:[%s166 + $0x150] sm:$0xff]
      %v217 = vld [vmem:[%s166 + $0x158] sm:$0xff]
      %v218 = vld [vmem:[%s166 + $0x160] sm:$0xff]
      %v219 = vld [vmem:[%s166 + $0x168] sm:$0xff]
      %v220 = vld [vmem:[%s166 + $0x170] sm:$0xff]
      %v221 = vld [vmem:[%s166 + $0x178] sm:$0xff]
      %v222 = vld [vmem:[%s166 + $0x180] sm:$0xff]
      %v223 = vld [vmem:[%s166 + $0x188] sm:$0xff]
      %v224 = vld [vmem:[%s166 + $0x190] sm:$0xff]
      %v225 = vld [vmem:[%s166 + $0x198] sm:$0xff]
      %v226 = vld [vmem:[%s166 + $0x1a0] sm:$0xff]
      %v227 = vld [vmem:[%s166 + $0x1a8] sm:$0xff]
      %v228 = vld [vmem:[%s166 + $0x1b0] sm:$0xff]
      %v229 = vld [vmem:[%s166 + $0x1b8] sm:$0xff]
      %v230 = vld [vmem:[%s166 + $0x1c0] sm:$0xff]
      %v231 = vld [vmem:[%s166 + $0x1c8] sm:$0xff]
      %v232 = vld [vmem:[%s166 + $0x1d0] sm:$0xff]
      %v233 = vld [vmem:[%s166 + $0x1d8] sm:$0xff]
      %v234 = vld [vmem:[%s166 + $0x1e0] sm:$0xff]
      %v235 = vld [vmem:[%s166 + $0x1e8] sm:$0xff]
      %v236 = vld [vmem:[%s166 + $0x1f0] sm:$0xff]
      %v237 = vld [vmem:[%s166 + $0x1f8] sm:$0xff]
      %v238 = vld [vmem:[%s1] sm:$0x1]
      %v240 = vlaneseq
      %v241 = vshrl.u32 %v240, 7
      %v242 = vsub.s32 0, %v241
      %v243 = vrot.slane %v238, %v242
      %v245 = vmul.f32 %v174, %v243
      %v246 = vmul.f32 %v175, %v243
      %v247 = vmul.f32 %v176, %v243
      %v248 = vmul.f32 %v177, %v243
      %v249 = vmul.f32 %v178, %v243
      %v250 = vmul.f32 %v179, %v243
      %v251 = vmul.f32 %v180, %v243
      %v252 = vmul.f32 %v181, %v243
      %v253 = vmul.f32 %v182, %v243
      %v254 = vmul.f32 %v183, %v243
      %v255 = vmul.f32 %v184, %v243
      %v256 = vmul.f32 %v185, %v243
      %v257 = vmul.f32 %v186, %v243
      %v258 = vmul.f32 %v187, %v243
      %v259 = vmul.f32 %v188, %v243
      %v260 = vmul.f32 %v189, %v243
      %v261 = vmul.f32 %v190, %v243
      %v262 = vmul.f32 %v191, %v243
      %v263 = vmul.f32 %v192, %v243
      %v264 = vmul.f32 %v193, %v243
      %v265 = vmul.f32 %v194, %v243
      %v266 = vmul.f32 %v195, %v243
      %v267 = vmul.f32 %v196, %v243
      %v268 = vmul.f32 %v197, %v243
      %v269 = vmul.f32 %v198, %v243
      %v270 = vmul.f32 %v199, %v243
      %v271 = vmul.f32 %v200, %v243
      %v272 = vmul.f32 %v201, %v243
      %v273 = vmul.f32 %v202, %v243
      %v274 = vmul.f32 %v203, %v243
      %v275 = vmul.f32 %v204, %v243
      %v276 = vmul.f32 %v205, %v243
      %v277 = vmul.f32 %v206, %v243
      %v278 = vmul.f32 %v207, %v243
      %v279 = vmul.f32 %v208, %v243
      %v280 = vmul.f32 %v209, %v243
      %v281 = vmul.f32 %v210, %v243
      %v282 = vmul.f32 %v211, %v243
      %v283 = vmul.f32 %v212, %v243
      %v284 = vmul.f32 %v213, %v243
      %v285 = vmul.f32 %v214, %v243
      %v286 = vmul.f32 %v215, %v243
      %v287 = vmul.f32 %v216, %v243
      %v288 = vmul.f32 %v217, %v243
      %v289 = vmul.f32 %v218, %v243
      %v290 = vmul.f32 %v219, %v243
      %v291 = vmul.f32 %v220, %v243
      %v292 = vmul.f32 %v221, %v243
      %v293 = vmul.f32 %v222, %v243
      %v294 = vmul.f32 %v223, %v243
      %v295 = vmul.f32 %v224, %v243
      %v296 = vmul.f32 %v225, %v243
      %v297 = vmul.f32 %v226, %v243
      %v298 = vmul.f32 %v227, %v243
      %v299 = vmul.f32 %v228, %v243
      %v300 = vmul.f32 %v229, %v243
      %v301 = vmul.f32 %v230, %v243
      %v302 = vmul.f32 %v231, %v243
      %v303 = vmul.f32 %v232, %v243
      %v304 = vmul.f32 %v233, %v243
      %v305 = vmul.f32 %v234, %v243
      %v306 = vmul.f32 %v235, %v243
      %v307 = vmul.f32 %v236, %v243
      %v308 = vmul.f32 %v237, %v243
      %v309 = vld [vmem:[%s2] sm:$0x1]
      %v311 = vlaneseq
      %v312 = vshrl.u32 %v311, 7
      %v313 = vsub.s32 0, %v312
      %v314 = vrot.slane %v309, %v313
      %v316 = vadd.f32 %v245, %v314
      %v317 = vadd.f32 %v246, %v314
      %v318 = vadd.f32 %v247, %v314
      %v319 = vadd.f32 %v248, %v314
      %v320 = vadd.f32 %v249, %v314
      %v321 = vadd.f32 %v250, %v314
      %v322 = vadd.f32 %v251, %v314
      %v323 = vadd.f32 %v252, %v314
      %v324 = vadd.f32 %v253, %v314
      %v325 = vadd.f32 %v254, %v314
      %v326 = vadd.f32 %v255, %v314
      %v327 = vadd.f32 %v256, %v314
      %v328 = vadd.f32 %v257, %v314
      %v329 = vadd.f32 %v258, %v314
      %v330 = vadd.f32 %v259, %v314
      %v331 = vadd.f32 %v260, %v314
      %v332 = vadd.f32 %v261, %v314
      %v333 = vadd.f32 %v262, %v314
      %v334 = vadd.f32 %v263, %v314
      %v335 = vadd.f32 %v264, %v314
      %v336 = vadd.f32 %v265, %v314
      %v337 = vadd.f32 %v266, %v314
      %v338 = vadd.f32 %v267, %v314
      %v339 = vadd.f32 %v268, %v314
      %v340 = vadd.f32 %v269, %v314
      %v341 = vadd.f32 %v270, %v314
      %v342 = vadd.f32 %v271, %v314
      %v343 = vadd.f32 %v272, %v314
      %v344 = vadd.f32 %v273, %v314
      %v345 = vadd.f32 %v274, %v314
      %v346 = vadd.f32 %v275, %v314
      %v347 = vadd.f32 %v276, %v314
      %v348 = vadd.f32 %v277, %v314
      %v349 = vadd.f32 %v278, %v314
      %v350 = vadd.f32 %v279, %v314
      %v351 = vadd.f32 %v280, %v314
      %v352 = vadd.f32 %v281, %v314
      %v353 = vadd.f32 %v282, %v314
      %v354 = vadd.f32 %v283, %v314
      %v355 = vadd.f32 %v284, %v314
      %v356 = vadd.f32 %v285, %v314
      %v357 = vadd.f32 %v286, %v314
      %v358 = vadd.f32 %v287, %v314
      %v359 = vadd.f32 %v288, %v314
      %v360 = vadd.f32 %v289, %v314
      %v361 = vadd.f32 %v290, %v314
      %v362 = vadd.f32 %v291, %v314
      %v363 = vadd.f32 %v292, %v314
      %v364 = vadd.f32 %v293, %v314
      %v365 = vadd.f32 %v294, %v314
      %v366 = vadd.f32 %v295, %v314
      %v367 = vadd.f32 %v296, %v314
      %v368 = vadd.f32 %v297, %v314
      %v369 = vadd.f32 %v298, %v314
      %v370 = vadd.f32 %v299, %v314
      %v371 = vadd.f32 %v300, %v314
      %v372 = vadd.f32 %v301, %v314
      %v373 = vadd.f32 %v302, %v314
      %v374 = vadd.f32 %v303, %v314
      %v375 = vadd.f32 %v304, %v314
      %v376 = vadd.f32 %v305, %v314
      %v377 = vadd.f32 %v306, %v314
      %v378 = vadd.f32 %v307, %v314
      %v379 = vadd.f32 %v308, %v314
      %v380 = vmax.f32 %v316, 0.0
      %v381 = vmax.f32 %v317, 0.0
      %v382 = vmax.f32 %v318, 0.0
      %v383 = vmax.f32 %v319, 0.0
      %v384 = vmax.f32 %v320, 0.0
      %v385 = vmax.f32 %v321, 0.0
      %v386 = vmax.f32 %v322, 0.0
      %v387 = vmax.f32 %v323, 0.0
      %v388 = vmax.f32 %v324, 0.0
      %v389 = vmax.f32 %v325, 0.0
      %v390 = vmax.f32 %v326, 0.0
      %v391 = vmax.f32 %v327, 0.0
      %v392 = vmax.f32 %v328, 0.0
      %v393 = vmax.f32 %v329, 0.0
      %v394 = vmax.f32 %v330, 0.0
      %v395 = vmax.f32 %v331, 0.0
      %v396 = vmax.f32 %v332, 0.0
      %v397 = vmax.f32 %v333, 0.0
      %v398 = vmax.f32 %v334, 0.0
      %v399 = vmax.f32 %v335, 0.0
      %v400 = vmax.f32 %v336, 0.0
      %v401 = vmax.f32 %v337, 0.0
      %v402 = vmax.f32 %v338, 0.0
      %v403 = vmax.f32 %v339, 0.0
      %v404 = vmax.f32 %v340, 0.0
      %v405 = vmax.f32 %v341, 0.0
      %v406 = vmax.f32 %v342, 0.0
      %v407 = vmax.f32 %v343, 0.0
      %v408 = vmax.f32 %v344, 0.0
      %v409 = vmax.f32 %v345, 0.0
      %v410 = vmax.f32 %v346, 0.0
      %v411 = vmax.f32 %v347, 0.0
      %v412 = vmax.f32 %v348, 0.0
      %v413 = vmax.f32 %v349, 0.0
      %v414 = vmax.f32 %v350, 0.0
      %v415 = vmax.f32 %v351, 0.0
      %v416 = vmax.f32 %v352, 0.0
      %v417 = vmax.f32 %v353, 0.0
      %v418 = vmax.f32 %v354, 0.0
      %v419 = vmax.f32 %v355, 0.0
      %v420 = vmax.f32 %v356, 0.0
      %v421 = vmax.f32 %v357, 0.0
      %v422 = vmax.f32 %v358, 0.0
      %v423 = vmax.f32 %v359, 0.0
      %v424 = vmax.f32 %v360, 0.0
      %v425 = vmax.f32 %v361, 0.0
      %v426 = vmax.f32 %v362, 0.0
      %v427 = vmax.f32 %v363, 0.0
      %v428 = vmax.f32 %v364, 0.0
      %v429 = vmax.f32 %v365, 0.0
      %v430 = vmax.f32 %v366, 0.0
      %v431 = vmax.f32 %v367, 0.0
      %v432 = vmax.f32 %v368, 0.0
      %v433 = vmax.f32 %v369, 0.0
      %v434 = vmax.f32 %v370, 0.0
      %v435 = vmax.f32 %v371, 0.0
      %v436 = vmax.f32 %v372, 0.0
      %v437 = vmax.f32 %v373, 0.0
      %v438 = vmax.f32 %v374, 0.0
      %v439 = vmax.f32 %v375, 0.0
      %v440 = vmax.f32 %v376, 0.0
      %v441 = vmax.f32 %v377, 0.0
      %v442 = vmax.f32 %v378, 0.0
      %v443 = vmax.f32 %v379, 0.0
      %444 = vst [vmem:[%s172] sm:$0xff] %v380
      %445 = vst [vmem:[%s172 + $0x8] sm:$0xff] %v381
      %446 = vst [vmem:[%s172 + $0x10] sm:$0xff] %v382
      %447 = vst [vmem:[%s172 + $0x18] sm:$0xff] %v383
      %448 = vst [vmem:[%s172 + $0x20] sm:$0xff] %v384
      %449 = vst [vmem:[%s172 + $0x28] sm:$0xff] %v385
      %450 = vst [vmem:[%s172 + $0x30] sm:$0xff] %v386
      %451 = vst [vmem:[%s172 + $0x38] sm:$0xff] %v387
      %452 = vst [vmem:[%s172 + $0x40] sm:$0xff] %v388
      %453 = vst [vmem:[%s172 + $0x48] sm:$0xff] %v389
      %454 = vst [vmem:[%s172 + $0x50] sm:$0xff] %v390
      %455 = vst [vmem:[%s172 + $0x58] sm:$0xff] %v391
      %456 = vst [vmem:[%s172 + $0x60] sm:$0xff] %v392
      %457 = vst [vmem:[%s172 + $0x68] sm:$0xff] %v393
      %458 = vst [vmem:[%s172 + $0x70] sm:$0xff] %v394
      %459 = vst [vmem:[%s172 + $0x78] sm:$0xff] %v395
      %460 = vst [vmem:[%s172 + $0x80] sm:$0xff] %v396
      %461 = vst [vmem:[%s172 + $0x88] sm:$0xff] %v397
      %462 = vst [vmem:[%s172 + $0x90] sm:$0xff] %v398
      %463 = vst [vmem:[%s172 + $0x98] sm:$0xff] %v399
      %464 = vst [vmem:[%s172 + $0xa0] sm:$0xff] %v400
      %465 = vst [vmem:[%s172 + $0xa8] sm:$0xff] %v401
      %466 = vst [vmem:[%s172 + $0xb0] sm:$0xff] %v402
      %467 = vst [vmem:[%s172 + $0xb8] sm:$0xff] %v403
      %468 = vst [vmem:[%s172 + $0xc0] sm:$0xff] %v404
      %469 = vst [vmem:[%s172 + $0xc8] sm:$0xff] %v405
      %470 = vst [vmem:[%s172 + $0xd0] sm:$0xff] %v406
      %471 = vst [vmem:[%s172 + $0xd8] sm:$0xff] %v407
      %472 = vst [vmem:[%s172 + $0xe0] sm:$0xff] %v408
      %473 = vst [vmem:[%s172 + $0xe8] sm:$0xff] %v409
      %474 = vst [vmem:[%s172 + $0xf0] sm:$0xff] %v410
      %475 = vst [vmem:[%s172 + $0xf8] sm:$0xff] %v411
      %476 = vst [vmem:[%s172 + $0x100] sm:$0xff] %v412
      %477 = vst [vmem:[%s172 + $0x108] sm:$0xff] %v413
      %478 = vst [vmem:[%s172 + $0x110] sm:$0xff] %v414
      %479 = vst [vmem:[%s172 + $0x118] sm:$0xff] %v415
      %480 = vst [vmem:[%s172 + $0x120] sm:$0xff] %v416
      %481 = vst [vmem:[%s172 + $0x128] sm:$0xff] %v417
      %482 = vst [vmem:[%s172 + $0x130] sm:$0xff] %v418
      %483 = vst [vmem:[%s172 + $0x138] sm:$0xff] %v419
      %484 = vst [vmem:[%s172 + $0x140] sm:$0xff] %v420
      %485 = vst [vmem:[%s172 + $0x148] sm:$0xff] %v421
      %486 = vst [vmem:[%s172 + $0x150] sm:$0xff] %v422
      %487 = vst [vmem:[%s172 + $0x158] sm:$0xff] %v423
      %488 = vst [vmem:[%s172 + $0x160] sm:$0xff] %v424
      %489 = vst [vmem:[%s172 + $0x168] sm:$0xff] %v425
      %490 = vst [vmem:[%s172 + $0x170] sm:$0xff] %v426
      %491 = vst [vmem:[%s172 + $0x178] sm:$0xff] %v427
      %492 = vst [vmem:[%s172 + $0x180] sm:$0xff] %v428
      %493 = vst [vmem:[%s172 + $0x188] sm:$0xff] %v429
      %494 = vst [vmem:[%s172 + $0x190] sm:$0xff] %v430
      %495 = vst [vmem:[%s172 + $0x198] sm:$0xff] %v431
      %496 = vst [vmem:[%s172 + $0x1a0] sm:$0xff] %v432
      %497 = vst [vmem:[%s172 + $0x1a8] sm:$0xff] %v433
      %498 = vst [vmem:[%s172 + $0x1b0] sm:$0xff] %v434
      %499 = vst [vmem:[%s172 + $0x1b8] sm:$0xff] %v435
      %500 = vst [vmem:[%s172 + $0x1c0] sm:$0xff] %v436
      %501 = vst [vmem:[%s172 + $0x1c8] sm:$0xff] %v437
      %502 = vst [vmem:[%s172 + $0x1d0] sm:$0xff] %v438
      %503 = vst [vmem:[%s172 + $0x1d8] sm:$0xff] %v439
      %504 = vst [vmem:[%s172 + $0x1e0] sm:$0xff] %v440
      %505 = vst [vmem:[%s172 + $0x1e8] sm:$0xff] %v441
      %506 = vst [vmem:[%s172 + $0x1f0] sm:$0xff] %v442
      %507 = vst [vmem:[%s172 + $0x1f8] sm:$0xff] %v443
      %s508 = smul.u32 64, %s14
      %p509 = scmp.lt.s32.totalorder %s508, 1023
      %s510 = scalar_select %p509, %s508, 1023
      %s511 = smul.addr %s510, 8
      %s512 = scalar_lea.vmem %s3, %s511
      // Predicated region
      $region33: #{forward.11} parent=31 // pred_check
        %p513 = pneg %p100
      $region34: #{forward.11} parent=31 // pred_check_branch
        %515 = sbr.rel (%p513) target = $region36
      $region35: #{forward.11} parent=31 // pred_region
        %s516 = smul.u32 64, %s14
      $region36: #{forward.11} parent=31 // pred_fallthru
        _
    $region32: #{forward.11} parent=5 // pred_fallthru
      _
    %p517 = scmp.le.s32.totalorder 2, %s9
    // Predicated region
    $region37: #{forward.11} parent=5 // pred_check
      %p518 = pneg %p517
    $region38: #{forward.11} parent=5 // pred_check_branch
      %520 = sbr.rel (%p518) target = $region40
    $region39: #{forward.11} parent=5 // pred_region
      %s521 = ssub.s32 %s9, 2
      // Predicated region
      $region41: #{forward.11} parent=39 // pred_check
        %p522 = pneg %p106
      $region42: #{forward.11} parent=39 // pred_check_branch
        %524 = sbr.rel (%p522) target = $region44
      $region43: #{forward.11} parent=39 // pred_region
        %s525 = smul.u32 64, %s15
        %p526 = scmp.lt.s32.totalorder %s525, 1023
        %s527 = scalar_select %p526, %s525, 1023
        %s528 = smul.addr %s527, 8
        %s529 = scalar_lea.vmem %s3, %s528
      $region44: #{forward.11} parent=39 // pred_fallthru
        _
    $region40: #{forward.11} parent=5 // pred_fallthru
      _
  $region6: #{forward.11} parent=0 // loop_footer
    %s13 = sadd.s32 1, %s9
  $region7: #{forward.11} parent=0 // loop_footer_branch
    %8 = sbr.rel target = $region3
  $region8: #{forward.11} parent=0 // loop_exit
    _

// kernel: forward.13
$region0: #{forward.13}
  #allocation0 [shape = 'u32[]', space=smem, size = 0x4, offset = 0x4, fixed_abs, tag = 'smem constant byte address 0x4 - core index']
  #allocation1 [shape = 'u32[144,128]{1,0:T(1,128)}', space=vmem, size = 0x12000, scoped, tag = 'internal scratch']
  %s0 = inlined_call_operand.vmem [shape: f32[2048,128], index: 0, kind: input, shape index: {}]
  %s1 = inlined_call_operand.vmem [shape: f32[1,128], index: 1, kind: input, shape index: {}]
  %s2 = inlined_call_operand.vmem [shape: f32[1,128], index: 2, kind: input, shape index: {}]
  %s3 = inlined_call_operand.vmem [shape: f32[2048,128], index: 3, kind: output, shape index: {}]
  %s4 = sld [smem:[#allocation0]]
  $region45: #{forward.13} parent=0
    _
  %s6 = ssub.s32 1, %s4
  %s7 = scalar_select 0, %s6, %s4
  loop: start=0, step=1, limit=6
  $region2: #{forward.13} parent=0 // loop_pre_header
    _
  $region3: #{forward.13} parent=0 // loop_header
    %s9 = sphi 0, %s13
    %p10 = scmp.ge.s32.totalorder %s9, 6
    %s19 = sphi 0, %s21
    %s22 = sphi 0, %s19
    %s23 = sphi 0, %s22
    %s39 = sphi 0, %s23
    %s43 = sphi 0, %s43
    %s45 = sphi 0, %s43
    %s46 = sphi 0, %s45
    %s60 = sphi 0, %s46
    %s64 = sphi 0, %s64
    %s66 = sphi 0, %s64
    %s67 = sphi 0, %s66
    %s81 = sphi 0, %s67
    %s87 = sphi 0, %s89
    %s90 = sphi 0, %s87
    %s91 = sphi 0, %s90
    %s107 = sphi 0, %s91
  $region4: #{forward.13} parent=0 // loop_header_branch
    %12 = sbr.rel (%p10) target = $region8
  $region5: #{forward.13} parent=0 // loop_body
    %s14 = ssub.s32 %s9, 1
    %s15 = ssub.s32 %s9, 2
    %s16 = sadd.s32 %s9, 1
    %s17 = ssub.s32 %s9, %s16
    %p18 = scmp.eq.s32.totalorder %s17, 0
    %s20 = sadd.s32 %s19, 1
    %s21 = scalar_select %p18, %s19, %s20
    %p24 = pneg %p18
    %p25 = scmp.eq.s32.totalorder %s9, 3
    %p26 = por %p24, %p25
    %p27 = scmp.ne.s32.totalorder %s19, %s22
    %p28 = scmp.eq.s32.totalorder %s9, 0
    %p29 = por %p27, %p28
    %p30 = scmp.ne.s32.totalorder %s19, %s22
    %p31 = scmp.eq.s32.totalorder %s14, 3
    %p32 = por %p30, %p31
    %p33 = scmp.ne.s32.totalorder %s22, %s23
    %p34 = scmp.eq.s32.totalorder %s14, 0
    %p35 = por %p33, %p34
    %p36 = scmp.ne.s32.totalorder %s22, %s23
    %p37 = scmp.eq.s32.totalorder %s15, 3
    %p38 = por %p36, %p37
    %p40 = scmp.ne.s32.totalorder %s23, %s39
    %p41 = scmp.eq.s32.totalorder %s15, 0
    %p42 = por %p40, %p41
    %s44 = sadd.s32 %s43, 1
    %p47 = scmp.eq.s32.totalorder %s9, 3
    %p48 = scmp.ne.s32.totalorder %s43, %s45
    %p49 = scmp.eq.s32.totalorder %s9, 0
    %p50 = por %p48, %p49
    %p51 = scmp.ne.s32.totalorder %s43, %s45
    %p52 = scmp.eq.s32.totalorder %s14, 3
    %p53 = por %p51, %p52
    %p54 = scmp.ne.s32.totalorder %s45, %s46
    %p55 = scmp.eq.s32.totalorder %s14, 0
    %p56 = por %p54, %p55
    %p57 = scmp.ne.s32.totalorder %s45, %s46
    %p58 = scmp.eq.s32.totalorder %s15, 3
    %p59 = por %p57, %p58
    %p61 = scmp.ne.s32.totalorder %s46, %s60
    %p62 = scmp.eq.s32.totalorder %s15, 0
    %p63 = por %p61, %p62
    %s65 = sadd.s32 %s64, 1
    %p68 = scmp.eq.s32.totalorder %s9, 3
    %p69 = scmp.ne.s32.totalorder %s64, %s66
    %p70 = scmp.eq.s32.totalorder %s9, 0
    %p71 = por %p69, %p70
    %p72 = scmp.ne.s32.totalorder %s64, %s66
    %p73 = scmp.eq.s32.totalorder %s14, 3
    %p74 = por %p72, %p73
    %p75 = scmp.ne.s32.totalorder %s66, %s67
    %p76 = scmp.eq.s32.totalorder %s14, 0
    %p77 = por %p75, %p76
    %p78 = scmp.ne.s32.totalorder %s66, %s67
    %p79 = scmp.eq.s32.totalorder %s15, 3
    %p80 = por %p78, %p79
    %p82 = scmp.ne.s32.totalorder %s67, %s81
    %p83 = scmp.eq.s32.totalorder %s15, 0
    %p84 = por %p82, %p83
    %s85 = ssub.s32 %s9, %s16
    %p86 = scmp.eq.s32.totalorder %s85, 0
    %s88 = sadd.s32 %s87, 1
    %s89 = scalar_select %p86, %s87, %s88
    %p92 = pneg %p86
    %p93 = scmp.eq.s32.totalorder %s9, 3
    %p94 = por %p92, %p93
    %p95 = scmp.ne.s32.totalorder %s87, %s90
    %p96 = scmp.eq.s32.totalorder %s9, 0
    %p97 = por %p95, %p96
    %p98 = scmp.ne.s32.totalorder %s87, %s90
    %p99 = scmp.eq.s32.totalorder %s14, 3
    %p100 = por %p98, %p99
    %p101 = scmp.ne.s32.totalorder %s90, %s91
    %p102 = scmp.eq.s32.totalorder %s14, 0
    %p103 = por %p101, %p102
    %p104 = scmp.ne.s32.totalorder %s90, %s91
    %p105 = scmp.eq.s32.totalorder %s15, 3
    %p106 = por %p104, %p105
    %p108 = scmp.ne.s32.totalorder %s91, %s107
    %p109 = scmp.eq.s32.totalorder %s15, 0
    %p110 = por %p108, %p109
    %p111 = scmp.le.s32.totalorder 1, %s9
    %p112 = scmp.lt.s32.totalorder %s9, 5
    %p113 = pnand %p111, %p112
    %p114 = pneg %p113
    // Predicated region
    $region9: #{forward.13} parent=5 // pred_check
      _
    $region10: #{forward.13} parent=5 // pred_check_branch
      %116 = sbr.rel (%p113) target = $region12
    $region11: #{forward.13} parent=5 // pred_region
      %s117 = ssub.s32 %s9, 1
      // Predicated region
      $region13: #{forward.13} parent=11 // pred_check
        %p118 = pneg %p56
      $region14: #{forward.13} parent=11 // pred_check_branch
        %120 = sbr.rel (%p118) target = $region16
      $region15: #{forward.13} parent=11 // pred_region
        _
      $region16: #{forward.13} parent=11 // pred_fallthru
        _
      // Predicated region
      $region17: #{forward.13} parent=11 // pred_check
        %p121 = pneg %p77
      $region18: #{forward.13} parent=11 // pred_check_branch
        %123 = sbr.rel (%p121) target = $region20
      $region19: #{forward.13} parent=11 // pred_region
        _
      $region20: #{forward.13} parent=11 // pred_fallthru
        _
    $region12: #{forward.13} parent=5 // pred_fallthru
      _
    %p124 = scmp.lt.s32.totalorder %s9, 4
    // Predicated region
    $region21: #{forward.13} parent=5 // pred_check
      %p125 = pneg %p124
    $region22: #{forward.13} parent=5 // pred_check_branch
      %127 = sbr.rel (%p125) target = $region24
    $region23: #{forward.13} parent=5 // pred_region
      // Predicated region
      $region25: #{forward.13} parent=23 // pred_check
        %p128 = pneg %p29
      $region26: #{forward.13} parent=23 // pred_check_branch
        %130 = sbr.rel (%p128) target = $region28
      $region27: #{forward.13} parent=23 // pred_region
        %s131 = smul.u32 64, %s9
        %p132 = scmp.lt.s32.totalorder %s131, 255
        %s133 = scalar_select %p132, %s131, 255
        %s134 = smul.addr %s133, 8
        %s135 = scalar_lea.vmem %s0, %s134
        %s136 = smul.u32 64, %s9
      $region28: #{forward.13} parent=23 // pred_fallthru
        _
    $region24: #{forward.13} parent=5 // pred_fallthru
      _
    %p137 = scmp.le.s32.totalorder 1, %s9
    %p138 = scmp.lt.s32.totalorder %s9, 5
    %p139 = pnand %p137, %p138
    %p140 = pneg %p139
    // Predicated region
    $region29: #{forward.13} parent=5 // pred_check
      _
    $region30: #{forward.13} parent=5 // pred_check_branch
      %142 = sbr.rel (%p139) target = $region32
    $region31: #{forward.13} parent=5 // pred_region
      %s143 = ssub.s32 %s9, 1
      %s144 = smul.u32 64, %s14
      %p145 = scmp.lt.s32.totalorder %s144, 255
      %s146 = scalar_select %p145, %s144, 255
      %s147 = smul.addr %s146, 8
      %s148 = scalar_lea.vmem %s0, %s147
      %p149 = pneg %p35
      %p150 = pneg %p32
      %p151 = pneg %p56
      %p152 = pneg %p53
      %p153 = pneg %p77
      %p154 = pneg %p74
      %p155 = pneg %p103
      %p156 = pneg %p100
      %s157 = smul.u32 64, %s14
      %p158 = scmp.lt.s32.totalorder %s157, 255
      %s159 = scalar_select %p158, %s157, 255
      %s160 = smul.addr %s159, 8
      %s161 = scalar_lea.vmem %s3, %s160
      %s162 = smul.u32 64, %s14
      %p163 = scmp.lt.s32.totalorder %s162, 255
      %s164 = scalar_select %p163, %s162, 255
      %s165 = smul.addr %s164, 8
      %s166 = scalar_lea.vmem %s0, %s165
      %s167 = smul.u32 64, %s14
      %s168 = smul.u32 64, %s14
      %p169 = scmp.lt.s32.totalorder %s168, 255
      %s170 = scalar_select %p169, %s168, 255
      %s171 = smul.addr %s170, 8
      %s172 = scalar_lea.vmem %s3, %s171
      %s173 = smul.u32 64, %s14
      %v174 = vld [vmem:[%s166] sm:$0xff]
      %v175 = vld [vmem:[%s166 + $0x8] sm:$0xff]
      %v176 = vld [vmem:[%s166 + $0x10] sm:$0xff]
      %v177 = vld [vmem:[%s166 + $0x18] sm:$0xff]
      %v178 = vld [vmem:[%s166 + $0x20] sm:$0xff]
      %v179 = vld [vmem:[%s166 + $0x28] sm:$0xff]
      %v180 = vld [vmem:[%s166 + $0x30] sm:$0xff]
      %v181 = vld [vmem:[%s166 + $0x38] sm:$0xff]
      %v182 = vld [vmem:[%s166 + $0x40] sm:$0xff]
      %v183 = vld [vmem:[%s166 + $0x48] sm:$0xff]
      %v184 = vld [vmem:[%s166 + $0x50] sm:$0xff]
      %v185 = vld [vmem:[%s166 + $0x58] sm:$0xff]
      %v186 = vld [vmem:[%s166 + $0x60] sm:$0xff]
      %v187 = vld [vmem:[%s166 + $0x68] sm:$0xff]
      %v188 = vld [vmem:[%s166 + $0x70] sm:$0xff]
      %v189 = vld [vmem:[%s166 + $0x78] sm:$0xff]
      %v190 = vld [vmem:[%s166 + $0x80] sm:$0xff]
      %v191 = vld [vmem:[%s166 + $0x88] sm:$0xff]
      %v192 = vld [vmem:[%s166 + $0x90] sm:$0xff]
      %v193 = vld [vmem:[%s166 + $0x98] sm:$0xff]
      %v194 = vld [vmem:[%s166 + $0xa0] sm:$0xff]
      %v195 = vld [vmem:[%s166 + $0xa8] sm:$0xff]
      %v196 = vld [vmem:[%s166 + $0xb0] sm:$0xff]
      %v197 = vld [vmem:[%s166 + $0xb8] sm:$0xff]
      %v198 = vld [vmem:[%s166 + $0xc0] sm:$0xff]
      %v199 = vld [vmem:[%s166 + $0xc8] sm:$0xff]
      %v200 = vld [vmem:[%s166 + $0xd0] sm:$0xff]
      %v201 = vld [vmem:[%s166 + $0xd8] sm:$0xff]
      %v202 = vld [vmem:[%s166 + $0xe0] sm:$0xff]
      %v203 = vld [vmem:[%s166 + $0xe8] sm:$0xff]
      %v204 = vld [vmem:[%s166 + $0xf0] sm:$0xff]
      %v205 = vld [vmem:[%s166 + $0xf8] sm:$0xff]
      %v206 = vld [vmem:[%s166 + $0x100] sm:$0xff]
      %v207 = vld [vmem:[%s166 + $0x108] sm:$0xff]
      %v208 = vld [vmem:[%s166 + $0x110] sm:$0xff]
      %v209 = vld [vmem:[%s166 + $0x118] sm:$0xff]
      %v210 = vld [vmem:[%s166 + $0x120] sm:$0xff]
      %v211 = vld [vmem:[%s166 + $0x128] sm:$0xff]
      %v212 = vld [vmem:[%s166 + $0x130] sm:$0xff]
      %v213 = vld [vmem:[%s166 + $0x138] sm:$0xff]
      %v214 = vld [vmem:[%s166 + $0x140] sm:$0xff]
      %v215 = vld [vmem:[%s166 + $0x148] sm:$0xff]
      %v216 = vld [vmem:[%s166 + $0x150] sm:$0xff]
      %v217 = vld [vmem:[%s166 + $0x158] sm:$0xff]
      %v218 = vld [vmem:[%s166 + $0x160] sm:$0xff]
      %v219 = vld [vmem:[%s166 + $0x168] sm:$0xff]
      %v220 = vld [vmem:[%s166 + $0x170] sm:$0xff]
      %v221 = vld [vmem:[%s166 + $0x178] sm:$0xff]
      %v222 = vld [vmem:[%s166 + $0x180] sm:$0xff]
      %v223 = vld [vmem:[%s166 + $0x188] sm:$0xff]
      %v224 = vld [vmem:[%s166 + $0x190] sm:$0xff]
      %v225 = vld [vmem:[%s166 + $0x198] sm:$0xff]
      %v226 = vld [vmem:[%s166 + $0x1a0] sm:$0xff]
      %v227 = vld [vmem:[%s166 + $0x1a8] sm:$0xff]
      %v228 = vld [vmem:[%s166 + $0x1b0] sm:$0xff]
      %v229 = vld [vmem:[%s166 + $0x1b8] sm:$0xff]
      %v230 = vld [vmem:[%s166 + $0x1c0] sm:$0xff]
      %v231 = vld [vmem:[%s166 + $0x1c8] sm:$0xff]
      %v232 = vld [vmem:[%s166 + $0x1d0] sm:$0xff]
      %v233 = vld [vmem:[%s166 + $0x1d8] sm:$0xff]
      %v234 = vld [vmem:[%s166 + $0x1e0] sm:$0xff]
      %v235 = vld [vmem:[%s166 + $0x1e8] sm:$0xff]
      %v236 = vld [vmem:[%s166 + $0x1f0] sm:$0xff]
      %v237 = vld [vmem:[%s166 + $0x1f8] sm:$0xff]
      %v238 = vld [vmem:[%s1] sm:$0x1]
      %v240 = vlaneseq
      %v241 = vshrl.u32 %v240, 7
      %v242 = vsub.s32 0, %v241
      %v243 = vrot.slane %v238, %v242
      %v245 = vmul.f32 %v174, %v243
      %v246 = vmul.f32 %v175, %v243
      %v247 = vmul.f32 %v176, %v243
      %v248 = vmul.f32 %v177, %v243
      %v249 = vmul.f32 %v178, %v243
      %v250 = vmul.f32 %v179, %v243
      %v251 = vmul.f32 %v180, %v243
      %v252 = vmul.f32 %v181, %v243
      %v253 = vmul.f32 %v182, %v243
      %v254 = vmul.f32 %v183, %v243
      %v255 = vmul.f32 %v184, %v243
      %v256 = vmul.f32 %v185, %v243
      %v257 = vmul.f32 %v186, %v243
      %v258 = vmul.f32 %v187, %v243
      %v259 = vmul.f32 %v188, %v243
      %v260 = vmul.f32 %v189, %v243
      %v261 = vmul.f32 %v190, %v243
      %v262 = vmul.f32 %v191, %v243
      %v263 = vmul.f32 %v192, %v243
      %v264 = vmul.f32 %v193, %v243
      %v265 = vmul.f32 %v194, %v243
      %v266 = vmul.f32 %v195, %v243
      %v267 = vmul.f32 %v196, %v243
      %v268 = vmul.f32 %v197, %v243
      %v269 = vmul.f32 %v198, %v243
      %v270 = vmul.f32 %v199, %v243
      %v271 = vmul.f32 %v200, %v243
      %v272 = vmul.f32 %v201, %v243
      %v273 = vmul.f32 %v202, %v243
      %v274 = vmul.f32 %v203, %v243
      %v275 = vmul.f32 %v204, %v243
      %v276 = vmul.f32 %v205, %v243
      %v277 = vmul.f32 %v206, %v243
      %v278 = vmul.f32 %v207, %v243
      %v279 = vmul.f32 %v208, %v243
      %v280 = vmul.f32 %v209, %v243
      %v281 = vmul.f32 %v210, %v243
      %v282 = vmul.f32 %v211, %v243
      %v283 = vmul.f32 %v212, %v243
      %v284 = vmul.f32 %v213, %v243
      %v285 = vmul.f32 %v214, %v243
      %v286 = vmul.f32 %v215, %v243
      %v287 = vmul.f32 %v216, %v243
      %v288 = vmul.f32 %v217, %v243
      %v289 = vmul.f32 %v218, %v243
      %v290 = vmul.f32 %v219, %v243
      %v291 = vmul.f32 %v220, %v243
      %v292 = vmul.f32 %v221, %v243
      %v293 = vmul.f32 %v222, %v243
      %v294 = vmul.f32 %v223, %v243
      %v295 = vmul.f32 %v224, %v243
      %v296 = vmul.f32 %v225, %v243
      %v297 = vmul.f32 %v226, %v243
      %v298 = vmul.f32 %v227, %v243
      %v299 = vmul.f32 %v228, %v243
      %v300 = vmul.f32 %v229, %v243
      %v301 = vmul.f32 %v230, %v243
      %v302 = vmul.f32 %v231, %v243
      %v303 = vmul.f32 %v232, %v243
      %v304 = vmul.f32 %v233, %v243
      %v305 = vmul.f32 %v234, %v243
      %v306 = vmul.f32 %v235, %v243
      %v307 = vmul.f32 %v236, %v243
      %v308 = vmul.f32 %v237, %v243
      %v309 = vld [vmem:[%s2] sm:$0x1]
      %v311 = vlaneseq
      %v312 = vshrl.u32 %v311, 7
      %v313 = vsub.s32 0, %v312
      %v314 = vrot.slane %v309, %v313
      %v316 = vadd.f32 %v245, %v314
      %v317 = vadd.f32 %v246, %v314
      %v318 = vadd.f32 %v247, %v314
      %v319 = vadd.f32 %v248, %v314
      %v320 = vadd.f32 %v249, %v314
      %v321 = vadd.f32 %v250, %v314
      %v322 = vadd.f32 %v251, %v314
      %v323 = vadd.f32 %v252, %v314
      %v324 = vadd.f32 %v253, %v314
      %v325 = vadd.f32 %v254, %v314
      %v326 = vadd.f32 %v255, %v314
      %v327 = vadd.f32 %v256, %v314
      %v328 = vadd.f32 %v257, %v314
      %v329 = vadd.f32 %v258, %v314
      %v330 = vadd.f32 %v259, %v314
      %v331 = vadd.f32 %v260, %v314
      %v332 = vadd.f32 %v261, %v314
      %v333 = vadd.f32 %v262, %v314
      %v334 = vadd.f32 %v263, %v314
      %v335 = vadd.f32 %v264, %v314
      %v336 = vadd.f32 %v265, %v314
      %v337 = vadd.f32 %v266, %v314
      %v338 = vadd.f32 %v267, %v314
      %v339 = vadd.f32 %v268, %v314
      %v340 = vadd.f32 %v269, %v314
      %v341 = vadd.f32 %v270, %v314
      %v342 = vadd.f32 %v271, %v314
      %v343 = vadd.f32 %v272, %v314
      %v344 = vadd.f32 %v273, %v314
      %v345 = vadd.f32 %v274, %v314
      %v346 = vadd.f32 %v275, %v314
      %v347 = vadd.f32 %v276, %v314
      %v348 = vadd.f32 %v277, %v314
      %v349 = vadd.f32 %v278, %v314
      %v350 = vadd.f32 %v279, %v314
      %v351 = vadd.f32 %v280, %v314
      %v352 = vadd.f32 %v281, %v314
      %v353 = vadd.f32 %v282, %v314
      %v354 = vadd.f32 %v283, %v314
      %v355 = vadd.f32 %v284, %v314
      %v356 = vadd.f32 %v285, %v314
      %v357 = vadd.f32 %v286, %v314
      %v358 = vadd.f32 %v287, %v314
      %v359 = vadd.f32 %v288, %v314
      %v360 = vadd.f32 %v289, %v314
      %v361 = vadd.f32 %v290, %v314
      %v362 = vadd.f32 %v291, %v314
      %v363 = vadd.f32 %v292, %v314
      %v364 = vadd.f32 %v293, %v314
      %v365 = vadd.f32 %v294, %v314
      %v366 = vadd.f32 %v295, %v314
      %v367 = vadd.f32 %v296, %v314
      %v368 = vadd.f32 %v297, %v314
      %v369 = vadd.f32 %v298, %v314
      %v370 = vadd.f32 %v299, %v314
      %v371 = vadd.f32 %v300, %v314
      %v372 = vadd.f32 %v301, %v314
      %v373 = vadd.f32 %v302, %v314
      %v374 = vadd.f32 %v303, %v314
      %v375 = vadd.f32 %v304, %v314
      %v376 = vadd.f32 %v305, %v314
      %v377 = vadd.f32 %v306, %v314
      %v378 = vadd.f32 %v307, %v314
      %v379 = vadd.f32 %v308, %v314
      %v380 = vmax.f32 %v316, 0.0
      %v381 = vmax.f32 %v317, 0.0
      %v382 = vmax.f32 %v318, 0.0
      %v383 = vmax.f32 %v319, 0.0
      %v384 = vmax.f32 %v320, 0.0
      %v385 = vmax.f32 %v321, 0.0
      %v386 = vmax.f32 %v322, 0.0
      %v387 = vmax.f32 %v323, 0.0
      %v388 = vmax.f32 %v324, 0.0
      %v389 = vmax.f32 %v325, 0.0
      %v390 = vmax.f32 %v326, 0.0
      %v391 = vmax.f32 %v327, 0.0
      %v392 = vmax.f32 %v328, 0.0
      %v393 = vmax.f32 %v329, 0.0
      %v394 = vmax.f32 %v330, 0.0
      %v395 = vmax.f32 %v331, 0.0
      %v396 = vmax.f32 %v332, 0.0
      %v397 = vmax.f32 %v333, 0.0
      %v398 = vmax.f32 %v334, 0.0
      %v399 = vmax.f32 %v335, 0.0
      %v400 = vmax.f32 %v336, 0.0
      %v401 = vmax.f32 %v337, 0.0
      %v402 = vmax.f32 %v338, 0.0
      %v403 = vmax.f32 %v339, 0.0
      %v404 = vmax.f32 %v340, 0.0
      %v405 = vmax.f32 %v341, 0.0
      %v406 = vmax.f32 %v342, 0.0
      %v407 = vmax.f32 %v343, 0.0
      %v408 = vmax.f32 %v344, 0.0
      %v409 = vmax.f32 %v345, 0.0
      %v410 = vmax.f32 %v346, 0.0
      %v411 = vmax.f32 %v347, 0.0
      %v412 = vmax.f32 %v348, 0.0
      %v413 = vmax.f32 %v349, 0.0
      %v414 = vmax.f32 %v350, 0.0
      %v415 = vmax.f32 %v351, 0.0
      %v416 = vmax.f32 %v352, 0.0
      %v417 = vmax.f32 %v353, 0.0
      %v418 = vmax.f32 %v354, 0.0
      %v419 = vmax.f32 %v355, 0.0
      %v420 = vmax.f32 %v356, 0.0
      %v421 = vmax.f32 %v357, 0.0
      %v422 = vmax.f32 %v358, 0.0
      %v423 = vmax.f32 %v359, 0.0
      %v424 = vmax.f32 %v360, 0.0
      %v425 = vmax.f32 %v361, 0.0
      %v426 = vmax.f32 %v362, 0.0
      %v427 = vmax.f32 %v363, 0.0
      %v428 = vmax.f32 %v364, 0.0
      %v429 = vmax.f32 %v365, 0.0
      %v430 = vmax.f32 %v366, 0.0
      %v431 = vmax.f32 %v367, 0.0
      %v432 = vmax.f32 %v368, 0.0
      %v433 = vmax.f32 %v369, 0.0
      %v434 = vmax.f32 %v370, 0.0
      %v435 = vmax.f32 %v371, 0.0
      %v436 = vmax.f32 %v372, 0.0
      %v437 = vmax.f32 %v373, 0.0
      %v438 = vmax.f32 %v374, 0.0
      %v439 = vmax.f32 %v375, 0.0
      %v440 = vmax.f32 %v376, 0.0
      %v441 = vmax.f32 %v377, 0.0
      %v442 = vmax.f32 %v378, 0.0
      %v443 = vmax.f32 %v379, 0.0
      %444 = vst [vmem:[%s172] sm:$0xff] %v380
      %445 = vst [vmem:[%s172 + $0x8] sm:$0xff] %v381
      %446 = vst [vmem:[%s172 + $0x10] sm:$0xff] %v382
      %447 = vst [vmem:[%s172 + $0x18] sm:$0xff] %v383
      %448 = vst [vmem:[%s172 + $0x20] sm:$0xff] %v384
      %449 = vst [vmem:[%s172 + $0x28] sm:$0xff] %v385
      %450 = vst [vmem:[%s172 + $0x30] sm:$0xff] %v386
      %451 = vst [vmem:[%s172 + $0x38] sm:$0xff] %v387
      %452 = vst [vmem:[%s172 + $0x40] sm:$0xff] %v388
      %453 = vst [vmem:[%s172 + $0x48] sm:$0xff] %v389
      %454 = vst [vmem:[%s172 + $0x50] sm:$0xff] %v390
      %455 = vst [vmem:[%s172 + $0x58] sm:$0xff] %v391
      %456 = vst [vmem:[%s172 + $0x60] sm:$0xff] %v392
      %457 = vst [vmem:[%s172 + $0x68] sm:$0xff] %v393
      %458 = vst [vmem:[%s172 + $0x70] sm:$0xff] %v394
      %459 = vst [vmem:[%s172 + $0x78] sm:$0xff] %v395
      %460 = vst [vmem:[%s172 + $0x80] sm:$0xff] %v396
      %461 = vst [vmem:[%s172 + $0x88] sm:$0xff] %v397
      %462 = vst [vmem:[%s172 + $0x90] sm:$0xff] %v398
      %463 = vst [vmem:[%s172 + $0x98] sm:$0xff] %v399
      %464 = vst [vmem:[%s172 + $0xa0] sm:$0xff] %v400
      %465 = vst [vmem:[%s172 + $0xa8] sm:$0xff] %v401
      %466 = vst [vmem:[%s172 + $0xb0] sm:$0xff] %v402
      %467 = vst [vmem:[%s172 + $0xb8] sm:$0xff] %v403
      %468 = vst [vmem:[%s172 + $0xc0] sm:$0xff] %v404
      %469 = vst [vmem:[%s172 + $0xc8] sm:$0xff] %v405
      %470 = vst [vmem:[%s172 + $0xd0] sm:$0xff] %v406
      %471 = vst [vmem:[%s172 + $0xd8] sm:$0xff] %v407
      %472 = vst [vmem:[%s172 + $0xe0] sm:$0xff] %v408
      %473 = vst [vmem:[%s172 + $0xe8] sm:$0xff] %v409
      %474 = vst [vmem:[%s172 + $0xf0] sm:$0xff] %v410
      %475 = vst [vmem:[%s172 + $0xf8] sm:$0xff] %v411
      %476 = vst [vmem:[%s172 + $0x100] sm:$0xff] %v412
      %477 = vst [vmem:[%s172 + $0x108] sm:$0xff] %v413
      %478 = vst [vmem:[%s172 + $0x110] sm:$0xff] %v414
      %479 = vst [vmem:[%s172 + $0x118] sm:$0xff] %v415
      %480 = vst [vmem:[%s172 + $0x120] sm:$0xff] %v416
      %481 = vst [vmem:[%s172 + $0x128] sm:$0xff] %v417
      %482 = vst [vmem:[%s172 + $0x130] sm:$0xff] %v418
      %483 = vst [vmem:[%s172 + $0x138] sm:$0xff] %v419
      %484 = vst [vmem:[%s172 + $0x140] sm:$0xff] %v420
      %485 = vst [vmem:[%s172 + $0x148] sm:$0xff] %v421
      %486 = vst [vmem:[%s172 + $0x150] sm:$0xff] %v422
      %487 = vst [vmem:[%s172 + $0x158] sm:$0xff] %v423
      %488 = vst [vmem:[%s172 + $0x160] sm:$0xff] %v424
      %489 = vst [vmem:[%s172 + $0x168] sm:$0xff] %v425
      %490 = vst [vmem:[%s172 + $0x170] sm:$0xff] %v426
      %491 = vst [vmem:[%s172 + $0x178] sm:$0xff] %v427
      %492 = vst [vmem:[%s172 + $0x180] sm:$0xff] %v428
      %493 = vst [vmem:[%s172 + $0x188] sm:$0xff] %v429
      %494 = vst [vmem:[%s172 + $0x190] sm:$0xff] %v430
      %495 = vst [vmem:[%s172 + $0x198] sm:$0xff] %v431
      %496 = vst [vmem:[%s172 + $0x1a0] sm:$0xff] %v432
      %497 = vst [vmem:[%s172 + $0x1a8] sm:$0xff] %v433
      %498 = vst [vmem:[%s172 + $0x1b0] sm:$0xff] %v434
      %499 = vst [vmem:[%s172 + $0x1b8] sm:$0xff] %v435
      %500 = vst [vmem:[%s172 + $0x1c0] sm:$0xff] %v436
      %501 = vst [vmem:[%s172 + $0x1c8] sm:$0xff] %v437
      %502 = vst [vmem:[%s172 + $0x1d0] sm:$0xff] %v438
      %503 = vst [vmem:[%s172 + $0x1d8] sm:$0xff] %v439
      %504 = vst [vmem:[%s172 + $0x1e0] sm:$0xff] %v440
      %505 = vst [vmem:[%s172 + $0x1e8] sm:$0xff] %v441
      %506 = vst [vmem:[%s172 + $0x1f0] sm:$0xff] %v442
      %507 = vst [vmem:[%s172 + $0x1f8] sm:$0xff] %v443
      %s508 = smul.u32 64, %s14
      %p509 = scmp.lt.s32.totalorder %s508, 255
      %s510 = scalar_select %p509, %s508, 255
      %s511 = smul.addr %s510, 8
      %s512 = scalar_lea.vmem %s3, %s511
      // Predicated region
      $region33: #{forward.13} parent=31 // pred_check
        %p513 = pneg %p100
      $region34: #{forward.13} parent=31 // pred_check_branch
        %515 = sbr.rel (%p513) target = $region36
      $region35: #{forward.13} parent=31 // pred_region
        %s516 = smul.u32 64, %s14
      $region36: #{forward.13} parent=31 // pred_fallthru
        _
    $region32: #{forward.13} parent=5 // pred_fallthru
      _
    %p517 = scmp.le.s32.totalorder 2, %s9
    // Predicated region
    $region37: #{forward.13} parent=5 // pred_check
      %p518 = pneg %p517
    $region38: #{forward.13} parent=5 // pred_check_branch
      %520 = sbr.rel (%p518) target = $region40
    $region39: #{forward.13} parent=5 // pred_region
      %s521 = ssub.s32 %s9, 2
      // Predicated region
      $region41: #{forward.13} parent=39 // pred_check
        %p522 = pneg %p106
      $region42: #{forward.13} parent=39 // pred_check_branch
        %524 = sbr.rel (%p522) target = $region44
      $region43: #{forward.13} parent=39 // pred_region
        %s525 = smul.u32 64, %s15
        %p526 = scmp.lt.s32.totalorder %s525, 255
        %s527 = scalar_select %p526, %s525, 255
        %s528 = smul.addr %s527, 8
        %s529 = scalar_lea.vmem %s3, %s528
      $region44: #{forward.13} parent=39 // pred_fallthru
        _
    $region40: #{forward.13} parent=5 // pred_fallthru
      _
  $region6: #{forward.13} parent=0 // loop_footer
    %s13 = sadd.s32 1, %s9
  $region7: #{forward.13} parent=0 // loop_footer_branch
    %8 = sbr.rel target = $region3
  $region8: #{forward.13} parent=0 // loop_exit
    _

// kernel: forward.12
$region0: #{forward.12}
  #allocation0 [shape = 'u32[]', space=smem, size = 0x4, offset = 0x4, fixed_abs, tag = 'smem constant byte address 0x4 - core index']
  #allocation1 [shape = 'u32[144,128]{1,0:T(1,128)}', space=vmem, size = 0x12000, scoped, tag = 'internal scratch']
  %s0 = inlined_call_operand.vmem [shape: f32[2048,144], index: 0, kind: input, shape index: {}]
  %s1 = inlined_call_operand.vmem [shape: f32[144,128], index: 1, kind: input, shape index: {}]
  %s2 = inlined_call_operand.vmem [shape: f32[2048,128], index: 2, kind: output, shape index: {0}]
  %s3 = inlined_call_operand.vmem [shape: f32[32,128], index: 3, kind: output, shape index: {1}]
  %4 = xla_tuple %s2, %s3
  %s5 = sld [smem:[#allocation0]]
  $region49: #{forward.12} parent=0
    _
  %s7 = ssub.s32 1, %s5
  %s8 = scalar_select 0, %s7, %s5
  loop: start=0, step=1, limit=6
  $region2: #{forward.12} parent=0 // loop_pre_header
    _
  $region3: #{forward.12} parent=0 // loop_header
    %s10 = sphi 0, %s14
    %p11 = scmp.ge.s32.totalorder %s10, 6
    %s20 = sphi 0, %s22
    %s23 = sphi 0, %s20
    %s24 = sphi 0, %s23
    %s40 = sphi 0, %s24
    %s44 = sphi 0, %s44
    %s46 = sphi 0, %s44
    %s47 = sphi 0, %s46
    %s61 = sphi 0, %s47
    %s67 = sphi 0, %s69
    %s70 = sphi 0, %s67
    %s71 = sphi 0, %s70
    %s87 = sphi 0, %s71
    %s93 = sphi 0, %s95
    %s96 = sphi 0, %s93
    %s97 = sphi 0, %s96
    %s113 = sphi 0, %s97
  $region4: #{forward.12} parent=0 // loop_header_branch
    %13 = sbr.rel (%p11) target = $region8
  $region5: #{forward.12} parent=0 // loop_body
    %s15 = ssub.s32 %s10, 1
    %s16 = ssub.s32 %s10, 2
    %s17 = sadd.s32 %s10, 1
    %s18 = ssub.s32 %s10, %s17
    %p19 = scmp.eq.s32.totalorder %s18, 0
    %s21 = sadd.s32 %s20, 1
    %s22 = scalar_select %p19, %s20, %s21
    %p25 = pneg %p19
    %p26 = scmp.eq.s32.totalorder %s10, 3
    %p27 = por %p25, %p26
    %p28 = scmp.ne.s32.totalorder %s20, %s23
    %p29 = scmp.eq.s32.totalorder %s10, 0
    %p30 = por %p28, %p29
    %p31 = scmp.ne.s32.totalorder %s20, %s23
    %p32 = scmp.eq.s32.totalorder %s15, 3
    %p33 = por %p31, %p32
    %p34 = scmp.ne.s32.totalorder %s23, %s24
    %p35 = scmp.eq.s32.totalorder %s15, 0
    %p36 = por %p34, %p35
    %p37 = scmp.ne.s32.totalorder %s23, %s24
    %p38 = scmp.eq.s32.totalorder %s16, 3
    %p39 = por %p37, %p38
    %p41 = scmp.ne.s32.totalorder %s24, %s40
    %p42 = scmp.eq.s32.totalorder %s16, 0
    %p43 = por %p41, %p42
    %s45 = sadd.s32 %s44, 1
    %p48 = scmp.eq.s32.totalorder %s10, 3
    %p49 = scmp.ne.s32.totalorder %s44, %s46
    %p50 = scmp.eq.s32.totalorder %s10, 0
    %p51 = por %p49, %p50
    %p52 = scmp.ne.s32.totalorder %s44, %s46
    %p53 = scmp.eq.s32.totalorder %s15, 3
    %p54 = por %p52, %p53
    %p55 = scmp.ne.s32.totalorder %s46, %s47
    %p56 = scmp.eq.s32.totalorder %s15, 0
    %p57 = por %p55, %p56
    %p58 = scmp.ne.s32.totalorder %s46, %s47
    %p59 = scmp.eq.s32.totalorder %s16, 3
    %p60 = por %p58, %p59
    %p62 = scmp.ne.s32.totalorder %s47, %s61
    %p63 = scmp.eq.s32.totalorder %s16, 0
    %p64 = por %p62, %p63
    %s65 = ssub.s32 %s10, %s17
    %p66 = scmp.eq.s32.totalorder %s65, 0
    %s68 = sadd.s32 %s67, 1
    %s69 = scalar_select %p66, %s67, %s68
    %p72 = pneg %p66
    %p73 = scmp.eq.s32.totalorder %s10, 3
    %p74 = por %p72, %p73
    %p75 = scmp.ne.s32.totalorder %s67, %s70
    %p76 = scmp.eq.s32.totalorder %s10, 0
    %p77 = por %p75, %p76
    %p78 = scmp.ne.s32.totalorder %s67, %s70
    %p79 = scmp.eq.s32.totalorder %s15, 3
    %p80 = por %p78, %p79
    %p81 = scmp.ne.s32.totalorder %s70, %s71
    %p82 = scmp.eq.s32.totalorder %s15, 0
    %p83 = por %p81, %p82
    %p84 = scmp.ne.s32.totalorder %s70, %s71
    %p85 = scmp.eq.s32.totalorder %s16, 3
    %p86 = por %p84, %p85
    %p88 = scmp.ne.s32.totalorder %s71, %s87
    %p89 = scmp.eq.s32.totalorder %s16, 0
    %p90 = por %p88, %p89
    %s91 = ssub.s32 %s10, %s17
    %p92 = scmp.eq.s32.totalorder %s91, 0
    %s94 = sadd.s32 %s93, 1
    %s95 = scalar_select %p92, %s93, %s94
    %p98 = pneg %p92
    %p99 = scmp.eq.s32.totalorder %s10, 3
    %p100 = por %p98, %p99
    %p101 = scmp.ne.s32.totalorder %s93, %s96
    %p102 = scmp.eq.s32.totalorder %s10, 0
    %p103 = por %p101, %p102
    %p104 = scmp.ne.s32.totalorder %s93, %s96
    %p105 = scmp.eq.s32.totalorder %s15, 3
    %p106 = por %p104, %p105
    %p107 = scmp.ne.s32.totalorder %s96, %s97
    %p108 = scmp.eq.s32.totalorder %s15, 0
    %p109 = por %p107, %p108
    %p110 = scmp.ne.s32.totalorder %s96, %s97
    %p111 = scmp.eq.s32.totalorder %s16, 3
    %p112 = por %p110, %p111
    %p114 = scmp.ne.s32.totalorder %s97, %s113
    %p115 = scmp.eq.s32.totalorder %s16, 0
    %p116 = por %p114, %p115
    %p117 = scmp.le.s32.totalorder 1, %s10
    %p118 = scmp.lt.s32.totalorder %s10, 5
    %p119 = pnand %p117, %p118
    %p120 = pneg %p119
    // Predicated region
    $region9: #{forward.12} parent=5 // pred_check
      _
    $region10: #{forward.12} parent=5 // pred_check_branch
      %122 = sbr.rel (%p119) target = $region12
    $region11: #{forward.12} parent=5 // pred_region
      %s123 = ssub.s32 %s10, 1
      // Predicated region
      $region13: #{forward.12} parent=11 // pred_check
        %p124 = pneg %p57
      $region14: #{forward.12} parent=11 // pred_check_branch
        %126 = sbr.rel (%p124) target = $region16
      $region15: #{forward.12} parent=11 // pred_region
        _
      $region16: #{forward.12} parent=11 // pred_fallthru
        _
    $region12: #{forward.12} parent=5 // pred_fallthru
      _
    %p127 = scmp.lt.s32.totalorder %s10, 4
    // Predicated region
    $region17: #{forward.12} parent=5 // pred_check
      %p128 = pneg %p127
    $region18: #{forward.12} parent=5 // pred_check_branch
      %130 = sbr.rel (%p128) target = $region20
    $region19: #{forward.12} parent=5 // pred_region
      // Predicated region
      $region21: #{forward.12} parent=19 // pred_check
        %p131 = pneg %p30
      $region22: #{forward.12} parent=19 // pred_check_branch
        %133 = sbr.rel (%p131) target = $region24
      $region23: #{forward.12} parent=19 // pred_region
        %s134 = smul.u32 64, %s10
        %p135 = scmp.lt.s32.totalorder %s134, 255
        %s136 = scalar_select %p135, %s134, 255
        %s137 = smul.addr %s136, 2
        %s138 = smul.addr %s137, 8
        %s139 = scalar_lea.vmem %s0, %s138
        %s140 = smul.u32 64, %s10
      $region24: #{forward.12} parent=19 // pred_fallthru
        _
    $region20: #{forward.12} parent=5 // pred_fallthru
      _
    %p141 = scmp.le.s32.totalorder 1, %s10
    %p142 = scmp.lt.s32.totalorder %s10, 5
    %p143 = pnand %p141, %p142
    %p144 = pneg %p143
    // Predicated region
    $region25: #{forward.12} parent=5 // pred_check
      _
    $region26: #{forward.12} parent=5 // pred_check_branch
      %146 = sbr.rel (%p143) target = $region28
    $region27: #{forward.12} parent=5 // pred_region
      %s147 = ssub.s32 %s10, 1
      %s148 = smul.u32 64, %s15
      %p149 = scmp.lt.s32.totalorder %s148, 255
      %s150 = scalar_select %p149, %s148, 255
      %s151 = smul.addr %s150, 2
      %s152 = smul.addr %s151, 8
      %s153 = scalar_lea.vmem %s0, %s152
      %p154 = pneg %p36
      %p155 = pneg %p33
      %p156 = pneg %p57
      %p157 = pneg %p54
      %p158 = pneg %p83
      %p159 = pneg %p80
      %s160 = smul.u32 64, %s15
      %p161 = scmp.lt.s32.totalorder %s160, 255
      %s162 = scalar_select %p161, %s160, 255
      %s163 = smul.addr %s162, 8
      %s164 = scalar_lea.vmem %s2, %s163
      %p165 = pneg %p109
      %p166 = pneg %p106
      %p167 = scmp.lt.s32.totalorder %s15, 3
      %s168 = scalar_select %p167, %s15, 3
      %s169 = smul.addr %s168, 8
      %s170 = scalar_lea.vmem %s3, %s169
      %s171 = smul.u32 64, %s15
      %p172 = scmp.lt.s32.totalorder %s171, 255
      %s173 = scalar_select %p172, %s171, 255
      %s174 = smul.addr %s173, 2
      %s175 = smul.addr %s174, 8
      %s176 = scalar_lea.vmem %s0, %s175
      %s177 = smul.u32 64, %s15
      %s178 = smul.u32 64, %s15
      %p179 = scmp.lt.s32.totalorder %s178, 255
      %s180 = scalar_select %p179, %s178, 255
      %s181 = smul.addr %s180, 8
      %s182 = scalar_lea.vmem %s2, %s181
      %s183 = smul.u32 64, %s15
      %p184 = scmp.lt.s32.totalorder %s15, 3
      %s185 = scalar_select %p184, %s15, 3
      %s186 = smul.addr %s185, 8
      %s187 = scalar_lea.vmem %s3, %s186
      %v188 = vld [vmem:[%s176] sm:$0xff]
      %v189 = vld [vmem:[%s176 + $0x8] sm:$0xff]
      %v190 = vld [vmem:[%s176 + $0x10] sm:$0xff]
      %v191 = vld [vmem:[%s176 + $0x18] sm:$0xff]
      %v192 = vld [vmem:[%s176 + $0x20] sm:$0xff]
      %v193 = vld [vmem:[%s176 + $0x28] sm:$0xff]
      %v194 = vld [vmem:[%s176 + $0x30] sm:$0xff]
      %v195 = vld [vmem:[%s176 + $0x38] sm:$0xff]
      %v196 = vld [vmem:[%s176 + $0x40] sm:$0xff]
      %v197 = vld [vmem:[%s176 + $0x48] sm:$0xff]
      %v198 = vld [vmem:[%s176 + $0x50] sm:$0xff]
      %v199 = vld [vmem:[%s176 + $0x58] sm:$0xff]
      %v200 = vld [vmem:[%s176 + $0x60] sm:$0xff]
      %v201 = vld [vmem:[%s176 + $0x68] sm:$0xff]
      %v202 = vld [vmem:[%s176 + $0x70] sm:$0xff]
      %v203 = vld [vmem:[%s176 + $0x78] sm:$0xff]
      %v204 = vld [vmem:[%s176 + $0x80] sm:$0xff]
      %v205 = vld [vmem:[%s176 + $0x88] sm:$0xff]
      %v206 = vld [vmem:[%s176 + $0x90] sm:$0xff]
      %v207 = vld [vmem:[%s176 + $0x98] sm:$0xff]
      %v208 = vld [vmem:[%s176 + $0xa0] sm:$0xff]
      %v209 = vld [vmem:[%s176 + $0xa8] sm:$0xff]
      %v210 = vld [vmem:[%s176 + $0xb0] sm:$0xff]
      %v211 = vld [vmem:[%s176 + $0xb8] sm:$0xff]
      %v212 = vld [vmem:[%s176 + $0xc0] sm:$0xff]
      %v213 = vld [vmem:[%s176 + $0xc8] sm:$0xff]
      %v214 = vld [vmem:[%s176 + $0xd0] sm:$0xff]
      %v215 = vld [vmem:[%s176 + $0xd8] sm:$0xff]
      %v216 = vld [vmem:[%s176 + $0xe0] sm:$0xff]
      %v217 = vld [vmem:[%s176 + $0xe8] sm:$0xff]
      %v218 = vld [vmem:[%s176 + $0xf0] sm:$0xff]
      %v219 = vld [vmem:[%s176 + $0xf8] sm:$0xff]
      %v220 = vld [vmem:[%s176 + $0x100] sm:$0xff]
      %v221 = vld [vmem:[%s176 + $0x108] sm:$0xff]
      %v222 = vld [vmem:[%s176 + $0x110] sm:$0xff]
      %v223 = vld [vmem:[%s176 + $0x118] sm:$0xff]
      %v224 = vld [vmem:[%s176 + $0x120] sm:$0xff]
      %v225 = vld [vmem:[%s176 + $0x128] sm:$0xff]
      %v226 = vld [vmem:[%s176 + $0x130] sm:$0xff]
      %v227 = vld [vmem:[%s176 + $0x138] sm:$0xff]
      %v228 = vld [vmem:[%s176 + $0x140] sm:$0xff]
      %v229 = vld [vmem:[%s176 + $0x148] sm:$0xff]
      %v230 = vld [vmem:[%s176 + $0x150] sm:$0xff]
      %v231 = vld [vmem:[%s176 + $0x158] sm:$0xff]
      %v232 = vld [vmem:[%s176 + $0x160] sm:$0xff]
      %v233 = vld [vmem:[%s176 + $0x168] sm:$0xff]
      %v234 = vld [vmem:[%s176 + $0x170] sm:$0xff]
      %v235 = vld [vmem:[%s176 + $0x178] sm:$0xff]
      %v236 = vld [vmem:[%s176 + $0x180] sm:$0xff]
      %v237 = vld [vmem:[%s176 + $0x188] sm:$0xff]
      %v238 = vld [vmem:[%s176 + $0x190] sm:$0xff]
      %v239 = vld [vmem:[%s176 + $0x198] sm:$0xff]
      %v240 = vld [vmem:[%s176 + $0x1a0] sm:$0xff]
      %v241 = vld [vmem:[%s176 + $0x1a8] sm:$0xff]
      %v242 = vld [vmem:[%s176 + $0x1b0] sm:$0xff]
      %v243 = vld [vmem:[%s176 + $0x1b8] sm:$0xff]
      %v244 = vld [vmem:[%s176 + $0x1c0] sm:$0xff]
      %v245 = vld [vmem:[%s176 + $0x1c8] sm:$0xff]
      %v246 = vld [vmem:[%s176 + $0x1d0] sm:$0xff]
      %v247 = vld [vmem:[%s176 + $0x1d8] sm:$0xff]
      %v248 = vld [vmem:[%s176 + $0x1e0] sm:$0xff]
      %v249 = vld [vmem:[%s176 + $0x1e8] sm:$0xff]
      %v250 = vld [vmem:[%s176 + $0x1f0] sm:$0xff]
      %v251 = vld [vmem:[%s176 + $0x1f8] sm:$0xff]
      %v252 = vld [vmem:[%s176 + $0x200] sm:$0xff]
      %v253 = vld [vmem:[%s176 + $0x208] sm:$0xff]
      %v254 = vld [vmem:[%s176 + $0x210] sm:$0xff]
      %v255 = vld [vmem:[%s176 + $0x218] sm:$0xff]
      %v256 = vld [vmem:[%s176 + $0x220] sm:$0xff]
      %v257 = vld [vmem:[%s176 + $0x228] sm:$0xff]
      %v258 = vld [vmem:[%s176 + $0x230] sm:$0xff]
      %v259 = vld [vmem:[%s176 + $0x238] sm:$0xff]
      %v260 = vld [vmem:[%s176 + $0x240] sm:$0xff]
      %v261 = vld [vmem:[%s176 + $0x248] sm:$0xff]
      %v262 = vld [vmem:[%s176 + $0x250] sm:$0xff]
      %v263 = vld [vmem:[%s176 + $0x258] sm:$0xff]
      %v264 = vld [vmem:[%s176 + $0x260] sm:$0xff]
      %v265 = vld [vmem:[%s176 + $0x268] sm:$0xff]
      %v266 = vld [vmem:[%s176 + $0x270] sm:$0xff]
      %v267 = vld [vmem:[%s176 + $0x278] sm:$0xff]
      %v268 = vld [vmem:[%s176 + $0x280] sm:$0xff]
      %v269 = vld [vmem:[%s176 + $0x288] sm:$0xff]
      %v270 = vld [vmem:[%s176 + $0x290] sm:$0xff]
      %v271 = vld [vmem:[%s176 + $0x298] sm:$0xff]
      %v272 = vld [vmem:[%s176 + $0x2a0] sm:$0xff]
      %v273 = vld [vmem:[%s176 + $0x2a8] sm:$0xff]
      %v274 = vld [vmem:[%s176 + $0x2b0] sm:$0xff]
      %v275 = vld [vmem:[%s176 + $0x2b8] sm:$0xff]
      %v276 = vld [vmem:[%s176 + $0x2c0] sm:$0xff]
      %v277 = vld [vmem:[%s176 + $0x2c8] sm:$0xff]
      %v278 = vld [vmem:[%s176 + $0x2d0] sm:$0xff]
      %v279 = vld [vmem:[%s176 + $0x2d8] sm:$0xff]
      %v280 = vld [vmem:[%s176 + $0x2e0] sm:$0xff]
      %v281 = vld [vmem:[%s176 + $0x2e8] sm:$0xff]
      %v282 = vld [vmem:[%s176 + $0x2f0] sm:$0xff]
      %v283 = vld [vmem:[%s176 + $0x2f8] sm:$0xff]
      %v284 = vld [vmem:[%s176 + $0x300] sm:$0xff]
      %v285 = vld [vmem:[%s176 + $0x308] sm:$0xff]
      %v286 = vld [vmem:[%s176 + $0x310] sm:$0xff]
      %v287 = vld [vmem:[%s176 + $0x318] sm:$0xff]
      %v288 = vld [vmem:[%s176 + $0x320] sm:$0xff]
      %v289 = vld [vmem:[%s176 + $0x328] sm:$0xff]
      %v290 = vld [vmem:[%s176 + $0x330] sm:$0xff]
      %v291 = vld [vmem:[%s176 + $0x338] sm:$0xff]
      %v292 = vld [vmem:[%s176 + $0x340] sm:$0xff]
      %v293 = vld [vmem:[%s176 + $0x348] sm:$0xff]
      %v294 = vld [vmem:[%s176 + $0x350] sm:$0xff]
      %v295 = vld [vmem:[%s176 + $0x358] sm:$0xff]
      %v296 = vld [vmem:[%s176 + $0x360] sm:$0xff]
      %v297 = vld [vmem:[%s176 + $0x368] sm:$0xff]
      %v298 = vld [vmem:[%s176 + $0x370] sm:$0xff]
      %v299 = vld [vmem:[%s176 + $0x378] sm:$0xff]
      %v300 = vld [vmem:[%s176 + $0x380] sm:$0xff]
      %v301 = vld [vmem:[%s176 + $0x388] sm:$0xff]
      %v302 = vld [vmem:[%s176 + $0x390] sm:$0xff]
      %v303 = vld [vmem:[%s176 + $0x398] sm:$0xff]
      %v304 = vld [vmem:[%s176 + $0x3a0] sm:$0xff]
      %v305 = vld [vmem:[%s176 + $0x3a8] sm:$0xff]
      %v306 = vld [vmem:[%s176 + $0x3b0] sm:$0xff]
      %v307 = vld [vmem:[%s176 + $0x3b8] sm:$0xff]
      %v308 = vld [vmem:[%s176 + $0x3c0] sm:$0xff]
      %v309 = vld [vmem:[%s176 + $0x3c8] sm:$0xff]
      %v310 = vld [vmem:[%s176 + $0x3d0] sm:$0xff]
      %v311 = vld [vmem:[%s176 + $0x3d8] sm:$0xff]
      %v312 = vld [vmem:[%s176 + $0x3e0] sm:$0xff]
      %v313 = vld [vmem:[%s176 + $0x3e8] sm:$0xff]
      %v314 = vld [vmem:[%s176 + $0x3f0] sm:$0xff]
      %v315 = vld [vmem:[%s176 + $0x3f8] sm:$0xff]
      %v316 = vld [vmem:[%s1] sm:$0xff]
      %v317 = vld [vmem:[%s1 + $0x8] sm:$0xff]
      %v318 = vld [vmem:[%s1 + $0x10] sm:$0xff]
      %v319 = vld [vmem:[%s1 + $0x18] sm:$0xff]
      %v320 = vld [vmem:[%s1 + $0x20] sm:$0xff]
      %v321 = vld [vmem:[%s1 + $0x28] sm:$0xff]
      %v322 = vld [vmem:[%s1 + $0x30] sm:$0xff]
      %v323 = vld [vmem:[%s1 + $0x38] sm:$0xff]
      %v324 = vld [vmem:[%s1 + $0x40] sm:$0xff]
      %v325 = vld [vmem:[%s1 + $0x48] sm:$0xff]
      %v326 = vld [vmem:[%s1 + $0x50] sm:$0xff]
      %v327 = vld [vmem:[%s1 + $0x58] sm:$0xff]
      %v328 = vld [vmem:[%s1 + $0x60] sm:$0xff]
      %v329 = vld [vmem:[%s1 + $0x68] sm:$0xff]
      %v330 = vld [vmem:[%s1 + $0x70] sm:$0xff]
      %v331 = vld [vmem:[%s1 + $0x78] sm:$0xff]
      %v332 = vld [vmem:[%s1 + $0x80] sm:$0xff]
      %v333 = vld [vmem:[%s1 + $0x88] sm:$0xff]
      %vm334 = vcmask 130048
      %v336 = vsel %vm334, %v189, 0
      %v339 = vsel %vm334, %v191, 0
      %v342 = vsel %vm334, %v193, 0
      %v345 = vsel %vm334, %v195, 0
      %v348 = vsel %vm334, %v197, 0
      %v351 = vsel %vm334, %v199, 0
      %v354 = vsel %vm334, %v201, 0
      %v357 = vsel %vm334, %v203, 0
      %v360 = vsel %vm334, %v205, 0
      %v363 = vsel %vm334, %v207, 0
      %v366 = vsel %vm334, %v209, 0
      %v369 = vsel %vm334, %v211, 0
      %v372 = vsel %vm334, %v213, 0
      %v375 = vsel %vm334, %v215, 0
      %v378 = vsel %vm334, %v217, 0
      %v381 = vsel %vm334, %v219, 0
      %v384 = vsel %vm334, %v221, 0
      %v387 = vsel %vm334, %v223, 0
      %v390 = vsel %vm334, %v225, 0
      %v393 = vsel %vm334, %v227, 0
      %v396 = vsel %vm334, %v229, 0
      %v399 = vsel %vm334, %v231, 0
      %v402 = vsel %vm334, %v233, 0
      %v405 = vsel %vm334, %v235, 0
      %v408 = vsel %vm334, %v237, 0
      %v411 = vsel %vm334, %v239, 0
      %v414 = vsel %vm334, %v241, 0
      %v417 = vsel %vm334, %v243, 0
      %v420 = vsel %vm334, %v245, 0
      %v423 = vsel %vm334, %v247, 0
      %v426 = vsel %vm334, %v249, 0
      %v429 = vsel %vm334, %v251, 0
      %v432 = vsel %vm334, %v253, 0
      %v435 = vsel %vm334, %v255, 0
      %v438 = vsel %vm334, %v257, 0
      %v441 = vsel %vm334, %v259, 0
      %v444 = vsel %vm334, %v261, 0
      %v447 = vsel %vm334, %v263, 0
      %v450 = vsel %vm334, %v265, 0
      %v453 = vsel %vm334, %v267, 0
      %v456 = vsel %vm334, %v269, 0
      %v459 = vsel %vm334, %v271, 0
      %v462 = vsel %vm334, %v273, 0
      %v465 = vsel %vm334, %v275, 0
      %v468 = vsel %vm334, %v277, 0
      %v471 = vsel %vm334, %v279, 0
      %v474 = vsel %vm334, %v281, 0
      %v477 = vsel %vm334, %v283, 0
      %v480 = vsel %vm334, %v285, 0
      %v483 = vsel %vm334, %v287, 0
      %v486 = vsel %vm334, %v289, 0
      %v489 = vsel %vm334, %v291, 0
      %v492 = vsel %vm334, %v293, 0
      %v495 = vsel %vm334, %v295, 0
      %v498 = vsel %vm334, %v297, 0
      %v501 = vsel %vm334, %v299, 0
      %v504 = vsel %vm334, %v301, 0
      %v507 = vsel %vm334, %v303, 0
      %v510 = vsel %vm334, %v305, 0
      %v513 = vsel %vm334, %v307, 0
      %v516 = vsel %vm334, %v309, 0
      %v519 = vsel %vm334, %v311, 0
      %v522 = vsel %vm334, %v313, 0
      %v525 = vsel %vm334, %v315, 0
      %527 = vmatprep.subr.mxu0 0.0
      %528 = vmatpush1.msra.mxu0 %v316
      %529 = vmatprep.subr.mxu0 0.0
      %530 = vmatpush1.msra.mxu0 %v317
      %531 = vmatprep.subr.mxu0 0.0
      %532 = vmatpush1.msra.mxu0 %v318
      %533 = vmatprep.subr.mxu0 0.0
      %534 = vmatpush1.msra.mxu0 %v319
      %535 = vmatprep.subr.mxu0 0.0
      %536 = vmatpush1.msra.mxu0 %v320
      %537 = vmatprep.subr.mxu0 0.0
      %538 = vmatpush1.msra.mxu0 %v321
      %539 = vmatprep.subr.mxu0 0.0
      %540 = vmatpush1.msra.mxu0 %v322
      %541 = vmatprep.subr.mxu0 0.0
      %542 = vmatpush1.msra.mxu0 %v323
      %543 = vmatprep.subr.mxu0 0.0
      %544 = vmatpush1.msra.mxu0 %v324
      %545 = vmatprep.subr.mxu0 0.0
      %546 = vmatpush1.msra.mxu0 %v325
      %547 = vmatprep.subr.mxu0 0.0
      %548 = vmatpush1.msra.mxu0 %v326
      %549 = vmatprep.subr.mxu0 0.0
      %550 = vmatpush1.msra.mxu0 %v327
      %551 = vmatprep.subr.mxu0 0.0
      %552 = vmatpush1.msra.mxu0 %v328
      %553 = vmatprep.subr.mxu0 0.0
      %554 = vmatpush1.msra.mxu0 %v329
      %555 = vmatprep.subr.mxu0 0.0
      %556 = vmatpush1.msra.mxu0 %v330
      %557 = vmatprep.subr.mxu0 0.0
      %558 = vmatpush1.msra.mxu0 %v331
      %559 = vmatprep.subr.mxu0 0.0
      %560 = vmatpush1.msra.mxu0 %v332
      %561 = vmatprep.subr.mxu0 0.0
      %562 = vmatpush1.msra.mxu0 %v333
      %563 = vmatprep.subr.mxu0 0.0
      %564 = vmatpush1.msra.mxu0 0.0
      %565 = vmatprep.subr.mxu0 0.0
      %566 = vmatpush1.msra.mxu0 0.0
      %567 = vmatprep.subr.mxu0 0.0
      %568 = vmatpush1.msra.mxu0 0.0
      %569 = vmatprep.subr.mxu0 0.0
      %570 = vmatpush1.msra.mxu0 0.0
      %571 = vmatprep.subr.mxu0 0.0
      %572 = vmatpush1.msra.mxu0 0.0
      %573 = vmatprep.subr.mxu0 0.0
      %574 = vmatpush1.msra.mxu0 0.0
      %575 = vmatprep.subr.mxu0 0.0
      %576 = vmatpush1.msra.mxu0 0.0
      %577 = vmatprep.subr.mxu0 0.0
      %578 = vmatpush1.msra.mxu0 0.0
      %579 = vmatprep.subr.mxu0 0.0
      %580 = vmatpush1.msra.mxu0 0.0
      %581 = vmatprep.subr.mxu0 0.0
      %582 = vmatpush1.msra.mxu0 0.0
      %583 = vmatprep.subr.mxu0 0.0
      %584 = vmatpush1.msra.mxu0 0.0
      %585 = vmatprep.subr.mxu0 0.0
      %586 = vmatpush1.msra.mxu0 0.0
      %587 = vmatprep.subr.mxu0 0.0
      %588 = vmatpush1.msra.mxu0 0.0
      %589 = vmatprep.subr.mxu0 0.0
      %590 = vmatpush1.msra.mxu0 0.0
      %591 = vmatprep.mubr.f32.mxu0 %v336
      %592 = vmatmul.mubr.f32.gmra.mrb[0].mxu0 %v188
      %v593 = vpop.f32.mrb[0].mxu0
      %v594 = vadd.f32 0.0, %v593
      %v595 = vpop.f32.mrb[0].mxu0
      %596 = vmatprep.mubr.f32.mxu0 %v339
      %597 = vmatmul.mubr.f32.gmra.mrb[0].mxu0 %v190
      %v598 = vpop.f32.mrb[0].mxu0
      %v599 = vadd.f32 0.0, %v598
      %v600 = vpop.f32.mrb[0].mxu0
      %601 = vmatprep.mubr.f32.mxu0 %v342
      %602 = vmatmul.mubr.f32.gmra.mrb[0].mxu0 %v192
      %v603 = vpop.f32.mrb[0].mxu0
      %v604 = vadd.f32 0.0, %v603
      %v605 = vpop.f32.mrb[0].mxu0
      %606 = vmatprep.mubr.f32.mxu0 %v345
      %607 = vmatmul.mubr.f32.gmra.mrb[0].mxu0 %v194
      %v608 = vpop.f32.mrb[0].mxu0
      %v609 = vadd.f32 0.0, %v608
      %v610 = vpop.f32.mrb[0].mxu0
      %611 = vmatprep.mubr.f32.mxu0 %v348
      %612 = vmatmul.mubr.f32.gmra.mrb[0].mxu0 %v196
      %v613 = vpop.f32.mrb[0].mxu0
      %v614 = vadd.f32 0.0, %v613
      %v615 = vpop.f32.mrb[0].mxu0
      %616 = vmatprep.mubr.f32.mxu0 %v351
      %617 = vmatmul.mubr.f32.gmra.mrb[0].mxu0 %v198
      %v618 = vpop.f32.mrb[0].mxu0
      %v619 = vadd.f32 0.0, %v618
      %v620 = vpop.f32.mrb[0].mxu0
      %621 = vmatprep.mubr.f32.mxu0 %v354
      %622 = vmatmul.mubr.f32.gmra.mrb[0].mxu0 %v200
      %v623 = vpop.f32.mrb[0].mxu0
      %v624 = vadd.f32 0.0, %v623
      %v625 = vpop.f32.mrb[0].mxu0
      %626 = vmatprep.mubr.f32.mxu0 %v357
      %627 = vmatmul.mubr.f32.gmra.mrb[0].mxu0 %v202
      %v628 = vpop.f32.mrb[0].mxu0
      %v629 = vadd.f32 0.0, %v628
      %v630 = vpop.f32.mrb[0].mxu0
      %631 = vmatprep.mubr.f32.mxu0 %v360
      %632 = vmatmul.mubr.f32.gmra.mrb[0].mxu0 %v204
      %v633 = vpop.f32.mrb[0].mxu0
      %v634 = vadd.f32 0.0, %v633
      %v635 = vpop.f32.mrb[0].mxu0
      %636 = vmatprep.mubr.f32.mxu0 %v363
      %637 = vmatmul.mubr.f32.gmra.mrb[0].mxu0 %v206
      %v638 = vpop.f32.mrb[0].mxu0
      %v639 = vadd.f32 0.0, %v638
      %v640 = vpop.f32.mrb[0].mxu0
      %641 = vmatprep.mubr.f32.mxu0 %v366
      %642 = vmatmul.mubr.f32.gmra.mrb[0].mxu0 %v208
      %v643 = vpop.f32.mrb[0].mxu0
      %v644 = vadd.f32 0.0, %v643
      %v645 = vpop.f32.mrb[0].mxu0
      %646 = vmatprep.mubr.f32.mxu0 %v369
      %647 = vmatmul.mubr.f32.gmra.mrb[0].mxu0 %v210
      %v648 = vpop.f32.mrb[0].mxu0
      %v649 = vadd.f32 0.0, %v648
      %v650 = vpop.f32.mrb[0].mxu0
      %651 = vmatprep.mubr.f32.mxu0 %v372
      %652 = vmatmul.mubr.f32.gmra.mrb[0].mxu0 %v212
      %v653 = vpop.f32.mrb[0].mxu0
      %v654 = vadd.f32 0.0, %v653
      %v655 = vpop.f32.mrb[0].mxu0
      %656 = vmatprep.mubr.f32.mxu0 %v375
      %657 = vmatmul.mubr.f32.gmra.mrb[0].mxu0 %v214
      %v658 = vpop.f32.mrb[0].mxu0
      %v659 = vadd.f32 0.0, %v658
      %v660 = vpop.f32.mrb[0].mxu0
      %661 = vmatprep.mubr.f32.mxu0 %v378
      %662 = vmatmul.mubr.f32.gmra.mrb[0].mxu0 %v216
      %v663 = vpop.f32.mrb[0].mxu0
      %v664 = vadd.f32 0.0, %v663
      %v665 = vpop.f32.mrb[0].mxu0
      %666 = vmatprep.mubr.f32.mxu0 %v381
      %667 = vmatmul.mubr.f32.gmra.mrb[0].mxu0 %v218
      %v668 = vpop.f32.mrb[0].mxu0
      %v669 = vadd.f32 0.0, %v668
      %v670 = vpop.f32.mrb[0].mxu0
      %671 = vmatprep.mubr.f32.mxu0 %v384
      %672 = vmatmul.mubr.f32.gmra.mrb[0].mxu0 %v220
      %v673 = vpop.f32.mrb[0].mxu0
      %v674 = vadd.f32 0.0, %v673
      %v675 = vpop.f32.mrb[0].mxu0
      %676 = vmatprep.mubr.f32.mxu0 %v387
      %677 = vmatmul.mubr.f32.gmra.mrb[0].mxu0 %v222
      %v678 = vpop.f32.mrb[0].mxu0
      %v679 = vadd.f32 0.0, %v678
      %v680 = vpop.f32.mrb[0].mxu0
      %681 = vmatprep.mubr.f32.mxu0 %v390
      %682 = vmatmul.mubr.f32.gmra.mrb[0].mxu0 %v224
      %v683 = vpop.f32.mrb[0].mxu0
      %v684 = vadd.f32 0.0, %v683
      %v685 = vpop.f32.mrb[0].mxu0
      %686 = vmatprep.mubr.f32.mxu0 %v393
      %687 = vmatmul.mubr.f32.gmra.mrb[0].mxu0 %v226
      %v688 = vpop.f32.mrb[0].mxu0
      %v689 = vadd.f32 0.0, %v688
      %v690 = vpop.f32.mrb[0].mxu0
      %691 = vmatprep.mubr.f32.mxu0 %v396
      %692 = vmatmul.mubr.f32.gmra.mrb[0].mxu0 %v228
      %v693 = vpop.f32.mrb[0].mxu0
      %v694 = vadd.f32 0.0, %v693
      %v695 = vpop.f32.mrb[0].mxu0
      %696 = vmatprep.mubr.f32.mxu0 %v399
      %697 = vmatmul.mubr.f32.gmra.mrb[0].mxu0 %v230
      %v698 = vpop.f32.mrb[0].mxu0
      %v699 = vadd.f32 0.0, %v698
      %v700 = vpop.f32.mrb[0].mxu0
      %701 = vmatprep.mubr.f32.mxu0 %v402
      %702 = vmatmul.mubr.f32.gmra.mrb[0].mxu0 %v232
      %v703 = vpop.f32.mrb[0].mxu0
      %v704 = vadd.f32 0.0, %v703
      %v705 = vpop.f32.mrb[0].mxu0
      %706 = vmatprep.mubr.f32.mxu0 %v405
      %707 = vmatmul.mubr.f32.gmra.mrb[0].mxu0 %v234
      %v708 = vpop.f32.mrb[0].mxu0
      %v709 = vadd.f32 0.0, %v708
      %v710 = vpop.f32.mrb[0].mxu0
      %711 = vmatprep.mubr.f32.mxu0 %v408
      %712 = vmatmul.mubr.f32.gmra.mrb[0].mxu0 %v236
      %v713 = vpop.f32.mrb[0].mxu0
      %v714 = vadd.f32 0.0, %v713
      %v715 = vpop.f32.mrb[0].mxu0
      %716 = vmatprep.mubr.f32.mxu0 %v411
      %717 = vmatmul.mubr.f32.gmra.mrb[0].mxu0 %v238
      %v718 = vpop.f32.mrb[0].mxu0
      %v719 = vadd.f32 0.0, %v718
      %v720 = vpop.f32.mrb[0].mxu0
      %721 = vmatprep.mubr.f32.mxu0 %v414
      %722 = vmatmul.mubr.f32.gmra.mrb[0].mxu0 %v240
      %v723 = vpop.f32.mrb[0].mxu0
      %v724 = vadd.f32 0.0, %v723
      %v725 = vpop.f32.mrb[0].mxu0
      %726 = vmatprep.mubr.f32.mxu0 %v417
      %727 = vmatmul.mubr.f32.gmra.mrb[0].mxu0 %v242
      %v728 = vpop.f32.mrb[0].mxu0
      %v729 = vadd.f32 0.0, %v728
      %v730 = vpop.f32.mrb[0].mxu0
      %731 = vmatprep.mubr.f32.mxu0 %v420
      %732 = vmatmul.mubr.f32.gmra.mrb[0].mxu0 %v244
      %v733 = vpop.f32.mrb[0].mxu0
      %v734 = vadd.f32 0.0, %v733
      %v735 = vpop.f32.mrb[0].mxu0
      %736 = vmatprep.mubr.f32.mxu0 %v423
      %737 = vmatmul.mubr.f32.gmra.mrb[0].mxu0 %v246
      %v738 = vpop.f32.mrb[0].mxu0
      %v739 = vadd.f32 0.0, %v738
      %v740 = vpop.f32.mrb[0].mxu0
      %741 = vmatprep.mubr.f32.mxu0 %v426
      %742 = vmatmul.mubr.f32.gmra.mrb[0].mxu0 %v248
      %v743 = vpop.f32.mrb[0].mxu0
      %v744 = vadd.f32 0.0, %v743
      %v745 = vpop.f32.mrb[0].mxu0
      %746 = vmatprep.mubr.f32.mxu0 %v429
      %747 = vmatmul.mubr.f32.gmra.mrb[0].mxu0 %v250
      %v748 = vpop.f32.mrb[0].mxu0
      %v749 = vadd.f32 0.0, %v748
      %v750 = vpop.f32.mrb[0].mxu0
      %751 = vmatprep.mubr.f32.mxu0 %v432
      %752 = vmatmul.mubr.f32.gmra.mrb[0].mxu0 %v252
      %v753 = vpop.f32.mrb[0].mxu0
      %v754 = vadd.f32 0.0, %v753
      %v755 = vpop.f32.mrb[0].mxu0
      %756 = vmatprep.mubr.f32.mxu0 %v435
      %757 = vmatmul.mubr.f32.gmra.mrb[0].mxu0 %v254
      %v758 = vpop.f32.mrb[0].mxu0
      %v759 = vadd.f32 0.0, %v758
      %v760 = vpop.f32.mrb[0].mxu0
      %761 = vmatprep.mubr.f32.mxu0 %v438
      %762 = vmatmul.mubr.f32.gmra.mrb[0].mxu0 %v256
      %v763 = vpop.f32.mrb[0].mxu0
      %v764 = vadd.f32 0.0, %v763
      %v765 = vpop.f32.mrb[0].mxu0
      %766 = vmatprep.mubr.f32.mxu0 %v441
      %767 = vmatmul.mubr.f32.gmra.mrb[0].mxu0 %v258
      %v768 = vpop.f32.mrb[0].mxu0
      %v769 = vadd.f32 0.0, %v768
      %v770 = vpop.f32.mrb[0].mxu0
      %771 = vmatprep.mubr.f32.mxu0 %v444
      %772 = vmatmul.mubr.f32.gmra.mrb[0].mxu0 %v260
      %v773 = vpop.f32.mrb[0].mxu0
      %v774 = vadd.f32 0.0, %v773
      %v775 = vpop.f32.mrb[0].mxu0
      %776 = vmatprep.mubr.f32.mxu0 %v447
      %777 = vmatmul.mubr.f32.gmra.mrb[0].mxu0 %v262
      %v778 = vpop.f32.mrb[0].mxu0
      %v779 = vadd.f32 0.0, %v778
      %v780 = vpop.f32.mrb[0].mxu0
      %781 = vmatprep.mubr.f32.mxu0 %v450
      %782 = vmatmul.mubr.f32.gmra.mrb[0].mxu0 %v264
      %v783 = vpop.f32.mrb[0].mxu0
      %v784 = vadd.f32 0.0, %v783
      %v785 = vpop.f32.mrb[0].mxu0
      %786 = vmatprep.mubr.f32.mxu0 %v453
      %787 = vmatmul.mubr.f32.gmra.mrb[0].mxu0 %v266
      %v788 = vpop.f32.mrb[0].mxu0
      %v789 = vadd.f32 0.0, %v788
      %v790 = vpop.f32.mrb[0].mxu0
      %791 = vmatprep.mubr.f32.mxu0 %v456
      %792 = vmatmul.mubr.f32.gmra.mrb[0].mxu0 %v268
      %v793 = vpop.f32.mrb[0].mxu0
      %v794 = vadd.f32 0.0, %v793
      %v795 = vpop.f32.mrb[0].mxu0
      %796 = vmatprep.mubr.f32.mxu0 %v459
      %797 = vmatmul.mubr.f32.gmra.mrb[0].mxu0 %v270
      %v798 = vpop.f32.mrb[0].mxu0
      %v799 = vadd.f32 0.0, %v798
      %v800 = vpop.f32.mrb[0].mxu0
      %801 = vmatprep.mubr.f32.mxu0 %v462
      %802 = vmatmul.mubr.f32.gmra.mrb[0].mxu0 %v272
      %v803 = vpop.f32.mrb[0].mxu0
      %v804 = vadd.f32 0.0, %v803
      %v805 = vpop.f32.mrb[0].mxu0
      %806 = vmatprep.mubr.f32.mxu0 %v465
      %807 = vmatmul.mubr.f32.gmra.mrb[0].mxu0 %v274
      %v808 = vpop.f32.mrb[0].mxu0
      %v809 = vadd.f32 0.0, %v808
      %v810 = vpop.f32.mrb[0].mxu0
      %811 = vmatprep.mubr.f32.mxu0 %v468
      %812 = vmatmul.mubr.f32.gmra.mrb[0].mxu0 %v276
      %v813 = vpop.f32.mrb[0].mxu0
      %v814 = vadd.f32 0.0, %v813
      %v815 = vpop.f32.mrb[0].mxu0
      %816 = vmatprep.mubr.f32.mxu0 %v471
      %817 = vmatmul.mubr.f32.gmra.mrb[0].mxu0 %v278
      %v818 = vpop.f32.mrb[0].mxu0
      %v819 = vadd.f32 0.0, %v818
      %v820 = vpop.f32.mrb[0].mxu0
      %821 = vmatprep.mubr.f32.mxu0 %v474
      %822 = vmatmul.mubr.f32.gmra.mrb[0].mxu0 %v280
      %v823 = vpop.f32.mrb[0].mxu0
      %v824 = vadd.f32 0.0, %v823
      %v825 = vpop.f32.mrb[0].mxu0
      %826 = vmatprep.mubr.f32.mxu0 %v477
      %827 = vmatmul.mubr.f32.gmra.mrb[0].mxu0 %v282
      %v828 = vpop.f32.mrb[0].mxu0
      %v829 = vadd.f32 0.0, %v828
      %v830 = vpop.f32.mrb[0].mxu0
      %831 = vmatprep.mubr.f32.mxu0 %v480
      %832 = vmatmul.mubr.f32.gmra.mrb[0].mxu0 %v284
      %v833 = vpop.f32.mrb[0].mxu0
      %v834 = vadd.f32 0.0, %v833
      %v835 = vpop.f32.mrb[0].mxu0
      %836 = vmatprep.mubr.f32.mxu0 %v483
      %837 = vmatmul.mubr.f32.gmra.mrb[0].mxu0 %v286
      %v838 = vpop.f32.mrb[0].mxu0
      %v839 = vadd.f32 0.0, %v838
      %v840 = vpop.f32.mrb[0].mxu0
      %841 = vmatprep.mubr.f32.mxu0 %v486
      %842 = vmatmul.mubr.f32.gmra.mrb[0].mxu0 %v288
      %v843 = vpop.f32.mrb[0].mxu0
      %v844 = vadd.f32 0.0, %v843
      %v845 = vpop.f32.mrb[0].mxu0
      %846 = vmatprep.mubr.f32.mxu0 %v489
      %847 = vmatmul.mubr.f32.gmra.mrb[0].mxu0 %v290
      %v848 = vpop.f32.mrb[0].mxu0
      %v849 = vadd.f32 0.0, %v848
      %v850 = vpop.f32.mrb[0].mxu0
      %851 = vmatprep.mubr.f32.mxu0 %v492
      %852 = vmatmul.mubr.f32.gmra.mrb[0].mxu0 %v292
      %v853 = vpop.f32.mrb[0].mxu0
      %v854 = vadd.f32 0.0, %v853
      %v855 = vpop.f32.mrb[0].mxu0
      %856 = vmatprep.mubr.f32.mxu0 %v495
      %857 = vmatmul.mubr.f32.gmra.mrb[0].mxu0 %v294
      %v858 = vpop.f32.mrb[0].mxu0
      %v859 = vadd.f32 0.0, %v858
      %v860 = vpop.f32.mrb[0].mxu0
      %861 = vmatprep.mubr.f32.mxu0 %v498
      %862 = vmatmul.mubr.f32.gmra.mrb[0].mxu0 %v296
      %v863 = vpop.f32.mrb[0].mxu0
      %v864 = vadd.f32 0.0, %v863
      %v865 = vpop.f32.mrb[0].mxu0
      %866 = vmatprep.mubr.f32.mxu0 %v501
      %867 = vmatmul.mubr.f32.gmra.mrb[0].mxu0 %v298
      %v868 = vpop.f32.mrb[0].mxu0
      %v869 = vadd.f32 0.0, %v868
      %v870 = vpop.f32.mrb[0].mxu0
      %871 = vmatprep.mubr.f32.mxu0 %v504
      %872 = vmatmul.mubr.f32.gmra.mrb[0].mxu0 %v300
      %v873 = vpop.f32.mrb[0].mxu0
      %v874 = vadd.f32 0.0, %v873
      %v875 = vpop.f32.mrb[0].mxu0
      %876 = vmatprep.mubr.f32.mxu0 %v507
      %877 = vmatmul.mubr.f32.gmra.mrb[0].mxu0 %v302
      %v878 = vpop.f32.mrb[0].mxu0
      %v879 = vadd.f32 0.0, %v878
      %v880 = vpop.f32.mrb[0].mxu0
      %881 = vmatprep.mubr.f32.mxu0 %v510
      %882 = vmatmul.mubr.f32.gmra.mrb[0].mxu0 %v304
      %v883 = vpop.f32.mrb[0].mxu0
      %v884 = vadd.f32 0.0, %v883
      %v885 = vpop.f32.mrb[0].mxu0
      %886 = vmatprep.mubr.f32.mxu0 %v513
      %887 = vmatmul.mubr.f32.gmra.mrb[0].mxu0 %v306
      %v888 = vpop.f32.mrb[0].mxu0
      %v889 = vadd.f32 0.0, %v888
      %v890 = vpop.f32.mrb[0].mxu0
      %891 = vmatprep.mubr.f32.mxu0 %v516
      %892 = vmatmul.mubr.f32.gmra.mrb[0].mxu0 %v308
      %v893 = vpop.f32.mrb[0].mxu0
      %v894 = vadd.f32 0.0, %v893
      %v895 = vpop.f32.mrb[0].mxu0
      %896 = vmatprep.mubr.f32.mxu0 %v519
      %897 = vmatmul.mubr.f32.gmra.mrb[0].mxu0 %v310
      %v898 = vpop.f32.mrb[0].mxu0
      %v899 = vadd.f32 0.0, %v898
      %v900 = vpop.f32.mrb[0].mxu0
      %901 = vmatprep.mubr.f32.mxu0 %v522
      %902 = vmatmul.mubr.f32.gmra.mrb[0].mxu0 %v312
      %v903 = vpop.f32.mrb[0].mxu0
      %v904 = vadd.f32 0.0, %v903
      %v905 = vpop.f32.mrb[0].mxu0
      %906 = vmatprep.mubr.f32.mxu0 %v525
      %907 = vmatmul.mubr.f32.gmra.mrb[0].mxu0 %v314
      %v908 = vpop.f32.mrb[0].mxu0
      %v909 = vadd.f32 0.0, %v908
      %v910 = vpop.f32.mrb[0].mxu0
      %911 = vdwg.mxu0
      %912 = vst [vmem:[%s182] sm:$0xff] %v594
      %913 = vst [vmem:[%s182 + $0x8] sm:$0xff] %v599
      %914 = vst [vmem:[%s182 + $0x10] sm:$0xff] %v604
      %915 = vst [vmem:[%s182 + $0x18] sm:$0xff] %v609
      %916 = vst [vmem:[%s182 + $0x20] sm:$0xff] %v614
      %917 = vst [vmem:[%s182 + $0x28] sm:$0xff] %v619
      %918 = vst [vmem:[%s182 + $0x30] sm:$0xff] %v624
      %919 = vst [vmem:[%s182 + $0x38] sm:$0xff] %v629
      %920 = vst [vmem:[%s182 + $0x40] sm:$0xff] %v634
      %921 = vst [vmem:[%s182 + $0x48] sm:$0xff] %v639
      %922 = vst [vmem:[%s182 + $0x50] sm:$0xff] %v644
      %923 = vst [vmem:[%s182 + $0x58] sm:$0xff] %v649
      %924 = vst [vmem:[%s182 + $0x60] sm:$0xff] %v654
      %925 = vst [vmem:[%s182 + $0x68] sm:$0xff] %v659
      %926 = vst [vmem:[%s182 + $0x70] sm:$0xff] %v664
      %927 = vst [vmem:[%s182 + $0x78] sm:$0xff] %v669
      %928 = vst [vmem:[%s182 + $0x80] sm:$0xff] %v674
      %929 = vst [vmem:[%s182 + $0x88] sm:$0xff] %v679
      %930 = vst [vmem:[%s182 + $0x90] sm:$0xff] %v684
      %931 = vst [vmem:[%s182 + $0x98] sm:$0xff] %v689
      %932 = vst [vmem:[%s182 + $0xa0] sm:$0xff] %v694
      %933 = vst [vmem:[%s182 + $0xa8] sm:$0xff] %v699
      %934 = vst [vmem:[%s182 + $0xb0] sm:$0xff] %v704
      %935 = vst [vmem:[%s182 + $0xb8] sm:$0xff] %v709
      %936 = vst [vmem:[%s182 + $0xc0] sm:$0xff] %v714
      %937 = vst [vmem:[%s182 + $0xc8] sm:$0xff] %v719
      %938 = vst [vmem:[%s182 + $0xd0] sm:$0xff] %v724
      %939 = vst [vmem:[%s182 + $0xd8] sm:$0xff] %v729
      %940 = vst [vmem:[%s182 + $0xe0] sm:$0xff] %v734
      %941 = vst [vmem:[%s182 + $0xe8] sm:$0xff] %v739
      %942 = vst [vmem:[%s182 + $0xf0] sm:$0xff] %v744
      %943 = vst [vmem:[%s182 + $0xf8] sm:$0xff] %v749
      %944 = vst [vmem:[%s182 + $0x100] sm:$0xff] %v754
      %945 = vst [vmem:[%s182 + $0x108] sm:$0xff] %v759
      %946 = vst [vmem:[%s182 + $0x110] sm:$0xff] %v764
      %947 = vst [vmem:[%s182 + $0x118] sm:$0xff] %v769
      %948 = vst [vmem:[%s182 + $0x120] sm:$0xff] %v774
      %949 = vst [vmem:[%s182 + $0x128] sm:$0xff] %v779
      %950 = vst [vmem:[%s182 + $0x130] sm:$0xff] %v784
      %951 = vst [vmem:[%s182 + $0x138] sm:$0xff] %v789
      %952 = vst [vmem:[%s182 + $0x140] sm:$0xff] %v794
      %953 = vst [vmem:[%s182 + $0x148] sm:$0xff] %v799
      %954 = vst [vmem:[%s182 + $0x150] sm:$0xff] %v804
      %955 = vst [vmem:[%s182 + $0x158] sm:$0xff] %v809
      %956 = vst [vmem:[%s182 + $0x160] sm:$0xff] %v814
      %957 = vst [vmem:[%s182 + $0x168] sm:$0xff] %v819
      %958 = vst [vmem:[%s182 + $0x170] sm:$0xff] %v824
      %959 = vst [vmem:[%s182 + $0x178] sm:$0xff] %v829
      %960 = vst [vmem:[%s182 + $0x180] sm:$0xff] %v834
      %961 = vst [vmem:[%s182 + $0x188] sm:$0xff] %v839
      %962 = vst [vmem:[%s182 + $0x190] sm:$0xff] %v844
      %963 = vst [vmem:[%s182 + $0x198] sm:$0xff] %v849
      %964 = vst [vmem:[%s182 + $0x1a0] sm:$0xff] %v854
      %965 = vst [vmem:[%s182 + $0x1a8] sm:$0xff] %v859
      %966 = vst [vmem:[%s182 + $0x1b0] sm:$0xff] %v864
      %967 = vst [vmem:[%s182 + $0x1b8] sm:$0xff] %v869
      %968 = vst [vmem:[%s182 + $0x1c0] sm:$0xff] %v874
      %969 = vst [vmem:[%s182 + $0x1c8] sm:$0xff] %v879
      %970 = vst [vmem:[%s182 + $0x1d0] sm:$0xff] %v884
      %971 = vst [vmem:[%s182 + $0x1d8] sm:$0xff] %v889
      %972 = vst [vmem:[%s182 + $0x1e0] sm:$0xff] %v894
      %973 = vst [vmem:[%s182 + $0x1e8] sm:$0xff] %v899
      %974 = vst [vmem:[%s182 + $0x1f0] sm:$0xff] %v904
      %975 = vst [vmem:[%s182 + $0x1f8] sm:$0xff] %v909
      %v976 = vadd.f32 %v594, %v599
      %v977 = vadd.f32 %v976, %v604
      %v978 = vadd.f32 %v977, %v609
      %v979 = vadd.f32 %v978, %v614
      %v980 = vadd.f32 %v979, %v619
      %v981 = vadd.f32 %v980, %v624
      %v982 = vadd.f32 %v981, %v629
      %v983 = vadd.f32 %v982, %v634
      %v984 = vadd.f32 %v983, %v639
      %v985 = vadd.f32 %v984, %v644
      %v986 = vadd.f32 %v985, %v649
      %v987 = vadd.f32 %v986, %v654
      %v988 = vadd.f32 %v987, %v659
      %v989 = vadd.f32 %v988, %v664
      %v990 = vadd.f32 %v989, %v669
      %v991 = vadd.f32 %v990, %v674
      %v992 = vadd.f32 %v991, %v679
      %v993 = vadd.f32 %v992, %v684
      %v994 = vadd.f32 %v993, %v689
      %v995 = vadd.f32 %v994, %v694
      %v996 = vadd.f32 %v995, %v699
      %v997 = vadd.f32 %v996, %v704
      %v998 = vadd.f32 %v997, %v709
      %v999 = vadd.f32 %v998, %v714
      %v1000 = vadd.f32 %v999, %v719
      %v1001 = vadd.f32 %v1000, %v724
      %v1002 = vadd.f32 %v1001, %v729
      %v1003 = vadd.f32 %v1002, %v734
      %v1004 = vadd.f32 %v1003, %v739
      %v1005 = vadd.f32 %v1004, %v744
      %v1006 = vadd.f32 %v1005, %v749
      %v1007 = vadd.f32 %v1006, %v754
      %v1008 = vadd.f32 %v1007, %v759
      %v1009 = vadd.f32 %v1008, %v764
      %v1010 = vadd.f32 %v1009, %v769
      %v1011 = vadd.f32 %v1010, %v774
      %v1012 = vadd.f32 %v1011, %v779
      %v1013 = vadd.f32 %v1012, %v784
      %v1014 = vadd.f32 %v1013, %v789
      %v1015 = vadd.f32 %v1014, %v794
      %v1016 = vadd.f32 %v1015, %v799
      %v1017 = vadd.f32 %v1016, %v804
      %v1018 = vadd.f32 %v1017, %v809
      %v1019 = vadd.f32 %v1018, %v814
      %v1020 = vadd.f32 %v1019, %v819
      %v1021 = vadd.f32 %v1020, %v824
      %v1022 = vadd.f32 %v1021, %v829
      %v1023 = vadd.f32 %v1022, %v834
      %v1024 = vadd.f32 %v1023, %v839
      %v1025 = vadd.f32 %v1024, %v844
      %v1026 = vadd.f32 %v1025, %v849
      %v1027 = vadd.f32 %v1026, %v854
      %v1028 = vadd.f32 %v1027, %v859
      %v1029 = vadd.f32 %v1028, %v864
      %v1030 = vadd.f32 %v1029, %v869
      %v1031 = vadd.f32 %v1030, %v874
      %v1032 = vadd.f32 %v1031, %v879
      %v1033 = vadd.f32 %v1032, %v884
      %v1034 = vadd.f32 %v1033, %v889
      %v1035 = vadd.f32 %v1034, %v894
      %v1036 = vadd.f32 %v1035, %v899
      %v1037 = vadd.f32 %v1036, %v904
      %v1038 = vadd.f32 %v1037, %v909
      %v1039 = vrot.slane %v1038, 4
      %v1040 = vadd.f32 %v1038, %v1039
      %v1041 = vrot.slane %v1040, 2
      %v1042 = vadd.f32 %v1040, %v1041
      %v1043 = vrot.slane %v1042, 1
      %v1044 = vadd.f32 %v1042, %v1043
      %v1045 = vmul.f32 %v594, %v594
      %v1046 = vmul.f32 %v599, %v599
      %v1047 = vmul.f32 %v604, %v604
      %v1048 = vmul.f32 %v609, %v609
      %v1049 = vmul.f32 %v614, %v614
      %v1050 = vmul.f32 %v619, %v619
      %v1051 = vmul.f32 %v624, %v624
      %v1052 = vmul.f32 %v629, %v629
      %v1053 = vmul.f32 %v634, %v634
      %v1054 = vmul.f32 %v639, %v639
      %v1055 = vmul.f32 %v644, %v644
      %v1056 = vmul.f32 %v649, %v649
      %v1057 = vmul.f32 %v654, %v654
      %v1058 = vmul.f32 %v659, %v659
      %v1059 = vmul.f32 %v664, %v664
      %v1060 = vmul.f32 %v669, %v669
      %v1061 = vmul.f32 %v674, %v674
      %v1062 = vmul.f32 %v679, %v679
      %v1063 = vmul.f32 %v684, %v684
      %v1064 = vmul.f32 %v689, %v689
      %v1065 = vmul.f32 %v694, %v694
      %v1066 = vmul.f32 %v699, %v699
      %v1067 = vmul.f32 %v704, %v704
      %v1068 = vmul.f32 %v709, %v709
      %v1069 = vmul.f32 %v714, %v714
      %v1070 = vmul.f32 %v719, %v719
      %v1071 = vmul.f32 %v724, %v724
      %v1072 = vmul.f32 %v729, %v729
      %v1073 = vmul.f32 %v734, %v734
      %v1074 = vmul.f32 %v739, %v739
      %v1075 = vmul.f32 %v744, %v744
      %v1076 = vmul.f32 %v749, %v749
      %v1077 = vmul.f32 %v754, %v754
      %v1078 = vmul.f32 %v759, %v759
      %v1079 = vmul.f32 %v764, %v764
      %v1080 = vmul.f32 %v769, %v769
      %v1081 = vmul.f32 %v774, %v774
      %v1082 = vmul.f32 %v779, %v779
      %v1083 = vmul.f32 %v784, %v784
      %v1084 = vmul.f32 %v789, %v789
      %v1085 = vmul.f32 %v794, %v794
      %v1086 = vmul.f32 %v799, %v799
      %v1087 = vmul.f32 %v804, %v804
      %v1088 = vmul.f32 %v809, %v809
      %v1089 = vmul.f32 %v814, %v814
      %v1090 = vmul.f32 %v819, %v819
      %v1091 = vmul.f32 %v824, %v824
      %v1092 = vmul.f32 %v829, %v829
      %v1093 = vmul.f32 %v834, %v834
      %v1094 = vmul.f32 %v839, %v839
      %v1095 = vmul.f32 %v844, %v844
      %v1096 = vmul.f32 %v849, %v849
      %v1097 = vmul.f32 %v854, %v854
      %v1098 = vmul.f32 %v859, %v859
      %v1099 = vmul.f32 %v864, %v864
      %v1100 = vmul.f32 %v869, %v869
      %v1101 = vmul.f32 %v874, %v874
      %v1102 = vmul.f32 %v879, %v879
      %v1103 = vmul.f32 %v884, %v884
      %v1104 = vmul.f32 %v889, %v889
      %v1105 = vmul.f32 %v894, %v894
      %v1106 = vmul.f32 %v899, %v899
      %v1107 = vmul.f32 %v904, %v904
      %v1108 = vmul.f32 %v909, %v909
      %v1109 = vadd.f32 %v1045, %v1046
      %v1110 = vadd.f32 %v1109, %v1047
      %v1111 = vadd.f32 %v1110, %v1048
      %v1112 = vadd.f32 %v1111, %v1049
      %v1113 = vadd.f32 %v1112, %v1050
      %v1114 = vadd.f32 %v1113, %v1051
      %v1115 = vadd.f32 %v1114, %v1052
      %v1116 = vadd.f32 %v1115, %v1053
      %v1117 = vadd.f32 %v1116, %v1054
      %v1118 = vadd.f32 %v1117, %v1055
      %v1119 = vadd.f32 %v1118, %v1056
      %v1120 = vadd.f32 %v1119, %v1057
      %v1121 = vadd.f32 %v1120, %v1058
      %v1122 = vadd.f32 %v1121, %v1059
      %v1123 = vadd.f32 %v1122, %v1060
      %v1124 = vadd.f32 %v1123, %v1061
      %v1125 = vadd.f32 %v1124, %v1062
      %v1126 = vadd.f32 %v1125, %v1063
      %v1127 = vadd.f32 %v1126, %v1064
      %v1128 = vadd.f32 %v1127, %v1065
      %v1129 = vadd.f32 %v1128, %v1066
      %v1130 = vadd.f32 %v1129, %v1067
      %v1131 = vadd.f32 %v1130, %v1068
      %v1132 = vadd.f32 %v1131, %v1069
      %v1133 = vadd.f32 %v1132, %v1070
      %v1134 = vadd.f32 %v1133, %v1071
      %v1135 = vadd.f32 %v1134, %v1072
      %v1136 = vadd.f32 %v1135, %v1073
      %v1137 = vadd.f32 %v1136, %v1074
      %v1138 = vadd.f32 %v1137, %v1075
      %v1139 = vadd.f32 %v1138, %v1076
      %v1140 = vadd.f32 %v1139, %v1077
      %v1141 = vadd.f32 %v1140, %v1078
      %v1142 = vadd.f32 %v1141, %v1079
      %v1143 = vadd.f32 %v1142, %v1080
      %v1144 = vadd.f32 %v1143, %v1081
      %v1145 = vadd.f32 %v1144, %v1082
      %v1146 = vadd.f32 %v1145, %v1083
      %v1147 = vadd.f32 %v1146, %v1084
      %v1148 = vadd.f32 %v1147, %v1085
      %v1149 = vadd.f32 %v1148, %v1086
      %v1150 = vadd.f32 %v1149, %v1087
      %v1151 = vadd.f32 %v1150, %v1088
      %v1152 = vadd.f32 %v1151, %v1089
      %v1153 = vadd.f32 %v1152, %v1090
      %v1154 = vadd.f32 %v1153, %v1091
      %v1155 = vadd.f32 %v1154, %v1092
      %v1156 = vadd.f32 %v1155, %v1093
      %v1157 = vadd.f32 %v1156, %v1094
      %v1158 = vadd.f32 %v1157, %v1095
      %v1159 = vadd.f32 %v1158, %v1096
      %v1160 = vadd.f32 %v1159, %v1097
      %v1161 = vadd.f32 %v1160, %v1098
      %v1162 = vadd.f32 %v1161, %v1099
      %v1163 = vadd.f32 %v1162, %v1100
      %v1164 = vadd.f32 %v1163, %v1101
      %v1165 = vadd.f32 %v1164, %v1102
      %v1166 = vadd.f32 %v1165, %v1103
      %v1167 = vadd.f32 %v1166, %v1104
      %v1168 = vadd.f32 %v1167, %v1105
      %v1169 = vadd.f32 %v1168, %v1106
      %v1170 = vadd.f32 %v1169, %v1107
      %v1171 = vadd.f32 %v1170, %v1108
      %v1172 = vrot.slane %v1171, 4
      %v1173 = vadd.f32 %v1171, %v1172
      %v1174 = vrot.slane %v1173, 2
      %v1175 = vadd.f32 %v1173, %v1174
      %v1176 = vrot.slane %v1175, 1
      %v1177 = vadd.f32 %v1175, %v1176
      %v1178 = vlaneseq
      %v1179 = vshrl.u32 %v1178, 7
      %vm1180 = vcmp.eq.s32.totalorder %v1179, 0
      %vm1181 = vcmp.eq.s32.totalorder %v1179, 1
      %v1182 = vsel %vm1181, %v1177, 0.0
      %v1183 = vsel %vm1180, %v1044, %v1182
      %1184 = vst [vmem:[%s187] sm:$0xff] %v1183
      %s1185 = smul.u32 64, %s15
      %p1186 = scmp.lt.s32.totalorder %s1185, 255
      %s1187 = scalar_select %p1186, %s1185, 255
      %s1188 = smul.addr %s1187, 8
      %s1189 = scalar_lea.vmem %s2, %s1188
      %p1190 = scmp.lt.s32.totalorder %s15, 3
      %s1191 = scalar_select %p1190, %s15, 3
      %s1192 = smul.addr %s1191, 8
      %s1193 = scalar_lea.vmem %s3, %s1192
      // Predicated region
      $region29: #{forward.12} parent=27 // pred_check
        %p1194 = pneg %p80
      $region30: #{forward.12} parent=27 // pred_check_branch
        %1196 = sbr.rel (%p1194) target = $region32
      $region31: #{forward.12} parent=27 // pred_region
        %s1197 = smul.u32 64, %s15
      $region32: #{forward.12} parent=27 // pred_fallthru
        _
      // Predicated region
      $region33: #{forward.12} parent=27 // pred_check
        %p1198 = pneg %p106
      $region34: #{forward.12} parent=27 // pred_check_branch
        %1200 = sbr.rel (%p1198) target = $region36
      $region35: #{forward.12} parent=27 // pred_region
        _
      $region36: #{forward.12} parent=27 // pred_fallthru
        _
    $region28: #{forward.12} parent=5 // pred_fallthru
      _
    %p1201 = scmp.le.s32.totalorder 2, %s10
    // Predicated region
    $region37: #{forward.12} parent=5 // pred_check
      %p1202 = pneg %p1201
    $region38: #{forward.12} parent=5 // pred_check_branch
      %1204 = sbr.rel (%p1202) target = $region40
    $region39: #{forward.12} parent=5 // pred_region
      %s1205 = ssub.s32 %s10, 2
      // Predicated region
      $region41: #{forward.12} parent=39 // pred_check
        %p1206 = pneg %p86
      $region42: #{forward.12} parent=39 // pred_check_branch
        %1208 = sbr.rel (%p1206) target = $region44
      $region43: #{forward.12} parent=39 // pred_region
        %s1209 = smul.u32 64, %s16
        %p1210 = scmp.lt.s32.totalorder %s1209, 255
        %s1211 = scalar_select %p1210, %s1209, 255
        %s1212 = smul.addr %s1211, 8
        %s1213 = scalar_lea.vmem %s2, %s1212
      $region44: #{forward.12} parent=39 // pred_fallthru
        _
      // Predicated region
      $region45: #{forward.12} parent=39 // pred_check
        %p1214 = pneg %p112
      $region46: #{forward.12} parent=39 // pred_check_branch
        %1216 = sbr.rel (%p1214) target = $region48
      $region47: #{forward.12} parent=39 // pred_region
        %p1217 = scmp.lt.s32.totalorder %s16, 3
        %s1218 = scalar_select %p1217, %s16, 3
        %s1219 = smul.addr %s1218, 8
        %s1220 = scalar_lea.vmem %s3, %s1219
      $region48: #{forward.12} parent=39 // pred_fallthru
        _
    $region40: #{forward.12} parent=5 // pred_fallthru
      _
  $region6: #{forward.12} parent=0 // loop_footer
    %s14 = sadd.s32 1, %s10
  $region7: #{forward.12} parent=0 // loop_footer_branch
    %9 = sbr.rel target = $region3
  $region8: #{forward.12} parent=0 // loop_exit
    _

// kernel: forward.15
$region0: #{forward.15}
  #allocation0 [shape = 'u32[]', space=smem, size = 0x4, offset = 0x4, fixed_abs, tag = 'smem constant byte address 0x4 - core index']
  #allocation1 [shape = 'u32[144,128]{1,0:T(1,128)}', space=vmem, size = 0x12000, scoped, tag = 'internal scratch']
  %s0 = inlined_call_operand.vmem [shape: f32[512,128], index: 0, kind: input, shape index: {}]
  %s1 = inlined_call_operand.vmem [shape: f32[1,128], index: 1, kind: input, shape index: {}]
  %s2 = inlined_call_operand.vmem [shape: f32[1,128], index: 2, kind: input, shape index: {}]
  %s3 = inlined_call_operand.vmem [shape: f32[512,128], index: 3, kind: output, shape index: {}]
  %s4 = sld [smem:[#allocation0]]
  $region22: #{forward.15} parent=0
    _
  %s6 = ssub.s32 1, %s4
  %s7 = scalar_select 0, %s6, %s4
  // Predicated region
  $region2: #{forward.15} parent=0 // pred_check
    _
  $region3: #{forward.15} parent=0 // pred_check_branch
    %9 = sbr.rel (0) target = $region5
  $region4: #{forward.15} parent=0 // pred_region
    _
  $region5: #{forward.15} parent=0 // pred_fallthru
    _
  // Predicated region
  $region6: #{forward.15} parent=0 // pred_check
    _
  $region7: #{forward.15} parent=0 // pred_check_branch
    %11 = sbr.rel (0) target = $region9
  $region8: #{forward.15} parent=0 // pred_region
    _
  $region9: #{forward.15} parent=0 // pred_fallthru
    _
  // Predicated region
  $region10: #{forward.15} parent=0 // pred_check
    _
  $region11: #{forward.15} parent=0 // pred_check_branch
    %13 = sbr.rel (0) target = $region13
  $region12: #{forward.15} parent=0 // pred_region
    _
  $region13: #{forward.15} parent=0 // pred_fallthru
    _
  %v14 = vld [vmem:[%s0] sm:$0xff]
  %v15 = vld [vmem:[%s0 + $0x8] sm:$0xff]
  %v16 = vld [vmem:[%s0 + $0x10] sm:$0xff]
  %v17 = vld [vmem:[%s0 + $0x18] sm:$0xff]
  %v18 = vld [vmem:[%s0 + $0x20] sm:$0xff]
  %v19 = vld [vmem:[%s0 + $0x28] sm:$0xff]
  %v20 = vld [vmem:[%s0 + $0x30] sm:$0xff]
  %v21 = vld [vmem:[%s0 + $0x38] sm:$0xff]
  %v22 = vld [vmem:[%s0 + $0x40] sm:$0xff]
  %v23 = vld [vmem:[%s0 + $0x48] sm:$0xff]
  %v24 = vld [vmem:[%s0 + $0x50] sm:$0xff]
  %v25 = vld [vmem:[%s0 + $0x58] sm:$0xff]
  %v26 = vld [vmem:[%s0 + $0x60] sm:$0xff]
  %v27 = vld [vmem:[%s0 + $0x68] sm:$0xff]
  %v28 = vld [vmem:[%s0 + $0x70] sm:$0xff]
  %v29 = vld [vmem:[%s0 + $0x78] sm:$0xff]
  %v30 = vld [vmem:[%s0 + $0x80] sm:$0xff]
  %v31 = vld [vmem:[%s0 + $0x88] sm:$0xff]
  %v32 = vld [vmem:[%s0 + $0x90] sm:$0xff]
  %v33 = vld [vmem:[%s0 + $0x98] sm:$0xff]
  %v34 = vld [vmem:[%s0 + $0xa0] sm:$0xff]
  %v35 = vld [vmem:[%s0 + $0xa8] sm:$0xff]
  %v36 = vld [vmem:[%s0 + $0xb0] sm:$0xff]
  %v37 = vld [vmem:[%s0 + $0xb8] sm:$0xff]
  %v38 = vld [vmem:[%s0 + $0xc0] sm:$0xff]
  %v39 = vld [vmem:[%s0 + $0xc8] sm:$0xff]
  %v40 = vld [vmem:[%s0 + $0xd0] sm:$0xff]
  %v41 = vld [vmem:[%s0 + $0xd8] sm:$0xff]
  %v42 = vld [vmem:[%s0 + $0xe0] sm:$0xff]
  %v43 = vld [vmem:[%s0 + $0xe8] sm:$0xff]
  %v44 = vld [vmem:[%s0 + $0xf0] sm:$0xff]
  %v45 = vld [vmem:[%s0 + $0xf8] sm:$0xff]
  %v46 = vld [vmem:[%s0 + $0x100] sm:$0xff]
  %v47 = vld [vmem:[%s0 + $0x108] sm:$0xff]
  %v48 = vld [vmem:[%s0 + $0x110] sm:$0xff]
  %v49 = vld [vmem:[%s0 + $0x118] sm:$0xff]
  %v50 = vld [vmem:[%s0 + $0x120] sm:$0xff]
  %v51 = vld [vmem:[%s0 + $0x128] sm:$0xff]
  %v52 = vld [vmem:[%s0 + $0x130] sm:$0xff]
  %v53 = vld [vmem:[%s0 + $0x138] sm:$0xff]
  %v54 = vld [vmem:[%s0 + $0x140] sm:$0xff]
  %v55 = vld [vmem:[%s0 + $0x148] sm:$0xff]
  %v56 = vld [vmem:[%s0 + $0x150] sm:$0xff]
  %v57 = vld [vmem:[%s0 + $0x158] sm:$0xff]
  %v58 = vld [vmem:[%s0 + $0x160] sm:$0xff]
  %v59 = vld [vmem:[%s0 + $0x168] sm:$0xff]
  %v60 = vld [vmem:[%s0 + $0x170] sm:$0xff]
  %v61 = vld [vmem:[%s0 + $0x178] sm:$0xff]
  %v62 = vld [vmem:[%s0 + $0x180] sm:$0xff]
  %v63 = vld [vmem:[%s0 + $0x188] sm:$0xff]
  %v64 = vld [vmem:[%s0 + $0x190] sm:$0xff]
  %v65 = vld [vmem:[%s0 + $0x198] sm:$0xff]
  %v66 = vld [vmem:[%s0 + $0x1a0] sm:$0xff]
  %v67 = vld [vmem:[%s0 + $0x1a8] sm:$0xff]
  %v68 = vld [vmem:[%s0 + $0x1b0] sm:$0xff]
  %v69 = vld [vmem:[%s0 + $0x1b8] sm:$0xff]
  %v70 = vld [vmem:[%s0 + $0x1c0] sm:$0xff]
  %v71 = vld [vmem:[%s0 + $0x1c8] sm:$0xff]
  %v72 = vld [vmem:[%s0 + $0x1d0] sm:$0xff]
  %v73 = vld [vmem:[%s0 + $0x1d8] sm:$0xff]
  %v74 = vld [vmem:[%s0 + $0x1e0] sm:$0xff]
  %v75 = vld [vmem:[%s0 + $0x1e8] sm:$0xff]
  %v76 = vld [vmem:[%s0 + $0x1f0] sm:$0xff]
  %v77 = vld [vmem:[%s0 + $0x1f8] sm:$0xff]
  %v78 = vld [vmem:[%s1] sm:$0x1]
  %v80 = vlaneseq
  %v81 = vshrl.u32 %v80, 7
  %v82 = vsub.s32 0, %v81
  %v83 = vrot.slane %v78, %v82
  %v85 = vmul.f32 %v14, %v83
  %v86 = vmul.f32 %v15, %v83
  %v87 = vmul.f32 %v16, %v83
  %v88 = vmul.f32 %v17, %v83
  %v89 = vmul.f32 %v18, %v83
  %v90 = vmul.f32 %v19, %v83
  %v91 = vmul.f32 %v20, %v83
  %v92 = vmul.f32 %v21, %v83
  %v93 = vmul.f32 %v22, %v83
  %v94 = vmul.f32 %v23, %v83
  %v95 = vmul.f32 %v24, %v83
  %v96 = vmul.f32 %v25, %v83
  %v97 = vmul.f32 %v26, %v83
  %v98 = vmul.f32 %v27, %v83
  %v99 = vmul.f32 %v28, %v83
  %v100 = vmul.f32 %v29, %v83
  %v101 = vmul.f32 %v30, %v83
  %v102 = vmul.f32 %v31, %v83
  %v103 = vmul.f32 %v32, %v83
  %v104 = vmul.f32 %v33, %v83
  %v105 = vmul.f32 %v34, %v83
  %v106 = vmul.f32 %v35, %v83
  %v107 = vmul.f32 %v36, %v83
  %v108 = vmul.f32 %v37, %v83
  %v109 = vmul.f32 %v38, %v83
  %v110 = vmul.f32 %v39, %v83
  %v111 = vmul.f32 %v40, %v83
  %v112 = vmul.f32 %v41, %v83
  %v113 = vmul.f32 %v42, %v83
  %v114 = vmul.f32 %v43, %v83
  %v115 = vmul.f32 %v44, %v83
  %v116 = vmul.f32 %v45, %v83
  %v117 = vmul.f32 %v46, %v83
  %v118 = vmul.f32 %v47, %v83
  %v119 = vmul.f32 %v48, %v83
  %v120 = vmul.f32 %v49, %v83
  %v121 = vmul.f32 %v50, %v83
  %v122 = vmul.f32 %v51, %v83
  %v123 = vmul.f32 %v52, %v83
  %v124 = vmul.f32 %v53, %v83
  %v125 = vmul.f32 %v54, %v83
  %v126 = vmul.f32 %v55, %v83
  %v127 = vmul.f32 %v56, %v83
  %v128 = vmul.f32 %v57, %v83
  %v129 = vmul.f32 %v58, %v83
  %v130 = vmul.f32 %v59, %v83
  %v131 = vmul.f32 %v60, %v83
  %v132 = vmul.f32 %v61, %v83
  %v133 = vmul.f32 %v62, %v83
  %v134 = vmul.f32 %v63, %v83
  %v135 = vmul.f32 %v64, %v83
  %v136 = vmul.f32 %v65, %v83
  %v137 = vmul.f32 %v66, %v83
  %v138 = vmul.f32 %v67, %v83
  %v139 = vmul.f32 %v68, %v83
  %v140 = vmul.f32 %v69, %v83
  %v141 = vmul.f32 %v70, %v83
  %v142 = vmul.f32 %v71, %v83
  %v143 = vmul.f32 %v72, %v83
  %v144 = vmul.f32 %v73, %v83
  %v145 = vmul.f32 %v74, %v83
  %v146 = vmul.f32 %v75, %v83
  %v147 = vmul.f32 %v76, %v83
  %v148 = vmul.f32 %v77, %v83
  %v149 = vld [vmem:[%s2] sm:$0x1]
  %v151 = vlaneseq
  %v152 = vshrl.u32 %v151, 7
  %v153 = vsub.s32 0, %v152
  %v154 = vrot.slane %v149, %v153
  %v156 = vadd.f32 %v85, %v154
  %v157 = vadd.f32 %v86, %v154
  %v158 = vadd.f32 %v87, %v154
  %v159 = vadd.f32 %v88, %v154
  %v160 = vadd.f32 %v89, %v154
  %v161 = vadd.f32 %v90, %v154
  %v162 = vadd.f32 %v91, %v154
  %v163 = vadd.f32 %v92, %v154
  %v164 = vadd.f32 %v93, %v154
  %v165 = vadd.f32 %v94, %v154
  %v166 = vadd.f32 %v95, %v154
  %v167 = vadd.f32 %v96, %v154
  %v168 = vadd.f32 %v97, %v154
  %v169 = vadd.f32 %v98, %v154
  %v170 = vadd.f32 %v99, %v154
  %v171 = vadd.f32 %v100, %v154
  %v172 = vadd.f32 %v101, %v154
  %v173 = vadd.f32 %v102, %v154
  %v174 = vadd.f32 %v103, %v154
  %v175 = vadd.f32 %v104, %v154
  %v176 = vadd.f32 %v105, %v154
  %v177 = vadd.f32 %v106, %v154
  %v178 = vadd.f32 %v107, %v154
  %v179 = vadd.f32 %v108, %v154
  %v180 = vadd.f32 %v109, %v154
  %v181 = vadd.f32 %v110, %v154
  %v182 = vadd.f32 %v111, %v154
  %v183 = vadd.f32 %v112, %v154
  %v184 = vadd.f32 %v113, %v154
  %v185 = vadd.f32 %v114, %v154
  %v186 = vadd.f32 %v115, %v154
  %v187 = vadd.f32 %v116, %v154
  %v188 = vadd.f32 %v117, %v154
  %v189 = vadd.f32 %v118, %v154
  %v190 = vadd.f32 %v119, %v154
  %v191 = vadd.f32 %v120, %v154
  %v192 = vadd.f32 %v121, %v154
  %v193 = vadd.f32 %v122, %v154
  %v194 = vadd.f32 %v123, %v154
  %v195 = vadd.f32 %v124, %v154
  %v196 = vadd.f32 %v125, %v154
  %v197 = vadd.f32 %v126, %v154
  %v198 = vadd.f32 %v127, %v154
  %v199 = vadd.f32 %v128, %v154
  %v200 = vadd.f32 %v129, %v154
  %v201 = vadd.f32 %v130, %v154
  %v202 = vadd.f32 %v131, %v154
  %v203 = vadd.f32 %v132, %v154
  %v204 = vadd.f32 %v133, %v154
  %v205 = vadd.f32 %v134, %v154
  %v206 = vadd.f32 %v135, %v154
  %v207 = vadd.f32 %v136, %v154
  %v208 = vadd.f32 %v137, %v154
  %v209 = vadd.f32 %v138, %v154
  %v210 = vadd.f32 %v139, %v154
  %v211 = vadd.f32 %v140, %v154
  %v212 = vadd.f32 %v141, %v154
  %v213 = vadd.f32 %v142, %v154
  %v214 = vadd.f32 %v143, %v154
  %v215 = vadd.f32 %v144, %v154
  %v216 = vadd.f32 %v145, %v154
  %v217 = vadd.f32 %v146, %v154
  %v218 = vadd.f32 %v147, %v154
  %v219 = vadd.f32 %v148, %v154
  %v220 = vmax.f32 %v156, 0.0
  %v221 = vmax.f32 %v157, 0.0
  %v222 = vmax.f32 %v158, 0.0
  %v223 = vmax.f32 %v159, 0.0
  %v224 = vmax.f32 %v160, 0.0
  %v225 = vmax.f32 %v161, 0.0
  %v226 = vmax.f32 %v162, 0.0
  %v227 = vmax.f32 %v163, 0.0
  %v228 = vmax.f32 %v164, 0.0
  %v229 = vmax.f32 %v165, 0.0
  %v230 = vmax.f32 %v166, 0.0
  %v231 = vmax.f32 %v167, 0.0
  %v232 = vmax.f32 %v168, 0.0
  %v233 = vmax.f32 %v169, 0.0
  %v234 = vmax.f32 %v170, 0.0
  %v235 = vmax.f32 %v171, 0.0
  %v236 = vmax.f32 %v172, 0.0
  %v237 = vmax.f32 %v173, 0.0
  %v238 = vmax.f32 %v174, 0.0
  %v239 = vmax.f32 %v175, 0.0
  %v240 = vmax.f32 %v176, 0.0
  %v241 = vmax.f32 %v177, 0.0
  %v242 = vmax.f32 %v178, 0.0
  %v243 = vmax.f32 %v179, 0.0
  %v244 = vmax.f32 %v180, 0.0
  %v245 = vmax.f32 %v181, 0.0
  %v246 = vmax.f32 %v182, 0.0
  %v247 = vmax.f32 %v183, 0.0
  %v248 = vmax.f32 %v184, 0.0
  %v249 = vmax.f32 %v185, 0.0
  %v250 = vmax.f32 %v186, 0.0
  %v251 = vmax.f32 %v187, 0.0
  %v252 = vmax.f32 %v188, 0.0
  %v253 = vmax.f32 %v189, 0.0
  %v254 = vmax.f32 %v190, 0.0
  %v255 = vmax.f32 %v191, 0.0
  %v256 = vmax.f32 %v192, 0.0
  %v257 = vmax.f32 %v193, 0.0
  %v258 = vmax.f32 %v194, 0.0
  %v259 = vmax.f32 %v195, 0.0
  %v260 = vmax.f32 %v196, 0.0
  %v261 = vmax.f32 %v197, 0.0
  %v262 = vmax.f32 %v198, 0.0
  %v263 = vmax.f32 %v199, 0.0
  %v264 = vmax.f32 %v200, 0.0
  %v265 = vmax.f32 %v201, 0.0
  %v266 = vmax.f32 %v202, 0.0
  %v267 = vmax.f32 %v203, 0.0
  %v268 = vmax.f32 %v204, 0.0
  %v269 = vmax.f32 %v205, 0.0
  %v270 = vmax.f32 %v206, 0.0
  %v271 = vmax.f32 %v207, 0.0
  %v272 = vmax.f32 %v208, 0.0
  %v273 = vmax.f32 %v209, 0.0
  %v274 = vmax.f32 %v210, 0.0
  %v275 = vmax.f32 %v211, 0.0
  %v276 = vmax.f32 %v212, 0.0
  %v277 = vmax.f32 %v213, 0.0
  %v278 = vmax.f32 %v214, 0.0
  %v279 = vmax.f32 %v215, 0.0
  %v280 = vmax.f32 %v216, 0.0
  %v281 = vmax.f32 %v217, 0.0
  %v282 = vmax.f32 %v218, 0.0
  %v283 = vmax.f32 %v219, 0.0
  %284 = vst [vmem:[%s3] sm:$0xff] %v220
  %285 = vst [vmem:[%s3 + $0x8] sm:$0xff] %v221
  %286 = vst [vmem:[%s3 + $0x10] sm:$0xff] %v222
  %287 = vst [vmem:[%s3 + $0x18] sm:$0xff] %v223
  %288 = vst [vmem:[%s3 + $0x20] sm:$0xff] %v224
  %289 = vst [vmem:[%s3 + $0x28] sm:$0xff] %v225
  %290 = vst [vmem:[%s3 + $0x30] sm:$0xff] %v226
  %291 = vst [vmem:[%s3 + $0x38] sm:$0xff] %v227
  %292 = vst [vmem:[%s3 + $0x40] sm:$0xff] %v228
  %293 = vst [vmem:[%s3 + $0x48] sm:$0xff] %v229
  %294 = vst [vmem:[%s3 + $0x50] sm:$0xff] %v230
  %295 = vst [vmem:[%s3 + $0x58] sm:$0xff] %v231
  %296 = vst [vmem:[%s3 + $0x60] sm:$0xff] %v232
  %297 = vst [vmem:[%s3 + $0x68] sm:$0xff] %v233
  %298 = vst [vmem:[%s3 + $0x70] sm:$0xff] %v234
  %299 = vst [vmem:[%s3 + $0x78] sm:$0xff] %v235
  %300 = vst [vmem:[%s3 + $0x80] sm:$0xff] %v236
  %301 = vst [vmem:[%s3 + $0x88] sm:$0xff] %v237
  %302 = vst [vmem:[%s3 + $0x90] sm:$0xff] %v238
  %303 = vst [vmem:[%s3 + $0x98] sm:$0xff] %v239
  %304 = vst [vmem:[%s3 + $0xa0] sm:$0xff] %v240
  %305 = vst [vmem:[%s3 + $0xa8] sm:$0xff] %v241
  %306 = vst [vmem:[%s3 + $0xb0] sm:$0xff] %v242
  %307 = vst [vmem:[%s3 + $0xb8] sm:$0xff] %v243
  %308 = vst [vmem:[%s3 + $0xc0] sm:$0xff] %v244
  %309 = vst [vmem:[%s3 + $0xc8] sm:$0xff] %v245
  %310 = vst [vmem:[%s3 + $0xd0] sm:$0xff] %v246
  %311 = vst [vmem:[%s3 + $0xd8] sm:$0xff] %v247
  %312 = vst [vmem:[%s3 + $0xe0] sm:$0xff] %v248
  %313 = vst [vmem:[%s3 + $0xe8] sm:$0xff] %v249
  %314 = vst [vmem:[%s3 + $0xf0] sm:$0xff] %v250
  %315 = vst [vmem:[%s3 + $0xf8] sm:$0xff] %v251
  %316 = vst [vmem:[%s3 + $0x100] sm:$0xff] %v252
  %317 = vst [vmem:[%s3 + $0x108] sm:$0xff] %v253
  %318 = vst [vmem:[%s3 + $0x110] sm:$0xff] %v254
  %319 = vst [vmem:[%s3 + $0x118] sm:$0xff] %v255
  %320 = vst [vmem:[%s3 + $0x120] sm:$0xff] %v256
  %321 = vst [vmem:[%s3 + $0x128] sm:$0xff] %v257
  %322 = vst [vmem:[%s3 + $0x130] sm:$0xff] %v258
  %323 = vst [vmem:[%s3 + $0x138] sm:$0xff] %v259
  %324 = vst [vmem:[%s3 + $0x140] sm:$0xff] %v260
  %325 = vst [vmem:[%s3 + $0x148] sm:$0xff] %v261
  %326 = vst [vmem:[%s3 + $0x150] sm:$0xff] %v262
  %327 = vst [vmem:[%s3 + $0x158] sm:$0xff] %v263
  %328 = vst [vmem:[%s3 + $0x160] sm:$0xff] %v264
  %329 = vst [vmem:[%s3 + $0x168] sm:$0xff] %v265
  %330 = vst [vmem:[%s3 + $0x170] sm:$0xff] %v266
  %331 = vst [vmem:[%s3 + $0x178] sm:$0xff] %v267
  %332 = vst [vmem:[%s3 + $0x180] sm:$0xff] %v268
  %333 = vst [vmem:[%s3 + $0x188] sm:$0xff] %v269
  %334 = vst [vmem:[%s3 + $0x190] sm:$0xff] %v270
  %335 = vst [vmem:[%s3 + $0x198] sm:$0xff] %v271
  %336 = vst [vmem:[%s3 + $0x1a0] sm:$0xff] %v272
  %337 = vst [vmem:[%s3 + $0x1a8] sm:$0xff] %v273
  %338 = vst [vmem:[%s3 + $0x1b0] sm:$0xff] %v274
  %339 = vst [vmem:[%s3 + $0x1b8] sm:$0xff] %v275
  %340 = vst [vmem:[%s3 + $0x1c0] sm:$0xff] %v276
  %341 = vst [vmem:[%s3 + $0x1c8] sm:$0xff] %v277
  %342 = vst [vmem:[%s3 + $0x1d0] sm:$0xff] %v278
  %343 = vst [vmem:[%s3 + $0x1d8] sm:$0xff] %v279
  %344 = vst [vmem:[%s3 + $0x1e0] sm:$0xff] %v280
  %345 = vst [vmem:[%s3 + $0x1e8] sm:$0xff] %v281
  %346 = vst [vmem:[%s3 + $0x1f0] sm:$0xff] %v282
  %347 = vst [vmem:[%s3 + $0x1f8] sm:$0xff] %v283
  // Predicated region
  $region14: #{forward.15} parent=0 // pred_check
    _
  $region15: #{forward.15} parent=0 // pred_check_branch
    %349 = sbr.rel (0) target = $region17
  $region16: #{forward.15} parent=0 // pred_region
    _
  $region17: #{forward.15} parent=0 // pred_fallthru
    _
  // Predicated region
  $region18: #{forward.15} parent=0 // pred_check
    _
  $region19: #{forward.15} parent=0 // pred_check_branch
    %351 = sbr.rel (0) target = $region21
  $region20: #{forward.15} parent=0 // pred_region
    _
  $region21: #{forward.15} parent=0 // pred_fallthru
    _

// kernel: forward.14
$region0: #{forward.14}
  #allocation0 [shape = 'u32[]', space=smem, size = 0x4, offset = 0x4, fixed_abs, tag = 'smem constant byte address 0x4 - core index']
  #allocation1 [shape = 'u32[144,128]{1,0:T(1,128)}', space=vmem, size = 0x12000, scoped, tag = 'internal scratch']
  %s0 = inlined_call_operand.vmem [shape: f32[512,288], index: 0, kind: input, shape index: {}]
  %s1 = inlined_call_operand.vmem [shape: f32[288,128], index: 1, kind: input, shape index: {}]
  %s2 = inlined_call_operand.vmem [shape: f32[512,128], index: 2, kind: output, shape index: {0}]
  %s3 = inlined_call_operand.vmem [shape: f32[8,128], index: 3, kind: output, shape index: {1}]
  %4 = xla_tuple %s2, %s3
  %s5 = sld [smem:[#allocation0]]
  $region26: #{forward.14} parent=0
    _
  %s7 = ssub.s32 1, %s5
  %s8 = scalar_select 0, %s7, %s5
  // Predicated region
  $region2: #{forward.14} parent=0 // pred_check
    _
  $region3: #{forward.14} parent=0 // pred_check_branch
    %10 = sbr.rel (0) target = $region5
  $region4: #{forward.14} parent=0 // pred_region
    _
  $region5: #{forward.14} parent=0 // pred_fallthru
    _
  // Predicated region
  $region6: #{forward.14} parent=0 // pred_check
    _
  $region7: #{forward.14} parent=0 // pred_check_branch
    %12 = sbr.rel (0) target = $region9
  $region8: #{forward.14} parent=0 // pred_region
    _
  $region9: #{forward.14} parent=0 // pred_fallthru
    _
  %v13 = vld [vmem:[%s0] sm:$0xff]
  %v14 = vld [vmem:[%s0 + $0x8] sm:$0xff]
  %v15 = vld [vmem:[%s0 + $0x10] sm:$0xff]
  %v16 = vld [vmem:[%s0 + $0x18] sm:$0xff]
  %v17 = vld [vmem:[%s0 + $0x20] sm:$0xff]
  %v18 = vld [vmem:[%s0 + $0x28] sm:$0xff]
  %v19 = vld [vmem:[%s0 + $0x30] sm:$0xff]
  %v20 = vld [vmem:[%s0 + $0x38] sm:$0xff]
  %v21 = vld [vmem:[%s0 + $0x40] sm:$0xff]
  %v22 = vld [vmem:[%s0 + $0x48] sm:$0xff]
  %v23 = vld [vmem:[%s0 + $0x50] sm:$0xff]
  %v24 = vld [vmem:[%s0 + $0x58] sm:$0xff]
  %v25 = vld [vmem:[%s0 + $0x60] sm:$0xff]
  %v26 = vld [vmem:[%s0 + $0x68] sm:$0xff]
  %v27 = vld [vmem:[%s0 + $0x70] sm:$0xff]
  %v28 = vld [vmem:[%s0 + $0x78] sm:$0xff]
  %v29 = vld [vmem:[%s0 + $0x80] sm:$0xff]
  %v30 = vld [vmem:[%s0 + $0x88] sm:$0xff]
  %v31 = vld [vmem:[%s0 + $0x90] sm:$0xff]
  %v32 = vld [vmem:[%s0 + $0x98] sm:$0xff]
  %v33 = vld [vmem:[%s0 + $0xa0] sm:$0xff]
  %v34 = vld [vmem:[%s0 + $0xa8] sm:$0xff]
  %v35 = vld [vmem:[%s0 + $0xb0] sm:$0xff]
  %v36 = vld [vmem:[%s0 + $0xb8] sm:$0xff]
  %v37 = vld [vmem:[%s0 + $0xc0] sm:$0xff]
  %v38 = vld [vmem:[%s0 + $0xc8] sm:$0xff]
  %v39 = vld [vmem:[%s0 + $0xd0] sm:$0xff]
  %v40 = vld [vmem:[%s0 + $0xd8] sm:$0xff]
  %v41 = vld [vmem:[%s0 + $0xe0] sm:$0xff]
  %v42 = vld [vmem:[%s0 + $0xe8] sm:$0xff]
  %v43 = vld [vmem:[%s0 + $0xf0] sm:$0xff]
  %v44 = vld [vmem:[%s0 + $0xf8] sm:$0xff]
  %v45 = vld [vmem:[%s0 + $0x100] sm:$0xff]
  %v46 = vld [vmem:[%s0 + $0x108] sm:$0xff]
  %v47 = vld [vmem:[%s0 + $0x110] sm:$0xff]
  %v48 = vld [vmem:[%s0 + $0x118] sm:$0xff]
  %v49 = vld [vmem:[%s0 + $0x120] sm:$0xff]
  %v50 = vld [vmem:[%s0 + $0x128] sm:$0xff]
  %v51 = vld [vmem:[%s0 + $0x130] sm:$0xff]
  %v52 = vld [vmem:[%s0 + $0x138] sm:$0xff]
  %v53 = vld [vmem:[%s0 + $0x140] sm:$0xff]
  %v54 = vld [vmem:[%s0 + $0x148] sm:$0xff]
  %v55 = vld [vmem:[%s0 + $0x150] sm:$0xff]
  %v56 = vld [vmem:[%s0 + $0x158] sm:$0xff]
  %v57 = vld [vmem:[%s0 + $0x160] sm:$0xff]
  %v58 = vld [vmem:[%s0 + $0x168] sm:$0xff]
  %v59 = vld [vmem:[%s0 + $0x170] sm:$0xff]
  %v60 = vld [vmem:[%s0 + $0x178] sm:$0xff]
  %v61 = vld [vmem:[%s0 + $0x180] sm:$0xff]
  %v62 = vld [vmem:[%s0 + $0x188] sm:$0xff]
  %v63 = vld [vmem:[%s0 + $0x190] sm:$0xff]
  %v64 = vld [vmem:[%s0 + $0x198] sm:$0xff]
  %v65 = vld [vmem:[%s0 + $0x1a0] sm:$0xff]
  %v66 = vld [vmem:[%s0 + $0x1a8] sm:$0xff]
  %v67 = vld [vmem:[%s0 + $0x1b0] sm:$0xff]
  %v68 = vld [vmem:[%s0 + $0x1b8] sm:$0xff]
  %v69 = vld [vmem:[%s0 + $0x1c0] sm:$0xff]
  %v70 = vld [vmem:[%s0 + $0x1c8] sm:$0xff]
  %v71 = vld [vmem:[%s0 + $0x1d0] sm:$0xff]
  %v72 = vld [vmem:[%s0 + $0x1d8] sm:$0xff]
  %v73 = vld [vmem:[%s0 + $0x1e0] sm:$0xff]
  %v74 = vld [vmem:[%s0 + $0x1e8] sm:$0xff]
  %v75 = vld [vmem:[%s0 + $0x1f0] sm:$0xff]
  %v76 = vld [vmem:[%s0 + $0x1f8] sm:$0xff]
  %v77 = vld [vmem:[%s0 + $0x200] sm:$0xff]
  %v78 = vld [vmem:[%s0 + $0x208] sm:$0xff]
  %v79 = vld [vmem:[%s0 + $0x210] sm:$0xff]
  %v80 = vld [vmem:[%s0 + $0x218] sm:$0xff]
  %v81 = vld [vmem:[%s0 + $0x220] sm:$0xff]
  %v82 = vld [vmem:[%s0 + $0x228] sm:$0xff]
  %v83 = vld [vmem:[%s0 + $0x230] sm:$0xff]
  %v84 = vld [vmem:[%s0 + $0x238] sm:$0xff]
  %v85 = vld [vmem:[%s0 + $0x240] sm:$0xff]
  %v86 = vld [vmem:[%s0 + $0x248] sm:$0xff]
  %v87 = vld [vmem:[%s0 + $0x250] sm:$0xff]
  %v88 = vld [vmem:[%s0 + $0x258] sm:$0xff]
  %v89 = vld [vmem:[%s0 + $0x260] sm:$0xff]
  %v90 = vld [vmem:[%s0 + $0x268] sm:$0xff]
  %v91 = vld [vmem:[%s0 + $0x270] sm:$0xff]
  %v92 = vld [vmem:[%s0 + $0x278] sm:$0xff]
  %v93 = vld [vmem:[%s0 + $0x280] sm:$0xff]
  %v94 = vld [vmem:[%s0 + $0x288] sm:$0xff]
  %v95 = vld [vmem:[%s0 + $0x290] sm:$0xff]
  %v96 = vld [vmem:[%s0 + $0x298] sm:$0xff]
  %v97 = vld [vmem:[%s0 + $0x2a0] sm:$0xff]
  %v98 = vld [vmem:[%s0 + $0x2a8] sm:$0xff]
  %v99 = vld [vmem:[%s0 + $0x2b0] sm:$0xff]
  %v100 = vld [vmem:[%s0 + $0x2b8] sm:$0xff]
  %v101 = vld [vmem:[%s0 + $0x2c0] sm:$0xff]
  %v102 = vld [vmem:[%s0 + $0x2c8] sm:$0xff]
  %v103 = vld [vmem:[%s0 + $0x2d0] sm:$0xff]
  %v104 = vld [vmem:[%s0 + $0x2d8] sm:$0xff]
  %v105 = vld [vmem:[%s0 + $0x2e0] sm:$0xff]
  %v106 = vld [vmem:[%s0 + $0x2e8] sm:$0xff]
  %v107 = vld [vmem:[%s0 + $0x2f0] sm:$0xff]
  %v108 = vld [vmem:[%s0 + $0x2f8] sm:$0xff]
  %v109 = vld [vmem:[%s0 + $0x300] sm:$0xff]
  %v110 = vld [vmem:[%s0 + $0x308] sm:$0xff]
  %v111 = vld [vmem:[%s0 + $0x310] sm:$0xff]
  %v112 = vld [vmem:[%s0 + $0x318] sm:$0xff]
  %v113 = vld [vmem:[%s0 + $0x320] sm:$0xff]
  %v114 = vld [vmem:[%s0 + $0x328] sm:$0xff]
  %v115 = vld [vmem:[%s0 + $0x330] sm:$0xff]
  %v116 = vld [vmem:[%s0 + $0x338] sm:$0xff]
  %v117 = vld [vmem:[%s0 + $0x340] sm:$0xff]
  %v118 = vld [vmem:[%s0 + $0x348] sm:$0xff]
  %v119 = vld [vmem:[%s0 + $0x350] sm:$0xff]
  %v120 = vld [vmem:[%s0 + $0x358] sm:$0xff]
  %v121 = vld [vmem:[%s0 + $0x360] sm:$0xff]
  %v122 = vld [vmem:[%s0 + $0x368] sm:$0xff]
  %v123 = vld [vmem:[%s0 + $0x370] sm:$0xff]
  %v124 = vld [vmem:[%s0 + $0x378] sm:$0xff]
  %v125 = vld [vmem:[%s0 + $0x380] sm:$0xff]
  %v126 = vld [vmem:[%s0 + $0x388] sm:$0xff]
  %v127 = vld [vmem:[%s0 + $0x390] sm:$0xff]
  %v128 = vld [vmem:[%s0 + $0x398] sm:$0xff]
  %v129 = vld [vmem:[%s0 + $0x3a0] sm:$0xff]
  %v130 = vld [vmem:[%s0 + $0x3a8] sm:$0xff]
  %v131 = vld [vmem:[%s0 + $0x3b0] sm:$0xff]
  %v132 = vld [vmem:[%s0 + $0x3b8] sm:$0xff]
  %v133 = vld [vmem:[%s0 + $0x3c0] sm:$0xff]
  %v134 = vld [vmem:[%s0 + $0x3c8] sm:$0xff]
  %v135 = vld [vmem:[%s0 + $0x3d0] sm:$0xff]
  %v136 = vld [vmem:[%s0 + $0x3d8] sm:$0xff]
  %v137 = vld [vmem:[%s0 + $0x3e0] sm:$0xff]
  %v138 = vld [vmem:[%s0 + $0x3e8] sm:$0xff]
  %v139 = vld [vmem:[%s0 + $0x3f0] sm:$0xff]
  %v140 = vld [vmem:[%s0 + $0x3f8] sm:$0xff]
  %v141 = vld [vmem:[%s0 + $0x400] sm:$0xff]
  %v142 = vld [vmem:[%s0 + $0x408] sm:$0xff]
  %v143 = vld [vmem:[%s0 + $0x410] sm:$0xff]
  %v144 = vld [vmem:[%s0 + $0x418] sm:$0xff]
  %v145 = vld [vmem:[%s0 + $0x420] sm:$0xff]
  %v146 = vld [vmem:[%s0 + $0x428] sm:$0xff]
  %v147 = vld [vmem:[%s0 + $0x430] sm:$0xff]
  %v148 = vld [vmem:[%s0 + $0x438] sm:$0xff]
  %v149 = vld [vmem:[%s0 + $0x440] sm:$0xff]
  %v150 = vld [vmem:[%s0 + $0x448] sm:$0xff]
  %v151 = vld [vmem:[%s0 + $0x450] sm:$0xff]
  %v152 = vld [vmem:[%s0 + $0x458] sm:$0xff]
  %v153 = vld [vmem:[%s0 + $0x460] sm:$0xff]
  %v154 = vld [vmem:[%s0 + $0x468] sm:$0xff]
  %v155 = vld [vmem:[%s0 + $0x470] sm:$0xff]
  %v156 = vld [vmem:[%s0 + $0x478] sm:$0xff]
  %v157 = vld [vmem:[%s0 + $0x480] sm:$0xff]
  %v158 = vld [vmem:[%s0 + $0x488] sm:$0xff]
  %v159 = vld [vmem:[%s0 + $0x490] sm:$0xff]
  %v160 = vld [vmem:[%s0 + $0x498] sm:$0xff]
  %v161 = vld [vmem:[%s0 + $0x4a0] sm:$0xff]
  %v162 = vld [vmem:[%s0 + $0x4a8] sm:$0xff]
  %v163 = vld [vmem:[%s0 + $0x4b0] sm:$0xff]
  %v164 = vld [vmem:[%s0 + $0x4b8] sm:$0xff]
  %v165 = vld [vmem:[%s0 + $0x4c0] sm:$0xff]
  %v166 = vld [vmem:[%s0 + $0x4c8] sm:$0xff]
  %v167 = vld [vmem:[%s0 + $0x4d0] sm:$0xff]
  %v168 = vld [vmem:[%s0 + $0x4d8] sm:$0xff]
  %v169 = vld [vmem:[%s0 + $0x4e0] sm:$0xff]
  %v170 = vld [vmem:[%s0 + $0x4e8] sm:$0xff]
  %v171 = vld [vmem:[%s0 + $0x4f0] sm:$0xff]
  %v172 = vld [vmem:[%s0 + $0x4f8] sm:$0xff]
  %v173 = vld [vmem:[%s0 + $0x500] sm:$0xff]
  %v174 = vld [vmem:[%s0 + $0x508] sm:$0xff]
  %v175 = vld [vmem:[%s0 + $0x510] sm:$0xff]
  %v176 = vld [vmem:[%s0 + $0x518] sm:$0xff]
  %v177 = vld [vmem:[%s0 + $0x520] sm:$0xff]
  %v178 = vld [vmem:[%s0 + $0x528] sm:$0xff]
  %v179 = vld [vmem:[%s0 + $0x530] sm:$0xff]
  %v180 = vld [vmem:[%s0 + $0x538] sm:$0xff]
  %v181 = vld [vmem:[%s0 + $0x540] sm:$0xff]
  %v182 = vld [vmem:[%s0 + $0x548] sm:$0xff]
  %v183 = vld [vmem:[%s0 + $0x550] sm:$0xff]
  %v184 = vld [vmem:[%s0 + $0x558] sm:$0xff]
  %v185 = vld [vmem:[%s0 + $0x560] sm:$0xff]
  %v186 = vld [vmem:[%s0 + $0x568] sm:$0xff]
  %v187 = vld [vmem:[%s0 + $0x570] sm:$0xff]
  %v188 = vld [vmem:[%s0 + $0x578] sm:$0xff]
  %v189 = vld [vmem:[%s0 + $0x580] sm:$0xff]
  %v190 = vld [vmem:[%s0 + $0x588] sm:$0xff]
  %v191 = vld [vmem:[%s0 + $0x590] sm:$0xff]
  %v192 = vld [vmem:[%s0 + $0x598] sm:$0xff]
  %v193 = vld [vmem:[%s0 + $0x5a0] sm:$0xff]
  %v194 = vld [vmem:[%s0 + $0x5a8] sm:$0xff]
  %v195 = vld [vmem:[%s0 + $0x5b0] sm:$0xff]
  %v196 = vld [vmem:[%s0 + $0x5b8] sm:$0xff]
  %v197 = vld [vmem:[%s0 + $0x5c0] sm:$0xff]
  %v198 = vld [vmem:[%s0 + $0x5c8] sm:$0xff]
  %v199 = vld [vmem:[%s0 + $0x5d0] sm:$0xff]
  %v200 = vld [vmem:[%s0 + $0x5d8] sm:$0xff]
  %v201 = vld [vmem:[%s0 + $0x5e0] sm:$0xff]
  %v202 = vld [vmem:[%s0 + $0x5e8] sm:$0xff]
  %v203 = vld [vmem:[%s0 + $0x5f0] sm:$0xff]
  %v204 = vld [vmem:[%s0 + $0x5f8] sm:$0xff]
  %v205 = vld [vmem:[%s1] sm:$0xff]
  %v206 = vld [vmem:[%s1 + $0x8] sm:$0xff]
  %v207 = vld [vmem:[%s1 + $0x10] sm:$0xff]
  %v208 = vld [vmem:[%s1 + $0x18] sm:$0xff]
  %v209 = vld [vmem:[%s1 + $0x20] sm:$0xff]
  %v210 = vld [vmem:[%s1 + $0x28] sm:$0xff]
  %v211 = vld [vmem:[%s1 + $0x30] sm:$0xff]
  %v212 = vld [vmem:[%s1 + $0x38] sm:$0xff]
  %v213 = vld [vmem:[%s1 + $0x40] sm:$0xff]
  %v214 = vld [vmem:[%s1 + $0x48] sm:$0xff]
  %v215 = vld [vmem:[%s1 + $0x50] sm:$0xff]
  %v216 = vld [vmem:[%s1 + $0x58] sm:$0xff]
  %v217 = vld [vmem:[%s1 + $0x60] sm:$0xff]
  %v218 = vld [vmem:[%s1 + $0x68] sm:$0xff]
  %v219 = vld [vmem:[%s1 + $0x70] sm:$0xff]
  %v220 = vld [vmem:[%s1 + $0x78] sm:$0xff]
  %v221 = vld [vmem:[%s1 + $0x80] sm:$0xff]
  %v222 = vld [vmem:[%s1 + $0x88] sm:$0xff]
  %v223 = vld [vmem:[%s1 + $0x90] sm:$0xff]
  %v224 = vld [vmem:[%s1 + $0x98] sm:$0xff]
  %v225 = vld [vmem:[%s1 + $0xa0] sm:$0xff]
  %v226 = vld [vmem:[%s1 + $0xa8] sm:$0xff]
  %v227 = vld [vmem:[%s1 + $0xb0] sm:$0xff]
  %v228 = vld [vmem:[%s1 + $0xb8] sm:$0xff]
  %v229 = vld [vmem:[%s1 + $0xc0] sm:$0xff]
  %v230 = vld [vmem:[%s1 + $0xc8] sm:$0xff]
  %v231 = vld [vmem:[%s1 + $0xd0] sm:$0xff]
  %v232 = vld [vmem:[%s1 + $0xd8] sm:$0xff]
  %v233 = vld [vmem:[%s1 + $0xe0] sm:$0xff]
  %v234 = vld [vmem:[%s1 + $0xe8] sm:$0xff]
  %v235 = vld [vmem:[%s1 + $0xf0] sm:$0xff]
  %v236 = vld [vmem:[%s1 + $0xf8] sm:$0xff]
  %v237 = vld [vmem:[%s1 + $0x100] sm:$0xff]
  %v238 = vld [vmem:[%s1 + $0x108] sm:$0xff]
  %v239 = vld [vmem:[%s1 + $0x110] sm:$0xff]
  %v240 = vld [vmem:[%s1 + $0x118] sm:$0xff]
  %vm241 = vcmask 261120
  %v243 = vsel %vm241, %v15, 0
  %v246 = vsel %vm241, %v18, 0
  %v249 = vsel %vm241, %v21, 0
  %v252 = vsel %vm241, %v24, 0
  %v255 = vsel %vm241, %v27, 0
  %v258 = vsel %vm241, %v30, 0
  %v261 = vsel %vm241, %v33, 0
  %v264 = vsel %vm241, %v36, 0
  %v267 = vsel %vm241, %v39, 0
  %v270 = vsel %vm241, %v42, 0
  %v273 = vsel %vm241, %v45, 0
  %v276 = vsel %vm241, %v48, 0
  %v279 = vsel %vm241, %v51, 0
  %v282 = vsel %vm241, %v54, 0
  %v285 = vsel %vm241, %v57, 0
  %v288 = vsel %vm241, %v60, 0
  %v291 = vsel %vm241, %v63, 0
  %v294 = vsel %vm241, %v66, 0
  %v297 = vsel %vm241, %v69, 0
  %v300 = vsel %vm241, %v72, 0
  %v303 = vsel %vm241, %v75, 0
  %v306 = vsel %vm241, %v78, 0
  %v309 = vsel %vm241, %v81, 0
  %v312 = vsel %vm241, %v84, 0
  %v315 = vsel %vm241, %v87, 0
  %v318 = vsel %vm241, %v90, 0
  %v321 = vsel %vm241, %v93, 0
  %v324 = vsel %vm241, %v96, 0
  %v327 = vsel %vm241, %v99, 0
  %v330 = vsel %vm241, %v102, 0
  %v333 = vsel %vm241, %v105, 0
  %v336 = vsel %vm241, %v108, 0
  %v339 = vsel %vm241, %v111, 0
  %v342 = vsel %vm241, %v114, 0
  %v345 = vsel %vm241, %v117, 0
  %v348 = vsel %vm241, %v120, 0
  %v351 = vsel %vm241, %v123, 0
  %v354 = vsel %vm241, %v126, 0
  %v357 = vsel %vm241, %v129, 0
  %v360 = vsel %vm241, %v132, 0
  %v363 = vsel %vm241, %v135, 0
  %v366 = vsel %vm241, %v138, 0
  %v369 = vsel %vm241, %v141, 0
  %v372 = vsel %vm241, %v144, 0
  %v375 = vsel %vm241, %v147, 0
  %v378 = vsel %vm241, %v150, 0
  %v381 = vsel %vm241, %v153, 0
  %v384 = vsel %vm241, %v156, 0
  %v387 = vsel %vm241, %v159, 0
  %v390 = vsel %vm241, %v162, 0
  %v393 = vsel %vm241, %v165, 0
  %v396 = vsel %vm241, %v168, 0
  %v399 = vsel %vm241, %v171, 0
  %v402 = vsel %vm241, %v174, 0
  %v405 = vsel %vm241, %v177, 0
  %v408 = vsel %vm241, %v180, 0
  %v411 = vsel %vm241, %v183, 0
  %v414 = vsel %vm241, %v186, 0
  %v417 = vsel %vm241, %v189, 0
  %v420 = vsel %vm241, %v192, 0
  %v423 = vsel %vm241, %v195, 0
  %v426 = vsel %vm241, %v198, 0
  %v429 = vsel %vm241, %v201, 0
  %v432 = vsel %vm241, %v204, 0
  %434 = vmatprep.subr.mxu0 0.0
  %435 = vmatpush1.msra.mxu0 %v205
  %436 = vmatprep.subr.mxu0 0.0
  %437 = vmatpush1.msra.mxu0 %v206
  %438 = vmatprep.subr.mxu0 0.0
  %439 = vmatpush1.msra.mxu0 %v207
  %440 = vmatprep.subr.mxu0 0.0
  %441 = vmatpush1.msra.mxu0 %v208
  %442 = vmatprep.subr.mxu0 0.0
  %443 = vmatpush1.msra.mxu0 %v209
  %444 = vmatprep.subr.mxu0 0.0
  %445 = vmatpush1.msra.mxu0 %v210
  %446 = vmatprep.subr.mxu0 0.0
  %447 = vmatpush1.msra.mxu0 %v211
  %448 = vmatprep.subr.mxu0 0.0
  %449 = vmatpush1.msra.mxu0 %v212
  %450 = vmatprep.subr.mxu0 0.0
  %451 = vmatpush1.msra.mxu0 %v213
  %452 = vmatprep.subr.mxu0 0.0
  %453 = vmatpush1.msra.mxu0 %v214
  %454 = vmatprep.subr.mxu0 0.0
  %455 = vmatpush1.msra.mxu0 %v215
  %456 = vmatprep.subr.mxu0 0.0
  %457 = vmatpush1.msra.mxu0 %v216
  %458 = vmatprep.subr.mxu0 0.0
  %459 = vmatpush1.msra.mxu0 %v217
  %460 = vmatprep.subr.mxu0 0.0
  %461 = vmatpush1.msra.mxu0 %v218
  %462 = vmatprep.subr.mxu0 0.0
  %463 = vmatpush1.msra.mxu0 %v219
  %464 = vmatprep.subr.mxu0 0.0
  %465 = vmatpush1.msra.mxu0 %v220
  %466 = vmatprep.subr.mxu0 0.0
  %467 = vmatpush1.msra.mxu0 %v221
  %468 = vmatprep.subr.mxu0 0.0
  %469 = vmatpush1.msra.mxu0 %v222
  %470 = vmatprep.subr.mxu0 0.0
  %471 = vmatpush1.msra.mxu0 %v223
  %472 = vmatprep.subr.mxu0 0.0
  %473 = vmatpush1.msra.mxu0 %v224
  %474 = vmatprep.subr.mxu0 0.0
  %475 = vmatpush1.msra.mxu0 %v225
  %476 = vmatprep.subr.mxu0 0.0
  %477 = vmatpush1.msra.mxu0 %v226
  %478 = vmatprep.subr.mxu0 0.0
  %479 = vmatpush1.msra.mxu0 %v227
  %480 = vmatprep.subr.mxu0 0.0
  %481 = vmatpush1.msra.mxu0 %v228
  %482 = vmatprep.subr.mxu0 0.0
  %483 = vmatpush1.msra.mxu0 %v229
  %484 = vmatprep.subr.mxu0 0.0
  %485 = vmatpush1.msra.mxu0 %v230
  %486 = vmatprep.subr.mxu0 0.0
  %487 = vmatpush1.msra.mxu0 %v231
  %488 = vmatprep.subr.mxu0 0.0
  %489 = vmatpush1.msra.mxu0 %v232
  %490 = vmatprep.subr.mxu0 0.0
  %491 = vmatpush1.msra.mxu0 %v233
  %492 = vmatprep.subr.mxu0 0.0
  %493 = vmatpush1.msra.mxu0 %v234
  %494 = vmatprep.subr.mxu0 0.0
  %495 = vmatpush1.msra.mxu0 %v235
  %496 = vmatprep.subr.mxu0 0.0
  %497 = vmatpush1.msra.mxu0 %v236
  %498 = vmatprep.mubr.f32.mxu0 %v14
  %499 = vmatmul.mubr.f32.gmra.mrb[0].mxu0 %v13
  %v500 = vpop.f32.mrb[0].mxu0
  %v501 = vadd.f32 0.0, %v500
  %v502 = vpop.f32.mrb[0].mxu0
  %503 = vmatprep.mubr.f32.mxu0 %v17
  %504 = vmatmul.mubr.f32.gmra.mrb[0].mxu0 %v16
  %v505 = vpop.f32.mrb[0].mxu0
  %v506 = vadd.f32 0.0, %v505
  %v507 = vpop.f32.mrb[0].mxu0
  %508 = vmatprep.mubr.f32.mxu0 %v20
  %509 = vmatmul.mubr.f32.gmra.mrb[0].mxu0 %v19
  %v510 = vpop.f32.mrb[0].mxu0
  %v511 = vadd.f32 0.0, %v510
  %v512 = vpop.f32.mrb[0].mxu0
  %513 = vmatprep.mubr.f32.mxu0 %v23
  %514 = vmatmul.mubr.f32.gmra.mrb[0].mxu0 %v22
  %v515 = vpop.f32.mrb[0].mxu0
  %v516 = vadd.f32 0.0, %v515
  %v517 = vpop.f32.mrb[0].mxu0
  %518 = vmatprep.mubr.f32.mxu0 %v26
  %519 = vmatmul.mubr.f32.gmra.mrb[0].mxu0 %v25
  %v520 = vpop.f32.mrb[0].mxu0
  %v521 = vadd.f32 0.0, %v520
  %v522 = vpop.f32.mrb[0].mxu0
  %523 = vmatprep.mubr.f32.mxu0 %v29
  %524 = vmatmul.mubr.f32.gmra.mrb[0].mxu0 %v28
  %v525 = vpop.f32.mrb[0].mxu0
  %v526 = vadd.f32 0.0, %v525
  %v527 = vpop.f32.mrb[0].mxu0
  %528 = vmatprep.mubr.f32.mxu0 %v32
  %529 = vmatmul.mubr.f32.gmra.mrb[0].mxu0 %v31
  %v530 = vpop.f32.mrb[0].mxu0
  %v531 = vadd.f32 0.0, %v530
  %v532 = vpop.f32.mrb[0].mxu0
  %533 = vmatprep.mubr.f32.mxu0 %v35
  %534 = vmatmul.mubr.f32.gmra.mrb[0].mxu0 %v34
  %v535 = vpop.f32.mrb[0].mxu0
  %v536 = vadd.f32 0.0, %v535
  %v537 = vpop.f32.mrb[0].mxu0
  %538 = vmatprep.mubr.f32.mxu0 %v38
  %539 = vmatmul.mubr.f32.gmra.mrb[0].mxu0 %v37
  %v540 = vpop.f32.mrb[0].mxu0
  %v541 = vadd.f32 0.0, %v540
  %v542 = vpop.f32.mrb[0].mxu0
  %543 = vmatprep.mubr.f32.mxu0 %v41
  %544 = vmatmul.mubr.f32.gmra.mrb[0].mxu0 %v40
  %v545 = vpop.f32.mrb[0].mxu0
  %v546 = vadd.f32 0.0, %v545
  %v547 = vpop.f32.mrb[0].mxu0
  %548 = vmatprep.mubr.f32.mxu0 %v44
  %549 = vmatmul.mubr.f32.gmra.mrb[0].mxu0 %v43
  %v550 = vpop.f32.mrb[0].mxu0
  %v551 = vadd.f32 0.0, %v550
  %v552 = vpop.f32.mrb[0].mxu0
  %553 = vmatprep.mubr.f32.mxu0 %v47
  %554 = vmatmul.mubr.f32.gmra.mrb[0].mxu0 %v46
  %v555 = vpop.f32.mrb[0].mxu0
  %v556 = vadd.f32 0.0, %v555
  %v557 = vpop.f32.mrb[0].mxu0
  %558 = vmatprep.mubr.f32.mxu0 %v50
  %559 = vmatmul.mubr.f32.gmra.mrb[0].mxu0 %v49
  %v560 = vpop.f32.mrb[0].mxu0
  %v561 = vadd.f32 0.0, %v560
  %v562 = vpop.f32.mrb[0].mxu0
  %563 = vmatprep.mubr.f32.mxu0 %v53
  %564 = vmatmul.mubr.f32.gmra.mrb[0].mxu0 %v52
  %v565 = vpop.f32.mrb[0].mxu0
  %v566 = vadd.f32 0.0, %v565
  %v567 = vpop.f32.mrb[0].mxu0
  %568 = vmatprep.mubr.f32.mxu0 %v56
  %569 = vmatmul.mubr.f32.gmra.mrb[0].mxu0 %v55
  %v570 = vpop.f32.mrb[0].mxu0
  %v571 = vadd.f32 0.0, %v570
  %v572 = vpop.f32.mrb[0].mxu0
  %573 = vmatprep.mubr.f32.mxu0 %v59
  %574 = vmatmul.mubr.f32.gmra.mrb[0].mxu0 %v58
  %v575 = vpop.f32.mrb[0].mxu0
  %v576 = vadd.f32 0.0, %v575
  %v577 = vpop.f32.mrb[0].mxu0
  %578 = vmatprep.mubr.f32.mxu0 %v62
  %579 = vmatmul.mubr.f32.gmra.mrb[0].mxu0 %v61
  %v580 = vpop.f32.mrb[0].mxu0
  %v581 = vadd.f32 0.0, %v580
  %v582 = vpop.f32.mrb[0].mxu0
  %583 = vmatprep.mubr.f32.mxu0 %v65
  %584 = vmatmul.mubr.f32.gmra.mrb[0].mxu0 %v64
  %v585 = vpop.f32.mrb[0].mxu0
  %v586 = vadd.f32 0.0, %v585
  %v587 = vpop.f32.mrb[0].mxu0
  %588 = vmatprep.mubr.f32.mxu0 %v68
  %589 = vmatmul.mubr.f32.gmra.mrb[0].mxu0 %v67
  %v590 = vpop.f32.mrb[0].mxu0
  %v591 = vadd.f32 0.0, %v590
  %v592 = vpop.f32.mrb[0].mxu0
  %593 = vmatprep.mubr.f32.mxu0 %v71
  %594 = vmatmul.mubr.f32.gmra.mrb[0].mxu0 %v70
  %v595 = vpop.f32.mrb[0].mxu0
  %v596 = vadd.f32 0.0, %v595
  %v597 = vpop.f32.mrb[0].mxu0
  %598 = vmatprep.mubr.f32.mxu0 %v74
  %599 = vmatmul.mubr.f32.gmra.mrb[0].mxu0 %v73
  %v600 = vpop.f32.mrb[0].mxu0
  %v601 = vadd.f32 0.0, %v600
  %v602 = vpop.f32.mrb[0].mxu0
  %603 = vmatprep.mubr.f32.mxu0 %v77
  %604 = vmatmul.mubr.f32.gmra.mrb[0].mxu0 %v76
  %v605 = vpop.f32.mrb[0].mxu0
  %v606 = vadd.f32 0.0, %v605
  %v607 = vpop.f32.mrb[0].mxu0
  %608 = vmatprep.mubr.f32.mxu0 %v80
  %609 = vmatmul.mubr.f32.gmra.mrb[0].mxu0 %v79
  %v610 = vpop.f32.mrb[0].mxu0
  %v611 = vadd.f32 0.0, %v610
  %v612 = vpop.f32.mrb[0].mxu0
  %613 = vmatprep.mubr.f32.mxu0 %v83
  %614 = vmatmul.mubr.f32.gmra.mrb[0].mxu0 %v82
  %v615 = vpop.f32.mrb[0].mxu0
  %v616 = vadd.f32 0.0, %v615
  %v617 = vpop.f32.mrb[0].mxu0
  %618 = vmatprep.mubr.f32.mxu0 %v86
  %619 = vmatmul.mubr.f32.gmra.mrb[0].mxu0 %v85
  %v620 = vpop.f32.mrb[0].mxu0
  %v621 = vadd.f32 0.0, %v620
  %v622 = vpop.f32.mrb[0].mxu0
  %623 = vmatprep.mubr.f32.mxu0 %v89
  %624 = vmatmul.mubr.f32.gmra.mrb[0].mxu0 %v88
  %v625 = vpop.f32.mrb[0].mxu0
  %v626 = vadd.f32 0.0, %v625
  %v627 = vpop.f32.mrb[0].mxu0
  %628 = vmatprep.mubr.f32.mxu0 %v92
  %629 = vmatmul.mubr.f32.gmra.mrb[0].mxu0 %v91
  %v630 = vpop.f32.mrb[0].mxu0
  %v631 = vadd.f32 0.0, %v630
  %v632 = vpop.f32.mrb[0].mxu0
  %633 = vmatprep.mubr.f32.mxu0 %v95
  %634 = vmatmul.mubr.f32.gmra.mrb[0].mxu0 %v94
  %v635 = vpop.f32.mrb[0].mxu0
  %v636 = vadd.f32 0.0, %v635
  %v637 = vpop.f32.mrb[0].mxu0
  %638 = vmatprep.mubr.f32.mxu0 %v98
  %639 = vmatmul.mubr.f32.gmra.mrb[0].mxu0 %v97
  %v640 = vpop.f32.mrb[0].mxu0
  %v641 = vadd.f32 0.0, %v640
  %v642 = vpop.f32.mrb[0].mxu0
  %643 = vmatprep.mubr.f32.mxu0 %v101
  %644 = vmatmul.mubr.f32.gmra.mrb[0].mxu0 %v100
  %v645 = vpop.f32.mrb[0].mxu0
  %v646 = vadd.f32 0.0, %v645
  %v647 = vpop.f32.mrb[0].mxu0
  %648 = vmatprep.mubr.f32.mxu0 %v104
  %649 = vmatmul.mubr.f32.gmra.mrb[0].mxu0 %v103
  %v650 = vpop.f32.mrb[0].mxu0
  %v651 = vadd.f32 0.0, %v650
  %v652 = vpop.f32.mrb[0].mxu0
  %653 = vmatprep.mubr.f32.mxu0 %v107
  %654 = vmatmul.mubr.f32.gmra.mrb[0].mxu0 %v106
  %v655 = vpop.f32.mrb[0].mxu0
  %v656 = vadd.f32 0.0, %v655
  %v657 = vpop.f32.mrb[0].mxu0
  %658 = vmatprep.mubr.f32.mxu0 %v110
  %659 = vmatmul.mubr.f32.gmra.mrb[0].mxu0 %v109
  %v660 = vpop.f32.mrb[0].mxu0
  %v661 = vadd.f32 0.0, %v660
  %v662 = vpop.f32.mrb[0].mxu0
  %663 = vmatprep.mubr.f32.mxu0 %v113
  %664 = vmatmul.mubr.f32.gmra.mrb[0].mxu0 %v112
  %v665 = vpop.f32.mrb[0].mxu0
  %v666 = vadd.f32 0.0, %v665
  %v667 = vpop.f32.mrb[0].mxu0
  %668 = vmatprep.mubr.f32.mxu0 %v116
  %669 = vmatmul.mubr.f32.gmra.mrb[0].mxu0 %v115
  %v670 = vpop.f32.mrb[0].mxu0
  %v671 = vadd.f32 0.0, %v670
  %v672 = vpop.f32.mrb[0].mxu0
  %673 = vmatprep.mubr.f32.mxu0 %v119
  %674 = vmatmul.mubr.f32.gmra.mrb[0].mxu0 %v118
  %v675 = vpop.f32.mrb[0].mxu0
  %v676 = vadd.f32 0.0, %v675
  %v677 = vpop.f32.mrb[0].mxu0
  %678 = vmatprep.mubr.f32.mxu0 %v122
  %679 = vmatmul.mubr.f32.gmra.mrb[0].mxu0 %v121
  %v680 = vpop.f32.mrb[0].mxu0
  %v681 = vadd.f32 0.0, %v680
  %v682 = vpop.f32.mrb[0].mxu0
  %683 = vmatprep.mubr.f32.mxu0 %v125
  %684 = vmatmul.mubr.f32.gmra.mrb[0].mxu0 %v124
  %v685 = vpop.f32.mrb[0].mxu0
  %v686 = vadd.f32 0.0, %v685
  %v687 = vpop.f32.mrb[0].mxu0
  %688 = vmatprep.mubr.f32.mxu0 %v128
  %689 = vmatmul.mubr.f32.gmra.mrb[0].mxu0 %v127
  %v690 = vpop.f32.mrb[0].mxu0
  %v691 = vadd.f32 0.0, %v690
  %v692 = vpop.f32.mrb[0].mxu0
  %693 = vmatprep.mubr.f32.mxu0 %v131
  %694 = vmatmul.mubr.f32.gmra.mrb[0].mxu0 %v130
  %v695 = vpop.f32.mrb[0].mxu0
  %v696 = vadd.f32 0.0, %v695
  %v697 = vpop.f32.mrb[0].mxu0
  %698 = vmatprep.mubr.f32.mxu0 %v134
  %699 = vmatmul.mubr.f32.gmra.mrb[0].mxu0 %v133
  %v700 = vpop.f32.mrb[0].mxu0
  %v701 = vadd.f32 0.0, %v700
  %v702 = vpop.f32.mrb[0].mxu0
  %703 = vmatprep.mubr.f32.mxu0 %v137
  %704 = vmatmul.mubr.f32.gmra.mrb[0].mxu0 %v136
  %v705 = vpop.f32.mrb[0].mxu0
  %v706 = vadd.f32 0.0, %v705
  %v707 = vpop.f32.mrb[0].mxu0
  %708 = vmatprep.mubr.f32.mxu0 %v140
  %709 = vmatmul.mubr.f32.gmra.mrb[0].mxu0 %v139
  %v710 = vpop.f32.mrb[0].mxu0
  %v711 = vadd.f32 0.0, %v710
  %v712 = vpop.f32.mrb[0].mxu0
  %713 = vmatprep.mubr.f32.mxu0 %v143
  %714 = vmatmul.mubr.f32.gmra.mrb[0].mxu0 %v142
  %v715 = vpop.f32.mrb[0].mxu0
  %v716 = vadd.f32 0.0, %v715
  %v717 = vpop.f32.mrb[0].mxu0
  %718 = vmatprep.mubr.f32.mxu0 %v146
  %719 = vmatmul.mubr.f32.gmra.mrb[0].mxu0 %v145
  %v720 = vpop.f32.mrb[0].mxu0
  %v721 = vadd.f32 0.0, %v720
  %v722 = vpop.f32.mrb[0].mxu0
  %723 = vmatprep.mubr.f32.mxu0 %v149
  %724 = vmatmul.mubr.f32.gmra.mrb[0].mxu0 %v148
  %v725 = vpop.f32.mrb[0].mxu0
  %v726 = vadd.f32 0.0, %v725
  %v727 = vpop.f32.mrb[0].mxu0
  %728 = vmatprep.mubr.f32.mxu0 %v152
  %729 = vmatmul.mubr.f32.gmra.mrb[0].mxu0 %v151
  %v730 = vpop.f32.mrb[0].mxu0
  %v731 = vadd.f32 0.0, %v730
  %v732 = vpop.f32.mrb[0].mxu0
  %733 = vmatprep.mubr.f32.mxu0 %v155
  %734 = vmatmul.mubr.f32.gmra.mrb[0].mxu0 %v154
  %v735 = vpop.f32.mrb[0].mxu0
  %v736 = vadd.f32 0.0, %v735
  %v737 = vpop.f32.mrb[0].mxu0
  %738 = vmatprep.mubr.f32.mxu0 %v158
  %739 = vmatmul.mubr.f32.gmra.mrb[0].mxu0 %v157
  %v740 = vpop.f32.mrb[0].mxu0
  %v741 = vadd.f32 0.0, %v740
  %v742 = vpop.f32.mrb[0].mxu0
  %743 = vmatprep.mubr.f32.mxu0 %v161
  %744 = vmatmul.mubr.f32.gmra.mrb[0].mxu0 %v160
  %v745 = vpop.f32.mrb[0].mxu0
  %v746 = vadd.f32 0.0, %v745
  %v747 = vpop.f32.mrb[0].mxu0
  %748 = vmatprep.mubr.f32.mxu0 %v164
  %749 = vmatmul.mubr.f32.gmra.mrb[0].mxu0 %v163
  %v750 = vpop.f32.mrb[0].mxu0
  %v751 = vadd.f32 0.0, %v750
  %v752 = vpop.f32.mrb[0].mxu0
  %753 = vmatprep.mubr.f32.mxu0 %v167
  %754 = vmatmul.mubr.f32.gmra.mrb[0].mxu0 %v166
  %v755 = vpop.f32.mrb[0].mxu0
  %v756 = vadd.f32 0.0, %v755
  %v757 = vpop.f32.mrb[0].mxu0
  %758 = vmatprep.mubr.f32.mxu0 %v170
  %759 = vmatmul.mubr.f32.gmra.mrb[0].mxu0 %v169
  %v760 = vpop.f32.mrb[0].mxu0
  %v761 = vadd.f32 0.0, %v760
  %v762 = vpop.f32.mrb[0].mxu0
  %763 = vmatprep.mubr.f32.mxu0 %v173
  %764 = vmatmul.mubr.f32.gmra.mrb[0].mxu0 %v172
  %v765 = vpop.f32.mrb[0].mxu0
  %v766 = vadd.f32 0.0, %v765
  %v767 = vpop.f32.mrb[0].mxu0
  %768 = vmatprep.mubr.f32.mxu0 %v176
  %769 = vmatmul.mubr.f32.gmra.mrb[0].mxu0 %v175
  %v770 = vpop.f32.mrb[0].mxu0
  %v771 = vadd.f32 0.0, %v770
  %v772 = vpop.f32.mrb[0].mxu0
  %773 = vmatprep.mubr.f32.mxu0 %v179
  %774 = vmatmul.mubr.f32.gmra.mrb[0].mxu0 %v178
  %v775 = vpop.f32.mrb[0].mxu0
  %v776 = vadd.f32 0.0, %v775
  %v777 = vpop.f32.mrb[0].mxu0
  %778 = vmatprep.mubr.f32.mxu0 %v182
  %779 = vmatmul.mubr.f32.gmra.mrb[0].mxu0 %v181
  %v780 = vpop.f32.mrb[0].mxu0
  %v781 = vadd.f32 0.0, %v780
  %v782 = vpop.f32.mrb[0].mxu0
  %783 = vmatprep.mubr.f32.mxu0 %v185
  %784 = vmatmul.mubr.f32.gmra.mrb[0].mxu0 %v184
  %v785 = vpop.f32.mrb[0].mxu0
  %v786 = vadd.f32 0.0, %v785
  %v787 = vpop.f32.mrb[0].mxu0
  %788 = vmatprep.mubr.f32.mxu0 %v188
  %789 = vmatmul.mubr.f32.gmra.mrb[0].mxu0 %v187
  %v790 = vpop.f32.mrb[0].mxu0
  %v791 = vadd.f32 0.0, %v790
  %v792 = vpop.f32.mrb[0].mxu0
  %793 = vmatprep.mubr.f32.mxu0 %v191
  %794 = vmatmul.mubr.f32.gmra.mrb[0].mxu0 %v190
  %v795 = vpop.f32.mrb[0].mxu0
  %v796 = vadd.f32 0.0, %v795
  %v797 = vpop.f32.mrb[0].mxu0
  %798 = vmatprep.mubr.f32.mxu0 %v194
  %799 = vmatmul.mubr.f32.gmra.mrb[0].mxu0 %v193
  %v800 = vpop.f32.mrb[0].mxu0
  %v801 = vadd.f32 0.0, %v800
  %v802 = vpop.f32.mrb[0].mxu0
  %803 = vmatprep.mubr.f32.mxu0 %v197
  %804 = vmatmul.mubr.f32.gmra.mrb[0].mxu0 %v196
  %v805 = vpop.f32.mrb[0].mxu0
  %v806 = vadd.f32 0.0, %v805
  %v807 = vpop.f32.mrb[0].mxu0
  %808 = vmatprep.mubr.f32.mxu0 %v200
  %809 = vmatmul.mubr.f32.gmra.mrb[0].mxu0 %v199
  %v810 = vpop.f32.mrb[0].mxu0
  %v811 = vadd.f32 0.0, %v810
  %v812 = vpop.f32.mrb[0].mxu0
  %813 = vmatprep.mubr.f32.mxu0 %v203
  %814 = vmatmul.mubr.f32.gmra.mrb[0].mxu0 %v202
  %v815 = vpop.f32.mrb[0].mxu0
  %v816 = vadd.f32 0.0, %v815
  %v817 = vpop.f32.mrb[0].mxu0
  %818 = vdwg.mxu0
  %819 = vmatprep.subr.mxu0 0.0
  %820 = vmatpush1.msra.mxu0 %v237
  %821 = vmatprep.subr.mxu0 0.0
  %822 = vmatpush1.msra.mxu0 %v238
  %823 = vmatprep.subr.mxu0 0.0
  %824 = vmatpush1.msra.mxu0 %v239
  %825 = vmatprep.subr.mxu0 0.0
  %826 = vmatpush1.msra.mxu0 %v240
  %827 = vmatprep.subr.mxu0 0.0
  %828 = vmatpush1.msra.mxu0 0.0
  %829 = vmatprep.subr.mxu0 0.0
  %830 = vmatpush1.msra.mxu0 0.0
  %831 = vmatprep.subr.mxu0 0.0
  %832 = vmatpush1.msra.mxu0 0.0
  %833 = vmatprep.subr.mxu0 0.0
  %834 = vmatpush1.msra.mxu0 0.0
  %835 = vmatprep.subr.mxu0 0.0
  %836 = vmatpush1.msra.mxu0 0.0
  %837 = vmatprep.subr.mxu0 0.0
  %838 = vmatpush1.msra.mxu0 0.0
  %839 = vmatprep.subr.mxu0 0.0
  %840 = vmatpush1.msra.mxu0 0.0
  %841 = vmatprep.subr.mxu0 0.0
  %842 = vmatpush1.msra.mxu0 0.0
  %843 = vmatprep.subr.mxu0 0.0
  %844 = vmatpush1.msra.mxu0 0.0
  %845 = vmatprep.subr.mxu0 0.0
  %846 = vmatpush1.msra.mxu0 0.0
  %847 = vmatprep.subr.mxu0 0.0
  %848 = vmatpush1.msra.mxu0 0.0
  %849 = vmatprep.subr.mxu0 0.0
  %850 = vmatpush1.msra.mxu0 0.0
  %851 = vmatprep.subr.mxu0 0.0
  %852 = vmatpush1.msra.mxu0 0.0
  %853 = vmatprep.subr.mxu0 0.0
  %854 = vmatpush1.msra.mxu0 0.0
  %855 = vmatprep.subr.mxu0 0.0
  %856 = vmatpush1.msra.mxu0 0.0
  %857 = vmatprep.subr.mxu0 0.0
  %858 = vmatpush1.msra.mxu0 0.0
  %859 = vmatprep.subr.mxu0 0.0
  %860 = vmatpush1.msra.mxu0 0.0
  %861 = vmatprep.subr.mxu0 0.0
  %862 = vmatpush1.msra.mxu0 0.0
  %863 = vmatprep.subr.mxu0 0.0
  %864 = vmatpush1.msra.mxu0 0.0
  %865 = vmatprep.subr.mxu0 0.0
  %866 = vmatpush1.msra.mxu0 0.0
  %867 = vmatprep.subr.mxu0 0.0
  %868 = vmatpush1.msra.mxu0 0.0
  %869 = vmatprep.subr.mxu0 0.0
  %870 = vmatpush1.msra.mxu0 0.0
  %871 = vmatprep.subr.mxu0 0.0
  %872 = vmatpush1.msra.mxu0 0.0
  %873 = vmatprep.subr.mxu0 0.0
  %874 = vmatpush1.msra.mxu0 0.0
  %875 = vmatprep.subr.mxu0 0.0
  %876 = vmatpush1.msra.mxu0 0.0
  %877 = vmatprep.subr.mxu0 0.0
  %878 = vmatpush1.msra.mxu0 0.0
  %879 = vmatprep.subr.mxu0 0.0
  %880 = vmatpush1.msra.mxu0 0.0
  %881 = vmatprep.subr.mxu0 0.0
  %882 = vmatpush1.msra.mxu0 0.0
  %883 = vmatprep.mubr.f32.mxu0 0.0
  %884 = vmatmul.mubr.f32.gmra.mrb[0].mxu0 %v243
  %v885 = vpop.f32.mrb[0].mxu0
  %v886 = vadd.f32 %v501, %v885
  %v887 = vpop.f32.mrb[0].mxu0
  %888 = vmatprep.mubr.f32.mxu0 0.0
  %889 = vmatmul.mubr.f32.gmra.mrb[0].mxu0 %v246
  %v890 = vpop.f32.mrb[0].mxu0
  %v891 = vadd.f32 %v506, %v890
  %v892 = vpop.f32.mrb[0].mxu0
  %893 = vmatprep.mubr.f32.mxu0 0.0
  %894 = vmatmul.mubr.f32.gmra.mrb[0].mxu0 %v249
  %v895 = vpop.f32.mrb[0].mxu0
  %v896 = vadd.f32 %v511, %v895
  %v897 = vpop.f32.mrb[0].mxu0
  %898 = vmatprep.mubr.f32.mxu0 0.0
  %899 = vmatmul.mubr.f32.gmra.mrb[0].mxu0 %v252
  %v900 = vpop.f32.mrb[0].mxu0
  %v901 = vadd.f32 %v516, %v900
  %v902 = vpop.f32.mrb[0].mxu0
  %903 = vmatprep.mubr.f32.mxu0 0.0
  %904 = vmatmul.mubr.f32.gmra.mrb[0].mxu0 %v255
  %v905 = vpop.f32.mrb[0].mxu0
  %v906 = vadd.f32 %v521, %v905
  %v907 = vpop.f32.mrb[0].mxu0
  %908 = vmatprep.mubr.f32.mxu0 0.0
  %909 = vmatmul.mubr.f32.gmra.mrb[0].mxu0 %v258
  %v910 = vpop.f32.mrb[0].mxu0
  %v911 = vadd.f32 %v526, %v910
  %v912 = vpop.f32.mrb[0].mxu0
  %913 = vmatprep.mubr.f32.mxu0 0.0
  %914 = vmatmul.mubr.f32.gmra.mrb[0].mxu0 %v261
  %v915 = vpop.f32.mrb[0].mxu0
  %v916 = vadd.f32 %v531, %v915
  %v917 = vpop.f32.mrb[0].mxu0
  %918 = vmatprep.mubr.f32.mxu0 0.0
  %919 = vmatmul.mubr.f32.gmra.mrb[0].mxu0 %v264
  %v920 = vpop.f32.mrb[0].mxu0
  %v921 = vadd.f32 %v536, %v920
  %v922 = vpop.f32.mrb[0].mxu0
  %923 = vmatprep.mubr.f32.mxu0 0.0
  %924 = vmatmul.mubr.f32.gmra.mrb[0].mxu0 %v267
  %v925 = vpop.f32.mrb[0].mxu0
  %v926 = vadd.f32 %v541, %v925
  %v927 = vpop.f32.mrb[0].mxu0
  %928 = vmatprep.mubr.f32.mxu0 0.0
  %929 = vmatmul.mubr.f32.gmra.mrb[0].mxu0 %v270
  %v930 = vpop.f32.mrb[0].mxu0
  %v931 = vadd.f32 %v546, %v930
  %v932 = vpop.f32.mrb[0].mxu0
  %933 = vmatprep.mubr.f32.mxu0 0.0
  %934 = vmatmul.mubr.f32.gmra.mrb[0].mxu0 %v273
  %v935 = vpop.f32.mrb[0].mxu0
  %v936 = vadd.f32 %v551, %v935
  %v937 = vpop.f32.mrb[0].mxu0
  %938 = vmatprep.mubr.f32.mxu0 0.0
  %939 = vmatmul.mubr.f32.gmra.mrb[0].mxu0 %v276
  %v940 = vpop.f32.mrb[0].mxu0
  %v941 = vadd.f32 %v556, %v940
  %v942 = vpop.f32.mrb[0].mxu0
  %943 = vmatprep.mubr.f32.mxu0 0.0
  %944 = vmatmul.mubr.f32.gmra.mrb[0].mxu0 %v279
  %v945 = vpop.f32.mrb[0].mxu0
  %v946 = vadd.f32 %v561, %v945
  %v947 = vpop.f32.mrb[0].mxu0
  %948 = vmatprep.mubr.f32.mxu0 0.0
  %949 = vmatmul.mubr.f32.gmra.mrb[0].mxu0 %v282
  %v950 = vpop.f32.mrb[0].mxu0
  %v951 = vadd.f32 %v566, %v950
  %v952 = vpop.f32.mrb[0].mxu0
  %953 = vmatprep.mubr.f32.mxu0 0.0
  %954 = vmatmul.mubr.f32.gmra.mrb[0].mxu0 %v285
  %v955 = vpop.f32.mrb[0].mxu0
  %v956 = vadd.f32 %v571, %v955
  %v957 = vpop.f32.mrb[0].mxu0
  %958 = vmatprep.mubr.f32.mxu0 0.0
  %959 = vmatmul.mubr.f32.gmra.mrb[0].mxu0 %v288
  %v960 = vpop.f32.mrb[0].mxu0
  %v961 = vadd.f32 %v576, %v960
  %v962 = vpop.f32.mrb[0].mxu0
  %963 = vmatprep.mubr.f32.mxu0 0.0
  %964 = vmatmul.mubr.f32.gmra.mrb[0].mxu0 %v291
  %v965 = vpop.f32.mrb[0].mxu0
  %v966 = vadd.f32 %v581, %v965
  %v967 = vpop.f32.mrb[0].mxu0
  %968 = vmatprep.mubr.f32.mxu0 0.0
  %969 = vmatmul.mubr.f32.gmra.mrb[0].mxu0 %v294
  %v970 = vpop.f32.mrb[0].mxu0
  %v971 = vadd.f32 %v586, %v970
  %v972 = vpop.f32.mrb[0].mxu0
  %973 = vmatprep.mubr.f32.mxu0 0.0
  %974 = vmatmul.mubr.f32.gmra.mrb[0].mxu0 %v297
  %v975 = vpop.f32.mrb[0].mxu0
  %v976 = vadd.f32 %v591, %v975
  %v977 = vpop.f32.mrb[0].mxu0
  %978 = vmatprep.mubr.f32.mxu0 0.0
  %979 = vmatmul.mubr.f32.gmra.mrb[0].mxu0 %v300
  %v980 = vpop.f32.mrb[0].mxu0
  %v981 = vadd.f32 %v596, %v980
  %v982 = vpop.f32.mrb[0].mxu0
  %983 = vmatprep.mubr.f32.mxu0 0.0
  %984 = vmatmul.mubr.f32.gmra.mrb[0].mxu0 %v303
  %v985 = vpop.f32.mrb[0].mxu0
  %v986 = vadd.f32 %v601, %v985
  %v987 = vpop.f32.mrb[0].mxu0
  %988 = vmatprep.mubr.f32.mxu0 0.0
  %989 = vmatmul.mubr.f32.gmra.mrb[0].mxu0 %v306
  %v990 = vpop.f32.mrb[0].mxu0
  %v991 = vadd.f32 %v606, %v990
  %v992 = vpop.f32.mrb[0].mxu0
  %993 = vmatprep.mubr.f32.mxu0 0.0
  %994 = vmatmul.mubr.f32.gmra.mrb[0].mxu0 %v309
  %v995 = vpop.f32.mrb[0].mxu0
  %v996 = vadd.f32 %v611, %v995
  %v997 = vpop.f32.mrb[0].mxu0
  %998 = vmatprep.mubr.f32.mxu0 0.0
  %999 = vmatmul.mubr.f32.gmra.mrb[0].mxu0 %v312
  %v1000 = vpop.f32.mrb[0].mxu0
  %v1001 = vadd.f32 %v616, %v1000
  %v1002 = vpop.f32.mrb[0].mxu0
  %1003 = vmatprep.mubr.f32.mxu0 0.0
  %1004 = vmatmul.mubr.f32.gmra.mrb[0].mxu0 %v315
  %v1005 = vpop.f32.mrb[0].mxu0
  %v1006 = vadd.f32 %v621, %v1005
  %v1007 = vpop.f32.mrb[0].mxu0
  %1008 = vmatprep.mubr.f32.mxu0 0.0
  %1009 = vmatmul.mubr.f32.gmra.mrb[0].mxu0 %v318
  %v1010 = vpop.f32.mrb[0].mxu0
  %v1011 = vadd.f32 %v626, %v1010
  %v1012 = vpop.f32.mrb[0].mxu0
  %1013 = vmatprep.mubr.f32.mxu0 0.0
  %1014 = vmatmul.mubr.f32.gmra.mrb[0].mxu0 %v321
  %v1015 = vpop.f32.mrb[0].mxu0
  %v1016 = vadd.f32 %v631, %v1015
  %v1017 = vpop.f32.mrb[0].mxu0
  %1018 = vmatprep.mubr.f32.mxu0 0.0
  %1019 = vmatmul.mubr.f32.gmra.mrb[0].mxu0 %v324
  %v1020 = vpop.f32.mrb[0].mxu0
  %v1021 = vadd.f32 %v636, %v1020
  %v1022 = vpop.f32.mrb[0].mxu0
  %1023 = vmatprep.mubr.f32.mxu0 0.0
  %1024 = vmatmul.mubr.f32.gmra.mrb[0].mxu0 %v327
  %v1025 = vpop.f32.mrb[0].mxu0
  %v1026 = vadd.f32 %v641, %v1025
  %v1027 = vpop.f32.mrb[0].mxu0
  %1028 = vmatprep.mubr.f32.mxu0 0.0
  %1029 = vmatmul.mubr.f32.gmra.mrb[0].mxu0 %v330
  %v1030 = vpop.f32.mrb[0].mxu0
  %v1031 = vadd.f32 %v646, %v1030
  %v1032 = vpop.f32.mrb[0].mxu0
  %1033 = vmatprep.mubr.f32.mxu0 0.0
  %1034 = vmatmul.mubr.f32.gmra.mrb[0].mxu0 %v333
  %v1035 = vpop.f32.mrb[0].mxu0
  %v1036 = vadd.f32 %v651, %v1035
  %v1037 = vpop.f32.mrb[0].mxu0
  %1038 = vmatprep.mubr.f32.mxu0 0.0
  %1039 = vmatmul.mubr.f32.gmra.mrb[0].mxu0 %v336
  %v1040 = vpop.f32.mrb[0].mxu0
  %v1041 = vadd.f32 %v656, %v1040
  %v1042 = vpop.f32.mrb[0].mxu0
  %1043 = vmatprep.mubr.f32.mxu0 0.0
  %1044 = vmatmul.mubr.f32.gmra.mrb[0].mxu0 %v339
  %v1045 = vpop.f32.mrb[0].mxu0
  %v1046 = vadd.f32 %v661, %v1045
  %v1047 = vpop.f32.mrb[0].mxu0
  %1048 = vmatprep.mubr.f32.mxu0 0.0
  %1049 = vmatmul.mubr.f32.gmra.mrb[0].mxu0 %v342
  %v1050 = vpop.f32.mrb[0].mxu0
  %v1051 = vadd.f32 %v666, %v1050
  %v1052 = vpop.f32.mrb[0].mxu0
  %1053 = vmatprep.mubr.f32.mxu0 0.0
  %1054 = vmatmul.mubr.f32.gmra.mrb[0].mxu0 %v345
  %v1055 = vpop.f32.mrb[0].mxu0
  %v1056 = vadd.f32 %v671, %v1055
  %v1057 = vpop.f32.mrb[0].mxu0
  %1058 = vmatprep.mubr.f32.mxu0 0.0
  %1059 = vmatmul.mubr.f32.gmra.mrb[0].mxu0 %v348
  %v1060 = vpop.f32.mrb[0].mxu0
  %v1061 = vadd.f32 %v676, %v1060
  %v1062 = vpop.f32.mrb[0].mxu0
  %1063 = vmatprep.mubr.f32.mxu0 0.0
  %1064 = vmatmul.mubr.f32.gmra.mrb[0].mxu0 %v351
  %v1065 = vpop.f32.mrb[0].mxu0
  %v1066 = vadd.f32 %v681, %v1065
  %v1067 = vpop.f32.mrb[0].mxu0
  %1068 = vmatprep.mubr.f32.mxu0 0.0
  %1069 = vmatmul.mubr.f32.gmra.mrb[0].mxu0 %v354
  %v1070 = vpop.f32.mrb[0].mxu0
  %v1071 = vadd.f32 %v686, %v1070
  %v1072 = vpop.f32.mrb[0].mxu0
  %1073 = vmatprep.mubr.f32.mxu0 0.0
  %1074 = vmatmul.mubr.f32.gmra.mrb[0].mxu0 %v357
  %v1075 = vpop.f32.mrb[0].mxu0
  %v1076 = vadd.f32 %v691, %v1075
  %v1077 = vpop.f32.mrb[0].mxu0
  %1078 = vmatprep.mubr.f32.mxu0 0.0
  %1079 = vmatmul.mubr.f32.gmra.mrb[0].mxu0 %v360
  %v1080 = vpop.f32.mrb[0].mxu0
  %v1081 = vadd.f32 %v696, %v1080
  %v1082 = vpop.f32.mrb[0].mxu0
  %1083 = vmatprep.mubr.f32.mxu0 0.0
  %1084 = vmatmul.mubr.f32.gmra.mrb[0].mxu0 %v363
  %v1085 = vpop.f32.mrb[0].mxu0
  %v1086 = vadd.f32 %v701, %v1085
  %v1087 = vpop.f32.mrb[0].mxu0
  %1088 = vmatprep.mubr.f32.mxu0 0.0
  %1089 = vmatmul.mubr.f32.gmra.mrb[0].mxu0 %v366
  %v1090 = vpop.f32.mrb[0].mxu0
  %v1091 = vadd.f32 %v706, %v1090
  %v1092 = vpop.f32.mrb[0].mxu0
  %1093 = vmatprep.mubr.f32.mxu0 0.0
  %1094 = vmatmul.mubr.f32.gmra.mrb[0].mxu0 %v369
  %v1095 = vpop.f32.mrb[0].mxu0
  %v1096 = vadd.f32 %v711, %v1095
  %v1097 = vpop.f32.mrb[0].mxu0
  %1098 = vmatprep.mubr.f32.mxu0 0.0
  %1099 = vmatmul.mubr.f32.gmra.mrb[0].mxu0 %v372
  %v1100 = vpop.f32.mrb[0].mxu0
  %v1101 = vadd.f32 %v716, %v1100
  %v1102 = vpop.f32.mrb[0].mxu0
  %1103 = vmatprep.mubr.f32.mxu0 0.0
  %1104 = vmatmul.mubr.f32.gmra.mrb[0].mxu0 %v375
  %v1105 = vpop.f32.mrb[0].mxu0
  %v1106 = vadd.f32 %v721, %v1105
  %v1107 = vpop.f32.mrb[0].mxu0
  %1108 = vmatprep.mubr.f32.mxu0 0.0
  %1109 = vmatmul.mubr.f32.gmra.mrb[0].mxu0 %v378
  %v1110 = vpop.f32.mrb[0].mxu0
  %v1111 = vadd.f32 %v726, %v1110
  %v1112 = vpop.f32.mrb[0].mxu0
  %1113 = vmatprep.mubr.f32.mxu0 0.0
  %1114 = vmatmul.mubr.f32.gmra.mrb[0].mxu0 %v381
  %v1115 = vpop.f32.mrb[0].mxu0
  %v1116 = vadd.f32 %v731, %v1115
  %v1117 = vpop.f32.mrb[0].mxu0
  %1118 = vmatprep.mubr.f32.mxu0 0.0
  %1119 = vmatmul.mubr.f32.gmra.mrb[0].mxu0 %v384
  %v1120 = vpop.f32.mrb[0].mxu0
  %v1121 = vadd.f32 %v736, %v1120
  %v1122 = vpop.f32.mrb[0].mxu0
  %1123 = vmatprep.mubr.f32.mxu0 0.0
  %1124 = vmatmul.mubr.f32.gmra.mrb[0].mxu0 %v387
  %v1125 = vpop.f32.mrb[0].mxu0
  %v1126 = vadd.f32 %v741, %v1125
  %v1127 = vpop.f32.mrb[0].mxu0
  %1128 = vmatprep.mubr.f32.mxu0 0.0
  %1129 = vmatmul.mubr.f32.gmra.mrb[0].mxu0 %v390
  %v1130 = vpop.f32.mrb[0].mxu0
  %v1131 = vadd.f32 %v746, %v1130
  %v1132 = vpop.f32.mrb[0].mxu0
  %1133 = vmatprep.mubr.f32.mxu0 0.0
  %1134 = vmatmul.mubr.f32.gmra.mrb[0].mxu0 %v393
  %v1135 = vpop.f32.mrb[0].mxu0
  %v1136 = vadd.f32 %v751, %v1135
  %v1137 = vpop.f32.mrb[0].mxu0
  %1138 = vmatprep.mubr.f32.mxu0 0.0
  %1139 = vmatmul.mubr.f32.gmra.mrb[0].mxu0 %v396
  %v1140 = vpop.f32.mrb[0].mxu0
  %v1141 = vadd.f32 %v756, %v1140
  %v1142 = vpop.f32.mrb[0].mxu0
  %1143 = vmatprep.mubr.f32.mxu0 0.0
  %1144 = vmatmul.mubr.f32.gmra.mrb[0].mxu0 %v399
  %v1145 = vpop.f32.mrb[0].mxu0
  %v1146 = vadd.f32 %v761, %v1145
  %v1147 = vpop.f32.mrb[0].mxu0
  %1148 = vmatprep.mubr.f32.mxu0 0.0
  %1149 = vmatmul.mubr.f32.gmra.mrb[0].mxu0 %v402
  %v1150 = vpop.f32.mrb[0].mxu0
  %v1151 = vadd.f32 %v766, %v1150
  %v1152 = vpop.f32.mrb[0].mxu0
  %1153 = vmatprep.mubr.f32.mxu0 0.0
  %1154 = vmatmul.mubr.f32.gmra.mrb[0].mxu0 %v405
  %v1155 = vpop.f32.mrb[0].mxu0
  %v1156 = vadd.f32 %v771, %v1155
  %v1157 = vpop.f32.mrb[0].mxu0
  %1158 = vmatprep.mubr.f32.mxu0 0.0
  %1159 = vmatmul.mubr.f32.gmra.mrb[0].mxu0 %v408
  %v1160 = vpop.f32.mrb[0].mxu0
  %v1161 = vadd.f32 %v776, %v1160
  %v1162 = vpop.f32.mrb[0].mxu0
  %1163 = vmatprep.mubr.f32.mxu0 0.0
  %1164 = vmatmul.mubr.f32.gmra.mrb[0].mxu0 %v411
  %v1165 = vpop.f32.mrb[0].mxu0
  %v1166 = vadd.f32 %v781, %v1165
  %v1167 = vpop.f32.mrb[0].mxu0
  %1168 = vmatprep.mubr.f32.mxu0 0.0
  %1169 = vmatmul.mubr.f32.gmra.mrb[0].mxu0 %v414
  %v1170 = vpop.f32.mrb[0].mxu0
  %v1171 = vadd.f32 %v786, %v1170
  %v1172 = vpop.f32.mrb[0].mxu0
  %1173 = vmatprep.mubr.f32.mxu0 0.0
  %1174 = vmatmul.mubr.f32.gmra.mrb[0].mxu0 %v417
  %v1175 = vpop.f32.mrb[0].mxu0
  %v1176 = vadd.f32 %v791, %v1175
  %v1177 = vpop.f32.mrb[0].mxu0
  %1178 = vmatprep.mubr.f32.mxu0 0.0
  %1179 = vmatmul.mubr.f32.gmra.mrb[0].mxu0 %v420
  %v1180 = vpop.f32.mrb[0].mxu0
  %v1181 = vadd.f32 %v796, %v1180
  %v1182 = vpop.f32.mrb[0].mxu0
  %1183 = vmatprep.mubr.f32.mxu0 0.0
  %1184 = vmatmul.mubr.f32.gmra.mrb[0].mxu0 %v423
  %v1185 = vpop.f32.mrb[0].mxu0
  %v1186 = vadd.f32 %v801, %v1185
  %v1187 = vpop.f32.mrb[0].mxu0
  %1188 = vmatprep.mubr.f32.mxu0 0.0
  %1189 = vmatmul.mubr.f32.gmra.mrb[0].mxu0 %v426
  %v1190 = vpop.f32.mrb[0].mxu0
  %v1191 = vadd.f32 %v806, %v1190
  %v1192 = vpop.f32.mrb[0].mxu0
  %1193 = vmatprep.mubr.f32.mxu0 0.0
  %1194 = vmatmul.mubr.f32.gmra.mrb[0].mxu0 %v429
  %v1195 = vpop.f32.mrb[0].mxu0
  %v1196 = vadd.f32 %v811, %v1195
  %v1197 = vpop.f32.mrb[0].mxu0
  %1198 = vmatprep.mubr.f32.mxu0 0.0
  %1199 = vmatmul.mubr.f32.gmra.mrb[0].mxu0 %v432
  %v1200 = vpop.f32.mrb[0].mxu0
  %v1201 = vadd.f32 %v816, %v1200
  %v1202 = vpop.f32.mrb[0].mxu0
  %1203 = vdwg.mxu0
  %1204 = vst [vmem:[%s2] sm:$0xff] %v886
  %1205 = vst [vmem:[%s2 + $0x8] sm:$0xff] %v891
  %1206 = vst [vmem:[%s2 + $0x10] sm:$0xff] %v896
  %1207 = vst [vmem:[%s2 + $0x18] sm:$0xff] %v901
  %1208 = vst [vmem:[%s2 + $0x20] sm:$0xff] %v906
  %1209 = vst [vmem:[%s2 + $0x28] sm:$0xff] %v911
  %1210 = vst [vmem:[%s2 + $0x30] sm:$0xff] %v916
  %1211 = vst [vmem:[%s2 + $0x38] sm:$0xff] %v921
  %1212 = vst [vmem:[%s2 + $0x40] sm:$0xff] %v926
  %1213 = vst [vmem:[%s2 + $0x48] sm:$0xff] %v931
  %1214 = vst [vmem:[%s2 + $0x50] sm:$0xff] %v936
  %1215 = vst [vmem:[%s2 + $0x58] sm:$0xff] %v941
  %1216 = vst [vmem:[%s2 + $0x60] sm:$0xff] %v946
  %1217 = vst [vmem:[%s2 + $0x68] sm:$0xff] %v951
  %1218 = vst [vmem:[%s2 + $0x70] sm:$0xff] %v956
  %1219 = vst [vmem:[%s2 + $0x78] sm:$0xff] %v961
  %1220 = vst [vmem:[%s2 + $0x80] sm:$0xff] %v966
  %1221 = vst [vmem:[%s2 + $0x88] sm:$0xff] %v971
  %1222 = vst [vmem:[%s2 + $0x90] sm:$0xff] %v976
  %1223 = vst [vmem:[%s2 + $0x98] sm:$0xff] %v981
  %1224 = vst [vmem:[%s2 + $0xa0] sm:$0xff] %v986
  %1225 = vst [vmem:[%s2 + $0xa8] sm:$0xff] %v991
  %1226 = vst [vmem:[%s2 + $0xb0] sm:$0xff] %v996
  %1227 = vst [vmem:[%s2 + $0xb8] sm:$0xff] %v1001
  %1228 = vst [vmem:[%s2 + $0xc0] sm:$0xff] %v1006
  %1229 = vst [vmem:[%s2 + $0xc8] sm:$0xff] %v1011
  %1230 = vst [vmem:[%s2 + $0xd0] sm:$0xff] %v1016
  %1231 = vst [vmem:[%s2 + $0xd8] sm:$0xff] %v1021
  %1232 = vst [vmem:[%s2 + $0xe0] sm:$0xff] %v1026
  %1233 = vst [vmem:[%s2 + $0xe8] sm:$0xff] %v1031
  %1234 = vst [vmem:[%s2 + $0xf0] sm:$0xff] %v1036
  %1235 = vst [vmem:[%s2 + $0xf8] sm:$0xff] %v1041
  %1236 = vst [vmem:[%s2 + $0x100] sm:$0xff] %v1046
  %1237 = vst [vmem:[%s2 + $0x108] sm:$0xff] %v1051
  %1238 = vst [vmem:[%s2 + $0x110] sm:$0xff] %v1056
  %1239 = vst [vmem:[%s2 + $0x118] sm:$0xff] %v1061
  %1240 = vst [vmem:[%s2 + $0x120] sm:$0xff] %v1066
  %1241 = vst [vmem:[%s2 + $0x128] sm:$0xff] %v1071
  %1242 = vst [vmem:[%s2 + $0x130] sm:$0xff] %v1076
  %1243 = vst [vmem:[%s2 + $0x138] sm:$0xff] %v1081
  %1244 = vst [vmem:[%s2 + $0x140] sm:$0xff] %v1086
  %1245 = vst [vmem:[%s2 + $0x148] sm:$0xff] %v1091
  %1246 = vst [vmem:[%s2 + $0x150] sm:$0xff] %v1096
  %1247 = vst [vmem:[%s2 + $0x158] sm:$0xff] %v1101
  %1248 = vst [vmem:[%s2 + $0x160] sm:$0xff] %v1106
  %1249 = vst [vmem:[%s2 + $0x168] sm:$0xff] %v1111
  %1250 = vst [vmem:[%s2 + $0x170] sm:$0xff] %v1116
  %1251 = vst [vmem:[%s2 + $0x178] sm:$0xff] %v1121
  %1252 = vst [vmem:[%s2 + $0x180] sm:$0xff] %v1126
  %1253 = vst [vmem:[%s2 + $0x188] sm:$0xff] %v1131
  %1254 = vst [vmem:[%s2 + $0x190] sm:$0xff] %v1136
  %1255 = vst [vmem:[%s2 + $0x198] sm:$0xff] %v1141
  %1256 = vst [vmem:[%s2 + $0x1a0] sm:$0xff] %v1146
  %1257 = vst [vmem:[%s2 + $0x1a8] sm:$0xff] %v1151
  %1258 = vst [vmem:[%s2 + $0x1b0] sm:$0xff] %v1156
  %1259 = vst [vmem:[%s2 + $0x1b8] sm:$0xff] %v1161
  %1260 = vst [vmem:[%s2 + $0x1c0] sm:$0xff] %v1166
  %1261 = vst [vmem:[%s2 + $0x1c8] sm:$0xff] %v1171
  %1262 = vst [vmem:[%s2 + $0x1d0] sm:$0xff] %v1176
  %1263 = vst [vmem:[%s2 + $0x1d8] sm:$0xff] %v1181
  %1264 = vst [vmem:[%s2 + $0x1e0] sm:$0xff] %v1186
  %1265 = vst [vmem:[%s2 + $0x1e8] sm:$0xff] %v1191
  %1266 = vst [vmem:[%s2 + $0x1f0] sm:$0xff] %v1196
  %1267 = vst [vmem:[%s2 + $0x1f8] sm:$0xff] %v1201
  %v1268 = vadd.f32 %v886, %v891
  %v1269 = vadd.f32 %v1268, %v896
  %v1270 = vadd.f32 %v1269, %v901
  %v1271 = vadd.f32 %v1270, %v906
  %v1272 = vadd.f32 %v1271, %v911
  %v1273 = vadd.f32 %v1272, %v916
  %v1274 = vadd.f32 %v1273, %v921
  %v1275 = vadd.f32 %v1274, %v926
  %v1276 = vadd.f32 %v1275, %v931
  %v1277 = vadd.f32 %v1276, %v936
  %v1278 = vadd.f32 %v1277, %v941
  %v1279 = vadd.f32 %v1278, %v946
  %v1280 = vadd.f32 %v1279, %v951
  %v1281 = vadd.f32 %v1280, %v956
  %v1282 = vadd.f32 %v1281, %v961
  %v1283 = vadd.f32 %v1282, %v966
  %v1284 = vadd.f32 %v1283, %v971
  %v1285 = vadd.f32 %v1284, %v976
  %v1286 = vadd.f32 %v1285, %v981
  %v1287 = vadd.f32 %v1286, %v986
  %v1288 = vadd.f32 %v1287, %v991
  %v1289 = vadd.f32 %v1288, %v996
  %v1290 = vadd.f32 %v1289, %v1001
  %v1291 = vadd.f32 %v1290, %v1006
  %v1292 = vadd.f32 %v1291, %v1011
  %v1293 = vadd.f32 %v1292, %v1016
  %v1294 = vadd.f32 %v1293, %v1021
  %v1295 = vadd.f32 %v1294, %v1026
  %v1296 = vadd.f32 %v1295, %v1031
  %v1297 = vadd.f32 %v1296, %v1036
  %v1298 = vadd.f32 %v1297, %v1041
  %v1299 = vadd.f32 %v1298, %v1046
  %v1300 = vadd.f32 %v1299, %v1051
  %v1301 = vadd.f32 %v1300, %v1056
  %v1302 = vadd.f32 %v1301, %v1061
  %v1303 = vadd.f32 %v1302, %v1066
  %v1304 = vadd.f32 %v1303, %v1071
  %v1305 = vadd.f32 %v1304, %v1076
  %v1306 = vadd.f32 %v1305, %v1081
  %v1307 = vadd.f32 %v1306, %v1086
  %v1308 = vadd.f32 %v1307, %v1091
  %v1309 = vadd.f32 %v1308, %v1096
  %v1310 = vadd.f32 %v1309, %v1101
  %v1311 = vadd.f32 %v1310, %v1106
  %v1312 = vadd.f32 %v1311, %v1111
  %v1313 = vadd.f32 %v1312, %v1116
  %v1314 = vadd.f32 %v1313, %v1121
  %v1315 = vadd.f32 %v1314, %v1126
  %v1316 = vadd.f32 %v1315, %v1131
  %v1317 = vadd.f32 %v1316, %v1136
  %v1318 = vadd.f32 %v1317, %v1141
  %v1319 = vadd.f32 %v1318, %v1146
  %v1320 = vadd.f32 %v1319, %v1151
  %v1321 = vadd.f32 %v1320, %v1156
  %v1322 = vadd.f32 %v1321, %v1161
  %v1323 = vadd.f32 %v1322, %v1166
  %v1324 = vadd.f32 %v1323, %v1171
  %v1325 = vadd.f32 %v1324, %v1176
  %v1326 = vadd.f32 %v1325, %v1181
  %v1327 = vadd.f32 %v1326, %v1186
  %v1328 = vadd.f32 %v1327, %v1191
  %v1329 = vadd.f32 %v1328, %v1196
  %v1330 = vadd.f32 %v1329, %v1201
  %v1331 = vrot.slane %v1330, 4
  %v1332 = vadd.f32 %v1330, %v1331
  %v1333 = vrot.slane %v1332, 2
  %v1334 = vadd.f32 %v1332, %v1333
  %v1335 = vrot.slane %v1334, 1
  %v1336 = vadd.f32 %v1334, %v1335
  %v1337 = vmul.f32 %v886, %v886
  %v1338 = vmul.f32 %v891, %v891
  %v1339 = vmul.f32 %v896, %v896
  %v1340 = vmul.f32 %v901, %v901
  %v1341 = vmul.f32 %v906, %v906
  %v1342 = vmul.f32 %v911, %v911
  %v1343 = vmul.f32 %v916, %v916
  %v1344 = vmul.f32 %v921, %v921
  %v1345 = vmul.f32 %v926, %v926
  %v1346 = vmul.f32 %v931, %v931
  %v1347 = vmul.f32 %v936, %v936
  %v1348 = vmul.f32 %v941, %v941
  %v1349 = vmul.f32 %v946, %v946
  %v1350 = vmul.f32 %v951, %v951
  %v1351 = vmul.f32 %v956, %v956
  %v1352 = vmul.f32 %v961, %v961
  %v1353 = vmul.f32 %v966, %v966
  %v1354 = vmul.f32 %v971, %v971
  %v1355 = vmul.f32 %v976, %v976
  %v1356 = vmul.f32 %v981, %v981
  %v1357 = vmul.f32 %v986, %v986
  %v1358 = vmul.f32 %v991, %v991
  %v1359 = vmul.f32 %v996, %v996
  %v1360 = vmul.f32 %v1001, %v1001
  %v1361 = vmul.f32 %v1006, %v1006
  %v1362 = vmul.f32 %v1011, %v1011
  %v1363 = vmul.f32 %v1016, %v1016
  %v1364 = vmul.f32 %v1021, %v1021
  %v1365 = vmul.f32 %v1026, %v1026
  %v1366 = vmul.f32 %v1031, %v1031
  %v1367 = vmul.f32 %v1036, %v1036
  %v1368 = vmul.f32 %v1041, %v1041
  %v1369 = vmul.f32 %v1046, %v1046
  %v1370 = vmul.f32 %v1051, %v1051
  %v1371 = vmul.f32 %v1056, %v1056
  %v1372 = vmul.f32 %v1061, %v1061
  %v1373 = vmul.f32 %v1066, %v1066
  %v1374 = vmul.f32 %v1071, %v1071
  %v1375 = vmul.f32 %v1076, %v1076
  %v1376 = vmul.f32 %v1081, %v1081
  %v1377 = vmul.f32 %v1086, %v1086
  %v1378 = vmul.f32 %v1091, %v1091
  %v1379 = vmul.f32 %v1096, %v1096
  %v1380 = vmul.f32 %v1101, %v1101
  %v1381 = vmul.f32 %v1106, %v1106
  %v1382 = vmul.f32 %v1111, %v1111
  %v1383 = vmul.f32 %v1116, %v1116
  %v1384 = vmul.f32 %v1121, %v1121
  %v1385 = vmul.f32 %v1126, %v1126
  %v1386 = vmul.f32 %v1131, %v1131
  %v1387 = vmul.f32 %v1136, %v1136
  %v1388 = vmul.f32 %v1141, %v1141
  %v1389 = vmul.f32 %v1146, %v1146
  %v1390 = vmul.f32 %v1151, %v1151
  %v1391 = vmul.f32 %v1156, %v1156
  %v1392 = vmul.f32 %v1161, %v1161
  %v1393 = vmul.f32 %v1166, %v1166
  %v1394 = vmul.f32 %v1171, %v1171
  %v1395 = vmul.f32 %v1176, %v1176
  %v1396 = vmul.f32 %v1181, %v1181
  %v1397 = vmul.f32 %v1186, %v1186
  %v1398 = vmul.f32 %v1191, %v1191
  %v1399 = vmul.f32 %v1196, %v1196
  %v1400 = vmul.f32 %v1201, %v1201
  %v1401 = vadd.f32 %v1337, %v1338
  %v1402 = vadd.f32 %v1401, %v1339
  %v1403 = vadd.f32 %v1402, %v1340
  %v1404 = vadd.f32 %v1403, %v1341
  %v1405 = vadd.f32 %v1404, %v1342
  %v1406 = vadd.f32 %v1405, %v1343
  %v1407 = vadd.f32 %v1406, %v1344
  %v1408 = vadd.f32 %v1407, %v1345
  %v1409 = vadd.f32 %v1408, %v1346
  %v1410 = vadd.f32 %v1409, %v1347
  %v1411 = vadd.f32 %v1410, %v1348
  %v1412 = vadd.f32 %v1411, %v1349
  %v1413 = vadd.f32 %v1412, %v1350
  %v1414 = vadd.f32 %v1413, %v1351
  %v1415 = vadd.f32 %v1414, %v1352
  %v1416 = vadd.f32 %v1415, %v1353
  %v1417 = vadd.f32 %v1416, %v1354
  %v1418 = vadd.f32 %v1417, %v1355
  %v1419 = vadd.f32 %v1418, %v1356
  %v1420 = vadd.f32 %v1419, %v1357
  %v1421 = vadd.f32 %v1420, %v1358
  %v1422 = vadd.f32 %v1421, %v1359
  %v1423 = vadd.f32 %v1422, %v1360
  %v1424 = vadd.f32 %v1423, %v1361
  %v1425 = vadd.f32 %v1424, %v1362
  %v1426 = vadd.f32 %v1425, %v1363
  %v1427 = vadd.f32 %v1426, %v1364
  %v1428 = vadd.f32 %v1427, %v1365
  %v1429 = vadd.f32 %v1428, %v1366
  %v1430 = vadd.f32 %v1429, %v1367
  %v1431 = vadd.f32 %v1430, %v1368
  %v1432 = vadd.f32 %v1431, %v1369
  %v1433 = vadd.f32 %v1432, %v1370
  %v1434 = vadd.f32 %v1433, %v1371
  %v1435 = vadd.f32 %v1434, %v1372
  %v1436 = vadd.f32 %v1435, %v1373
  %v1437 = vadd.f32 %v1436, %v1374
  %v1438 = vadd.f32 %v1437, %v1375
  %v1439 = vadd.f32 %v1438, %v1376
  %v1440 = vadd.f32 %v1439, %v1377
  %v1441 = vadd.f32 %v1440, %v1378
  %v1442 = vadd.f32 %v1441, %v1379
  %v1443 = vadd.f32 %v1442, %v1380
  %v1444 = vadd.f32 %v1443, %v1381
  %v1445 = vadd.f32 %v1444, %v1382
  %v1446 = vadd.f32 %v1445, %v1383
  %v1447 = vadd.f32 %v1446, %v1384
  %v1448 = vadd.f32 %v1447, %v1385
  %v1449 = vadd.f32 %v1448, %v1386
  %v1450 = vadd.f32 %v1449, %v1387
  %v1451 = vadd.f32 %v1450, %v1388
  %v1452 = vadd.f32 %v1451, %v1389
  %v1453 = vadd.f32 %v1452, %v1390
  %v1454 = vadd.f32 %v1453, %v1391
  %v1455 = vadd.f32 %v1454, %v1392
  %v1456 = vadd.f32 %v1455, %v1393
  %v1457 = vadd.f32 %v1456, %v1394
  %v1458 = vadd.f32 %v1457, %v1395
  %v1459 = vadd.f32 %v1458, %v1396
  %v1460 = vadd.f32 %v1459, %v1397
  %v1461 = vadd.f32 %v1460, %v1398
  %v1462 = vadd.f32 %v1461, %v1399
  %v1463 = vadd.f32 %v1462, %v1400
  %v1464 = vrot.slane %v1463, 4
  %v1465 = vadd.f32 %v1463, %v1464
  %v1466 = vrot.slane %v1465, 2
  %v1467 = vadd.f32 %v1465, %v1466
  %v1468 = vrot.slane %v1467, 1
  %v1469 = vadd.f32 %v1467, %v1468
  %v1470 = vlaneseq
  %v1471 = vshrl.u32 %v1470, 7
  %vm1472 = vcmp.eq.s32.totalorder %v1471, 0
  %vm1473 = vcmp.eq.s32.totalorder %v1471, 1
  %v1474 = vsel %vm1473, %v1469, 0.0
  %v1475 = vsel %vm1472, %v1336, %v1474
  %1476 = vst [vmem:[%s3] sm:$0xff] %v1475
  // Predicated region
  $region10: #{forward.14} parent=0 // pred_check
    _
  $region11: #{forward.14} parent=0 // pred_check_branch
    %1478 = sbr.rel (0) target = $region13
  $region12: #{forward.14} parent=0 // pred_region
    _
  $region13: #{forward.14} parent=0 // pred_fallthru
    _
  // Predicated region
  $region14: #{forward.14} parent=0 // pred_check
    _
  $region15: #{forward.14} parent=0 // pred_check_branch
    %1480 = sbr.rel (0) target = $region17
  $region16: #{forward.14} parent=0 // pred_region
    _
  $region17: #{forward.14} parent=0 // pred_fallthru
    _
  // Predicated region
  $region18: #{forward.14} parent=0 // pred_check
    _
  $region19: #{forward.14} parent=0 // pred_check_branch
    %1482 = sbr.rel (0) target = $region21
  $region20: #{forward.14} parent=0 // pred_region
    _
  $region21: #{forward.14} parent=0 // pred_fallthru
    _
  // Predicated region
  $region22: #{forward.14} parent=0 // pred_check
    _
  $region23: #{forward.14} parent=0 // pred_check_branch
    %1484 = sbr.rel (0) target = $region25
  $region24: #{forward.14} parent=0 // pred_region
    _
  $region25: #{forward.14} parent=0 // pred_fallthru
    _

// kernel: forward.16
$region0: #{forward.16}
  #allocation0 [shape = 'u32[]', space=smem, size = 0x4, offset = 0x4, fixed_abs, tag = 'smem constant byte address 0x4 - core index']
  #allocation1 [shape = 'u32[144,128]{1,0:T(1,128)}', space=vmem, size = 0x12000, scoped, tag = 'internal scratch']
  %s0 = inlined_call_operand.vmem [shape: f32[128,576], index: 0, kind: input, shape index: {}]
  %s1 = inlined_call_operand.vmem [shape: f32[576,128], index: 1, kind: input, shape index: {}]
  %s2 = inlined_call_operand.vmem [shape: f32[128,128], index: 2, kind: output, shape index: {0}]
  %s3 = inlined_call_operand.vmem [shape: f32[8,128], index: 3, kind: output, shape index: {1}]
  %4 = xla_tuple %s2, %s3
  %s5 = sld [smem:[#allocation0]]
  $region26: #{forward.16} parent=0
    _
  %s7 = ssub.s32 1, %s5
  %s8 = scalar_select 0, %s7, %s5
  // Predicated region
  $region2: #{forward.16} parent=0 // pred_check
    _
  $region3: #{forward.16} parent=0 // pred_check_branch
    %10 = sbr.rel (0) target = $region5
  $region4: #{forward.16} parent=0 // pred_region
    _
  $region5: #{forward.16} parent=0 // pred_fallthru
    _
  // Predicated region
  $region6: #{forward.16} parent=0 // pred_check
    _
  $region7: #{forward.16} parent=0 // pred_check_branch
    %12 = sbr.rel (0) target = $region9
  $region8: #{forward.16} parent=0 // pred_region
    _
  $region9: #{forward.16} parent=0 // pred_fallthru
    _
  %v13 = vld [vmem:[%s0] sm:$0xff]
  %v14 = vld [vmem:[%s0 + $0x8] sm:$0xff]
  %v15 = vld [vmem:[%s0 + $0x10] sm:$0xff]
  %v16 = vld [vmem:[%s0 + $0x18] sm:$0xff]
  %v17 = vld [vmem:[%s0 + $0x20] sm:$0xff]
  %v18 = vld [vmem:[%s0 + $0x28] sm:$0xff]
  %v19 = vld [vmem:[%s0 + $0x30] sm:$0xff]
  %v20 = vld [vmem:[%s0 + $0x38] sm:$0xff]
  %v21 = vld [vmem:[%s0 + $0x40] sm:$0xff]
  %v22 = vld [vmem:[%s0 + $0x48] sm:$0xff]
  %v23 = vld [vmem:[%s0 + $0x50] sm:$0xff]
  %v24 = vld [vmem:[%s0 + $0x58] sm:$0xff]
  %v25 = vld [vmem:[%s0 + $0x60] sm:$0xff]
  %v26 = vld [vmem:[%s0 + $0x68] sm:$0xff]
  %v27 = vld [vmem:[%s0 + $0x70] sm:$0xff]
  %v28 = vld [vmem:[%s0 + $0x78] sm:$0xff]
  %v29 = vld [vmem:[%s0 + $0x80] sm:$0xff]
  %v30 = vld [vmem:[%s0 + $0x88] sm:$0xff]
  %v31 = vld [vmem:[%s0 + $0x90] sm:$0xff]
  %v32 = vld [vmem:[%s0 + $0x98] sm:$0xff]
  %v33 = vld [vmem:[%s0 + $0xa0] sm:$0xff]
  %v34 = vld [vmem:[%s0 + $0xa8] sm:$0xff]
  %v35 = vld [vmem:[%s0 + $0xb0] sm:$0xff]
  %v36 = vld [vmem:[%s0 + $0xb8] sm:$0xff]
  %v37 = vld [vmem:[%s0 + $0xc0] sm:$0xff]
  %v38 = vld [vmem:[%s0 + $0xc8] sm:$0xff]
  %v39 = vld [vmem:[%s0 + $0xd0] sm:$0xff]
  %v40 = vld [vmem:[%s0 + $0xd8] sm:$0xff]
  %v41 = vld [vmem:[%s0 + $0xe0] sm:$0xff]
  %v42 = vld [vmem:[%s0 + $0xe8] sm:$0xff]
  %v43 = vld [vmem:[%s0 + $0xf0] sm:$0xff]
  %v44 = vld [vmem:[%s0 + $0xf8] sm:$0xff]
  %v45 = vld [vmem:[%s0 + $0x100] sm:$0xff]
  %v46 = vld [vmem:[%s0 + $0x108] sm:$0xff]
  %v47 = vld [vmem:[%s0 + $0x110] sm:$0xff]
  %v48 = vld [vmem:[%s0 + $0x118] sm:$0xff]
  %v49 = vld [vmem:[%s0 + $0x120] sm:$0xff]
  %v50 = vld [vmem:[%s0 + $0x128] sm:$0xff]
  %v51 = vld [vmem:[%s0 + $0x130] sm:$0xff]
  %v52 = vld [vmem:[%s0 + $0x138] sm:$0xff]
  %v53 = vld [vmem:[%s0 + $0x140] sm:$0xff]
  %v54 = vld [vmem:[%s0 + $0x148] sm:$0xff]
  %v55 = vld [vmem:[%s0 + $0x150] sm:$0xff]
  %v56 = vld [vmem:[%s0 + $0x158] sm:$0xff]
  %v57 = vld [vmem:[%s0 + $0x160] sm:$0xff]
  %v58 = vld [vmem:[%s0 + $0x168] sm:$0xff]
  %v59 = vld [vmem:[%s0 + $0x170] sm:$0xff]
  %v60 = vld [vmem:[%s0 + $0x178] sm:$0xff]
  %v61 = vld [vmem:[%s0 + $0x180] sm:$0xff]
  %v62 = vld [vmem:[%s0 + $0x188] sm:$0xff]
  %v63 = vld [vmem:[%s0 + $0x190] sm:$0xff]
  %v64 = vld [vmem:[%s0 + $0x198] sm:$0xff]
  %v65 = vld [vmem:[%s0 + $0x1a0] sm:$0xff]
  %v66 = vld [vmem:[%s0 + $0x1a8] sm:$0xff]
  %v67 = vld [vmem:[%s0 + $0x1b0] sm:$0xff]
  %v68 = vld [vmem:[%s0 + $0x1b8] sm:$0xff]
  %v69 = vld [vmem:[%s0 + $0x1c0] sm:$0xff]
  %v70 = vld [vmem:[%s0 + $0x1c8] sm:$0xff]
  %v71 = vld [vmem:[%s0 + $0x1d0] sm:$0xff]
  %v72 = vld [vmem:[%s0 + $0x1d8] sm:$0xff]
  %v73 = vld [vmem:[%s0 + $0x1e0] sm:$0xff]
  %v74 = vld [vmem:[%s0 + $0x1e8] sm:$0xff]
  %v75 = vld [vmem:[%s0 + $0x1f0] sm:$0xff]
  %v76 = vld [vmem:[%s0 + $0x1f8] sm:$0xff]
  %v77 = vld [vmem:[%s0 + $0x200] sm:$0xff]
  %v78 = vld [vmem:[%s0 + $0x208] sm:$0xff]
  %v79 = vld [vmem:[%s0 + $0x210] sm:$0xff]
  %v80 = vld [vmem:[%s0 + $0x218] sm:$0xff]
  %v81 = vld [vmem:[%s0 + $0x220] sm:$0xff]
  %v82 = vld [vmem:[%s0 + $0x228] sm:$0xff]
  %v83 = vld [vmem:[%s0 + $0x230] sm:$0xff]
  %v84 = vld [vmem:[%s0 + $0x238] sm:$0xff]
  %v85 = vld [vmem:[%s0 + $0x240] sm:$0xff]
  %v86 = vld [vmem:[%s0 + $0x248] sm:$0xff]
  %v87 = vld [vmem:[%s0 + $0x250] sm:$0xff]
  %v88 = vld [vmem:[%s0 + $0x258] sm:$0xff]
  %v89 = vld [vmem:[%s0 + $0x260] sm:$0xff]
  %v90 = vld [vmem:[%s0 + $0x268] sm:$0xff]
  %v91 = vld [vmem:[%s0 + $0x270] sm:$0xff]
  %v92 = vld [vmem:[%s0 + $0x278] sm:$0xff]
  %v93 = vld [vmem:[%s1] sm:$0xff]
  %v94 = vld [vmem:[%s1 + $0x8] sm:$0xff]
  %v95 = vld [vmem:[%s1 + $0x10] sm:$0xff]
  %v96 = vld [vmem:[%s1 + $0x18] sm:$0xff]
  %v97 = vld [vmem:[%s1 + $0x20] sm:$0xff]
  %v98 = vld [vmem:[%s1 + $0x28] sm:$0xff]
  %v99 = vld [vmem:[%s1 + $0x30] sm:$0xff]
  %v100 = vld [vmem:[%s1 + $0x38] sm:$0xff]
  %v101 = vld [vmem:[%s1 + $0x40] sm:$0xff]
  %v102 = vld [vmem:[%s1 + $0x48] sm:$0xff]
  %v103 = vld [vmem:[%s1 + $0x50] sm:$0xff]
  %v104 = vld [vmem:[%s1 + $0x58] sm:$0xff]
  %v105 = vld [vmem:[%s1 + $0x60] sm:$0xff]
  %v106 = vld [vmem:[%s1 + $0x68] sm:$0xff]
  %v107 = vld [vmem:[%s1 + $0x70] sm:$0xff]
  %v108 = vld [vmem:[%s1 + $0x78] sm:$0xff]
  %v109 = vld [vmem:[%s1 + $0x80] sm:$0xff]
  %v110 = vld [vmem:[%s1 + $0x88] sm:$0xff]
  %v111 = vld [vmem:[%s1 + $0x90] sm:$0xff]
  %v112 = vld [vmem:[%s1 + $0x98] sm:$0xff]
  %v113 = vld [vmem:[%s1 + $0xa0] sm:$0xff]
  %v114 = vld [vmem:[%s1 + $0xa8] sm:$0xff]
  %v115 = vld [vmem:[%s1 + $0xb0] sm:$0xff]
  %v116 = vld [vmem:[%s1 + $0xb8] sm:$0xff]
  %v117 = vld [vmem:[%s1 + $0xc0] sm:$0xff]
  %v118 = vld [vmem:[%s1 + $0xc8] sm:$0xff]
  %v119 = vld [vmem:[%s1 + $0xd0] sm:$0xff]
  %v120 = vld [vmem:[%s1 + $0xd8] sm:$0xff]
  %v121 = vld [vmem:[%s1 + $0xe0] sm:$0xff]
  %v122 = vld [vmem:[%s1 + $0xe8] sm:$0xff]
  %v123 = vld [vmem:[%s1 + $0xf0] sm:$0xff]
  %v124 = vld [vmem:[%s1 + $0xf8] sm:$0xff]
  %v125 = vld [vmem:[%s1 + $0x100] sm:$0xff]
  %v126 = vld [vmem:[%s1 + $0x108] sm:$0xff]
  %v127 = vld [vmem:[%s1 + $0x110] sm:$0xff]
  %v128 = vld [vmem:[%s1 + $0x118] sm:$0xff]
  %v129 = vld [vmem:[%s1 + $0x120] sm:$0xff]
  %v130 = vld [vmem:[%s1 + $0x128] sm:$0xff]
  %v131 = vld [vmem:[%s1 + $0x130] sm:$0xff]
  %v132 = vld [vmem:[%s1 + $0x138] sm:$0xff]
  %v133 = vld [vmem:[%s1 + $0x140] sm:$0xff]
  %v134 = vld [vmem:[%s1 + $0x148] sm:$0xff]
  %v135 = vld [vmem:[%s1 + $0x150] sm:$0xff]
  %v136 = vld [vmem:[%s1 + $0x158] sm:$0xff]
  %v137 = vld [vmem:[%s1 + $0x160] sm:$0xff]
  %v138 = vld [vmem:[%s1 + $0x168] sm:$0xff]
  %v139 = vld [vmem:[%s1 + $0x170] sm:$0xff]
  %v140 = vld [vmem:[%s1 + $0x178] sm:$0xff]
  %v141 = vld [vmem:[%s1 + $0x180] sm:$0xff]
  %v142 = vld [vmem:[%s1 + $0x188] sm:$0xff]
  %v143 = vld [vmem:[%s1 + $0x190] sm:$0xff]
  %v144 = vld [vmem:[%s1 + $0x198] sm:$0xff]
  %v145 = vld [vmem:[%s1 + $0x1a0] sm:$0xff]
  %v146 = vld [vmem:[%s1 + $0x1a8] sm:$0xff]
  %v147 = vld [vmem:[%s1 + $0x1b0] sm:$0xff]
  %v148 = vld [vmem:[%s1 + $0x1b8] sm:$0xff]
  %v149 = vld [vmem:[%s1 + $0x1c0] sm:$0xff]
  %v150 = vld [vmem:[%s1 + $0x1c8] sm:$0xff]
  %v151 = vld [vmem:[%s1 + $0x1d0] sm:$0xff]
  %v152 = vld [vmem:[%s1 + $0x1d8] sm:$0xff]
  %v153 = vld [vmem:[%s1 + $0x1e0] sm:$0xff]
  %v154 = vld [vmem:[%s1 + $0x1e8] sm:$0xff]
  %v155 = vld [vmem:[%s1 + $0x1f0] sm:$0xff]
  %v156 = vld [vmem:[%s1 + $0x1f8] sm:$0xff]
  %v157 = vld [vmem:[%s1 + $0x200] sm:$0xff]
  %v158 = vld [vmem:[%s1 + $0x208] sm:$0xff]
  %v159 = vld [vmem:[%s1 + $0x210] sm:$0xff]
  %v160 = vld [vmem:[%s1 + $0x218] sm:$0xff]
  %v161 = vld [vmem:[%s1 + $0x220] sm:$0xff]
  %v162 = vld [vmem:[%s1 + $0x228] sm:$0xff]
  %v163 = vld [vmem:[%s1 + $0x230] sm:$0xff]
  %v164 = vld [vmem:[%s1 + $0x238] sm:$0xff]
  %vm165 = vcmask 523264
  %v167 = vsel %vm165, %v17, 0
  %v170 = vsel %vm165, %v22, 0
  %v173 = vsel %vm165, %v27, 0
  %v176 = vsel %vm165, %v32, 0
  %v179 = vsel %vm165, %v37, 0
  %v182 = vsel %vm165, %v42, 0
  %v185 = vsel %vm165, %v47, 0
  %v188 = vsel %vm165, %v52, 0
  %v191 = vsel %vm165, %v57, 0
  %v194 = vsel %vm165, %v62, 0
  %v197 = vsel %vm165, %v67, 0
  %v200 = vsel %vm165, %v72, 0
  %v203 = vsel %vm165, %v77, 0
  %v206 = vsel %vm165, %v82, 0
  %v209 = vsel %vm165, %v87, 0
  %v212 = vsel %vm165, %v92, 0
  %214 = vmatprep.subr.mxu0 0.0
  %215 = vmatpush1.msra.mxu0 %v93
  %216 = vmatprep.subr.mxu0 0.0
  %217 = vmatpush1.msra.mxu0 %v94
  %218 = vmatprep.subr.mxu0 0.0
  %219 = vmatpush1.msra.mxu0 %v95
  %220 = vmatprep.subr.mxu0 0.0
  %221 = vmatpush1.msra.mxu0 %v96
  %222 = vmatprep.subr.mxu0 0.0
  %223 = vmatpush1.msra.mxu0 %v97
  %224 = vmatprep.subr.mxu0 0.0
  %225 = vmatpush1.msra.mxu0 %v98
  %226 = vmatprep.subr.mxu0 0.0
  %227 = vmatpush1.msra.mxu0 %v99
  %228 = vmatprep.subr.mxu0 0.0
  %229 = vmatpush1.msra.mxu0 %v100
  %230 = vmatprep.subr.mxu0 0.0
  %231 = vmatpush1.msra.mxu0 %v101
  %232 = vmatprep.subr.mxu0 0.0
  %233 = vmatpush1.msra.mxu0 %v102
  %234 = vmatprep.subr.mxu0 0.0
  %235 = vmatpush1.msra.mxu0 %v103
  %236 = vmatprep.subr.mxu0 0.0
  %237 = vmatpush1.msra.mxu0 %v104
  %238 = vmatprep.subr.mxu0 0.0
  %239 = vmatpush1.msra.mxu0 %v105
  %240 = vmatprep.subr.mxu0 0.0
  %241 = vmatpush1.msra.mxu0 %v106
  %242 = vmatprep.subr.mxu0 0.0
  %243 = vmatpush1.msra.mxu0 %v107
  %244 = vmatprep.subr.mxu0 0.0
  %245 = vmatpush1.msra.mxu0 %v108
  %246 = vmatprep.subr.mxu0 0.0
  %247 = vmatpush1.msra.mxu0 %v109
  %248 = vmatprep.subr.mxu0 0.0
  %249 = vmatpush1.msra.mxu0 %v110
  %250 = vmatprep.subr.mxu0 0.0
  %251 = vmatpush1.msra.mxu0 %v111
  %252 = vmatprep.subr.mxu0 0.0
  %253 = vmatpush1.msra.mxu0 %v112
  %254 = vmatprep.subr.mxu0 0.0
  %255 = vmatpush1.msra.mxu0 %v113
  %256 = vmatprep.subr.mxu0 0.0
  %257 = vmatpush1.msra.mxu0 %v114
  %258 = vmatprep.subr.mxu0 0.0
  %259 = vmatpush1.msra.mxu0 %v115
  %260 = vmatprep.subr.mxu0 0.0
  %261 = vmatpush1.msra.mxu0 %v116
  %262 = vmatprep.subr.mxu0 0.0
  %263 = vmatpush1.msra.mxu0 %v117
  %264 = vmatprep.subr.mxu0 0.0
  %265 = vmatpush1.msra.mxu0 %v118
  %266 = vmatprep.subr.mxu0 0.0
  %267 = vmatpush1.msra.mxu0 %v119
  %268 = vmatprep.subr.mxu0 0.0
  %269 = vmatpush1.msra.mxu0 %v120
  %270 = vmatprep.subr.mxu0 0.0
  %271 = vmatpush1.msra.mxu0 %v121
  %272 = vmatprep.subr.mxu0 0.0
  %273 = vmatpush1.msra.mxu0 %v122
  %274 = vmatprep.subr.mxu0 0.0
  %275 = vmatpush1.msra.mxu0 %v123
  %276 = vmatprep.subr.mxu0 0.0
  %277 = vmatpush1.msra.mxu0 %v124
  %278 = vmatprep.mubr.f32.mxu0 %v14
  %279 = vmatmul.mubr.f32.gmra.mrb[0].mxu0 %v13
  %v280 = vpop.f32.mrb[0].mxu0
  %v281 = vadd.f32 0.0, %v280
  %v282 = vpop.f32.mrb[0].mxu0
  %283 = vmatprep.mubr.f32.mxu0 %v19
  %284 = vmatmul.mubr.f32.gmra.mrb[0].mxu0 %v18
  %v285 = vpop.f32.mrb[0].mxu0
  %v286 = vadd.f32 0.0, %v285
  %v287 = vpop.f32.mrb[0].mxu0
  %288 = vmatprep.mubr.f32.mxu0 %v24
  %289 = vmatmul.mubr.f32.gmra.mrb[0].mxu0 %v23
  %v290 = vpop.f32.mrb[0].mxu0
  %v291 = vadd.f32 0.0, %v290
  %v292 = vpop.f32.mrb[0].mxu0
  %293 = vmatprep.mubr.f32.mxu0 %v29
  %294 = vmatmul.mubr.f32.gmra.mrb[0].mxu0 %v28
  %v295 = vpop.f32.mrb[0].mxu0
  %v296 = vadd.f32 0.0, %v295
  %v297 = vpop.f32.mrb[0].mxu0
  %298 = vmatprep.mubr.f32.mxu0 %v34
  %299 = vmatmul.mubr.f32.gmra.mrb[0].mxu0 %v33
  %v300 = vpop.f32.mrb[0].mxu0
  %v301 = vadd.f32 0.0, %v300
  %v302 = vpop.f32.mrb[0].mxu0
  %303 = vmatprep.mubr.f32.mxu0 %v39
  %304 = vmatmul.mubr.f32.gmra.mrb[0].mxu0 %v38
  %v305 = vpop.f32.mrb[0].mxu0
  %v306 = vadd.f32 0.0, %v305
  %v307 = vpop.f32.mrb[0].mxu0
  %308 = vmatprep.mubr.f32.mxu0 %v44
  %309 = vmatmul.mubr.f32.gmra.mrb[0].mxu0 %v43
  %v310 = vpop.f32.mrb[0].mxu0
  %v311 = vadd.f32 0.0, %v310
  %v312 = vpop.f32.mrb[0].mxu0
  %313 = vmatprep.mubr.f32.mxu0 %v49
  %314 = vmatmul.mubr.f32.gmra.mrb[0].mxu0 %v48
  %v315 = vpop.f32.mrb[0].mxu0
  %v316 = vadd.f32 0.0, %v315
  %v317 = vpop.f32.mrb[0].mxu0
  %318 = vmatprep.mubr.f32.mxu0 %v54
  %319 = vmatmul.mubr.f32.gmra.mrb[0].mxu0 %v53
  %v320 = vpop.f32.mrb[0].mxu0
  %v321 = vadd.f32 0.0, %v320
  %v322 = vpop.f32.mrb[0].mxu0
  %323 = vmatprep.mubr.f32.mxu0 %v59
  %324 = vmatmul.mubr.f32.gmra.mrb[0].mxu0 %v58
  %v325 = vpop.f32.mrb[0].mxu0
  %v326 = vadd.f32 0.0, %v325
  %v327 = vpop.f32.mrb[0].mxu0
  %328 = vmatprep.mubr.f32.mxu0 %v64
  %329 = vmatmul.mubr.f32.gmra.mrb[0].mxu0 %v63
  %v330 = vpop.f32.mrb[0].mxu0
  %v331 = vadd.f32 0.0, %v330
  %v332 = vpop.f32.mrb[0].mxu0
  %333 = vmatprep.mubr.f32.mxu0 %v69
  %334 = vmatmul.mubr.f32.gmra.mrb[0].mxu0 %v68
  %v335 = vpop.f32.mrb[0].mxu0
  %v336 = vadd.f32 0.0, %v335
  %v337 = vpop.f32.mrb[0].mxu0
  %338 = vmatprep.mubr.f32.mxu0 %v74
  %339 = vmatmul.mubr.f32.gmra.mrb[0].mxu0 %v73
  %v340 = vpop.f32.mrb[0].mxu0
  %v341 = vadd.f32 0.0, %v340
  %v342 = vpop.f32.mrb[0].mxu0
  %343 = vmatprep.mubr.f32.mxu0 %v79
  %344 = vmatmul.mubr.f32.gmra.mrb[0].mxu0 %v78
  %v345 = vpop.f32.mrb[0].mxu0
  %v346 = vadd.f32 0.0, %v345
  %v347 = vpop.f32.mrb[0].mxu0
  %348 = vmatprep.mubr.f32.mxu0 %v84
  %349 = vmatmul.mubr.f32.gmra.mrb[0].mxu0 %v83
  %v350 = vpop.f32.mrb[0].mxu0
  %v351 = vadd.f32 0.0, %v350
  %v352 = vpop.f32.mrb[0].mxu0
  %353 = vmatprep.mubr.f32.mxu0 %v89
  %354 = vmatmul.mubr.f32.gmra.mrb[0].mxu0 %v88
  %v355 = vpop.f32.mrb[0].mxu0
  %v356 = vadd.f32 0.0, %v355
  %v357 = vpop.f32.mrb[0].mxu0
  %358 = vdwg.mxu0
  %359 = vmatprep.subr.mxu0 0.0
  %360 = vmatpush1.msra.mxu0 %v125
  %361 = vmatprep.subr.mxu0 0.0
  %362 = vmatpush1.msra.mxu0 %v126
  %363 = vmatprep.subr.mxu0 0.0
  %364 = vmatpush1.msra.mxu0 %v127
  %365 = vmatprep.subr.mxu0 0.0
  %366 = vmatpush1.msra.mxu0 %v128
  %367 = vmatprep.subr.mxu0 0.0
  %368 = vmatpush1.msra.mxu0 %v129
  %369 = vmatprep.subr.mxu0 0.0
  %370 = vmatpush1.msra.mxu0 %v130
  %371 = vmatprep.subr.mxu0 0.0
  %372 = vmatpush1.msra.mxu0 %v131
  %373 = vmatprep.subr.mxu0 0.0
  %374 = vmatpush1.msra.mxu0 %v132
  %375 = vmatprep.subr.mxu0 0.0
  %376 = vmatpush1.msra.mxu0 %v133
  %377 = vmatprep.subr.mxu0 0.0
  %378 = vmatpush1.msra.mxu0 %v134
  %379 = vmatprep.subr.mxu0 0.0
  %380 = vmatpush1.msra.mxu0 %v135
  %381 = vmatprep.subr.mxu0 0.0
  %382 = vmatpush1.msra.mxu0 %v136
  %383 = vmatprep.subr.mxu0 0.0
  %384 = vmatpush1.msra.mxu0 %v137
  %385 = vmatprep.subr.mxu0 0.0
  %386 = vmatpush1.msra.mxu0 %v138
  %387 = vmatprep.subr.mxu0 0.0
  %388 = vmatpush1.msra.mxu0 %v139
  %389 = vmatprep.subr.mxu0 0.0
  %390 = vmatpush1.msra.mxu0 %v140
  %391 = vmatprep.subr.mxu0 0.0
  %392 = vmatpush1.msra.mxu0 %v141
  %393 = vmatprep.subr.mxu0 0.0
  %394 = vmatpush1.msra.mxu0 %v142
  %395 = vmatprep.subr.mxu0 0.0
  %396 = vmatpush1.msra.mxu0 %v143
  %397 = vmatprep.subr.mxu0 0.0
  %398 = vmatpush1.msra.mxu0 %v144
  %399 = vmatprep.subr.mxu0 0.0
  %400 = vmatpush1.msra.mxu0 %v145
  %401 = vmatprep.subr.mxu0 0.0
  %402 = vmatpush1.msra.mxu0 %v146
  %403 = vmatprep.subr.mxu0 0.0
  %404 = vmatpush1.msra.mxu0 %v147
  %405 = vmatprep.subr.mxu0 0.0
  %406 = vmatpush1.msra.mxu0 %v148
  %407 = vmatprep.subr.mxu0 0.0
  %408 = vmatpush1.msra.mxu0 %v149
  %409 = vmatprep.subr.mxu0 0.0
  %410 = vmatpush1.msra.mxu0 %v150
  %411 = vmatprep.subr.mxu0 0.0
  %412 = vmatpush1.msra.mxu0 %v151
  %413 = vmatprep.subr.mxu0 0.0
  %414 = vmatpush1.msra.mxu0 %v152
  %415 = vmatprep.subr.mxu0 0.0
  %416 = vmatpush1.msra.mxu0 %v153
  %417 = vmatprep.subr.mxu0 0.0
  %418 = vmatpush1.msra.mxu0 %v154
  %419 = vmatprep.subr.mxu0 0.0
  %420 = vmatpush1.msra.mxu0 %v155
  %421 = vmatprep.subr.mxu0 0.0
  %422 = vmatpush1.msra.mxu0 %v156
  %423 = vmatprep.mubr.f32.mxu0 %v16
  %424 = vmatmul.mubr.f32.gmra.mrb[0].mxu0 %v15
  %v425 = vpop.f32.mrb[0].mxu0
  %v426 = vadd.f32 %v281, %v425
  %v427 = vpop.f32.mrb[0].mxu0
  %428 = vmatprep.mubr.f32.mxu0 %v21
  %429 = vmatmul.mubr.f32.gmra.mrb[0].mxu0 %v20
  %v430 = vpop.f32.mrb[0].mxu0
  %v431 = vadd.f32 %v286, %v430
  %v432 = vpop.f32.mrb[0].mxu0
  %433 = vmatprep.mubr.f32.mxu0 %v26
  %434 = vmatmul.mubr.f32.gmra.mrb[0].mxu0 %v25
  %v435 = vpop.f32.mrb[0].mxu0
  %v436 = vadd.f32 %v291, %v435
  %v437 = vpop.f32.mrb[0].mxu0
  %438 = vmatprep.mubr.f32.mxu0 %v31
  %439 = vmatmul.mubr.f32.gmra.mrb[0].mxu0 %v30
  %v440 = vpop.f32.mrb[0].mxu0
  %v441 = vadd.f32 %v296, %v440
  %v442 = vpop.f32.mrb[0].mxu0
  %443 = vmatprep.mubr.f32.mxu0 %v36
  %444 = vmatmul.mubr.f32.gmra.mrb[0].mxu0 %v35
  %v445 = vpop.f32.mrb[0].mxu0
  %v446 = vadd.f32 %v301, %v445
  %v447 = vpop.f32.mrb[0].mxu0
  %448 = vmatprep.mubr.f32.mxu0 %v41
  %449 = vmatmul.mubr.f32.gmra.mrb[0].mxu0 %v40
  %v450 = vpop.f32.mrb[0].mxu0
  %v451 = vadd.f32 %v306, %v450
  %v452 = vpop.f32.mrb[0].mxu0
  %453 = vmatprep.mubr.f32.mxu0 %v46
  %454 = vmatmul.mubr.f32.gmra.mrb[0].mxu0 %v45
  %v455 = vpop.f32.mrb[0].mxu0
  %v456 = vadd.f32 %v311, %v455
  %v457 = vpop.f32.mrb[0].mxu0
  %458 = vmatprep.mubr.f32.mxu0 %v51
  %459 = vmatmul.mubr.f32.gmra.mrb[0].mxu0 %v50
  %v460 = vpop.f32.mrb[0].mxu0
  %v461 = vadd.f32 %v316, %v460
  %v462 = vpop.f32.mrb[0].mxu0
  %463 = vmatprep.mubr.f32.mxu0 %v56
  %464 = vmatmul.mubr.f32.gmra.mrb[0].mxu0 %v55
  %v465 = vpop.f32.mrb[0].mxu0
  %v466 = vadd.f32 %v321, %v465
  %v467 = vpop.f32.mrb[0].mxu0
  %468 = vmatprep.mubr.f32.mxu0 %v61
  %469 = vmatmul.mubr.f32.gmra.mrb[0].mxu0 %v60
  %v470 = vpop.f32.mrb[0].mxu0
  %v471 = vadd.f32 %v326, %v470
  %v472 = vpop.f32.mrb[0].mxu0
  %473 = vmatprep.mubr.f32.mxu0 %v66
  %474 = vmatmul.mubr.f32.gmra.mrb[0].mxu0 %v65
  %v475 = vpop.f32.mrb[0].mxu0
  %v476 = vadd.f32 %v331, %v475
  %v477 = vpop.f32.mrb[0].mxu0
  %478 = vmatprep.mubr.f32.mxu0 %v71
  %479 = vmatmul.mubr.f32.gmra.mrb[0].mxu0 %v70
  %v480 = vpop.f32.mrb[0].mxu0
  %v481 = vadd.f32 %v336, %v480
  %v482 = vpop.f32.mrb[0].mxu0
  %483 = vmatprep.mubr.f32.mxu0 %v76
  %484 = vmatmul.mubr.f32.gmra.mrb[0].mxu0 %v75
  %v485 = vpop.f32.mrb[0].mxu0
  %v486 = vadd.f32 %v341, %v485
  %v487 = vpop.f32.mrb[0].mxu0
  %488 = vmatprep.mubr.f32.mxu0 %v81
  %489 = vmatmul.mubr.f32.gmra.mrb[0].mxu0 %v80
  %v490 = vpop.f32.mrb[0].mxu0
  %v491 = vadd.f32 %v346, %v490
  %v492 = vpop.f32.mrb[0].mxu0
  %493 = vmatprep.mubr.f32.mxu0 %v86
  %494 = vmatmul.mubr.f32.gmra.mrb[0].mxu0 %v85
  %v495 = vpop.f32.mrb[0].mxu0
  %v496 = vadd.f32 %v351, %v495
  %v497 = vpop.f32.mrb[0].mxu0
  %498 = vmatprep.mubr.f32.mxu0 %v91
  %499 = vmatmul.mubr.f32.gmra.mrb[0].mxu0 %v90
  %v500 = vpop.f32.mrb[0].mxu0
  %v501 = vadd.f32 %v356, %v500
  %v502 = vpop.f32.mrb[0].mxu0
  %503 = vdwg.mxu0
  %504 = vmatprep.subr.mxu0 0.0
  %505 = vmatpush1.msra.mxu0 %v157
  %506 = vmatprep.subr.mxu0 0.0
  %507 = vmatpush1.msra.mxu0 %v158
  %508 = vmatprep.subr.mxu0 0.0
  %509 = vmatpush1.msra.mxu0 %v159
  %510 = vmatprep.subr.mxu0 0.0
  %511 = vmatpush1.msra.mxu0 %v160
  %512 = vmatprep.subr.mxu0 0.0
  %513 = vmatpush1.msra.mxu0 %v161
  %514 = vmatprep.subr.mxu0 0.0
  %515 = vmatpush1.msra.mxu0 %v162
  %516 = vmatprep.subr.mxu0 0.0
  %517 = vmatpush1.msra.mxu0 %v163
  %518 = vmatprep.subr.mxu0 0.0
  %519 = vmatpush1.msra.mxu0 %v164
  %520 = vmatprep.subr.mxu0 0.0
  %521 = vmatpush1.msra.mxu0 0.0
  %522 = vmatprep.subr.mxu0 0.0
  %523 = vmatpush1.msra.mxu0 0.0
  %524 = vmatprep.subr.mxu0 0.0
  %525 = vmatpush1.msra.mxu0 0.0
  %526 = vmatprep.subr.mxu0 0.0
  %527 = vmatpush1.msra.mxu0 0.0
  %528 = vmatprep.subr.mxu0 0.0
  %529 = vmatpush1.msra.mxu0 0.0
  %530 = vmatprep.subr.mxu0 0.0
  %531 = vmatpush1.msra.mxu0 0.0
  %532 = vmatprep.subr.mxu0 0.0
  %533 = vmatpush1.msra.mxu0 0.0
  %534 = vmatprep.subr.mxu0 0.0
  %535 = vmatpush1.msra.mxu0 0.0
  %536 = vmatprep.subr.mxu0 0.0
  %537 = vmatpush1.msra.mxu0 0.0
  %538 = vmatprep.subr.mxu0 0.0
  %539 = vmatpush1.msra.mxu0 0.0
  %540 = vmatprep.subr.mxu0 0.0
  %541 = vmatpush1.msra.mxu0 0.0
  %542 = vmatprep.subr.mxu0 0.0
  %543 = vmatpush1.msra.mxu0 0.0
  %544 = vmatprep.subr.mxu0 0.0
  %545 = vmatpush1.msra.mxu0 0.0
  %546 = vmatprep.subr.mxu0 0.0
  %547 = vmatpush1.msra.mxu0 0.0
  %548 = vmatprep.subr.mxu0 0.0
  %549 = vmatpush1.msra.mxu0 0.0
  %550 = vmatprep.subr.mxu0 0.0
  %551 = vmatpush1.msra.mxu0 0.0
  %552 = vmatprep.subr.mxu0 0.0
  %553 = vmatpush1.msra.mxu0 0.0
  %554 = vmatprep.subr.mxu0 0.0
  %555 = vmatpush1.msra.mxu0 0.0
  %556 = vmatprep.subr.mxu0 0.0
  %557 = vmatpush1.msra.mxu0 0.0
  %558 = vmatprep.subr.mxu0 0.0
  %559 = vmatpush1.msra.mxu0 0.0
  %560 = vmatprep.subr.mxu0 0.0
  %561 = vmatpush1.msra.mxu0 0.0
  %562 = vmatprep.subr.mxu0 0.0
  %563 = vmatpush1.msra.mxu0 0.0
  %564 = vmatprep.subr.mxu0 0.0
  %565 = vmatpush1.msra.mxu0 0.0
  %566 = vmatprep.subr.mxu0 0.0
  %567 = vmatpush1.msra.mxu0 0.0
  %568 = vmatprep.mubr.f32.mxu0 0.0
  %569 = vmatmul.mubr.f32.gmra.mrb[0].mxu0 %v167
  %v570 = vpop.f32.mrb[0].mxu0
  %v571 = vadd.f32 %v426, %v570
  %v572 = vpop.f32.mrb[0].mxu0
  %573 = vmatprep.mubr.f32.mxu0 0.0
  %574 = vmatmul.mubr.f32.gmra.mrb[0].mxu0 %v170
  %v575 = vpop.f32.mrb[0].mxu0
  %v576 = vadd.f32 %v431, %v575
  %v577 = vpop.f32.mrb[0].mxu0
  %578 = vmatprep.mubr.f32.mxu0 0.0
  %579 = vmatmul.mubr.f32.gmra.mrb[0].mxu0 %v173
  %v580 = vpop.f32.mrb[0].mxu0
  %v581 = vadd.f32 %v436, %v580
  %v582 = vpop.f32.mrb[0].mxu0
  %583 = vmatprep.mubr.f32.mxu0 0.0
  %584 = vmatmul.mubr.f32.gmra.mrb[0].mxu0 %v176
  %v585 = vpop.f32.mrb[0].mxu0
  %v586 = vadd.f32 %v441, %v585
  %v587 = vpop.f32.mrb[0].mxu0
  %588 = vmatprep.mubr.f32.mxu0 0.0
  %589 = vmatmul.mubr.f32.gmra.mrb[0].mxu0 %v179
  %v590 = vpop.f32.mrb[0].mxu0
  %v591 = vadd.f32 %v446, %v590
  %v592 = vpop.f32.mrb[0].mxu0
  %593 = vmatprep.mubr.f32.mxu0 0.0
  %594 = vmatmul.mubr.f32.gmra.mrb[0].mxu0 %v182
  %v595 = vpop.f32.mrb[0].mxu0
  %v596 = vadd.f32 %v451, %v595
  %v597 = vpop.f32.mrb[0].mxu0
  %598 = vmatprep.mubr.f32.mxu0 0.0
  %599 = vmatmul.mubr.f32.gmra.mrb[0].mxu0 %v185
  %v600 = vpop.f32.mrb[0].mxu0
  %v601 = vadd.f32 %v456, %v600
  %v602 = vpop.f32.mrb[0].mxu0
  %603 = vmatprep.mubr.f32.mxu0 0.0
  %604 = vmatmul.mubr.f32.gmra.mrb[0].mxu0 %v188
  %v605 = vpop.f32.mrb[0].mxu0
  %v606 = vadd.f32 %v461, %v605
  %v607 = vpop.f32.mrb[0].mxu0
  %608 = vmatprep.mubr.f32.mxu0 0.0
  %609 = vmatmul.mubr.f32.gmra.mrb[0].mxu0 %v191
  %v610 = vpop.f32.mrb[0].mxu0
  %v611 = vadd.f32 %v466, %v610
  %v612 = vpop.f32.mrb[0].mxu0
  %613 = vmatprep.mubr.f32.mxu0 0.0
  %614 = vmatmul.mubr.f32.gmra.mrb[0].mxu0 %v194
  %v615 = vpop.f32.mrb[0].mxu0
  %v616 = vadd.f32 %v471, %v615
  %v617 = vpop.f32.mrb[0].mxu0
  %618 = vmatprep.mubr.f32.mxu0 0.0
  %619 = vmatmul.mubr.f32.gmra.mrb[0].mxu0 %v197
  %v620 = vpop.f32.mrb[0].mxu0
  %v621 = vadd.f32 %v476, %v620
  %v622 = vpop.f32.mrb[0].mxu0
  %623 = vmatprep.mubr.f32.mxu0 0.0
  %624 = vmatmul.mubr.f32.gmra.mrb[0].mxu0 %v200
  %v625 = vpop.f32.mrb[0].mxu0
  %v626 = vadd.f32 %v481, %v625
  %v627 = vpop.f32.mrb[0].mxu0
  %628 = vmatprep.mubr.f32.mxu0 0.0
  %629 = vmatmul.mubr.f32.gmra.mrb[0].mxu0 %v203
  %v630 = vpop.f32.mrb[0].mxu0
  %v631 = vadd.f32 %v486, %v630
  %v632 = vpop.f32.mrb[0].mxu0
  %633 = vmatprep.mubr.f32.mxu0 0.0
  %634 = vmatmul.mubr.f32.gmra.mrb[0].mxu0 %v206
  %v635 = vpop.f32.mrb[0].mxu0
  %v636 = vadd.f32 %v491, %v635
  %v637 = vpop.f32.mrb[0].mxu0
  %638 = vmatprep.mubr.f32.mxu0 0.0
  %639 = vmatmul.mubr.f32.gmra.mrb[0].mxu0 %v209
  %v640 = vpop.f32.mrb[0].mxu0
  %v641 = vadd.f32 %v496, %v640
  %v642 = vpop.f32.mrb[0].mxu0
  %643 = vmatprep.mubr.f32.mxu0 0.0
  %644 = vmatmul.mubr.f32.gmra.mrb[0].mxu0 %v212
  %v645 = vpop.f32.mrb[0].mxu0
  %v646 = vadd.f32 %v501, %v645
  %v647 = vpop.f32.mrb[0].mxu0
  %648 = vdwg.mxu0
  %649 = vst [vmem:[%s2] sm:$0xff] %v571
  %650 = vst [vmem:[%s2 + $0x8] sm:$0xff] %v576
  %651 = vst [vmem:[%s2 + $0x10] sm:$0xff] %v581
  %652 = vst [vmem:[%s2 + $0x18] sm:$0xff] %v586
  %653 = vst [vmem:[%s2 + $0x20] sm:$0xff] %v591
  %654 = vst [vmem:[%s2 + $0x28] sm:$0xff] %v596
  %655 = vst [vmem:[%s2 + $0x30] sm:$0xff] %v601
  %656 = vst [vmem:[%s2 + $0x38] sm:$0xff] %v606
  %657 = vst [vmem:[%s2 + $0x40] sm:$0xff] %v611
  %658 = vst [vmem:[%s2 + $0x48] sm:$0xff] %v616
  %659 = vst [vmem:[%s2 + $0x50] sm:$0xff] %v621
  %660 = vst [vmem:[%s2 + $0x58] sm:$0xff] %v626
  %661 = vst [vmem:[%s2 + $0x60] sm:$0xff] %v631
  %662 = vst [vmem:[%s2 + $0x68] sm:$0xff] %v636
  %663 = vst [vmem:[%s2 + $0x70] sm:$0xff] %v641
  %664 = vst [vmem:[%s2 + $0x78] sm:$0xff] %v646
  %v665 = vadd.f32 %v571, %v576
  %v666 = vadd.f32 %v665, %v581
  %v667 = vadd.f32 %v666, %v586
  %v668 = vadd.f32 %v667, %v591
  %v669 = vadd.f32 %v668, %v596
  %v670 = vadd.f32 %v669, %v601
  %v671 = vadd.f32 %v670, %v606
  %v672 = vadd.f32 %v671, %v611
  %v673 = vadd.f32 %v672, %v616
  %v674 = vadd.f32 %v673, %v621
  %v675 = vadd.f32 %v674, %v626
  %v676 = vadd.f32 %v675, %v631
  %v677 = vadd.f32 %v676, %v636
  %v678 = vadd.f32 %v677, %v641
  %v679 = vadd.f32 %v678, %v646
  %v680 = vrot.slane %v679, 4
  %v681 = vadd.f32 %v679, %v680
  %v682 = vrot.slane %v681, 2
  %v683 = vadd.f32 %v681, %v682
  %v684 = vrot.slane %v683, 1
  %v685 = vadd.f32 %v683, %v684
  %v686 = vmul.f32 %v571, %v571
  %v687 = vmul.f32 %v576, %v576
  %v688 = vmul.f32 %v581, %v581
  %v689 = vmul.f32 %v586, %v586
  %v690 = vmul.f32 %v591, %v591
  %v691 = vmul.f32 %v596, %v596
  %v692 = vmul.f32 %v601, %v601
  %v693 = vmul.f32 %v606, %v606
  %v694 = vmul.f32 %v611, %v611
  %v695 = vmul.f32 %v616, %v616
  %v696 = vmul.f32 %v621, %v621
  %v697 = vmul.f32 %v626, %v626
  %v698 = vmul.f32 %v631, %v631
  %v699 = vmul.f32 %v636, %v636
  %v700 = vmul.f32 %v641, %v641
  %v701 = vmul.f32 %v646, %v646
  %v702 = vadd.f32 %v686, %v687
  %v703 = vadd.f32 %v702, %v688
  %v704 = vadd.f32 %v703, %v689
  %v705 = vadd.f32 %v704, %v690
  %v706 = vadd.f32 %v705, %v691
  %v707 = vadd.f32 %v706, %v692
  %v708 = vadd.f32 %v707, %v693
  %v709 = vadd.f32 %v708, %v694
  %v710 = vadd.f32 %v709, %v695
  %v711 = vadd.f32 %v710, %v696
  %v712 = vadd.f32 %v711, %v697
  %v713 = vadd.f32 %v712, %v698
  %v714 = vadd.f32 %v713, %v699
  %v715 = vadd.f32 %v714, %v700
  %v716 = vadd.f32 %v715, %v701
  %v717 = vrot.slane %v716, 4
  %v718 = vadd.f32 %v716, %v717
  %v719 = vrot.slane %v718, 2
  %v720 = vadd.f32 %v718, %v719
  %v721 = vrot.slane %v720, 1
  %v722 = vadd.f32 %v720, %v721
  %v723 = vlaneseq
  %v724 = vshrl.u32 %v723, 7
  %vm725 = vcmp.eq.s32.totalorder %v724, 0
  %vm726 = vcmp.eq.s32.totalorder %v724, 1
  %v727 = vsel %vm726, %v722, 0.0
  %v728 = vsel %vm725, %v685, %v727
  %729 = vst [vmem:[%s3] sm:$0xff] %v728
  // Predicated region
  $region10: #{forward.16} parent=0 // pred_check
    _
  $region11: #{forward.16} parent=0 // pred_check_branch
    %731 = sbr.rel (0) target = $region13
  $region12: #{forward.16} parent=0 // pred_region
    _
  $region13: #{forward.16} parent=0 // pred_fallthru
    _
  // Predicated region
  $region14: #{forward.16} parent=0 // pred_check
    _
  $region15: #{forward.16} parent=0 // pred_check_branch
    %733 = sbr.rel (0) target = $region17
  $region16: #{forward.16} parent=0 // pred_region
    _
  $region17: #{forward.16} parent=0 // pred_fallthru
    _
  // Predicated region
  $region18: #{forward.16} parent=0 // pred_check
    _
  $region19: #{forward.16} parent=0 // pred_check_branch
    %735 = sbr.rel (0) target = $region21
  $region20: #{forward.16} parent=0 // pred_region
    _
  $region21: #{forward.16} parent=0 // pred_fallthru
    _
  // Predicated region
  $region22: #{forward.16} parent=0 // pred_check
    _
  $region23: #{forward.16} parent=0 // pred_check_branch
    %737 = sbr.rel (0) target = $region25
  $region24: #{forward.16} parent=0 // pred_region
    _
  $region25: #{forward.16} parent=0 // pred_fallthru
    _

// kernel: forward.17
$region0: #{forward.17}
  #allocation0 [shape = 'u32[]', space=smem, size = 0x4, offset = 0x4, fixed_abs, tag = 'smem constant byte address 0x4 - core index']
  #allocation1 [shape = 'u32[144,128]{1,0:T(1,128)}', space=vmem, size = 0x12000, scoped, tag = 'internal scratch']
  %s0 = inlined_call_operand.vmem [shape: f32[128,128], index: 0, kind: input, shape index: {}]
  %s1 = inlined_call_operand.vmem [shape: f32[1,128], index: 1, kind: input, shape index: {}]
  %s2 = inlined_call_operand.vmem [shape: f32[1,128], index: 2, kind: input, shape index: {}]
  %s3 = inlined_call_operand.vmem [shape: f32[128,128], index: 3, kind: output, shape index: {}]
  %s4 = sld [smem:[#allocation0]]
  $region22: #{forward.17} parent=0
    _
  %s6 = ssub.s32 1, %s4
  %s7 = scalar_select 0, %s6, %s4
  // Predicated region
  $region2: #{forward.17} parent=0 // pred_check
    _
  $region3: #{forward.17} parent=0 // pred_check_branch
    %9 = sbr.rel (0) target = $region5
  $region4: #{forward.17} parent=0 // pred_region
    _
  $region5: #{forward.17} parent=0 // pred_fallthru
    _
  // Predicated region
  $region6: #{forward.17} parent=0 // pred_check
    _
  $region7: #{forward.17} parent=0 // pred_check_branch
    %11 = sbr.rel (0) target = $region9
  $region8: #{forward.17} parent=0 // pred_region
    _
  $region9: #{forward.17} parent=0 // pred_fallthru
    _
  // Predicated region
  $region10: #{forward.17} parent=0 // pred_check
    _
  $region11: #{forward.17} parent=0 // pred_check_branch
    %13 = sbr.rel (0) target = $region13
  $region12: #{forward.17} parent=0 // pred_region
    _
  $region13: #{forward.17} parent=0 // pred_fallthru
    _
  %v14 = vld [vmem:[%s0] sm:$0xff]
  %v15 = vld [vmem:[%s0 + $0x8] sm:$0xff]
  %v16 = vld [vmem:[%s0 + $0x10] sm:$0xff]
  %v17 = vld [vmem:[%s0 + $0x18] sm:$0xff]
  %v18 = vld [vmem:[%s0 + $0x20] sm:$0xff]
  %v19 = vld [vmem:[%s0 + $0x28] sm:$0xff]
  %v20 = vld [vmem:[%s0 + $0x30] sm:$0xff]
  %v21 = vld [vmem:[%s0 + $0x38] sm:$0xff]
  %v22 = vld [vmem:[%s0 + $0x40] sm:$0xff]
  %v23 = vld [vmem:[%s0 + $0x48] sm:$0xff]
  %v24 = vld [vmem:[%s0 + $0x50] sm:$0xff]
  %v25 = vld [vmem:[%s0 + $0x58] sm:$0xff]
  %v26 = vld [vmem:[%s0 + $0x60] sm:$0xff]
  %v27 = vld [vmem:[%s0 + $0x68] sm:$0xff]
  %v28 = vld [vmem:[%s0 + $0x70] sm:$0xff]
  %v29 = vld [vmem:[%s0 + $0x78] sm:$0xff]
  %v30 = vld [vmem:[%s1] sm:$0x1]
  %v32 = vlaneseq
  %v33 = vshrl.u32 %v32, 7
  %v34 = vsub.s32 0, %v33
  %v35 = vrot.slane %v30, %v34
  %v37 = vmul.f32 %v14, %v35
  %v38 = vmul.f32 %v15, %v35
  %v39 = vmul.f32 %v16, %v35
  %v40 = vmul.f32 %v17, %v35
  %v41 = vmul.f32 %v18, %v35
  %v42 = vmul.f32 %v19, %v35
  %v43 = vmul.f32 %v20, %v35
  %v44 = vmul.f32 %v21, %v35
  %v45 = vmul.f32 %v22, %v35
  %v46 = vmul.f32 %v23, %v35
  %v47 = vmul.f32 %v24, %v35
  %v48 = vmul.f32 %v25, %v35
  %v49 = vmul.f32 %v26, %v35
  %v50 = vmul.f32 %v27, %v35
  %v51 = vmul.f32 %v28, %v35
  %v52 = vmul.f32 %v29, %v35
  %v53 = vld [vmem:[%s2] sm:$0x1]
  %v55 = vlaneseq
  %v56 = vshrl.u32 %v55, 7
  %v57 = vsub.s32 0, %v56
  %v58 = vrot.slane %v53, %v57
  %v60 = vadd.f32 %v37, %v58
  %v61 = vadd.f32 %v38, %v58
  %v62 = vadd.f32 %v39, %v58
  %v63 = vadd.f32 %v40, %v58
  %v64 = vadd.f32 %v41, %v58
  %v65 = vadd.f32 %v42, %v58
  %v66 = vadd.f32 %v43, %v58
  %v67 = vadd.f32 %v44, %v58
  %v68 = vadd.f32 %v45, %v58
  %v69 = vadd.f32 %v46, %v58
  %v70 = vadd.f32 %v47, %v58
  %v71 = vadd.f32 %v48, %v58
  %v72 = vadd.f32 %v49, %v58
  %v73 = vadd.f32 %v50, %v58
  %v74 = vadd.f32 %v51, %v58
  %v75 = vadd.f32 %v52, %v58
  %v76 = vmax.f32 %v60, 0.0
  %v77 = vmax.f32 %v61, 0.0
  %v78 = vmax.f32 %v62, 0.0
  %v79 = vmax.f32 %v63, 0.0
  %v80 = vmax.f32 %v64, 0.0
  %v81 = vmax.f32 %v65, 0.0
  %v82 = vmax.f32 %v66, 0.0
  %v83 = vmax.f32 %v67, 0.0
  %v84 = vmax.f32 %v68, 0.0
  %v85 = vmax.f32 %v69, 0.0
  %v86 = vmax.f32 %v70, 0.0
  %v87 = vmax.f32 %v71, 0.0
  %v88 = vmax.f32 %v72, 0.0
  %v89 = vmax.f32 %v73, 0.0
  %v90 = vmax.f32 %v74, 0.0
  %v91 = vmax.f32 %v75, 0.0
  %92 = vst [vmem:[%s3] sm:$0xff] %v76
  %93 = vst [vmem:[%s3 + $0x8] sm:$0xff] %v77
  %94 = vst [vmem:[%s3 + $0x10] sm:$0xff] %v78
  %95 = vst [vmem:[%s3 + $0x18] sm:$0xff] %v79
  %96 = vst [vmem:[%s3 + $0x20] sm:$0xff] %v80
  %97 = vst [vmem:[%s3 + $0x28] sm:$0xff] %v81
  %98 = vst [vmem:[%s3 + $0x30] sm:$0xff] %v82
  %99 = vst [vmem:[%s3 + $0x38] sm:$0xff] %v83
  %100 = vst [vmem:[%s3 + $0x40] sm:$0xff] %v84
  %101 = vst [vmem:[%s3 + $0x48] sm:$0xff] %v85
  %102 = vst [vmem:[%s3 + $0x50] sm:$0xff] %v86
  %103 = vst [vmem:[%s3 + $0x58] sm:$0xff] %v87
  %104 = vst [vmem:[%s3 + $0x60] sm:$0xff] %v88
  %105 = vst [vmem:[%s3 + $0x68] sm:$0xff] %v89
  %106 = vst [vmem:[%s3 + $0x70] sm:$0xff] %v90
  %107 = vst [vmem:[%s3 + $0x78] sm:$0xff] %v91
  // Predicated region
  $region14: #{forward.17} parent=0 // pred_check
    _
  $region15: #{forward.17} parent=0 // pred_check_branch
    %109 = sbr.rel (0) target = $region17
  $region16: #{forward.17} parent=0 // pred_region
    _
  $region17: #{forward.17} parent=0 // pred_fallthru
    _
  // Predicated region
  $region18: #{forward.17} parent=0 // pred_check
    _
  $region19: #{forward.17} parent=0 // pred_check_branch
    %111 = sbr.rel (0) target = $region21
  $region20: #{forward.17} parent=0 // pred_region
    _
  $region21: #{forward.17} parent=0 // pred_fallthru
    _

// kernel: forward.18
$region0: #{forward.18}
  #allocation0 [shape = 'u32[]', space=smem, size = 0x4, offset = 0x4, fixed_abs, tag = 'smem constant byte address 0x4 - core index']
  #allocation1 [shape = 'u32[144,128]{1,0:T(1,128)}', space=vmem, size = 0x12000, scoped, tag = 'internal scratch']
  %s0 = inlined_call_operand.vmem [shape: f32[8,1024], index: 0, kind: input, shape index: {}]
  %s1 = inlined_call_operand.vmem [shape: f32[1024,256], index: 1, kind: input, shape index: {}]
  %s2 = inlined_call_operand.vmem [shape: f32[1,256], index: 2, kind: input, shape index: {}]
  %s3 = inlined_call_operand.vmem [shape: f32[1,256], index: 3, kind: input, shape index: {}]
  %s4 = inlined_call_operand.vmem [shape: f32[256,256], index: 4, kind: input, shape index: {}]
  %s5 = inlined_call_operand.vmem [shape: f32[1,256], index: 5, kind: input, shape index: {}]
  %s6 = inlined_call_operand.vmem [shape: f32[8,256], index: 6, kind: output, shape index: {}]
  %s7 = sld [smem:[#allocation0]]
  $region34: #{forward.18} parent=0
    _
  %s9 = ssub.s32 1, %s7
  %s10 = scalar_select 0, %s9, %s7
  // Predicated region
  $region2: #{forward.18} parent=0 // pred_check
    _
  $region3: #{forward.18} parent=0 // pred_check_branch
    %12 = sbr.rel (0) target = $region5
  $region4: #{forward.18} parent=0 // pred_region
    _
  $region5: #{forward.18} parent=0 // pred_fallthru
    _
  // Predicated region
  $region6: #{forward.18} parent=0 // pred_check
    _
  $region7: #{forward.18} parent=0 // pred_check_branch
    %14 = sbr.rel (0) target = $region9
  $region8: #{forward.18} parent=0 // pred_region
    _
  $region9: #{forward.18} parent=0 // pred_fallthru
    _
  // Predicated region
  $region10: #{forward.18} parent=0 // pred_check
    _
  $region11: #{forward.18} parent=0 // pred_check_branch
    %16 = sbr.rel (0) target = $region13
  $region12: #{forward.18} parent=0 // pred_region
    _
  $region13: #{forward.18} parent=0 // pred_fallthru
    _
  // Predicated region
  $region14: #{forward.18} parent=0 // pred_check
    _
  $region15: #{forward.18} parent=0 // pred_check_branch
    %18 = sbr.rel (0) target = $region17
  $region16: #{forward.18} parent=0 // pred_region
    _
  $region17: #{forward.18} parent=0 // pred_fallthru
    _
  // Predicated region
  $region18: #{forward.18} parent=0 // pred_check
    _
  $region19: #{forward.18} parent=0 // pred_check_branch
    %20 = sbr.rel (0) target = $region21
  $region20: #{forward.18} parent=0 // pred_region
    _
  $region21: #{forward.18} parent=0 // pred_fallthru
    _
  // Predicated region
  $region22: #{forward.18} parent=0 // pred_check
    _
  $region23: #{forward.18} parent=0 // pred_check_branch
    %22 = sbr.rel (0) target = $region25
  $region24: #{forward.18} parent=0 // pred_region
    _
  $region25: #{forward.18} parent=0 // pred_fallthru
    _
  %v23 = vld [vmem:[%s0] sm:$0xff]
  %v24 = vld [vmem:[%s0 + $0x8] sm:$0xff]
  %v25 = vld [vmem:[%s0 + $0x10] sm:$0xff]
  %v26 = vld [vmem:[%s0 + $0x18] sm:$0xff]
  %v27 = vld [vmem:[%s0 + $0x20] sm:$0xff]
  %v28 = vld [vmem:[%s0 + $0x28] sm:$0xff]
  %v29 = vld [vmem:[%s0 + $0x30] sm:$0xff]
  %v30 = vld [vmem:[%s0 + $0x38] sm:$0xff]
  %v31 = vld [vmem:[%s1] sm:$0xff]
  %v32 = vld [vmem:[%s1 + $0x8] sm:$0xff]
  %v33 = vld [vmem:[%s1 + $0x10] sm:$0xff]
  %v34 = vld [vmem:[%s1 + $0x18] sm:$0xff]
  %v35 = vld [vmem:[%s1 + $0x20] sm:$0xff]
  %v36 = vld [vmem:[%s1 + $0x28] sm:$0xff]
  %v37 = vld [vmem:[%s1 + $0x30] sm:$0xff]
  %v38 = vld [vmem:[%s1 + $0x38] sm:$0xff]
  %v39 = vld [vmem:[%s1 + $0x40] sm:$0xff]
  %v40 = vld [vmem:[%s1 + $0x48] sm:$0xff]
  %v41 = vld [vmem:[%s1 + $0x50] sm:$0xff]
  %v42 = vld [vmem:[%s1 + $0x58] sm:$0xff]
  %v43 = vld [vmem:[%s1 + $0x60] sm:$0xff]
  %v44 = vld [vmem:[%s1 + $0x68] sm:$0xff]
  %v45 = vld [vmem:[%s1 + $0x70] sm:$0xff]
  %v46 = vld [vmem:[%s1 + $0x78] sm:$0xff]
  %v47 = vld [vmem:[%s1 + $0x80] sm:$0xff]
  %v48 = vld [vmem:[%s1 + $0x88] sm:$0xff]
  %v49 = vld [vmem:[%s1 + $0x90] sm:$0xff]
  %v50 = vld [vmem:[%s1 + $0x98] sm:$0xff]
  %v51 = vld [vmem:[%s1 + $0xa0] sm:$0xff]
  %v52 = vld [vmem:[%s1 + $0xa8] sm:$0xff]
  %v53 = vld [vmem:[%s1 + $0xb0] sm:$0xff]
  %v54 = vld [vmem:[%s1 + $0xb8] sm:$0xff]
  %v55 = vld [vmem:[%s1 + $0xc0] sm:$0xff]
  %v56 = vld [vmem:[%s1 + $0xc8] sm:$0xff]
  %v57 = vld [vmem:[%s1 + $0xd0] sm:$0xff]
  %v58 = vld [vmem:[%s1 + $0xd8] sm:$0xff]
  %v59 = vld [vmem:[%s1 + $0xe0] sm:$0xff]
  %v60 = vld [vmem:[%s1 + $0xe8] sm:$0xff]
  %v61 = vld [vmem:[%s1 + $0xf0] sm:$0xff]
  %v62 = vld [vmem:[%s1 + $0xf8] sm:$0xff]
  %v63 = vld [vmem:[%s1 + $0x100] sm:$0xff]
  %v64 = vld [vmem:[%s1 + $0x108] sm:$0xff]
  %v65 = vld [vmem:[%s1 + $0x110] sm:$0xff]
  %v66 = vld [vmem:[%s1 + $0x118] sm:$0xff]
  %v67 = vld [vmem:[%s1 + $0x120] sm:$0xff]
  %v68 = vld [vmem:[%s1 + $0x128] sm:$0xff]
  %v69 = vld [vmem:[%s1 + $0x130] sm:$0xff]
  %v70 = vld [vmem:[%s1 + $0x138] sm:$0xff]
  %v71 = vld [vmem:[%s1 + $0x140] sm:$0xff]
  %v72 = vld [vmem:[%s1 + $0x148] sm:$0xff]
  %v73 = vld [vmem:[%s1 + $0x150] sm:$0xff]
  %v74 = vld [vmem:[%s1 + $0x158] sm:$0xff]
  %v75 = vld [vmem:[%s1 + $0x160] sm:$0xff]
  %v76 = vld [vmem:[%s1 + $0x168] sm:$0xff]
  %v77 = vld [vmem:[%s1 + $0x170] sm:$0xff]
  %v78 = vld [vmem:[%s1 + $0x178] sm:$0xff]
  %v79 = vld [vmem:[%s1 + $0x180] sm:$0xff]
  %v80 = vld [vmem:[%s1 + $0x188] sm:$0xff]
  %v81 = vld [vmem:[%s1 + $0x190] sm:$0xff]
  %v82 = vld [vmem:[%s1 + $0x198] sm:$0xff]
  %v83 = vld [vmem:[%s1 + $0x1a0] sm:$0xff]
  %v84 = vld [vmem:[%s1 + $0x1a8] sm:$0xff]
  %v85 = vld [vmem:[%s1 + $0x1b0] sm:$0xff]
  %v86 = vld [vmem:[%s1 + $0x1b8] sm:$0xff]
  %v87 = vld [vmem:[%s1 + $0x1c0] sm:$0xff]
  %v88 = vld [vmem:[%s1 + $0x1c8] sm:$0xff]
  %v89 = vld [vmem:[%s1 + $0x1d0] sm:$0xff]
  %v90 = vld [vmem:[%s1 + $0x1d8] sm:$0xff]
  %v91 = vld [vmem:[%s1 + $0x1e0] sm:$0xff]
  %v92 = vld [vmem:[%s1 + $0x1e8] sm:$0xff]
  %v93 = vld [vmem:[%s1 + $0x1f0] sm:$0xff]
  %v94 = vld [vmem:[%s1 + $0x1f8] sm:$0xff]
  %v95 = vld [vmem:[%s1 + $0x200] sm:$0xff]
  %v96 = vld [vmem:[%s1 + $0x208] sm:$0xff]
  %v97 = vld [vmem:[%s1 + $0x210] sm:$0xff]
  %v98 = vld [vmem:[%s1 + $0x218] sm:$0xff]
  %v99 = vld [vmem:[%s1 + $0x220] sm:$0xff]
  %v100 = vld [vmem:[%s1 + $0x228] sm:$0xff]
  %v101 = vld [vmem:[%s1 + $0x230] sm:$0xff]
  %v102 = vld [vmem:[%s1 + $0x238] sm:$0xff]
  %v103 = vld [vmem:[%s1 + $0x240] sm:$0xff]
  %v104 = vld [vmem:[%s1 + $0x248] sm:$0xff]
  %v105 = vld [vmem:[%s1 + $0x250] sm:$0xff]
  %v106 = vld [vmem:[%s1 + $0x258] sm:$0xff]
  %v107 = vld [vmem:[%s1 + $0x260] sm:$0xff]
  %v108 = vld [vmem:[%s1 + $0x268] sm:$0xff]
  %v109 = vld [vmem:[%s1 + $0x270] sm:$0xff]
  %v110 = vld [vmem:[%s1 + $0x278] sm:$0xff]
  %v111 = vld [vmem:[%s1 + $0x280] sm:$0xff]
  %v112 = vld [vmem:[%s1 + $0x288] sm:$0xff]
  %v113 = vld [vmem:[%s1 + $0x290] sm:$0xff]
  %v114 = vld [vmem:[%s1 + $0x298] sm:$0xff]
  %v115 = vld [vmem:[%s1 + $0x2a0] sm:$0xff]
  %v116 = vld [vmem:[%s1 + $0x2a8] sm:$0xff]
  %v117 = vld [vmem:[%s1 + $0x2b0] sm:$0xff]
  %v118 = vld [vmem:[%s1 + $0x2b8] sm:$0xff]
  %v119 = vld [vmem:[%s1 + $0x2c0] sm:$0xff]
  %v120 = vld [vmem:[%s1 + $0x2c8] sm:$0xff]
  %v121 = vld [vmem:[%s1 + $0x2d0] sm:$0xff]
  %v122 = vld [vmem:[%s1 + $0x2d8] sm:$0xff]
  %v123 = vld [vmem:[%s1 + $0x2e0] sm:$0xff]
  %v124 = vld [vmem:[%s1 + $0x2e8] sm:$0xff]
  %v125 = vld [vmem:[%s1 + $0x2f0] sm:$0xff]
  %v126 = vld [vmem:[%s1 + $0x2f8] sm:$0xff]
  %v127 = vld [vmem:[%s1 + $0x300] sm:$0xff]
  %v128 = vld [vmem:[%s1 + $0x308] sm:$0xff]
  %v129 = vld [vmem:[%s1 + $0x310] sm:$0xff]
  %v130 = vld [vmem:[%s1 + $0x318] sm:$0xff]
  %v131 = vld [vmem:[%s1 + $0x320] sm:$0xff]
  %v132 = vld [vmem:[%s1 + $0x328] sm:$0xff]
  %v133 = vld [vmem:[%s1 + $0x330] sm:$0xff]
  %v134 = vld [vmem:[%s1 + $0x338] sm:$0xff]
  %v135 = vld [vmem:[%s1 + $0x340] sm:$0xff]
  %v136 = vld [vmem:[%s1 + $0x348] sm:$0xff]
  %v137 = vld [vmem:[%s1 + $0x350] sm:$0xff]
  %v138 = vld [vmem:[%s1 + $0x358] sm:$0xff]
  %v139 = vld [vmem:[%s1 + $0x360] sm:$0xff]
  %v140 = vld [vmem:[%s1 + $0x368] sm:$0xff]
  %v141 = vld [vmem:[%s1 + $0x370] sm:$0xff]
  %v142 = vld [vmem:[%s1 + $0x378] sm:$0xff]
  %v143 = vld [vmem:[%s1 + $0x380] sm:$0xff]
  %v144 = vld [vmem:[%s1 + $0x388] sm:$0xff]
  %v145 = vld [vmem:[%s1 + $0x390] sm:$0xff]
  %v146 = vld [vmem:[%s1 + $0x398] sm:$0xff]
  %v147 = vld [vmem:[%s1 + $0x3a0] sm:$0xff]
  %v148 = vld [vmem:[%s1 + $0x3a8] sm:$0xff]
  %v149 = vld [vmem:[%s1 + $0x3b0] sm:$0xff]
  %v150 = vld [vmem:[%s1 + $0x3b8] sm:$0xff]
  %v151 = vld [vmem:[%s1 + $0x3c0] sm:$0xff]
  %v152 = vld [vmem:[%s1 + $0x3c8] sm:$0xff]
  %v153 = vld [vmem:[%s1 + $0x3d0] sm:$0xff]
  %v154 = vld [vmem:[%s1 + $0x3d8] sm:$0xff]
  %v155 = vld [vmem:[%s1 + $0x3e0] sm:$0xff]
  %v156 = vld [vmem:[%s1 + $0x3e8] sm:$0xff]
  %v157 = vld [vmem:[%s1 + $0x3f0] sm:$0xff]
  %v158 = vld [vmem:[%s1 + $0x3f8] sm:$0xff]
  %v159 = vld [vmem:[%s1 + $0x400] sm:$0xff]
  %v160 = vld [vmem:[%s1 + $0x408] sm:$0xff]
  %v161 = vld [vmem:[%s1 + $0x410] sm:$0xff]
  %v162 = vld [vmem:[%s1 + $0x418] sm:$0xff]
  %v163 = vld [vmem:[%s1 + $0x420] sm:$0xff]
  %v164 = vld [vmem:[%s1 + $0x428] sm:$0xff]
  %v165 = vld [vmem:[%s1 + $0x430] sm:$0xff]
  %v166 = vld [vmem:[%s1 + $0x438] sm:$0xff]
  %v167 = vld [vmem:[%s1 + $0x440] sm:$0xff]
  %v168 = vld [vmem:[%s1 + $0x448] sm:$0xff]
  %v169 = vld [vmem:[%s1 + $0x450] sm:$0xff]
  %v170 = vld [vmem:[%s1 + $0x458] sm:$0xff]
  %v171 = vld [vmem:[%s1 + $0x460] sm:$0xff]
  %v172 = vld [vmem:[%s1 + $0x468] sm:$0xff]
  %v173 = vld [vmem:[%s1 + $0x470] sm:$0xff]
  %v174 = vld [vmem:[%s1 + $0x478] sm:$0xff]
  %v175 = vld [vmem:[%s1 + $0x480] sm:$0xff]
  %v176 = vld [vmem:[%s1 + $0x488] sm:$0xff]
  %v177 = vld [vmem:[%s1 + $0x490] sm:$0xff]
  %v178 = vld [vmem:[%s1 + $0x498] sm:$0xff]
  %v179 = vld [vmem:[%s1 + $0x4a0] sm:$0xff]
  %v180 = vld [vmem:[%s1 + $0x4a8] sm:$0xff]
  %v181 = vld [vmem:[%s1 + $0x4b0] sm:$0xff]
  %v182 = vld [vmem:[%s1 + $0x4b8] sm:$0xff]
  %v183 = vld [vmem:[%s1 + $0x4c0] sm:$0xff]
  %v184 = vld [vmem:[%s1 + $0x4c8] sm:$0xff]
  %v185 = vld [vmem:[%s1 + $0x4d0] sm:$0xff]
  %v186 = vld [vmem:[%s1 + $0x4d8] sm:$0xff]
  %v187 = vld [vmem:[%s1 + $0x4e0] sm:$0xff]
  %v188 = vld [vmem:[%s1 + $0x4e8] sm:$0xff]
  %v189 = vld [vmem:[%s1 + $0x4f0] sm:$0xff]
  %v190 = vld [vmem:[%s1 + $0x4f8] sm:$0xff]
  %v191 = vld [vmem:[%s1 + $0x500] sm:$0xff]
  %v192 = vld [vmem:[%s1 + $0x508] sm:$0xff]
  %v193 = vld [vmem:[%s1 + $0x510] sm:$0xff]
  %v194 = vld [vmem:[%s1 + $0x518] sm:$0xff]
  %v195 = vld [vmem:[%s1 + $0x520] sm:$0xff]
  %v196 = vld [vmem:[%s1 + $0x528] sm:$0xff]
  %v197 = vld [vmem:[%s1 + $0x530] sm:$0xff]
  %v198 = vld [vmem:[%s1 + $0x538] sm:$0xff]
  %v199 = vld [vmem:[%s1 + $0x540] sm:$0xff]
  %v200 = vld [vmem:[%s1 + $0x548] sm:$0xff]
  %v201 = vld [vmem:[%s1 + $0x550] sm:$0xff]
  %v202 = vld [vmem:[%s1 + $0x558] sm:$0xff]
  %v203 = vld [vmem:[%s1 + $0x560] sm:$0xff]
  %v204 = vld [vmem:[%s1 + $0x568] sm:$0xff]
  %v205 = vld [vmem:[%s1 + $0x570] sm:$0xff]
  %v206 = vld [vmem:[%s1 + $0x578] sm:$0xff]
  %v207 = vld [vmem:[%s1 + $0x580] sm:$0xff]
  %v208 = vld [vmem:[%s1 + $0x588] sm:$0xff]
  %v209 = vld [vmem:[%s1 + $0x590] sm:$0xff]
  %v210 = vld [vmem:[%s1 + $0x598] sm:$0xff]
  %v211 = vld [vmem:[%s1 + $0x5a0] sm:$0xff]
  %v212 = vld [vmem:[%s1 + $0x5a8] sm:$0xff]
  %v213 = vld [vmem:[%s1 + $0x5b0] sm:$0xff]
  %v214 = vld [vmem:[%s1 + $0x5b8] sm:$0xff]
  %v215 = vld [vmem:[%s1 + $0x5c0] sm:$0xff]
  %v216 = vld [vmem:[%s1 + $0x5c8] sm:$0xff]
  %v217 = vld [vmem:[%s1 + $0x5d0] sm:$0xff]
  %v218 = vld [vmem:[%s1 + $0x5d8] sm:$0xff]
  %v219 = vld [vmem:[%s1 + $0x5e0] sm:$0xff]
  %v220 = vld [vmem:[%s1 + $0x5e8] sm:$0xff]
  %v221 = vld [vmem:[%s1 + $0x5f0] sm:$0xff]
  %v222 = vld [vmem:[%s1 + $0x5f8] sm:$0xff]
  %v223 = vld [vmem:[%s1 + $0x600] sm:$0xff]
  %v224 = vld [vmem:[%s1 + $0x608] sm:$0xff]
  %v225 = vld [vmem:[%s1 + $0x610] sm:$0xff]
  %v226 = vld [vmem:[%s1 + $0x618] sm:$0xff]
  %v227 = vld [vmem:[%s1 + $0x620] sm:$0xff]
  %v228 = vld [vmem:[%s1 + $0x628] sm:$0xff]
  %v229 = vld [vmem:[%s1 + $0x630] sm:$0xff]
  %v230 = vld [vmem:[%s1 + $0x638] sm:$0xff]
  %v231 = vld [vmem:[%s1 + $0x640] sm:$0xff]
  %v232 = vld [vmem:[%s1 + $0x648] sm:$0xff]
  %v233 = vld [vmem:[%s1 + $0x650] sm:$0xff]
  %v234 = vld [vmem:[%s1 + $0x658] sm:$0xff]
  %v235 = vld [vmem:[%s1 + $0x660] sm:$0xff]
  %v236 = vld [vmem:[%s1 + $0x668] sm:$0xff]
  %v237 = vld [vmem:[%s1 + $0x670] sm:$0xff]
  %v238 = vld [vmem:[%s1 + $0x678] sm:$0xff]
  %v239 = vld [vmem:[%s1 + $0x680] sm:$0xff]
  %v240 = vld [vmem:[%s1 + $0x688] sm:$0xff]
  %v241 = vld [vmem:[%s1 + $0x690] sm:$0xff]
  %v242 = vld [vmem:[%s1 + $0x698] sm:$0xff]
  %v243 = vld [vmem:[%s1 + $0x6a0] sm:$0xff]
  %v244 = vld [vmem:[%s1 + $0x6a8] sm:$0xff]
  %v245 = vld [vmem:[%s1 + $0x6b0] sm:$0xff]
  %v246 = vld [vmem:[%s1 + $0x6b8] sm:$0xff]
  %v247 = vld [vmem:[%s1 + $0x6c0] sm:$0xff]
  %v248 = vld [vmem:[%s1 + $0x6c8] sm:$0xff]
  %v249 = vld [vmem:[%s1 + $0x6d0] sm:$0xff]
  %v250 = vld [vmem:[%s1 + $0x6d8] sm:$0xff]
  %v251 = vld [vmem:[%s1 + $0x6e0] sm:$0xff]
  %v252 = vld [vmem:[%s1 + $0x6e8] sm:$0xff]
  %v253 = vld [vmem:[%s1 + $0x6f0] sm:$0xff]
  %v254 = vld [vmem:[%s1 + $0x6f8] sm:$0xff]
  %v255 = vld [vmem:[%s1 + $0x700] sm:$0xff]
  %v256 = vld [vmem:[%s1 + $0x708] sm:$0xff]
  %v257 = vld [vmem:[%s1 + $0x710] sm:$0xff]
  %v258 = vld [vmem:[%s1 + $0x718] sm:$0xff]
  %v259 = vld [vmem:[%s1 + $0x720] sm:$0xff]
  %v260 = vld [vmem:[%s1 + $0x728] sm:$0xff]
  %v261 = vld [vmem:[%s1 + $0x730] sm:$0xff]
  %v262 = vld [vmem:[%s1 + $0x738] sm:$0xff]
  %v263 = vld [vmem:[%s1 + $0x740] sm:$0xff]
  %v264 = vld [vmem:[%s1 + $0x748] sm:$0xff]
  %v265 = vld [vmem:[%s1 + $0x750] sm:$0xff]
  %v266 = vld [vmem:[%s1 + $0x758] sm:$0xff]
  %v267 = vld [vmem:[%s1 + $0x760] sm:$0xff]
  %v268 = vld [vmem:[%s1 + $0x768] sm:$0xff]
  %v269 = vld [vmem:[%s1 + $0x770] sm:$0xff]
  %v270 = vld [vmem:[%s1 + $0x778] sm:$0xff]
  %v271 = vld [vmem:[%s1 + $0x780] sm:$0xff]
  %v272 = vld [vmem:[%s1 + $0x788] sm:$0xff]
  %v273 = vld [vmem:[%s1 + $0x790] sm:$0xff]
  %v274 = vld [vmem:[%s1 + $0x798] sm:$0xff]
  %v275 = vld [vmem:[%s1 + $0x7a0] sm:$0xff]
  %v276 = vld [vmem:[%s1 + $0x7a8] sm:$0xff]
  %v277 = vld [vmem:[%s1 + $0x7b0] sm:$0xff]
  %v278 = vld [vmem:[%s1 + $0x7b8] sm:$0xff]
  %v279 = vld [vmem:[%s1 + $0x7c0] sm:$0xff]
  %v280 = vld [vmem:[%s1 + $0x7c8] sm:$0xff]
  %v281 = vld [vmem:[%s1 + $0x7d0] sm:$0xff]
  %v282 = vld [vmem:[%s1 + $0x7d8] sm:$0xff]
  %v283 = vld [vmem:[%s1 + $0x7e0] sm:$0xff]
  %v284 = vld [vmem:[%s1 + $0x7e8] sm:$0xff]
  %v285 = vld [vmem:[%s1 + $0x7f0] sm:$0xff]
  %v286 = vld [vmem:[%s1 + $0x7f8] sm:$0xff]
  %287 = vmatprep.subr.mxu0 %v32
  %288 = vmatpush1.msra.mxu0 %v31
  %289 = vmatprep.subr.mxu0 %v34
  %290 = vmatpush1.msra.mxu0 %v33
  %291 = vmatprep.subr.mxu0 %v36
  %292 = vmatpush1.msra.mxu0 %v35
  %293 = vmatprep.subr.mxu0 %v38
  %294 = vmatpush1.msra.mxu0 %v37
  %295 = vmatprep.subr.mxu0 %v40
  %296 = vmatpush1.msra.mxu0 %v39
  %297 = vmatprep.subr.mxu0 %v42
  %298 = vmatpush1.msra.mxu0 %v41
  %299 = vmatprep.subr.mxu0 %v44
  %300 = vmatpush1.msra.mxu0 %v43
  %301 = vmatprep.subr.mxu0 %v46
  %302 = vmatpush1.msra.mxu0 %v45
  %303 = vmatprep.subr.mxu0 %v48
  %304 = vmatpush1.msra.mxu0 %v47
  %305 = vmatprep.subr.mxu0 %v50
  %306 = vmatpush1.msra.mxu0 %v49
  %307 = vmatprep.subr.mxu0 %v52
  %308 = vmatpush1.msra.mxu0 %v51
  %309 = vmatprep.subr.mxu0 %v54
  %310 = vmatpush1.msra.mxu0 %v53
  %311 = vmatprep.subr.mxu0 %v56
  %312 = vmatpush1.msra.mxu0 %v55
  %313 = vmatprep.subr.mxu0 %v58
  %314 = vmatpush1.msra.mxu0 %v57
  %315 = vmatprep.subr.mxu0 %v60
  %316 = vmatpush1.msra.mxu0 %v59
  %317 = vmatprep.subr.mxu0 %v62
  %318 = vmatpush1.msra.mxu0 %v61
  %319 = vmatprep.subr.mxu0 %v64
  %320 = vmatpush1.msra.mxu0 %v63
  %321 = vmatprep.subr.mxu0 %v66
  %322 = vmatpush1.msra.mxu0 %v65
  %323 = vmatprep.subr.mxu0 %v68
  %324 = vmatpush1.msra.mxu0 %v67
  %325 = vmatprep.subr.mxu0 %v70
  %326 = vmatpush1.msra.mxu0 %v69
  %327 = vmatprep.subr.mxu0 %v72
  %328 = vmatpush1.msra.mxu0 %v71
  %329 = vmatprep.subr.mxu0 %v74
  %330 = vmatpush1.msra.mxu0 %v73
  %331 = vmatprep.subr.mxu0 %v76
  %332 = vmatpush1.msra.mxu0 %v75
  %333 = vmatprep.subr.mxu0 %v78
  %334 = vmatpush1.msra.mxu0 %v77
  %335 = vmatprep.subr.mxu0 %v80
  %336 = vmatpush1.msra.mxu0 %v79
  %337 = vmatprep.subr.mxu0 %v82
  %338 = vmatpush1.msra.mxu0 %v81
  %339 = vmatprep.subr.mxu0 %v84
  %340 = vmatpush1.msra.mxu0 %v83
  %341 = vmatprep.subr.mxu0 %v86
  %342 = vmatpush1.msra.mxu0 %v85
  %343 = vmatprep.subr.mxu0 %v88
  %344 = vmatpush1.msra.mxu0 %v87
  %345 = vmatprep.subr.mxu0 %v90
  %346 = vmatpush1.msra.mxu0 %v89
  %347 = vmatprep.subr.mxu0 %v92
  %348 = vmatpush1.msra.mxu0 %v91
  %349 = vmatprep.subr.mxu0 %v94
  %350 = vmatpush1.msra.mxu0 %v93
  %351 = vmatprep.mubr.f32.mxu0 %v24
  %352 = vmatmul.mubr.f32.gmra.mrb[0].mxu0 %v23
  %v353 = vpop.f32.mrb[0].mxu0
  %v354 = vadd.f32 0.0, %v353
  %v355 = vpop.f32.mrb[0].mxu0
  %v356 = vadd.f32 0.0, %v355
  %357 = vdwg.mxu0
  %358 = vmatprep.subr.mxu0 %v96
  %359 = vmatpush1.msra.mxu0 %v95
  %360 = vmatprep.subr.mxu0 %v98
  %361 = vmatpush1.msra.mxu0 %v97
  %362 = vmatprep.subr.mxu0 %v100
  %363 = vmatpush1.msra.mxu0 %v99
  %364 = vmatprep.subr.mxu0 %v102
  %365 = vmatpush1.msra.mxu0 %v101
  %366 = vmatprep.subr.mxu0 %v104
  %367 = vmatpush1.msra.mxu0 %v103
  %368 = vmatprep.subr.mxu0 %v106
  %369 = vmatpush1.msra.mxu0 %v105
  %370 = vmatprep.subr.mxu0 %v108
  %371 = vmatpush1.msra.mxu0 %v107
  %372 = vmatprep.subr.mxu0 %v110
  %373 = vmatpush1.msra.mxu0 %v109
  %374 = vmatprep.subr.mxu0 %v112
  %375 = vmatpush1.msra.mxu0 %v111
  %376 = vmatprep.subr.mxu0 %v114
  %377 = vmatpush1.msra.mxu0 %v113
  %378 = vmatprep.subr.mxu0 %v116
  %379 = vmatpush1.msra.mxu0 %v115
  %380 = vmatprep.subr.mxu0 %v118
  %381 = vmatpush1.msra.mxu0 %v117
  %382 = vmatprep.subr.mxu0 %v120
  %383 = vmatpush1.msra.mxu0 %v119
  %384 = vmatprep.subr.mxu0 %v122
  %385 = vmatpush1.msra.mxu0 %v121
  %386 = vmatprep.subr.mxu0 %v124
  %387 = vmatpush1.msra.mxu0 %v123
  %388 = vmatprep.subr.mxu0 %v126
  %389 = vmatpush1.msra.mxu0 %v125
  %390 = vmatprep.subr.mxu0 %v128
  %391 = vmatpush1.msra.mxu0 %v127
  %392 = vmatprep.subr.mxu0 %v130
  %393 = vmatpush1.msra.mxu0 %v129
  %394 = vmatprep.subr.mxu0 %v132
  %395 = vmatpush1.msra.mxu0 %v131
  %396 = vmatprep.subr.mxu0 %v134
  %397 = vmatpush1.msra.mxu0 %v133
  %398 = vmatprep.subr.mxu0 %v136
  %399 = vmatpush1.msra.mxu0 %v135
  %400 = vmatprep.subr.mxu0 %v138
  %401 = vmatpush1.msra.mxu0 %v137
  %402 = vmatprep.subr.mxu0 %v140
  %403 = vmatpush1.msra.mxu0 %v139
  %404 = vmatprep.subr.mxu0 %v142
  %405 = vmatpush1.msra.mxu0 %v141
  %406 = vmatprep.subr.mxu0 %v144
  %407 = vmatpush1.msra.mxu0 %v143
  %408 = vmatprep.subr.mxu0 %v146
  %409 = vmatpush1.msra.mxu0 %v145
  %410 = vmatprep.subr.mxu0 %v148
  %411 = vmatpush1.msra.mxu0 %v147
  %412 = vmatprep.subr.mxu0 %v150
  %413 = vmatpush1.msra.mxu0 %v149
  %414 = vmatprep.subr.mxu0 %v152
  %415 = vmatpush1.msra.mxu0 %v151
  %416 = vmatprep.subr.mxu0 %v154
  %417 = vmatpush1.msra.mxu0 %v153
  %418 = vmatprep.subr.mxu0 %v156
  %419 = vmatpush1.msra.mxu0 %v155
  %420 = vmatprep.subr.mxu0 %v158
  %421 = vmatpush1.msra.mxu0 %v157
  %422 = vmatprep.mubr.f32.mxu0 %v26
  %423 = vmatmul.mubr.f32.gmra.mrb[0].mxu0 %v25
  %v424 = vpop.f32.mrb[0].mxu0
  %v425 = vadd.f32 %v354, %v424
  %v426 = vpop.f32.mrb[0].mxu0
  %v427 = vadd.f32 %v356, %v426
  %428 = vdwg.mxu0
  %429 = vmatprep.subr.mxu0 %v160
  %430 = vmatpush1.msra.mxu0 %v159
  %431 = vmatprep.subr.mxu0 %v162
  %432 = vmatpush1.msra.mxu0 %v161
  %433 = vmatprep.subr.mxu0 %v164
  %434 = vmatpush1.msra.mxu0 %v163
  %435 = vmatprep.subr.mxu0 %v166
  %436 = vmatpush1.msra.mxu0 %v165
  %437 = vmatprep.subr.mxu0 %v168
  %438 = vmatpush1.msra.mxu0 %v167
  %439 = vmatprep.subr.mxu0 %v170
  %440 = vmatpush1.msra.mxu0 %v169
  %441 = vmatprep.subr.mxu0 %v172
  %442 = vmatpush1.msra.mxu0 %v171
  %443 = vmatprep.subr.mxu0 %v174
  %444 = vmatpush1.msra.mxu0 %v173
  %445 = vmatprep.subr.mxu0 %v176
  %446 = vmatpush1.msra.mxu0 %v175
  %447 = vmatprep.subr.mxu0 %v178
  %448 = vmatpush1.msra.mxu0 %v177
  %449 = vmatprep.subr.mxu0 %v180
  %450 = vmatpush1.msra.mxu0 %v179
  %451 = vmatprep.subr.mxu0 %v182
  %452 = vmatpush1.msra.mxu0 %v181
  %453 = vmatprep.subr.mxu0 %v184
  %454 = vmatpush1.msra.mxu0 %v183
  %455 = vmatprep.subr.mxu0 %v186
  %456 = vmatpush1.msra.mxu0 %v185
  %457 = vmatprep.subr.mxu0 %v188
  %458 = vmatpush1.msra.mxu0 %v187
  %459 = vmatprep.subr.mxu0 %v190
  %460 = vmatpush1.msra.mxu0 %v189
  %461 = vmatprep.subr.mxu0 %v192
  %462 = vmatpush1.msra.mxu0 %v191
  %463 = vmatprep.subr.mxu0 %v194
  %464 = vmatpush1.msra.mxu0 %v193
  %465 = vmatprep.subr.mxu0 %v196
  %466 = vmatpush1.msra.mxu0 %v195
  %467 = vmatprep.subr.mxu0 %v198
  %468 = vmatpush1.msra.mxu0 %v197
  %469 = vmatprep.subr.mxu0 %v200
  %470 = vmatpush1.msra.mxu0 %v199
  %471 = vmatprep.subr.mxu0 %v202
  %472 = vmatpush1.msra.mxu0 %v201
  %473 = vmatprep.subr.mxu0 %v204
  %474 = vmatpush1.msra.mxu0 %v203
  %475 = vmatprep.subr.mxu0 %v206
  %476 = vmatpush1.msra.mxu0 %v205
  %477 = vmatprep.subr.mxu0 %v208
  %478 = vmatpush1.msra.mxu0 %v207
  %479 = vmatprep.subr.mxu0 %v210
  %480 = vmatpush1.msra.mxu0 %v209
  %481 = vmatprep.subr.mxu0 %v212
  %482 = vmatpush1.msra.mxu0 %v211
  %483 = vmatprep.subr.mxu0 %v214
  %484 = vmatpush1.msra.mxu0 %v213
  %485 = vmatprep.subr.mxu0 %v216
  %486 = vmatpush1.msra.mxu0 %v215
  %487 = vmatprep.subr.mxu0 %v218
  %488 = vmatpush1.msra.mxu0 %v217
  %489 = vmatprep.subr.mxu0 %v220
  %490 = vmatpush1.msra.mxu0 %v219
  %491 = vmatprep.subr.mxu0 %v222
  %492 = vmatpush1.msra.mxu0 %v221
  %493 = vmatprep.mubr.f32.mxu0 %v28
  %494 = vmatmul.mubr.f32.gmra.mrb[0].mxu0 %v27
  %v495 = vpop.f32.mrb[0].mxu0
  %v496 = vadd.f32 %v425, %v495
  %v497 = vpop.f32.mrb[0].mxu0
  %v498 = vadd.f32 %v427, %v497
  %499 = vdwg.mxu0
  %500 = vmatprep.subr.mxu0 %v224
  %501 = vmatpush1.msra.mxu0 %v223
  %502 = vmatprep.subr.mxu0 %v226
  %503 = vmatpush1.msra.mxu0 %v225
  %504 = vmatprep.subr.mxu0 %v228
  %505 = vmatpush1.msra.mxu0 %v227
  %506 = vmatprep.subr.mxu0 %v230
  %507 = vmatpush1.msra.mxu0 %v229
  %508 = vmatprep.subr.mxu0 %v232
  %509 = vmatpush1.msra.mxu0 %v231
  %510 = vmatprep.subr.mxu0 %v234
  %511 = vmatpush1.msra.mxu0 %v233
  %512 = vmatprep.subr.mxu0 %v236
  %513 = vmatpush1.msra.mxu0 %v235
  %514 = vmatprep.subr.mxu0 %v238
  %515 = vmatpush1.msra.mxu0 %v237
  %516 = vmatprep.subr.mxu0 %v240
  %517 = vmatpush1.msra.mxu0 %v239
  %518 = vmatprep.subr.mxu0 %v242
  %519 = vmatpush1.msra.mxu0 %v241
  %520 = vmatprep.subr.mxu0 %v244
  %521 = vmatpush1.msra.mxu0 %v243
  %522 = vmatprep.subr.mxu0 %v246
  %523 = vmatpush1.msra.mxu0 %v245
  %524 = vmatprep.subr.mxu0 %v248
  %525 = vmatpush1.msra.mxu0 %v247
  %526 = vmatprep.subr.mxu0 %v250
  %527 = vmatpush1.msra.mxu0 %v249
  %528 = vmatprep.subr.mxu0 %v252
  %529 = vmatpush1.msra.mxu0 %v251
  %530 = vmatprep.subr.mxu0 %v254
  %531 = vmatpush1.msra.mxu0 %v253
  %532 = vmatprep.subr.mxu0 %v256
  %533 = vmatpush1.msra.mxu0 %v255
  %534 = vmatprep.subr.mxu0 %v258
  %535 = vmatpush1.msra.mxu0 %v257
  %536 = vmatprep.subr.mxu0 %v260
  %537 = vmatpush1.msra.mxu0 %v259
  %538 = vmatprep.subr.mxu0 %v262
  %539 = vmatpush1.msra.mxu0 %v261
  %540 = vmatprep.subr.mxu0 %v264
  %541 = vmatpush1.msra.mxu0 %v263
  %542 = vmatprep.subr.mxu0 %v266
  %543 = vmatpush1.msra.mxu0 %v265
  %544 = vmatprep.subr.mxu0 %v268
  %545 = vmatpush1.msra.mxu0 %v267
  %546 = vmatprep.subr.mxu0 %v270
  %547 = vmatpush1.msra.mxu0 %v269
  %548 = vmatprep.subr.mxu0 %v272
  %549 = vmatpush1.msra.mxu0 %v271
  %550 = vmatprep.subr.mxu0 %v274
  %551 = vmatpush1.msra.mxu0 %v273
  %552 = vmatprep.subr.mxu0 %v276
  %553 = vmatpush1.msra.mxu0 %v275
  %554 = vmatprep.subr.mxu0 %v278
  %555 = vmatpush1.msra.mxu0 %v277
  %556 = vmatprep.subr.mxu0 %v280
  %557 = vmatpush1.msra.mxu0 %v279
  %558 = vmatprep.subr.mxu0 %v282
  %559 = vmatpush1.msra.mxu0 %v281
  %560 = vmatprep.subr.mxu0 %v284
  %561 = vmatpush1.msra.mxu0 %v283
  %562 = vmatprep.subr.mxu0 %v286
  %563 = vmatpush1.msra.mxu0 %v285
  %564 = vmatprep.mubr.f32.mxu0 %v30
  %565 = vmatmul.mubr.f32.gmra.mrb[0].mxu0 %v29
  %v566 = vpop.f32.mrb[0].mxu0
  %v567 = vadd.f32 %v496, %v566
  %v568 = vpop.f32.mrb[0].mxu0
  %v569 = vadd.f32 %v498, %v568
  %570 = vdwg.mxu0
  %v571 = vrot.slane %v567, 4
  %v572 = vadd.f32 %v567, %v571
  %v573 = vrot.slane %v572, 2
  %v574 = vadd.f32 %v572, %v573
  %v575 = vrot.slane %v574, 1
  %v576 = vadd.f32 %v574, %v575
  %v577 = vrot.slane %v569, 4
  %v578 = vadd.f32 %v569, %v577
  %v579 = vrot.slane %v578, 2
  %v580 = vadd.f32 %v578, %v579
  %v581 = vrot.slane %v580, 1
  %v582 = vadd.f32 %v580, %v581
  %v583 = vrcp.pop 8.0
  %v584 = vmul.f32 %v576, %v583
  %v585 = vmul.f32 %v582, %v583
  %v586 = vmul.f32 %v567, %v567
  %v587 = vmul.f32 %v569, %v569
  %v588 = vrot.slane %v586, 4
  %v589 = vadd.f32 %v586, %v588
  %v590 = vrot.slane %v589, 2
  %v591 = vadd.f32 %v589, %v590
  %v592 = vrot.slane %v591, 1
  %v593 = vadd.f32 %v591, %v592
  %v594 = vrot.slane %v587, 4
  %v595 = vadd.f32 %v587, %v594
  %v596 = vrot.slane %v595, 2
  %v597 = vadd.f32 %v595, %v596
  %v598 = vrot.slane %v597, 1
  %v599 = vadd.f32 %v597, %v598
  %v600 = vmul.f32 %v593, %v583
  %v601 = vmul.f32 %v599, %v583
  %v602 = vmul.f32 %v584, %v584
  %v603 = vmul.f32 %v585, %v585
  %v604 = vsub.f32 %v600, %v602
  %v605 = vsub.f32 %v601, %v603
  %v606 = vmax.f32 %v604, 0.0
  %v607 = vmax.f32 %v605, 0.0
  %v608 = vld [vmem:[%s2] sm:$0x3]
  %v609 = vadd.f32 %v606, 1e-05
  %v610 = vadd.f32 %v607, 1e-05
  %v611 = vrsqrt.pop %v609
  %v612 = vmul.f32 %v609, %v611
  %vm613 = vcmp.eq.f32.partialorder %v609, inf
  %v614 = vsel %vm613, %v609, %v612
  %vm615 = vcmp.eq.f32.partialorder %v609, 0.0
  %v616 = vand.u32 %v609, 2147483648
  %v617 = vsel %vm615, %v616, %v614
  %v618 = vrsqrt.pop %v610
  %v619 = vmul.f32 %v610, %v618
  %vm620 = vcmp.eq.f32.partialorder %v610, inf
  %v621 = vsel %vm620, %v610, %v619
  %vm622 = vcmp.eq.f32.partialorder %v610, 0.0
  %v623 = vand.u32 %v610, 2147483648
  %v624 = vsel %vm622, %v623, %v621
  %v627 = vcombine.low %v617, %v624
  %v629 = vunpack.c.l.s4 1966171168
  %v630 = vunpack.c.0.s8 %v629
  %v631 = vlaneseq
  %v632 = vshrl.u32 %v631, 7
  %v633 = vsub.s32 %v630, %v632
  %v634 = vrot.slane %v627, %v633
  %v636 = vunpack.c.l.s4 1966171168
  %v637 = vunpack.c.0.s8 %v636
  %v638 = vlaneseq
  %v639 = vshrl.u32 %v638, 7
  %v640 = vsub.s32 %v637, %v639
  %v641 = vrot.slane %v634, %v640
  %v643 = vrcp.pop %v641
  %v644 = vmul.f32 %v608, %v643
  %v645 = vld [vmem:[%s3] sm:$0x3]
  %v647 = vlaneseq
  %v648 = vshrl.u32 %v647, 7
  %v649 = vsub.s32 0, %v648
  %v650 = vrot.slane %v644, %v649
  %v651 = vlaneseq
  %v652 = vshrl.u32 %v651, 7
  %v653 = vsub.s32 1, %v652
  %v654 = vrot.slane %v644, %v653
  %v657 = vmul.f32 %v584, %v650
  %v658 = vmul.f32 %v585, %v654
  %v661 = vcombine.low %v657, %v658
  %v663 = vunpack.c.l.s4 1966171168
  %v664 = vunpack.c.0.s8 %v663
  %v665 = vlaneseq
  %v666 = vshrl.u32 %v665, 7
  %v667 = vsub.s32 %v664, %v666
  %v668 = vrot.slane %v661, %v667
  %v670 = vunpack.c.l.s4 1966171168
  %v671 = vunpack.c.0.s8 %v670
  %v672 = vlaneseq
  %v673 = vshrl.u32 %v672, 7
  %v674 = vsub.s32 %v671, %v673
  %v675 = vrot.slane %v668, %v674
  %v677 = vsub.f32 %v645, %v675
  %v678 = vmul.f32 %v567, %v650
  %v679 = vmul.f32 %v569, %v654
  %v681 = vlaneseq
  %v682 = vshrl.u32 %v681, 7
  %v683 = vsub.s32 0, %v682
  %v684 = vrot.slane %v677, %v683
  %v685 = vlaneseq
  %v686 = vshrl.u32 %v685, 7
  %v687 = vsub.s32 1, %v686
  %v688 = vrot.slane %v677, %v687
  %v691 = vadd.f32 %v678, %v684
  %v692 = vadd.f32 %v679, %v688
  %v693 = vmax.f32 %v691, 0.0
  %v694 = vmax.f32 %v692, 0.0
  %v695 = vld [vmem:[%s4] sm:$0xff]
  %v696 = vld [vmem:[%s4 + $0x8] sm:$0xff]
  %v697 = vld [vmem:[%s4 + $0x10] sm:$0xff]
  %v698 = vld [vmem:[%s4 + $0x18] sm:$0xff]
  %v699 = vld [vmem:[%s4 + $0x20] sm:$0xff]
  %v700 = vld [vmem:[%s4 + $0x28] sm:$0xff]
  %v701 = vld [vmem:[%s4 + $0x30] sm:$0xff]
  %v702 = vld [vmem:[%s4 + $0x38] sm:$0xff]
  %v703 = vld [vmem:[%s4 + $0x40] sm:$0xff]
  %v704 = vld [vmem:[%s4 + $0x48] sm:$0xff]
  %v705 = vld [vmem:[%s4 + $0x50] sm:$0xff]
  %v706 = vld [vmem:[%s4 + $0x58] sm:$0xff]
  %v707 = vld [vmem:[%s4 + $0x60] sm:$0xff]
  %v708 = vld [vmem:[%s4 + $0x68] sm:$0xff]
  %v709 = vld [vmem:[%s4 + $0x70] sm:$0xff]
  %v710 = vld [vmem:[%s4 + $0x78] sm:$0xff]
  %v711 = vld [vmem:[%s4 + $0x80] sm:$0xff]
  %v712 = vld [vmem:[%s4 + $0x88] sm:$0xff]
  %v713 = vld [vmem:[%s4 + $0x90] sm:$0xff]
  %v714 = vld [vmem:[%s4 + $0x98] sm:$0xff]
  %v715 = vld [vmem:[%s4 + $0xa0] sm:$0xff]
  %v716 = vld [vmem:[%s4 + $0xa8] sm:$0xff]
  %v717 = vld [vmem:[%s4 + $0xb0] sm:$0xff]
  %v718 = vld [vmem:[%s4 + $0xb8] sm:$0xff]
  %v719 = vld [vmem:[%s4 + $0xc0] sm:$0xff]
  %v720 = vld [vmem:[%s4 + $0xc8] sm:$0xff]
  %v721 = vld [vmem:[%s4 + $0xd0] sm:$0xff]
  %v722 = vld [vmem:[%s4 + $0xd8] sm:$0xff]
  %v723 = vld [vmem:[%s4 + $0xe0] sm:$0xff]
  %v724 = vld [vmem:[%s4 + $0xe8] sm:$0xff]
  %v725 = vld [vmem:[%s4 + $0xf0] sm:$0xff]
  %v726 = vld [vmem:[%s4 + $0xf8] sm:$0xff]
  %v727 = vld [vmem:[%s4 + $0x100] sm:$0xff]
  %v728 = vld [vmem:[%s4 + $0x108] sm:$0xff]
  %v729 = vld [vmem:[%s4 + $0x110] sm:$0xff]
  %v730 = vld [vmem:[%s4 + $0x118] sm:$0xff]
  %v731 = vld [vmem:[%s4 + $0x120] sm:$0xff]
  %v732 = vld [vmem:[%s4 + $0x128] sm:$0xff]
  %v733 = vld [vmem:[%s4 + $0x130] sm:$0xff]
  %v734 = vld [vmem:[%s4 + $0x138] sm:$0xff]
  %v735 = vld [vmem:[%s4 + $0x140] sm:$0xff]
  %v736 = vld [vmem:[%s4 + $0x148] sm:$0xff]
  %v737 = vld [vmem:[%s4 + $0x150] sm:$0xff]
  %v738 = vld [vmem:[%s4 + $0x158] sm:$0xff]
  %v739 = vld [vmem:[%s4 + $0x160] sm:$0xff]
  %v740 = vld [vmem:[%s4 + $0x168] sm:$0xff]
  %v741 = vld [vmem:[%s4 + $0x170] sm:$0xff]
  %v742 = vld [vmem:[%s4 + $0x178] sm:$0xff]
  %v743 = vld [vmem:[%s4 + $0x180] sm:$0xff]
  %v744 = vld [vmem:[%s4 + $0x188] sm:$0xff]
  %v745 = vld [vmem:[%s4 + $0x190] sm:$0xff]
  %v746 = vld [vmem:[%s4 + $0x198] sm:$0xff]
  %v747 = vld [vmem:[%s4 + $0x1a0] sm:$0xff]
  %v748 = vld [vmem:[%s4 + $0x1a8] sm:$0xff]
  %v749 = vld [vmem:[%s4 + $0x1b0] sm:$0xff]
  %v750 = vld [vmem:[%s4 + $0x1b8] sm:$0xff]
  %v751 = vld [vmem:[%s4 + $0x1c0] sm:$0xff]
  %v752 = vld [vmem:[%s4 + $0x1c8] sm:$0xff]
  %v753 = vld [vmem:[%s4 + $0x1d0] sm:$0xff]
  %v754 = vld [vmem:[%s4 + $0x1d8] sm:$0xff]
  %v755 = vld [vmem:[%s4 + $0x1e0] sm:$0xff]
  %v756 = vld [vmem:[%s4 + $0x1e8] sm:$0xff]
  %v757 = vld [vmem:[%s4 + $0x1f0] sm:$0xff]
  %v758 = vld [vmem:[%s4 + $0x1f8] sm:$0xff]
  %v759 = vld [vmem:[%s5] sm:$0x3]
  %v761 = vlaneseq
  %v762 = vshrl.u32 %v761, 7
  %v763 = vsub.s32 0, %v762
  %v764 = vrot.slane %v759, %v763
  %v765 = vlaneseq
  %v766 = vshrl.u32 %v765, 7
  %v767 = vsub.s32 1, %v766
  %v768 = vrot.slane %v759, %v767
  %771 = vmatprep.subr.mxu0 %v696
  %772 = vmatpush1.msra.mxu0 %v695
  %773 = vmatprep.subr.mxu0 %v698
  %774 = vmatpush1.msra.mxu0 %v697
  %775 = vmatprep.subr.mxu0 %v700
  %776 = vmatpush1.msra.mxu0 %v699
  %777 = vmatprep.subr.mxu0 %v702
  %778 = vmatpush1.msra.mxu0 %v701
  %779 = vmatprep.subr.mxu0 %v704
  %780 = vmatpush1.msra.mxu0 %v703
  %781 = vmatprep.subr.mxu0 %v706
  %782 = vmatpush1.msra.mxu0 %v705
  %783 = vmatprep.subr.mxu0 %v708
  %784 = vmatpush1.msra.mxu0 %v707
  %785 = vmatprep.subr.mxu0 %v710
  %786 = vmatpush1.msra.mxu0 %v709
  %787 = vmatprep.subr.mxu0 %v712
  %788 = vmatpush1.msra.mxu0 %v711
  %789 = vmatprep.subr.mxu0 %v714
  %790 = vmatpush1.msra.mxu0 %v713
  %791 = vmatprep.subr.mxu0 %v716
  %792 = vmatpush1.msra.mxu0 %v715
  %793 = vmatprep.subr.mxu0 %v718
  %794 = vmatpush1.msra.mxu0 %v717
  %795 = vmatprep.subr.mxu0 %v720
  %796 = vmatpush1.msra.mxu0 %v719
  %797 = vmatprep.subr.mxu0 %v722
  %798 = vmatpush1.msra.mxu0 %v721
  %799 = vmatprep.subr.mxu0 %v724
  %800 = vmatpush1.msra.mxu0 %v723
  %801 = vmatprep.subr.mxu0 %v726
  %802 = vmatpush1.msra.mxu0 %v725
  %803 = vmatprep.subr.mxu0 %v728
  %804 = vmatpush1.msra.mxu0 %v727
  %805 = vmatprep.subr.mxu0 %v730
  %806 = vmatpush1.msra.mxu0 %v729
  %807 = vmatprep.subr.mxu0 %v732
  %808 = vmatpush1.msra.mxu0 %v731
  %809 = vmatprep.subr.mxu0 %v734
  %810 = vmatpush1.msra.mxu0 %v733
  %811 = vmatprep.subr.mxu0 %v736
  %812 = vmatpush1.msra.mxu0 %v735
  %813 = vmatprep.subr.mxu0 %v738
  %814 = vmatpush1.msra.mxu0 %v737
  %815 = vmatprep.subr.mxu0 %v740
  %816 = vmatpush1.msra.mxu0 %v739
  %817 = vmatprep.subr.mxu0 %v742
  %818 = vmatpush1.msra.mxu0 %v741
  %819 = vmatprep.subr.mxu0 %v744
  %820 = vmatpush1.msra.mxu0 %v743
  %821 = vmatprep.subr.mxu0 %v746
  %822 = vmatpush1.msra.mxu0 %v745
  %823 = vmatprep.subr.mxu0 %v748
  %824 = vmatpush1.msra.mxu0 %v747
  %825 = vmatprep.subr.mxu0 %v750
  %826 = vmatpush1.msra.mxu0 %v749
  %827 = vmatprep.subr.mxu0 %v752
  %828 = vmatpush1.msra.mxu0 %v751
  %829 = vmatprep.subr.mxu0 %v754
  %830 = vmatpush1.msra.mxu0 %v753
  %831 = vmatprep.subr.mxu0 %v756
  %832 = vmatpush1.msra.mxu0 %v755
  %833 = vmatprep.subr.mxu0 %v758
  %834 = vmatpush1.msra.mxu0 %v757
  %835 = vmatprep.mubr.f32.mxu0 %v694
  %836 = vmatmul.mubr.f32.gmra.mrb[0].mxu0 %v693
  %v837 = vpop.f32.mrb[0].mxu0
  %v838 = vadd.f32 %v764, %v837
  %v839 = vpop.f32.mrb[0].mxu0
  %v840 = vadd.f32 %v768, %v839
  %841 = vdwg.mxu0
  %842 = vst [vmem:[%s6] sm:$0xff] %v838
  %843 = vst [vmem:[%s6 + $0x8] sm:$0xff] %v840
  // Predicated region
  $region26: #{forward.18} parent=0 // pred_check
    _
  $region27: #{forward.18} parent=0 // pred_check_branch
    %845 = sbr.rel (0) target = $region29
  $region28: #{forward.18} parent=0 // pred_region
    _
  $region29: #{forward.18} parent=0 // pred_fallthru
    _
  // Predicated region
  $region30: #{forward.18} parent=0 // pred_check
    _
  $region31: #{forward.18} parent=0 // pred_check_branch
    %847 = sbr.rel (0) target = $region33
  $region32: #{forward.18} parent=0 // pred_region
    _
  $region33: #{forward.18} parent=0 // pred_fallthru
    _

// kernel: forward.19
$region0: #{forward.19}
  #allocation0 [shape = 'u32[]', space=smem, size = 0x4, offset = 0x4, fixed_abs, tag = 'smem constant byte address 0x4 - core index']
  #allocation1 [shape = 'u32[144,128]{1,0:T(1,128)}', space=vmem, size = 0x12000, scoped, tag = 'internal scratch']
  %s0 = inlined_call_operand.vmem [shape: f32[4,2,256], index: 0, kind: input, shape index: {}]
  %s1 = inlined_call_operand.vmem [shape: f32[256,768], index: 1, kind: input, shape index: {}]
  %s2 = inlined_call_operand.vmem [shape: f32[256,768], index: 2, kind: input, shape index: {}]
  %s3 = inlined_call_operand.vmem [shape: f32[1,768], index: 3, kind: input, shape index: {}]
  %s4 = inlined_call_operand.vmem [shape: f32[1,768], index: 4, kind: input, shape index: {}]
  %s5 = inlined_call_operand.vmem [shape: f32[256,256], index: 5, kind: input, shape index: {}]
  %s6 = inlined_call_operand.vmem [shape: f32[1,256], index: 6, kind: input, shape index: {}]
  %s7 = inlined_call_operand.vmem [shape: f32[1,256], index: 7, kind: input, shape index: {}]
  %s8 = inlined_call_operand.vmem [shape: f32[1,256], index: 8, kind: input, shape index: {}]
  %s9 = inlined_call_operand.vmem [shape: f32[256,128], index: 9, kind: input, shape index: {}]
  %s10 = inlined_call_operand.vmem [shape: f32[1,128], index: 10, kind: input, shape index: {}]
  %s11 = inlined_call_operand.hbm [shape: f32[2,128], index: 11, kind: output, shape index: {0}]
  %s12 = inlined_call_operand.hbm [shape: f32[2,256], index: 12, kind: output, shape index: {1}]
  %13 = xla_tuple %s11, %s12
  %s14 = sld [smem:[#allocation0]]
  $region62: #{forward.19} parent=0
    _
  %s16 = ssub.s32 1, %s14
  %s17 = scalar_select 0, %s16, %s14
  $region1: #{forward.19} parent=0
    #allocation2 [shape = 'u8[1024]{0}', space=vmem, size = 0x400, scoped, tag = 'output window, operand 0, single buffered']
    #allocation3 [shape = 's32[1]{0}', space=sflag, size = 0x4, scoped, tag = 'scoped memory for forward.19']
    #allocation4 [shape = 'u8[2048]{0}', space=vmem, size = 0x800, scoped, tag = 'output window, operand 1, single buffered']
    #allocation5 [shape = 's32[1]{0}', space=sflag, size = 0x4, scoped, tag = 'scoped memory for forward.19']
    %18 = vsyncpa [#allocation3], 0
    %19 = vsyncpa [#allocation5], 0
    // Predicated region
    $region2: #{forward.19} parent=1 // pred_check
      _
    $region3: #{forward.19} parent=1 // pred_check_branch
      %21 = sbr.rel (0) target = $region5
    $region4: #{forward.19} parent=1 // pred_region
      _
    $region5: #{forward.19} parent=1 // pred_fallthru
      _
    // Predicated region
    $region6: #{forward.19} parent=1 // pred_check
      _
    $region7: #{forward.19} parent=1 // pred_check_branch
      %23 = sbr.rel (0) target = $region9
    $region8: #{forward.19} parent=1 // pred_region
      _
    $region9: #{forward.19} parent=1 // pred_fallthru
      _
    // Predicated region
    $region10: #{forward.19} parent=1 // pred_check
      _
    $region11: #{forward.19} parent=1 // pred_check_branch
      %25 = sbr.rel (0) target = $region13
    $region12: #{forward.19} parent=1 // pred_region
      _
    $region13: #{forward.19} parent=1 // pred_fallthru
      _
    // Predicated region
    $region14: #{forward.19} parent=1 // pred_check
      _
    $region15: #{forward.19} parent=1 // pred_check_branch
      %27 = sbr.rel (0) target = $region17
    $region16: #{forward.19} parent=1 // pred_region
      _
    $region17: #{forward.19} parent=1 // pred_fallthru
      _
    // Predicated region
    $region18: #{forward.19} parent=1 // pred_check
      _
    $region19: #{forward.19} parent=1 // pred_check_branch
      %29 = sbr.rel (0) target = $region21
    $region20: #{forward.19} parent=1 // pred_region
      _
    $region21: #{forward.19} parent=1 // pred_fallthru
      _
    // Predicated region
    $region22: #{forward.19} parent=1 // pred_check
      _
    $region23: #{forward.19} parent=1 // pred_check_branch
      %31 = sbr.rel (0) target = $region25
    $region24: #{forward.19} parent=1 // pred_region
      _
    $region25: #{forward.19} parent=1 // pred_fallthru
      _
    // Predicated region
    $region26: #{forward.19} parent=1 // pred_check
      _
    $region27: #{forward.19} parent=1 // pred_check_branch
      %33 = sbr.rel (0) target = $region29
    $region28: #{forward.19} parent=1 // pred_region
      _
    $region29: #{forward.19} parent=1 // pred_fallthru
      _
    // Predicated region
    $region30: #{forward.19} parent=1 // pred_check
      _
    $region31: #{forward.19} parent=1 // pred_check_branch
      %35 = sbr.rel (0) target = $region33
    $region32: #{forward.19} parent=1 // pred_region
      _
    $region33: #{forward.19} parent=1 // pred_fallthru
      _
    // Predicated region
    $region34: #{forward.19} parent=1 // pred_check
      _
    $region35: #{forward.19} parent=1 // pred_check_branch
      %37 = sbr.rel (0) target = $region37
    $region36: #{forward.19} parent=1 // pred_region
      _
    $region37: #{forward.19} parent=1 // pred_fallthru
      _
    // Predicated region
    $region38: #{forward.19} parent=1 // pred_check
      _
    $region39: #{forward.19} parent=1 // pred_check_branch
      %39 = sbr.rel (0) target = $region41
    $region40: #{forward.19} parent=1 // pred_region
      _
    $region41: #{forward.19} parent=1 // pred_fallthru
      _
    // Predicated region
    $region42: #{forward.19} parent=1 // pred_check
      _
    $region43: #{forward.19} parent=1 // pred_check_branch
      %41 = sbr.rel (0) target = $region45
    $region44: #{forward.19} parent=1 // pred_region
      _
    $region45: #{forward.19} parent=1 // pred_fallthru
      _
    %v42 = vld [vmem:[%s1] sm:$0xff]
    %v43 = vld [vmem:[%s1 + $0x8] sm:$0xff]
    %v44 = vld [vmem:[%s1 + $0x10] sm:$0xff]
    %v45 = vld [vmem:[%s1 + $0x18] sm:$0xff]
    %v46 = vld [vmem:[%s1 + $0x20] sm:$0xff]
    %v47 = vld [vmem:[%s1 + $0x28] sm:$0xff]
    %v48 = vld [vmem:[%s1 + $0x30] sm:$0xff]
    %v49 = vld [vmem:[%s1 + $0x38] sm:$0xff]
    %v50 = vld [vmem:[%s1 + $0x40] sm:$0xff]
    %v51 = vld [vmem:[%s1 + $0x48] sm:$0xff]
    %v52 = vld [vmem:[%s1 + $0x50] sm:$0xff]
    %v53 = vld [vmem:[%s1 + $0x58] sm:$0xff]
    %v54 = vld [vmem:[%s1 + $0x60] sm:$0xff]
    %v55 = vld [vmem:[%s1 + $0x68] sm:$0xff]
    %v56 = vld [vmem:[%s1 + $0x70] sm:$0xff]
    %v57 = vld [vmem:[%s1 + $0x78] sm:$0xff]
    %v58 = vld [vmem:[%s1 + $0x80] sm:$0xff]
    %v59 = vld [vmem:[%s1 + $0x88] sm:$0xff]
    %v60 = vld [vmem:[%s1 + $0x90] sm:$0xff]
    %v61 = vld [vmem:[%s1 + $0x98] sm:$0xff]
    %v62 = vld [vmem:[%s1 + $0xa0] sm:$0xff]
    %v63 = vld [vmem:[%s1 + $0xa8] sm:$0xff]
    %v64 = vld [vmem:[%s1 + $0xb0] sm:$0xff]
    %v65 = vld [vmem:[%s1 + $0xb8] sm:$0xff]
    %v66 = vld [vmem:[%s1 + $0xc0] sm:$0xff]
    %v67 = vld [vmem:[%s1 + $0xc8] sm:$0xff]
    %v68 = vld [vmem:[%s1 + $0xd0] sm:$0xff]
    %v69 = vld [vmem:[%s1 + $0xd8] sm:$0xff]
    %v70 = vld [vmem:[%s1 + $0xe0] sm:$0xff]
    %v71 = vld [vmem:[%s1 + $0xe8] sm:$0xff]
    %v72 = vld [vmem:[%s1 + $0xf0] sm:$0xff]
    %v73 = vld [vmem:[%s1 + $0xf8] sm:$0xff]
    %v74 = vld [vmem:[%s1 + $0x100] sm:$0xff]
    %v75 = vld [vmem:[%s1 + $0x108] sm:$0xff]
    %v76 = vld [vmem:[%s1 + $0x110] sm:$0xff]
    %v77 = vld [vmem:[%s1 + $0x118] sm:$0xff]
    %v78 = vld [vmem:[%s1 + $0x120] sm:$0xff]
    %v79 = vld [vmem:[%s1 + $0x128] sm:$0xff]
    %v80 = vld [vmem:[%s1 + $0x130] sm:$0xff]
    %v81 = vld [vmem:[%s1 + $0x138] sm:$0xff]
    %v82 = vld [vmem:[%s1 + $0x140] sm:$0xff]
    %v83 = vld [vmem:[%s1 + $0x148] sm:$0xff]
    %v84 = vld [vmem:[%s1 + $0x150] sm:$0xff]
    %v85 = vld [vmem:[%s1 + $0x158] sm:$0xff]
    %v86 = vld [vmem:[%s1 + $0x160] sm:$0xff]
    %v87 = vld [vmem:[%s1 + $0x168] sm:$0xff]
    %v88 = vld [vmem:[%s1 + $0x170] sm:$0xff]
    %v89 = vld [vmem:[%s1 + $0x178] sm:$0xff]
    %v90 = vld [vmem:[%s1 + $0x180] sm:$0xff]
    %v91 = vld [vmem:[%s1 + $0x188] sm:$0xff]
    %v92 = vld [vmem:[%s1 + $0x190] sm:$0xff]
    %v93 = vld [vmem:[%s1 + $0x198] sm:$0xff]
    %v94 = vld [vmem:[%s1 + $0x1a0] sm:$0xff]
    %v95 = vld [vmem:[%s1 + $0x1a8] sm:$0xff]
    %v96 = vld [vmem:[%s1 + $0x1b0] sm:$0xff]
    %v97 = vld [vmem:[%s1 + $0x1b8] sm:$0xff]
    %v98 = vld [vmem:[%s1 + $0x1c0] sm:$0xff]
    %v99 = vld [vmem:[%s1 + $0x1c8] sm:$0xff]
    %v100 = vld [vmem:[%s1 + $0x1d0] sm:$0xff]
    %v101 = vld [vmem:[%s1 + $0x1d8] sm:$0xff]
    %v102 = vld [vmem:[%s1 + $0x1e0] sm:$0xff]
    %v103 = vld [vmem:[%s1 + $0x1e8] sm:$0xff]
    %v104 = vld [vmem:[%s1 + $0x1f0] sm:$0xff]
    %v105 = vld [vmem:[%s1 + $0x1f8] sm:$0xff]
    %v106 = vld [vmem:[%s1 + $0x200] sm:$0xff]
    %v107 = vld [vmem:[%s1 + $0x208] sm:$0xff]
    %v108 = vld [vmem:[%s1 + $0x210] sm:$0xff]
    %v109 = vld [vmem:[%s1 + $0x218] sm:$0xff]
    %v110 = vld [vmem:[%s1 + $0x220] sm:$0xff]
    %v111 = vld [vmem:[%s1 + $0x228] sm:$0xff]
    %v112 = vld [vmem:[%s1 + $0x230] sm:$0xff]
    %v113 = vld [vmem:[%s1 + $0x238] sm:$0xff]
    %v114 = vld [vmem:[%s1 + $0x240] sm:$0xff]
    %v115 = vld [vmem:[%s1 + $0x248] sm:$0xff]
    %v116 = vld [vmem:[%s1 + $0x250] sm:$0xff]
    %v117 = vld [vmem:[%s1 + $0x258] sm:$0xff]
    %v118 = vld [vmem:[%s1 + $0x260] sm:$0xff]
    %v119 = vld [vmem:[%s1 + $0x268] sm:$0xff]
    %v120 = vld [vmem:[%s1 + $0x270] sm:$0xff]
    %v121 = vld [vmem:[%s1 + $0x278] sm:$0xff]
    %v122 = vld [vmem:[%s1 + $0x280] sm:$0xff]
    %v123 = vld [vmem:[%s1 + $0x288] sm:$0xff]
    %v124 = vld [vmem:[%s1 + $0x290] sm:$0xff]
    %v125 = vld [vmem:[%s1 + $0x298] sm:$0xff]
    %v126 = vld [vmem:[%s1 + $0x2a0] sm:$0xff]
    %v127 = vld [vmem:[%s1 + $0x2a8] sm:$0xff]
    %v128 = vld [vmem:[%s1 + $0x2b0] sm:$0xff]
    %v129 = vld [vmem:[%s1 + $0x2b8] sm:$0xff]
    %v130 = vld [vmem:[%s1 + $0x2c0] sm:$0xff]
    %v131 = vld [vmem:[%s1 + $0x2c8] sm:$0xff]
    %v132 = vld [vmem:[%s1 + $0x2d0] sm:$0xff]
    %v133 = vld [vmem:[%s1 + $0x2d8] sm:$0xff]
    %v134 = vld [vmem:[%s1 + $0x2e0] sm:$0xff]
    %v135 = vld [vmem:[%s1 + $0x2e8] sm:$0xff]
    %v136 = vld [vmem:[%s1 + $0x2f0] sm:$0xff]
    %v137 = vld [vmem:[%s1 + $0x2f8] sm:$0xff]
    %v138 = vld [vmem:[%s1 + $0x300] sm:$0xff]
    %v139 = vld [vmem:[%s1 + $0x308] sm:$0xff]
    %v140 = vld [vmem:[%s1 + $0x310] sm:$0xff]
    %v141 = vld [vmem:[%s1 + $0x318] sm:$0xff]
    %v142 = vld [vmem:[%s1 + $0x320] sm:$0xff]
    %v143 = vld [vmem:[%s1 + $0x328] sm:$0xff]
    %v144 = vld [vmem:[%s1 + $0x330] sm:$0xff]
    %v145 = vld [vmem:[%s1 + $0x338] sm:$0xff]
    %v146 = vld [vmem:[%s1 + $0x340] sm:$0xff]
    %v147 = vld [vmem:[%s1 + $0x348] sm:$0xff]
    %v148 = vld [vmem:[%s1 + $0x350] sm:$0xff]
    %v149 = vld [vmem:[%s1 + $0x358] sm:$0xff]
    %v150 = vld [vmem:[%s1 + $0x360] sm:$0xff]
    %v151 = vld [vmem:[%s1 + $0x368] sm:$0xff]
    %v152 = vld [vmem:[%s1 + $0x370] sm:$0xff]
    %v153 = vld [vmem:[%s1 + $0x378] sm:$0xff]
    %v154 = vld [vmem:[%s1 + $0x380] sm:$0xff]
    %v155 = vld [vmem:[%s1 + $0x388] sm:$0xff]
    %v156 = vld [vmem:[%s1 + $0x390] sm:$0xff]
    %v157 = vld [vmem:[%s1 + $0x398] sm:$0xff]
    %v158 = vld [vmem:[%s1 + $0x3a0] sm:$0xff]
    %v159 = vld [vmem:[%s1 + $0x3a8] sm:$0xff]
    %v160 = vld [vmem:[%s1 + $0x3b0] sm:$0xff]
    %v161 = vld [vmem:[%s1 + $0x3b8] sm:$0xff]
    %v162 = vld [vmem:[%s1 + $0x3c0] sm:$0xff]
    %v163 = vld [vmem:[%s1 + $0x3c8] sm:$0xff]
    %v164 = vld [vmem:[%s1 + $0x3d0] sm:$0xff]
    %v165 = vld [vmem:[%s1 + $0x3d8] sm:$0xff]
    %v166 = vld [vmem:[%s1 + $0x3e0] sm:$0xff]
    %v167 = vld [vmem:[%s1 + $0x3e8] sm:$0xff]
    %v168 = vld [vmem:[%s1 + $0x3f0] sm:$0xff]
    %v169 = vld [vmem:[%s1 + $0x3f8] sm:$0xff]
    %v170 = vld [vmem:[%s1 + $0x400] sm:$0xff]
    %v171 = vld [vmem:[%s1 + $0x408] sm:$0xff]
    %v172 = vld [vmem:[%s1 + $0x410] sm:$0xff]
    %v173 = vld [vmem:[%s1 + $0x418] sm:$0xff]
    %v174 = vld [vmem:[%s1 + $0x420] sm:$0xff]
    %v175 = vld [vmem:[%s1 + $0x428] sm:$0xff]
    %v176 = vld [vmem:[%s1 + $0x430] sm:$0xff]
    %v177 = vld [vmem:[%s1 + $0x438] sm:$0xff]
    %v178 = vld [vmem:[%s1 + $0x440] sm:$0xff]
    %v179 = vld [vmem:[%s1 + $0x448] sm:$0xff]
    %v180 = vld [vmem:[%s1 + $0x450] sm:$0xff]
    %v181 = vld [vmem:[%s1 + $0x458] sm:$0xff]
    %v182 = vld [vmem:[%s1 + $0x460] sm:$0xff]
    %v183 = vld [vmem:[%s1 + $0x468] sm:$0xff]
    %v184 = vld [vmem:[%s1 + $0x470] sm:$0xff]
    %v185 = vld [vmem:[%s1 + $0x478] sm:$0xff]
    %v186 = vld [vmem:[%s1 + $0x480] sm:$0xff]
    %v187 = vld [vmem:[%s1 + $0x488] sm:$0xff]
    %v188 = vld [vmem:[%s1 + $0x490] sm:$0xff]
    %v189 = vld [vmem:[%s1 + $0x498] sm:$0xff]
    %v190 = vld [vmem:[%s1 + $0x4a0] sm:$0xff]
    %v191 = vld [vmem:[%s1 + $0x4a8] sm:$0xff]
    %v192 = vld [vmem:[%s1 + $0x4b0] sm:$0xff]
    %v193 = vld [vmem:[%s1 + $0x4b8] sm:$0xff]
    %v194 = vld [vmem:[%s1 + $0x4c0] sm:$0xff]
    %v195 = vld [vmem:[%s1 + $0x4c8] sm:$0xff]
    %v196 = vld [vmem:[%s1 + $0x4d0] sm:$0xff]
    %v197 = vld [vmem:[%s1 + $0x4d8] sm:$0xff]
    %v198 = vld [vmem:[%s1 + $0x4e0] sm:$0xff]
    %v199 = vld [vmem:[%s1 + $0x4e8] sm:$0xff]
    %v200 = vld [vmem:[%s1 + $0x4f0] sm:$0xff]
    %v201 = vld [vmem:[%s1 + $0x4f8] sm:$0xff]
    %v202 = vld [vmem:[%s1 + $0x500] sm:$0xff]
    %v203 = vld [vmem:[%s1 + $0x508] sm:$0xff]
    %v204 = vld [vmem:[%s1 + $0x510] sm:$0xff]
    %v205 = vld [vmem:[%s1 + $0x518] sm:$0xff]
    %v206 = vld [vmem:[%s1 + $0x520] sm:$0xff]
    %v207 = vld [vmem:[%s1 + $0x528] sm:$0xff]
    %v208 = vld [vmem:[%s1 + $0x530] sm:$0xff]
    %v209 = vld [vmem:[%s1 + $0x538] sm:$0xff]
    %v210 = vld [vmem:[%s1 + $0x540] sm:$0xff]
    %v211 = vld [vmem:[%s1 + $0x548] sm:$0xff]
    %v212 = vld [vmem:[%s1 + $0x550] sm:$0xff]
    %v213 = vld [vmem:[%s1 + $0x558] sm:$0xff]
    %v214 = vld [vmem:[%s1 + $0x560] sm:$0xff]
    %v215 = vld [vmem:[%s1 + $0x568] sm:$0xff]
    %v216 = vld [vmem:[%s1 + $0x570] sm:$0xff]
    %v217 = vld [vmem:[%s1 + $0x578] sm:$0xff]
    %v218 = vld [vmem:[%s1 + $0x580] sm:$0xff]
    %v219 = vld [vmem:[%s1 + $0x588] sm:$0xff]
    %v220 = vld [vmem:[%s1 + $0x590] sm:$0xff]
    %v221 = vld [vmem:[%s1 + $0x598] sm:$0xff]
    %v222 = vld [vmem:[%s1 + $0x5a0] sm:$0xff]
    %v223 = vld [vmem:[%s1 + $0x5a8] sm:$0xff]
    %v224 = vld [vmem:[%s1 + $0x5b0] sm:$0xff]
    %v225 = vld [vmem:[%s1 + $0x5b8] sm:$0xff]
    %v226 = vld [vmem:[%s1 + $0x5c0] sm:$0xff]
    %v227 = vld [vmem:[%s1 + $0x5c8] sm:$0xff]
    %v228 = vld [vmem:[%s1 + $0x5d0] sm:$0xff]
    %v229 = vld [vmem:[%s1 + $0x5d8] sm:$0xff]
    %v230 = vld [vmem:[%s1 + $0x5e0] sm:$0xff]
    %v231 = vld [vmem:[%s1 + $0x5e8] sm:$0xff]
    %v232 = vld [vmem:[%s1 + $0x5f0] sm:$0xff]
    %v233 = vld [vmem:[%s1 + $0x5f8] sm:$0xff]
    %v234 = vld [vmem:[%s2] sm:$0xff]
    %v235 = vld [vmem:[%s2 + $0x8] sm:$0xff]
    %v236 = vld [vmem:[%s2 + $0x10] sm:$0xff]
    %v237 = vld [vmem:[%s2 + $0x18] sm:$0xff]
    %v238 = vld [vmem:[%s2 + $0x20] sm:$0xff]
    %v239 = vld [vmem:[%s2 + $0x28] sm:$0xff]
    %v240 = vld [vmem:[%s2 + $0x30] sm:$0xff]
    %v241 = vld [vmem:[%s2 + $0x38] sm:$0xff]
    %v242 = vld [vmem:[%s2 + $0x40] sm:$0xff]
    %v243 = vld [vmem:[%s2 + $0x48] sm:$0xff]
    %v244 = vld [vmem:[%s2 + $0x50] sm:$0xff]
    %v245 = vld [vmem:[%s2 + $0x58] sm:$0xff]
    %v246 = vld [vmem:[%s2 + $0x60] sm:$0xff]
    %v247 = vld [vmem:[%s2 + $0x68] sm:$0xff]
    %v248 = vld [vmem:[%s2 + $0x70] sm:$0xff]
    %v249 = vld [vmem:[%s2 + $0x78] sm:$0xff]
    %v250 = vld [vmem:[%s2 + $0x80] sm:$0xff]
    %v251 = vld [vmem:[%s2 + $0x88] sm:$0xff]
    %v252 = vld [vmem:[%s2 + $0x90] sm:$0xff]
    %v253 = vld [vmem:[%s2 + $0x98] sm:$0xff]
    %v254 = vld [vmem:[%s2 + $0xa0] sm:$0xff]
    %v255 = vld [vmem:[%s2 + $0xa8] sm:$0xff]
    %v256 = vld [vmem:[%s2 + $0xb0] sm:$0xff]
    %v257 = vld [vmem:[%s2 + $0xb8] sm:$0xff]
    %v258 = vld [vmem:[%s2 + $0xc0] sm:$0xff]
    %v259 = vld [vmem:[%s2 + $0xc8] sm:$0xff]
    %v260 = vld [vmem:[%s2 + $0xd0] sm:$0xff]
    %v261 = vld [vmem:[%s2 + $0xd8] sm:$0xff]
    %v262 = vld [vmem:[%s2 + $0xe0] sm:$0xff]
    %v263 = vld [vmem:[%s2 + $0xe8] sm:$0xff]
    %v264 = vld [vmem:[%s2 + $0xf0] sm:$0xff]
    %v265 = vld [vmem:[%s2 + $0xf8] sm:$0xff]
    %v266 = vld [vmem:[%s2 + $0x100] sm:$0xff]
    %v267 = vld [vmem:[%s2 + $0x108] sm:$0xff]
    %v268 = vld [vmem:[%s2 + $0x110] sm:$0xff]
    %v269 = vld [vmem:[%s2 + $0x118] sm:$0xff]
    %v270 = vld [vmem:[%s2 + $0x120] sm:$0xff]
    %v271 = vld [vmem:[%s2 + $0x128] sm:$0xff]
    %v272 = vld [vmem:[%s2 + $0x130] sm:$0xff]
    %v273 = vld [vmem:[%s2 + $0x138] sm:$0xff]
    %v274 = vld [vmem:[%s2 + $0x140] sm:$0xff]
    %v275 = vld [vmem:[%s2 + $0x148] sm:$0xff]
    %v276 = vld [vmem:[%s2 + $0x150] sm:$0xff]
    %v277 = vld [vmem:[%s2 + $0x158] sm:$0xff]
    %v278 = vld [vmem:[%s2 + $0x160] sm:$0xff]
    %v279 = vld [vmem:[%s2 + $0x168] sm:$0xff]
    %v280 = vld [vmem:[%s2 + $0x170] sm:$0xff]
    %v281 = vld [vmem:[%s2 + $0x178] sm:$0xff]
    %v282 = vld [vmem:[%s2 + $0x180] sm:$0xff]
    %v283 = vld [vmem:[%s2 + $0x188] sm:$0xff]
    %v284 = vld [vmem:[%s2 + $0x190] sm:$0xff]
    %v285 = vld [vmem:[%s2 + $0x198] sm:$0xff]
    %v286 = vld [vmem:[%s2 + $0x1a0] sm:$0xff]
    %v287 = vld [vmem:[%s2 + $0x1a8] sm:$0xff]
    %v288 = vld [vmem:[%s2 + $0x1b0] sm:$0xff]
    %v289 = vld [vmem:[%s2 + $0x1b8] sm:$0xff]
    %v290 = vld [vmem:[%s2 + $0x1c0] sm:$0xff]
    %v291 = vld [vmem:[%s2 + $0x1c8] sm:$0xff]
    %v292 = vld [vmem:[%s2 + $0x1d0] sm:$0xff]
    %v293 = vld [vmem:[%s2 + $0x1d8] sm:$0xff]
    %v294 = vld [vmem:[%s2 + $0x1e0] sm:$0xff]
    %v295 = vld [vmem:[%s2 + $0x1e8] sm:$0xff]
    %v296 = vld [vmem:[%s2 + $0x1f0] sm:$0xff]
    %v297 = vld [vmem:[%s2 + $0x1f8] sm:$0xff]
    %v298 = vld [vmem:[%s2 + $0x200] sm:$0xff]
    %v299 = vld [vmem:[%s2 + $0x208] sm:$0xff]
    %v300 = vld [vmem:[%s2 + $0x210] sm:$0xff]
    %v301 = vld [vmem:[%s2 + $0x218] sm:$0xff]
    %v302 = vld [vmem:[%s2 + $0x220] sm:$0xff]
    %v303 = vld [vmem:[%s2 + $0x228] sm:$0xff]
    %v304 = vld [vmem:[%s2 + $0x230] sm:$0xff]
    %v305 = vld [vmem:[%s2 + $0x238] sm:$0xff]
    %v306 = vld [vmem:[%s2 + $0x240] sm:$0xff]
    %v307 = vld [vmem:[%s2 + $0x248] sm:$0xff]
    %v308 = vld [vmem:[%s2 + $0x250] sm:$0xff]
    %v309 = vld [vmem:[%s2 + $0x258] sm:$0xff]
    %v310 = vld [vmem:[%s2 + $0x260] sm:$0xff]
    %v311 = vld [vmem:[%s2 + $0x268] sm:$0xff]
    %v312 = vld [vmem:[%s2 + $0x270] sm:$0xff]
    %v313 = vld [vmem:[%s2 + $0x278] sm:$0xff]
    %v314 = vld [vmem:[%s2 + $0x280] sm:$0xff]
    %v315 = vld [vmem:[%s2 + $0x288] sm:$0xff]
    %v316 = vld [vmem:[%s2 + $0x290] sm:$0xff]
    %v317 = vld [vmem:[%s2 + $0x298] sm:$0xff]
    %v318 = vld [vmem:[%s2 + $0x2a0] sm:$0xff]
    %v319 = vld [vmem:[%s2 + $0x2a8] sm:$0xff]
    %v320 = vld [vmem:[%s2 + $0x2b0] sm:$0xff]
    %v321 = vld [vmem:[%s2 + $0x2b8] sm:$0xff]
    %v322 = vld [vmem:[%s2 + $0x2c0] sm:$0xff]
    %v323 = vld [vmem:[%s2 + $0x2c8] sm:$0xff]
    %v324 = vld [vmem:[%s2 + $0x2d0] sm:$0xff]
    %v325 = vld [vmem:[%s2 + $0x2d8] sm:$0xff]
    %v326 = vld [vmem:[%s2 + $0x2e0] sm:$0xff]
    %v327 = vld [vmem:[%s2 + $0x2e8] sm:$0xff]
    %v328 = vld [vmem:[%s2 + $0x2f0] sm:$0xff]
    %v329 = vld [vmem:[%s2 + $0x2f8] sm:$0xff]
    %v330 = vld [vmem:[%s2 + $0x300] sm:$0xff]
    %v331 = vld [vmem:[%s2 + $0x308] sm:$0xff]
    %v332 = vld [vmem:[%s2 + $0x310] sm:$0xff]
    %v333 = vld [vmem:[%s2 + $0x318] sm:$0xff]
    %v334 = vld [vmem:[%s2 + $0x320] sm:$0xff]
    %v335 = vld [vmem:[%s2 + $0x328] sm:$0xff]
    %v336 = vld [vmem:[%s2 + $0x330] sm:$0xff]
    %v337 = vld [vmem:[%s2 + $0x338] sm:$0xff]
    %v338 = vld [vmem:[%s2 + $0x340] sm:$0xff]
    %v339 = vld [vmem:[%s2 + $0x348] sm:$0xff]
    %v340 = vld [vmem:[%s2 + $0x350] sm:$0xff]
    %v341 = vld [vmem:[%s2 + $0x358] sm:$0xff]
    %v342 = vld [vmem:[%s2 + $0x360] sm:$0xff]
    %v343 = vld [vmem:[%s2 + $0x368] sm:$0xff]
    %v344 = vld [vmem:[%s2 + $0x370] sm:$0xff]
    %v345 = vld [vmem:[%s2 + $0x378] sm:$0xff]
    %v346 = vld [vmem:[%s2 + $0x380] sm:$0xff]
    %v347 = vld [vmem:[%s2 + $0x388] sm:$0xff]
    %v348 = vld [vmem:[%s2 + $0x390] sm:$0xff]
    %v349 = vld [vmem:[%s2 + $0x398] sm:$0xff]
    %v350 = vld [vmem:[%s2 + $0x3a0] sm:$0xff]
    %v351 = vld [vmem:[%s2 + $0x3a8] sm:$0xff]
    %v352 = vld [vmem:[%s2 + $0x3b0] sm:$0xff]
    %v353 = vld [vmem:[%s2 + $0x3b8] sm:$0xff]
    %v354 = vld [vmem:[%s2 + $0x3c0] sm:$0xff]
    %v355 = vld [vmem:[%s2 + $0x3c8] sm:$0xff]
    %v356 = vld [vmem:[%s2 + $0x3d0] sm:$0xff]
    %v357 = vld [vmem:[%s2 + $0x3d8] sm:$0xff]
    %v358 = vld [vmem:[%s2 + $0x3e0] sm:$0xff]
    %v359 = vld [vmem:[%s2 + $0x3e8] sm:$0xff]
    %v360 = vld [vmem:[%s2 + $0x3f0] sm:$0xff]
    %v361 = vld [vmem:[%s2 + $0x3f8] sm:$0xff]
    %v362 = vld [vmem:[%s2 + $0x400] sm:$0xff]
    %v363 = vld [vmem:[%s2 + $0x408] sm:$0xff]
    %v364 = vld [vmem:[%s2 + $0x410] sm:$0xff]
    %v365 = vld [vmem:[%s2 + $0x418] sm:$0xff]
    %v366 = vld [vmem:[%s2 + $0x420] sm:$0xff]
    %v367 = vld [vmem:[%s2 + $0x428] sm:$0xff]
    %v368 = vld [vmem:[%s2 + $0x430] sm:$0xff]
    %v369 = vld [vmem:[%s2 + $0x438] sm:$0xff]
    %v370 = vld [vmem:[%s2 + $0x440] sm:$0xff]
    %v371 = vld [vmem:[%s2 + $0x448] sm:$0xff]
    %v372 = vld [vmem:[%s2 + $0x450] sm:$0xff]
    %v373 = vld [vmem:[%s2 + $0x458] sm:$0xff]
    %v374 = vld [vmem:[%s2 + $0x460] sm:$0xff]
    %v375 = vld [vmem:[%s2 + $0x468] sm:$0xff]
    %v376 = vld [vmem:[%s2 + $0x470] sm:$0xff]
    %v377 = vld [vmem:[%s2 + $0x478] sm:$0xff]
    %v378 = vld [vmem:[%s2 + $0x480] sm:$0xff]
    %v379 = vld [vmem:[%s2 + $0x488] sm:$0xff]
    %v380 = vld [vmem:[%s2 + $0x490] sm:$0xff]
    %v381 = vld [vmem:[%s2 + $0x498] sm:$0xff]
    %v382 = vld [vmem:[%s2 + $0x4a0] sm:$0xff]
    %v383 = vld [vmem:[%s2 + $0x4a8] sm:$0xff]
    %v384 = vld [vmem:[%s2 + $0x4b0] sm:$0xff]
    %v385 = vld [vmem:[%s2 + $0x4b8] sm:$0xff]
    %v386 = vld [vmem:[%s2 + $0x4c0] sm:$0xff]
    %v387 = vld [vmem:[%s2 + $0x4c8] sm:$0xff]
    %v388 = vld [vmem:[%s2 + $0x4d0] sm:$0xff]
    %v389 = vld [vmem:[%s2 + $0x4d8] sm:$0xff]
    %v390 = vld [vmem:[%s2 + $0x4e0] sm:$0xff]
    %v391 = vld [vmem:[%s2 + $0x4e8] sm:$0xff]
    %v392 = vld [vmem:[%s2 + $0x4f0] sm:$0xff]
    %v393 = vld [vmem:[%s2 + $0x4f8] sm:$0xff]
    %v394 = vld [vmem:[%s2 + $0x500] sm:$0xff]
    %v395 = vld [vmem:[%s2 + $0x508] sm:$0xff]
    %v396 = vld [vmem:[%s2 + $0x510] sm:$0xff]
    %v397 = vld [vmem:[%s2 + $0x518] sm:$0xff]
    %v398 = vld [vmem:[%s2 + $0x520] sm:$0xff]
    %v399 = vld [vmem:[%s2 + $0x528] sm:$0xff]
    %v400 = vld [vmem:[%s2 + $0x530] sm:$0xff]
    %v401 = vld [vmem:[%s2 + $0x538] sm:$0xff]
    %v402 = vld [vmem:[%s2 + $0x540] sm:$0xff]
    %v403 = vld [vmem:[%s2 + $0x548] sm:$0xff]
    %v404 = vld [vmem:[%s2 + $0x550] sm:$0xff]
    %v405 = vld [vmem:[%s2 + $0x558] sm:$0xff]
    %v406 = vld [vmem:[%s2 + $0x560] sm:$0xff]
    %v407 = vld [vmem:[%s2 + $0x568] sm:$0xff]
    %v408 = vld [vmem:[%s2 + $0x570] sm:$0xff]
    %v409 = vld [vmem:[%s2 + $0x578] sm:$0xff]
    %v410 = vld [vmem:[%s2 + $0x580] sm:$0xff]
    %v411 = vld [vmem:[%s2 + $0x588] sm:$0xff]
    %v412 = vld [vmem:[%s2 + $0x590] sm:$0xff]
    %v413 = vld [vmem:[%s2 + $0x598] sm:$0xff]
    %v414 = vld [vmem:[%s2 + $0x5a0] sm:$0xff]
    %v415 = vld [vmem:[%s2 + $0x5a8] sm:$0xff]
    %v416 = vld [vmem:[%s2 + $0x5b0] sm:$0xff]
    %v417 = vld [vmem:[%s2 + $0x5b8] sm:$0xff]
    %v418 = vld [vmem:[%s2 + $0x5c0] sm:$0xff]
    %v419 = vld [vmem:[%s2 + $0x5c8] sm:$0xff]
    %v420 = vld [vmem:[%s2 + $0x5d0] sm:$0xff]
    %v421 = vld [vmem:[%s2 + $0x5d8] sm:$0xff]
    %v422 = vld [vmem:[%s2 + $0x5e0] sm:$0xff]
    %v423 = vld [vmem:[%s2 + $0x5e8] sm:$0xff]
    %v424 = vld [vmem:[%s2 + $0x5f0] sm:$0xff]
    %v425 = vld [vmem:[%s2 + $0x5f8] sm:$0xff]
    %v426 = vld [vmem:[%s3] sm:$0x3f]
    %v427 = vld [vmem:[%s4] sm:$0x3f]
    %v428 = vld [vmem:[%s5] sm:$0xff]
    %v429 = vld [vmem:[%s5 + $0x8] sm:$0xff]
    %v430 = vld [vmem:[%s5 + $0x10] sm:$0xff]
    %v431 = vld [vmem:[%s5 + $0x18] sm:$0xff]
    %v432 = vld [vmem:[%s5 + $0x20] sm:$0xff]
    %v433 = vld [vmem:[%s5 + $0x28] sm:$0xff]
    %v434 = vld [vmem:[%s5 + $0x30] sm:$0xff]
    %v435 = vld [vmem:[%s5 + $0x38] sm:$0xff]
    %v436 = vld [vmem:[%s5 + $0x40] sm:$0xff]
    %v437 = vld [vmem:[%s5 + $0x48] sm:$0xff]
    %v438 = vld [vmem:[%s5 + $0x50] sm:$0xff]
    %v439 = vld [vmem:[%s5 + $0x58] sm:$0xff]
    %v440 = vld [vmem:[%s5 + $0x60] sm:$0xff]
    %v441 = vld [vmem:[%s5 + $0x68] sm:$0xff]
    %v442 = vld [vmem:[%s5 + $0x70] sm:$0xff]
    %v443 = vld [vmem:[%s5 + $0x78] sm:$0xff]
    %v444 = vld [vmem:[%s5 + $0x80] sm:$0xff]
    %v445 = vld [vmem:[%s5 + $0x88] sm:$0xff]
    %v446 = vld [vmem:[%s5 + $0x90] sm:$0xff]
    %v447 = vld [vmem:[%s5 + $0x98] sm:$0xff]
    %v448 = vld [vmem:[%s5 + $0xa0] sm:$0xff]
    %v449 = vld [vmem:[%s5 + $0xa8] sm:$0xff]
    %v450 = vld [vmem:[%s5 + $0xb0] sm:$0xff]
    %v451 = vld [vmem:[%s5 + $0xb8] sm:$0xff]
    %v452 = vld [vmem:[%s5 + $0xc0] sm:$0xff]
    %v453 = vld [vmem:[%s5 + $0xc8] sm:$0xff]
    %v454 = vld [vmem:[%s5 + $0xd0] sm:$0xff]
    %v455 = vld [vmem:[%s5 + $0xd8] sm:$0xff]
    %v456 = vld [vmem:[%s5 + $0xe0] sm:$0xff]
    %v457 = vld [vmem:[%s5 + $0xe8] sm:$0xff]
    %v458 = vld [vmem:[%s5 + $0xf0] sm:$0xff]
    %v459 = vld [vmem:[%s5 + $0xf8] sm:$0xff]
    %v460 = vld [vmem:[%s5 + $0x100] sm:$0xff]
    %v461 = vld [vmem:[%s5 + $0x108] sm:$0xff]
    %v462 = vld [vmem:[%s5 + $0x110] sm:$0xff]
    %v463 = vld [vmem:[%s5 + $0x118] sm:$0xff]
    %v464 = vld [vmem:[%s5 + $0x120] sm:$0xff]
    %v465 = vld [vmem:[%s5 + $0x128] sm:$0xff]
    %v466 = vld [vmem:[%s5 + $0x130] sm:$0xff]
    %v467 = vld [vmem:[%s5 + $0x138] sm:$0xff]
    %v468 = vld [vmem:[%s5 + $0x140] sm:$0xff]
    %v469 = vld [vmem:[%s5 + $0x148] sm:$0xff]
    %v470 = vld [vmem:[%s5 + $0x150] sm:$0xff]
    %v471 = vld [vmem:[%s5 + $0x158] sm:$0xff]
    %v472 = vld [vmem:[%s5 + $0x160] sm:$0xff]
    %v473 = vld [vmem:[%s5 + $0x168] sm:$0xff]
    %v474 = vld [vmem:[%s5 + $0x170] sm:$0xff]
    %v475 = vld [vmem:[%s5 + $0x178] sm:$0xff]
    %v476 = vld [vmem:[%s5 + $0x180] sm:$0xff]
    %v477 = vld [vmem:[%s5 + $0x188] sm:$0xff]
    %v478 = vld [vmem:[%s5 + $0x190] sm:$0xff]
    %v479 = vld [vmem:[%s5 + $0x198] sm:$0xff]
    %v480 = vld [vmem:[%s5 + $0x1a0] sm:$0xff]
    %v481 = vld [vmem:[%s5 + $0x1a8] sm:$0xff]
    %v482 = vld [vmem:[%s5 + $0x1b0] sm:$0xff]
    %v483 = vld [vmem:[%s5 + $0x1b8] sm:$0xff]
    %v484 = vld [vmem:[%s5 + $0x1c0] sm:$0xff]
    %v485 = vld [vmem:[%s5 + $0x1c8] sm:$0xff]
    %v486 = vld [vmem:[%s5 + $0x1d0] sm:$0xff]
    %v487 = vld [vmem:[%s5 + $0x1d8] sm:$0xff]
    %v488 = vld [vmem:[%s5 + $0x1e0] sm:$0xff]
    %v489 = vld [vmem:[%s5 + $0x1e8] sm:$0xff]
    %v490 = vld [vmem:[%s5 + $0x1f0] sm:$0xff]
    %v491 = vld [vmem:[%s5 + $0x1f8] sm:$0xff]
    %v492 = vld [vmem:[%s6] sm:$0x3]
    %v493 = vld [vmem:[%s0] sm:$0xf]
    %v494 = vmul.f32 %v493, 0.9
    %v495 = vadd.f32 %v494, 0.0
    %v497 = vlaneseq
    %v498 = vshrl.u32 %v497, 7
    %v499 = vsub.s32 0, %v498
    %v500 = vrot.slane %v426, %v499
    %v501 = vlaneseq
    %v502 = vshrl.u32 %v501, 7
    %v503 = vsub.s32 1, %v502
    %v504 = vrot.slane %v426, %v503
    %v505 = vlaneseq
    %v506 = vshrl.u32 %v505, 7
    %v507 = vsub.s32 2, %v506
    %v508 = vrot.slane %v426, %v507
    %v509 = vlaneseq
    %v510 = vshrl.u32 %v509, 7
    %v511 = vsub.s32 3, %v510
    %v512 = vrot.slane %v426, %v511
    %v513 = vlaneseq
    %v514 = vshrl.u32 %v513, 7
    %v515 = vsub.s32 4, %v514
    %v516 = vrot.slane %v426, %v515
    %v517 = vlaneseq
    %v518 = vshrl.u32 %v517, 7
    %v519 = vsub.s32 5, %v518
    %v520 = vrot.slane %v426, %v519
    %v529 = vunpack.c.l.s4 1983009808
    %v530 = vunpack.c.0.s8 %v529
    %v531 = vlaneseq
    %v532 = vshrl.u32 %v531, 7
    %v533 = vsub.s32 %v530, %v532
    %v534 = vrot.slane %v495, %v533
    %v535 = vcombine.high %v534, %v534
    %538 = vmatprep.subr.mxu0 %v43
    %539 = vmatpush1.msra.mxu0 %v42
    %540 = vmatprep.subr.mxu0 %v49
    %541 = vmatpush1.msra.mxu0 %v48
    %542 = vmatprep.subr.mxu0 %v55
    %543 = vmatpush1.msra.mxu0 %v54
    %544 = vmatprep.subr.mxu0 %v61
    %545 = vmatpush1.msra.mxu0 %v60
    %546 = vmatprep.subr.mxu0 %v67
    %547 = vmatpush1.msra.mxu0 %v66
    %548 = vmatprep.subr.mxu0 %v73
    %549 = vmatpush1.msra.mxu0 %v72
    %550 = vmatprep.subr.mxu0 %v79
    %551 = vmatpush1.msra.mxu0 %v78
    %552 = vmatprep.subr.mxu0 %v85
    %553 = vmatpush1.msra.mxu0 %v84
    %554 = vmatprep.subr.mxu0 %v91
    %555 = vmatpush1.msra.mxu0 %v90
    %556 = vmatprep.subr.mxu0 %v97
    %557 = vmatpush1.msra.mxu0 %v96
    %558 = vmatprep.subr.mxu0 %v103
    %559 = vmatpush1.msra.mxu0 %v102
    %560 = vmatprep.subr.mxu0 %v109
    %561 = vmatpush1.msra.mxu0 %v108
    %562 = vmatprep.subr.mxu0 %v115
    %563 = vmatpush1.msra.mxu0 %v114
    %564 = vmatprep.subr.mxu0 %v121
    %565 = vmatpush1.msra.mxu0 %v120
    %566 = vmatprep.subr.mxu0 %v127
    %567 = vmatpush1.msra.mxu0 %v126
    %568 = vmatprep.subr.mxu0 %v133
    %569 = vmatpush1.msra.mxu0 %v132
    %570 = vmatprep.subr.mxu0 %v139
    %571 = vmatpush1.msra.mxu0 %v138
    %572 = vmatprep.subr.mxu0 %v145
    %573 = vmatpush1.msra.mxu0 %v144
    %574 = vmatprep.subr.mxu0 %v151
    %575 = vmatpush1.msra.mxu0 %v150
    %576 = vmatprep.subr.mxu0 %v157
    %577 = vmatpush1.msra.mxu0 %v156
    %578 = vmatprep.subr.mxu0 %v163
    %579 = vmatpush1.msra.mxu0 %v162
    %580 = vmatprep.subr.mxu0 %v169
    %581 = vmatpush1.msra.mxu0 %v168
    %582 = vmatprep.subr.mxu0 %v175
    %583 = vmatpush1.msra.mxu0 %v174
    %584 = vmatprep.subr.mxu0 %v181
    %585 = vmatpush1.msra.mxu0 %v180
    %586 = vmatprep.subr.mxu0 %v187
    %587 = vmatpush1.msra.mxu0 %v186
    %588 = vmatprep.subr.mxu0 %v193
    %589 = vmatpush1.msra.mxu0 %v192
    %590 = vmatprep.subr.mxu0 %v199
    %591 = vmatpush1.msra.mxu0 %v198
    %592 = vmatprep.subr.mxu0 %v205
    %593 = vmatpush1.msra.mxu0 %v204
    %594 = vmatprep.subr.mxu0 %v211
    %595 = vmatpush1.msra.mxu0 %v210
    %596 = vmatprep.subr.mxu0 %v217
    %597 = vmatpush1.msra.mxu0 %v216
    %598 = vmatprep.subr.mxu0 %v223
    %599 = vmatpush1.msra.mxu0 %v222
    %600 = vmatprep.subr.mxu0 %v229
    %601 = vmatpush1.msra.mxu0 %v228
    %602 = vmatprep.mubr.f32.mxu0 %v535
    %603 = vmatmul.mubr.f32.gmra.mrb[0].mxu0 %v534
    %v604 = vpop.f32.mrb[0].mxu0
    %v605 = vadd.f32 %v500, %v604
    %v606 = vpop.f32.mrb[0].mxu0
    %v607 = vadd.f32 %v504, %v606
    %608 = vdwg.mxu0
    %609 = vmatprep.subr.mxu0 %v45
    %610 = vmatpush1.msra.mxu0 %v44
    %611 = vmatprep.subr.mxu0 %v51
    %612 = vmatpush1.msra.mxu0 %v50
    %613 = vmatprep.subr.mxu0 %v57
    %614 = vmatpush1.msra.mxu0 %v56
    %615 = vmatprep.subr.mxu0 %v63
    %616 = vmatpush1.msra.mxu0 %v62
    %617 = vmatprep.subr.mxu0 %v69
    %618 = vmatpush1.msra.mxu0 %v68
    %619 = vmatprep.subr.mxu0 %v75
    %620 = vmatpush1.msra.mxu0 %v74
    %621 = vmatprep.subr.mxu0 %v81
    %622 = vmatpush1.msra.mxu0 %v80
    %623 = vmatprep.subr.mxu0 %v87
    %624 = vmatpush1.msra.mxu0 %v86
    %625 = vmatprep.subr.mxu0 %v93
    %626 = vmatpush1.msra.mxu0 %v92
    %627 = vmatprep.subr.mxu0 %v99
    %628 = vmatpush1.msra.mxu0 %v98
    %629 = vmatprep.subr.mxu0 %v105
    %630 = vmatpush1.msra.mxu0 %v104
    %631 = vmatprep.subr.mxu0 %v111
    %632 = vmatpush1.msra.mxu0 %v110
    %633 = vmatprep.subr.mxu0 %v117
    %634 = vmatpush1.msra.mxu0 %v116
    %635 = vmatprep.subr.mxu0 %v123
    %636 = vmatpush1.msra.mxu0 %v122
    %637 = vmatprep.subr.mxu0 %v129
    %638 = vmatpush1.msra.mxu0 %v128
    %639 = vmatprep.subr.mxu0 %v135
    %640 = vmatpush1.msra.mxu0 %v134
    %641 = vmatprep.subr.mxu0 %v141
    %642 = vmatpush1.msra.mxu0 %v140
    %643 = vmatprep.subr.mxu0 %v147
    %644 = vmatpush1.msra.mxu0 %v146
    %645 = vmatprep.subr.mxu0 %v153
    %646 = vmatpush1.msra.mxu0 %v152
    %647 = vmatprep.subr.mxu0 %v159
    %648 = vmatpush1.msra.mxu0 %v158
    %649 = vmatprep.subr.mxu0 %v165
    %650 = vmatpush1.msra.mxu0 %v164
    %651 = vmatprep.subr.mxu0 %v171
    %652 = vmatpush1.msra.mxu0 %v170
    %653 = vmatprep.subr.mxu0 %v177
    %654 = vmatpush1.msra.mxu0 %v176
    %655 = vmatprep.subr.mxu0 %v183
    %656 = vmatpush1.msra.mxu0 %v182
    %657 = vmatprep.subr.mxu0 %v189
    %658 = vmatpush1.msra.mxu0 %v188
    %659 = vmatprep.subr.mxu0 %v195
    %660 = vmatpush1.msra.mxu0 %v194
    %661 = vmatprep.subr.mxu0 %v201
    %662 = vmatpush1.msra.mxu0 %v200
    %663 = vmatprep.subr.mxu0 %v207
    %664 = vmatpush1.msra.mxu0 %v206
    %665 = vmatprep.subr.mxu0 %v213
    %666 = vmatpush1.msra.mxu0 %v212
    %667 = vmatprep.subr.mxu0 %v219
    %668 = vmatpush1.msra.mxu0 %v218
    %669 = vmatprep.subr.mxu0 %v225
    %670 = vmatpush1.msra.mxu0 %v224
    %671 = vmatprep.subr.mxu0 %v231
    %672 = vmatpush1.msra.mxu0 %v230
    %673 = vmatprep.mubr.f32.mxu0 %v535
    %674 = vmatmul.mubr.f32.gmra.mrb[0].mxu0 %v534
    %v675 = vpop.f32.mrb[0].mxu0
    %v676 = vadd.f32 %v508, %v675
    %v677 = vpop.f32.mrb[0].mxu0
    %v678 = vadd.f32 %v512, %v677
    %679 = vdwg.mxu0
    %680 = vmatprep.subr.mxu0 %v47
    %681 = vmatpush1.msra.mxu0 %v46
    %682 = vmatprep.subr.mxu0 %v53
    %683 = vmatpush1.msra.mxu0 %v52
    %684 = vmatprep.subr.mxu0 %v59
    %685 = vmatpush1.msra.mxu0 %v58
    %686 = vmatprep.subr.mxu0 %v65
    %687 = vmatpush1.msra.mxu0 %v64
    %688 = vmatprep.subr.mxu0 %v71
    %689 = vmatpush1.msra.mxu0 %v70
    %690 = vmatprep.subr.mxu0 %v77
    %691 = vmatpush1.msra.mxu0 %v76
    %692 = vmatprep.subr.mxu0 %v83
    %693 = vmatpush1.msra.mxu0 %v82
    %694 = vmatprep.subr.mxu0 %v89
    %695 = vmatpush1.msra.mxu0 %v88
    %696 = vmatprep.subr.mxu0 %v95
    %697 = vmatpush1.msra.mxu0 %v94
    %698 = vmatprep.subr.mxu0 %v101
    %699 = vmatpush1.msra.mxu0 %v100
    %700 = vmatprep.subr.mxu0 %v107
    %701 = vmatpush1.msra.mxu0 %v106
    %702 = vmatprep.subr.mxu0 %v113
    %703 = vmatpush1.msra.mxu0 %v112
    %704 = vmatprep.subr.mxu0 %v119
    %705 = vmatpush1.msra.mxu0 %v118
    %706 = vmatprep.subr.mxu0 %v125
    %707 = vmatpush1.msra.mxu0 %v124
    %708 = vmatprep.subr.mxu0 %v131
    %709 = vmatpush1.msra.mxu0 %v130
    %710 = vmatprep.subr.mxu0 %v137
    %711 = vmatpush1.msra.mxu0 %v136
    %712 = vmatprep.subr.mxu0 %v143
    %713 = vmatpush1.msra.mxu0 %v142
    %714 = vmatprep.subr.mxu0 %v149
    %715 = vmatpush1.msra.mxu0 %v148
    %716 = vmatprep.subr.mxu0 %v155
    %717 = vmatpush1.msra.mxu0 %v154
    %718 = vmatprep.subr.mxu0 %v161
    %719 = vmatpush1.msra.mxu0 %v160
    %720 = vmatprep.subr.mxu0 %v167
    %721 = vmatpush1.msra.mxu0 %v166
    %722 = vmatprep.subr.mxu0 %v173
    %723 = vmatpush1.msra.mxu0 %v172
    %724 = vmatprep.subr.mxu0 %v179
    %725 = vmatpush1.msra.mxu0 %v178
    %726 = vmatprep.subr.mxu0 %v185
    %727 = vmatpush1.msra.mxu0 %v184
    %728 = vmatprep.subr.mxu0 %v191
    %729 = vmatpush1.msra.mxu0 %v190
    %730 = vmatprep.subr.mxu0 %v197
    %731 = vmatpush1.msra.mxu0 %v196
    %732 = vmatprep.subr.mxu0 %v203
    %733 = vmatpush1.msra.mxu0 %v202
    %734 = vmatprep.subr.mxu0 %v209
    %735 = vmatpush1.msra.mxu0 %v208
    %736 = vmatprep.subr.mxu0 %v215
    %737 = vmatpush1.msra.mxu0 %v214
    %738 = vmatprep.subr.mxu0 %v221
    %739 = vmatpush1.msra.mxu0 %v220
    %740 = vmatprep.subr.mxu0 %v227
    %741 = vmatpush1.msra.mxu0 %v226
    %742 = vmatprep.subr.mxu0 %v233
    %743 = vmatpush1.msra.mxu0 %v232
    %744 = vmatprep.mubr.f32.mxu0 %v535
    %745 = vmatmul.mubr.f32.gmra.mrb[0].mxu0 %v534
    %v746 = vpop.f32.mrb[0].mxu0
    %v747 = vadd.f32 %v516, %v746
    %v748 = vpop.f32.mrb[0].mxu0
    %v749 = vadd.f32 %v520, %v748
    %750 = vdwg.mxu0
    %v752 = vlaneseq
    %v753 = vshrl.u32 %v752, 7
    %v754 = vsub.s32 0, %v753
    %v755 = vrot.slane %v427, %v754
    %v756 = vlaneseq
    %v757 = vshrl.u32 %v756, 7
    %v758 = vsub.s32 1, %v757
    %v759 = vrot.slane %v427, %v758
    %v760 = vlaneseq
    %v761 = vshrl.u32 %v760, 7
    %v762 = vsub.s32 2, %v761
    %v763 = vrot.slane %v427, %v762
    %v764 = vlaneseq
    %v765 = vshrl.u32 %v764, 7
    %v766 = vsub.s32 3, %v765
    %v767 = vrot.slane %v427, %v766
    %v768 = vlaneseq
    %v769 = vshrl.u32 %v768, 7
    %v770 = vsub.s32 4, %v769
    %v771 = vrot.slane %v427, %v770
    %v772 = vlaneseq
    %v773 = vshrl.u32 %v772, 7
    %v774 = vsub.s32 5, %v773
    %v775 = vrot.slane %v427, %v774
    %782 = vmatprep.subr.mxu0 %v235
    %783 = vmatpush1.msra.mxu0 %v234
    %784 = vmatprep.subr.mxu0 %v241
    %785 = vmatpush1.msra.mxu0 %v240
    %786 = vmatprep.subr.mxu0 %v247
    %787 = vmatpush1.msra.mxu0 %v246
    %788 = vmatprep.subr.mxu0 %v253
    %789 = vmatpush1.msra.mxu0 %v252
    %790 = vmatprep.subr.mxu0 %v259
    %791 = vmatpush1.msra.mxu0 %v258
    %792 = vmatprep.subr.mxu0 %v265
    %793 = vmatpush1.msra.mxu0 %v264
    %794 = vmatprep.subr.mxu0 %v271
    %795 = vmatpush1.msra.mxu0 %v270
    %796 = vmatprep.subr.mxu0 %v277
    %797 = vmatpush1.msra.mxu0 %v276
    %798 = vmatprep.subr.mxu0 %v283
    %799 = vmatpush1.msra.mxu0 %v282
    %800 = vmatprep.subr.mxu0 %v289
    %801 = vmatpush1.msra.mxu0 %v288
    %802 = vmatprep.subr.mxu0 %v295
    %803 = vmatpush1.msra.mxu0 %v294
    %804 = vmatprep.subr.mxu0 %v301
    %805 = vmatpush1.msra.mxu0 %v300
    %806 = vmatprep.subr.mxu0 %v307
    %807 = vmatpush1.msra.mxu0 %v306
    %808 = vmatprep.subr.mxu0 %v313
    %809 = vmatpush1.msra.mxu0 %v312
    %810 = vmatprep.subr.mxu0 %v319
    %811 = vmatpush1.msra.mxu0 %v318
    %812 = vmatprep.subr.mxu0 %v325
    %813 = vmatpush1.msra.mxu0 %v324
    %814 = vmatprep.subr.mxu0 %v331
    %815 = vmatpush1.msra.mxu0 %v330
    %816 = vmatprep.subr.mxu0 %v337
    %817 = vmatpush1.msra.mxu0 %v336
    %818 = vmatprep.subr.mxu0 %v343
    %819 = vmatpush1.msra.mxu0 %v342
    %820 = vmatprep.subr.mxu0 %v349
    %821 = vmatpush1.msra.mxu0 %v348
    %822 = vmatprep.subr.mxu0 %v355
    %823 = vmatpush1.msra.mxu0 %v354
    %824 = vmatprep.subr.mxu0 %v361
    %825 = vmatpush1.msra.mxu0 %v360
    %826 = vmatprep.subr.mxu0 %v367
    %827 = vmatpush1.msra.mxu0 %v366
    %828 = vmatprep.subr.mxu0 %v373
    %829 = vmatpush1.msra.mxu0 %v372
    %830 = vmatprep.subr.mxu0 %v379
    %831 = vmatpush1.msra.mxu0 %v378
    %832 = vmatprep.subr.mxu0 %v385
    %833 = vmatpush1.msra.mxu0 %v384
    %834 = vmatprep.subr.mxu0 %v391
    %835 = vmatpush1.msra.mxu0 %v390
    %836 = vmatprep.subr.mxu0 %v397
    %837 = vmatpush1.msra.mxu0 %v396
    %838 = vmatprep.subr.mxu0 %v403
    %839 = vmatpush1.msra.mxu0 %v402
    %840 = vmatprep.subr.mxu0 %v409
    %841 = vmatpush1.msra.mxu0 %v408
    %842 = vmatprep.subr.mxu0 %v415
    %843 = vmatpush1.msra.mxu0 %v414
    %844 = vmatprep.subr.mxu0 %v421
    %845 = vmatpush1.msra.mxu0 %v420
    %846 = vmatprep.mubr.f32.mxu0 0.0
    %847 = vmatmul.mubr.f32.gmra.mrb[0].mxu0 0.0
    %v848 = vpop.f32.mrb[0].mxu0
    %v849 = vadd.f32 %v755, %v848
    %v850 = vpop.f32.mrb[0].mxu0
    %v851 = vadd.f32 %v759, %v850
    %852 = vdwg.mxu0
    %853 = vmatprep.subr.mxu0 %v237
    %854 = vmatpush1.msra.mxu0 %v236
    %855 = vmatprep.subr.mxu0 %v243
    %856 = vmatpush1.msra.mxu0 %v242
    %857 = vmatprep.subr.mxu0 %v249
    %858 = vmatpush1.msra.mxu0 %v248
    %859 = vmatprep.subr.mxu0 %v255
    %860 = vmatpush1.msra.mxu0 %v254
    %861 = vmatprep.subr.mxu0 %v261
    %862 = vmatpush1.msra.mxu0 %v260
    %863 = vmatprep.subr.mxu0 %v267
    %864 = vmatpush1.msra.mxu0 %v266
    %865 = vmatprep.subr.mxu0 %v273
    %866 = vmatpush1.msra.mxu0 %v272
    %867 = vmatprep.subr.mxu0 %v279
    %868 = vmatpush1.msra.mxu0 %v278
    %869 = vmatprep.subr.mxu0 %v285
    %870 = vmatpush1.msra.mxu0 %v284
    %871 = vmatprep.subr.mxu0 %v291
    %872 = vmatpush1.msra.mxu0 %v290
    %873 = vmatprep.subr.mxu0 %v297
    %874 = vmatpush1.msra.mxu0 %v296
    %875 = vmatprep.subr.mxu0 %v303
    %876 = vmatpush1.msra.mxu0 %v302
    %877 = vmatprep.subr.mxu0 %v309
    %878 = vmatpush1.msra.mxu0 %v308
    %879 = vmatprep.subr.mxu0 %v315
    %880 = vmatpush1.msra.mxu0 %v314
    %881 = vmatprep.subr.mxu0 %v321
    %882 = vmatpush1.msra.mxu0 %v320
    %883 = vmatprep.subr.mxu0 %v327
    %884 = vmatpush1.msra.mxu0 %v326
    %885 = vmatprep.subr.mxu0 %v333
    %886 = vmatpush1.msra.mxu0 %v332
    %887 = vmatprep.subr.mxu0 %v339
    %888 = vmatpush1.msra.mxu0 %v338
    %889 = vmatprep.subr.mxu0 %v345
    %890 = vmatpush1.msra.mxu0 %v344
    %891 = vmatprep.subr.mxu0 %v351
    %892 = vmatpush1.msra.mxu0 %v350
    %893 = vmatprep.subr.mxu0 %v357
    %894 = vmatpush1.msra.mxu0 %v356
    %895 = vmatprep.subr.mxu0 %v363
    %896 = vmatpush1.msra.mxu0 %v362
    %897 = vmatprep.subr.mxu0 %v369
    %898 = vmatpush1.msra.mxu0 %v368
    %899 = vmatprep.subr.mxu0 %v375
    %900 = vmatpush1.msra.mxu0 %v374
    %901 = vmatprep.subr.mxu0 %v381
    %902 = vmatpush1.msra.mxu0 %v380
    %903 = vmatprep.subr.mxu0 %v387
    %904 = vmatpush1.msra.mxu0 %v386
    %905 = vmatprep.subr.mxu0 %v393
    %906 = vmatpush1.msra.mxu0 %v392
    %907 = vmatprep.subr.mxu0 %v399
    %908 = vmatpush1.msra.mxu0 %v398
    %909 = vmatprep.subr.mxu0 %v405
    %910 = vmatpush1.msra.mxu0 %v404
    %911 = vmatprep.subr.mxu0 %v411
    %912 = vmatpush1.msra.mxu0 %v410
    %913 = vmatprep.subr.mxu0 %v417
    %914 = vmatpush1.msra.mxu0 %v416
    %915 = vmatprep.subr.mxu0 %v423
    %916 = vmatpush1.msra.mxu0 %v422
    %917 = vmatprep.mubr.f32.mxu0 0.0
    %918 = vmatmul.mubr.f32.gmra.mrb[0].mxu0 0.0
    %v919 = vpop.f32.mrb[0].mxu0
    %v920 = vadd.f32 %v763, %v919
    %v921 = vpop.f32.mrb[0].mxu0
    %v922 = vadd.f32 %v767, %v921
    %923 = vdwg.mxu0
    %924 = vmatprep.subr.mxu0 %v239
    %925 = vmatpush1.msra.mxu0 %v238
    %926 = vmatprep.subr.mxu0 %v245
    %927 = vmatpush1.msra.mxu0 %v244
    %928 = vmatprep.subr.mxu0 %v251
    %929 = vmatpush1.msra.mxu0 %v250
    %930 = vmatprep.subr.mxu0 %v257
    %931 = vmatpush1.msra.mxu0 %v256
    %932 = vmatprep.subr.mxu0 %v263
    %933 = vmatpush1.msra.mxu0 %v262
    %934 = vmatprep.subr.mxu0 %v269
    %935 = vmatpush1.msra.mxu0 %v268
    %936 = vmatprep.subr.mxu0 %v275
    %937 = vmatpush1.msra.mxu0 %v274
    %938 = vmatprep.subr.mxu0 %v281
    %939 = vmatpush1.msra.mxu0 %v280
    %940 = vmatprep.subr.mxu0 %v287
    %941 = vmatpush1.msra.mxu0 %v286
    %942 = vmatprep.subr.mxu0 %v293
    %943 = vmatpush1.msra.mxu0 %v292
    %944 = vmatprep.subr.mxu0 %v299
    %945 = vmatpush1.msra.mxu0 %v298
    %946 = vmatprep.subr.mxu0 %v305
    %947 = vmatpush1.msra.mxu0 %v304
    %948 = vmatprep.subr.mxu0 %v311
    %949 = vmatpush1.msra.mxu0 %v310
    %950 = vmatprep.subr.mxu0 %v317
    %951 = vmatpush1.msra.mxu0 %v316
    %952 = vmatprep.subr.mxu0 %v323
    %953 = vmatpush1.msra.mxu0 %v322
    %954 = vmatprep.subr.mxu0 %v329
    %955 = vmatpush1.msra.mxu0 %v328
    %956 = vmatprep.subr.mxu0 %v335
    %957 = vmatpush1.msra.mxu0 %v334
    %958 = vmatprep.subr.mxu0 %v341
    %959 = vmatpush1.msra.mxu0 %v340
    %960 = vmatprep.subr.mxu0 %v347
    %961 = vmatpush1.msra.mxu0 %v346
    %962 = vmatprep.subr.mxu0 %v353
    %963 = vmatpush1.msra.mxu0 %v352
    %964 = vmatprep.subr.mxu0 %v359
    %965 = vmatpush1.msra.mxu0 %v358
    %966 = vmatprep.subr.mxu0 %v365
    %967 = vmatpush1.msra.mxu0 %v364
    %968 = vmatprep.subr.mxu0 %v371
    %969 = vmatpush1.msra.mxu0 %v370
    %970 = vmatprep.subr.mxu0 %v377
    %971 = vmatpush1.msra.mxu0 %v376
    %972 = vmatprep.subr.mxu0 %v383
    %973 = vmatpush1.msra.mxu0 %v382
    %974 = vmatprep.subr.mxu0 %v389
    %975 = vmatpush1.msra.mxu0 %v388
    %976 = vmatprep.subr.mxu0 %v395
    %977 = vmatpush1.msra.mxu0 %v394
    %978 = vmatprep.subr.mxu0 %v401
    %979 = vmatpush1.msra.mxu0 %v400
    %980 = vmatprep.subr.mxu0 %v407
    %981 = vmatpush1.msra.mxu0 %v406
    %982 = vmatprep.subr.mxu0 %v413
    %983 = vmatpush1.msra.mxu0 %v412
    %984 = vmatprep.subr.mxu0 %v419
    %985 = vmatpush1.msra.mxu0 %v418
    %986 = vmatprep.subr.mxu0 %v425
    %987 = vmatpush1.msra.mxu0 %v424
    %988 = vmatprep.mubr.f32.mxu0 0.0
    %989 = vmatmul.mubr.f32.gmra.mrb[0].mxu0 0.0
    %v990 = vpop.f32.mrb[0].mxu0
    %v991 = vadd.f32 %v771, %v990
    %v992 = vpop.f32.mrb[0].mxu0
    %v993 = vadd.f32 %v775, %v992
    %994 = vdwg.mxu0
    %v995 = vadd.f32 %v605, %v849
    %v996 = vadd.f32 %v607, %v851
    %v997 = vxor.u32 %v995, 2147483648
    %v998 = vxor.u32 %v996, 2147483648
    %v999 = vmul.f32 %v997, 1.442695
    %v1000 = vpow.pop %v999
    %v1001 = vmul.f32 %v998, 1.442695
    %v1002 = vpow.pop %v1001
    %v1003 = vadd.f32 %v1000, 1.0
    %v1004 = vadd.f32 %v1002, 1.0
    %v1005 = vrcp.pop %v1003
    %v1006 = vmul.f32 1.0, %v1005
    %v1007 = vrcp.pop %v1004
    %v1008 = vmul.f32 1.0, %v1007
    %v1009 = vadd.f32 %v676, %v920
    %v1010 = vadd.f32 %v678, %v922
    %v1011 = vxor.u32 %v1009, 2147483648
    %v1012 = vxor.u32 %v1010, 2147483648
    %v1013 = vmul.f32 %v1011, 1.442695
    %v1014 = vpow.pop %v1013
    %v1015 = vmul.f32 %v1012, 1.442695
    %v1016 = vpow.pop %v1015
    %v1017 = vadd.f32 %v1014, 1.0
    %v1018 = vadd.f32 %v1016, 1.0
    %v1019 = vrcp.pop %v1017
    %v1020 = vmul.f32 1.0, %v1019
    %v1021 = vrcp.pop %v1018
    %v1022 = vmul.f32 1.0, %v1021
    %v1023 = vmul.f32 %v1006, %v991
    %v1024 = vmul.f32 %v1008, %v993
    %v1025 = vadd.f32 %v747, %v1023
    %v1026 = vadd.f32 %v749, %v1024
    %v1027 = vtanh.pop %v1025
    %v1028 = vtanh.pop %v1026
    %v1029 = vsub.f32 1.0, %v1020
    %v1030 = vsub.f32 1.0, %v1022
    %v1031 = vmul.f32 %v1029, %v1027
    %v1032 = vmul.f32 %v1030, %v1028
    %v1033 = vmul.f32 %v1020, 0.0
    %v1034 = vmul.f32 %v1022, 0.0
    %v1035 = vadd.f32 %v1031, %v1033
    %v1036 = vadd.f32 %v1032, %v1034
    %v1038 = vlaneseq
    %v1039 = vshrl.u32 %v1038, 7
    %v1040 = vsub.s32 0, %v1039
    %v1041 = vrot.slane %v492, %v1040
    %v1042 = vlaneseq
    %v1043 = vshrl.u32 %v1042, 7
    %v1044 = vsub.s32 1, %v1043
    %v1045 = vrot.slane %v492, %v1044
    %1048 = vmatprep.subr.mxu0 %v429
    %1049 = vmatpush1.msra.mxu0 %v428
    %1050 = vmatprep.subr.mxu0 %v431
    %1051 = vmatpush1.msra.mxu0 %v430
    %1052 = vmatprep.subr.mxu0 %v433
    %1053 = vmatpush1.msra.mxu0 %v432
    %1054 = vmatprep.subr.mxu0 %v435
    %1055 = vmatpush1.msra.mxu0 %v434
    %1056 = vmatprep.subr.mxu0 %v437
    %1057 = vmatpush1.msra.mxu0 %v436
    %1058 = vmatprep.subr.mxu0 %v439
    %1059 = vmatpush1.msra.mxu0 %v438
    %1060 = vmatprep.subr.mxu0 %v441
    %1061 = vmatpush1.msra.mxu0 %v440
    %1062 = vmatprep.subr.mxu0 %v443
    %1063 = vmatpush1.msra.mxu0 %v442
    %1064 = vmatprep.subr.mxu0 %v445
    %1065 = vmatpush1.msra.mxu0 %v444
    %1066 = vmatprep.subr.mxu0 %v447
    %1067 = vmatpush1.msra.mxu0 %v446
    %1068 = vmatprep.subr.mxu0 %v449
    %1069 = vmatpush1.msra.mxu0 %v448
    %1070 = vmatprep.subr.mxu0 %v451
    %1071 = vmatpush1.msra.mxu0 %v450
    %1072 = vmatprep.subr.mxu0 %v453
    %1073 = vmatpush1.msra.mxu0 %v452
    %1074 = vmatprep.subr.mxu0 %v455
    %1075 = vmatpush1.msra.mxu0 %v454
    %1076 = vmatprep.subr.mxu0 %v457
    %1077 = vmatpush1.msra.mxu0 %v456
    %1078 = vmatprep.subr.mxu0 %v459
    %1079 = vmatpush1.msra.mxu0 %v458
    %1080 = vmatprep.subr.mxu0 %v461
    %1081 = vmatpush1.msra.mxu0 %v460
    %1082 = vmatprep.subr.mxu0 %v463
    %1083 = vmatpush1.msra.mxu0 %v462
    %1084 = vmatprep.subr.mxu0 %v465
    %1085 = vmatpush1.msra.mxu0 %v464
    %1086 = vmatprep.subr.mxu0 %v467
    %1087 = vmatpush1.msra.mxu0 %v466
    %1088 = vmatprep.subr.mxu0 %v469
    %1089 = vmatpush1.msra.mxu0 %v468
    %1090 = vmatprep.subr.mxu0 %v471
    %1091 = vmatpush1.msra.mxu0 %v470
    %1092 = vmatprep.subr.mxu0 %v473
    %1093 = vmatpush1.msra.mxu0 %v472
    %1094 = vmatprep.subr.mxu0 %v475
    %1095 = vmatpush1.msra.mxu0 %v474
    %1096 = vmatprep.subr.mxu0 %v477
    %1097 = vmatpush1.msra.mxu0 %v476
    %1098 = vmatprep.subr.mxu0 %v479
    %1099 = vmatpush1.msra.mxu0 %v478
    %1100 = vmatprep.subr.mxu0 %v481
    %1101 = vmatpush1.msra.mxu0 %v480
    %1102 = vmatprep.subr.mxu0 %v483
    %1103 = vmatpush1.msra.mxu0 %v482
    %1104 = vmatprep.subr.mxu0 %v485
    %1105 = vmatpush1.msra.mxu0 %v484
    %1106 = vmatprep.subr.mxu0 %v487
    %1107 = vmatpush1.msra.mxu0 %v486
    %1108 = vmatprep.subr.mxu0 %v489
    %1109 = vmatpush1.msra.mxu0 %v488
    %1110 = vmatprep.subr.mxu0 %v491
    %1111 = vmatpush1.msra.mxu0 %v490
    %1112 = vmatprep.mubr.f32.mxu0 %v1036
    %1113 = vmatmul.mubr.f32.gmra.mrb[0].mxu0 %v1035
    %v1114 = vpop.f32.mrb[0].mxu0
    %v1115 = vadd.f32 %v1041, %v1114
    %v1116 = vpop.f32.mrb[0].mxu0
    %v1117 = vadd.f32 %v1045, %v1116
    %1118 = vdwg.mxu0
    %s1119 = scalar_lea.vmem %s0, 4
    %v1120 = vld [vmem:[%s1119] sm:$0xf]
    %v1121 = vmul.f32 %v1115, 0.1
    %v1122 = vmul.f32 %v1117, 0.1
    %v1123 = vmul.f32 %v1120, 0.9
    %v1126 = vunpack.c.l.s4 1983009808
    %v1127 = vunpack.c.0.s8 %v1126
    %v1128 = vlaneseq
    %v1129 = vshrl.u32 %v1128, 7
    %v1130 = vsub.s32 %v1127, %v1129
    %v1131 = vrot.slane %v1123, %v1130
    %v1132 = vcombine.high %v1131, %v1131
    %v1135 = vadd.f32 %v1121, %v1131
    %v1136 = vadd.f32 %v1122, %v1132
    %1137 = vmatprep.subr.mxu0 %v43
    %1138 = vmatpush1.msra.mxu0 %v42
    %1139 = vmatprep.subr.mxu0 %v49
    %1140 = vmatpush1.msra.mxu0 %v48
    %1141 = vmatprep.subr.mxu0 %v55
    %1142 = vmatpush1.msra.mxu0 %v54
    %1143 = vmatprep.subr.mxu0 %v61
    %1144 = vmatpush1.msra.mxu0 %v60
    %1145 = vmatprep.subr.mxu0 %v67
    %1146 = vmatpush1.msra.mxu0 %v66
    %1147 = vmatprep.subr.mxu0 %v73
    %1148 = vmatpush1.msra.mxu0 %v72
    %1149 = vmatprep.subr.mxu0 %v79
    %1150 = vmatpush1.msra.mxu0 %v78
    %1151 = vmatprep.subr.mxu0 %v85
    %1152 = vmatpush1.msra.mxu0 %v84
    %1153 = vmatprep.subr.mxu0 %v91
    %1154 = vmatpush1.msra.mxu0 %v90
    %1155 = vmatprep.subr.mxu0 %v97
    %1156 = vmatpush1.msra.mxu0 %v96
    %1157 = vmatprep.subr.mxu0 %v103
    %1158 = vmatpush1.msra.mxu0 %v102
    %1159 = vmatprep.subr.mxu0 %v109
    %1160 = vmatpush1.msra.mxu0 %v108
    %1161 = vmatprep.subr.mxu0 %v115
    %1162 = vmatpush1.msra.mxu0 %v114
    %1163 = vmatprep.subr.mxu0 %v121
    %1164 = vmatpush1.msra.mxu0 %v120
    %1165 = vmatprep.subr.mxu0 %v127
    %1166 = vmatpush1.msra.mxu0 %v126
    %1167 = vmatprep.subr.mxu0 %v133
    %1168 = vmatpush1.msra.mxu0 %v132
    %1169 = vmatprep.subr.mxu0 %v139
    %1170 = vmatpush1.msra.mxu0 %v138
    %1171 = vmatprep.subr.mxu0 %v145
    %1172 = vmatpush1.msra.mxu0 %v144
    %1173 = vmatprep.subr.mxu0 %v151
    %1174 = vmatpush1.msra.mxu0 %v150
    %1175 = vmatprep.subr.mxu0 %v157
    %1176 = vmatpush1.msra.mxu0 %v156
    %1177 = vmatprep.subr.mxu0 %v163
    %1178 = vmatpush1.msra.mxu0 %v162
    %1179 = vmatprep.subr.mxu0 %v169
    %1180 = vmatpush1.msra.mxu0 %v168
    %1181 = vmatprep.subr.mxu0 %v175
    %1182 = vmatpush1.msra.mxu0 %v174
    %1183 = vmatprep.subr.mxu0 %v181
    %1184 = vmatpush1.msra.mxu0 %v180
    %1185 = vmatprep.subr.mxu0 %v187
    %1186 = vmatpush1.msra.mxu0 %v186
    %1187 = vmatprep.subr.mxu0 %v193
    %1188 = vmatpush1.msra.mxu0 %v192
    %1189 = vmatprep.subr.mxu0 %v199
    %1190 = vmatpush1.msra.mxu0 %v198
    %1191 = vmatprep.subr.mxu0 %v205
    %1192 = vmatpush1.msra.mxu0 %v204
    %1193 = vmatprep.subr.mxu0 %v211
    %1194 = vmatpush1.msra.mxu0 %v210
    %1195 = vmatprep.subr.mxu0 %v217
    %1196 = vmatpush1.msra.mxu0 %v216
    %1197 = vmatprep.subr.mxu0 %v223
    %1198 = vmatpush1.msra.mxu0 %v222
    %1199 = vmatprep.subr.mxu0 %v229
    %1200 = vmatpush1.msra.mxu0 %v228
    %1201 = vmatprep.mubr.f32.mxu0 %v1136
    %1202 = vmatmul.mubr.f32.gmra.mrb[0].mxu0 %v1135
    %v1203 = vpop.f32.mrb[0].mxu0
    %v1204 = vadd.f32 %v500, %v1203
    %v1205 = vpop.f32.mrb[0].mxu0
    %v1206 = vadd.f32 %v504, %v1205
    %1207 = vdwg.mxu0
    %1208 = vmatprep.subr.mxu0 %v45
    %1209 = vmatpush1.msra.mxu0 %v44
    %1210 = vmatprep.subr.mxu0 %v51
    %1211 = vmatpush1.msra.mxu0 %v50
    %1212 = vmatprep.subr.mxu0 %v57
    %1213 = vmatpush1.msra.mxu0 %v56
    %1214 = vmatprep.subr.mxu0 %v63
    %1215 = vmatpush1.msra.mxu0 %v62
    %1216 = vmatprep.subr.mxu0 %v69
    %1217 = vmatpush1.msra.mxu0 %v68
    %1218 = vmatprep.subr.mxu0 %v75
    %1219 = vmatpush1.msra.mxu0 %v74
    %1220 = vmatprep.subr.mxu0 %v81
    %1221 = vmatpush1.msra.mxu0 %v80
    %1222 = vmatprep.subr.mxu0 %v87
    %1223 = vmatpush1.msra.mxu0 %v86
    %1224 = vmatprep.subr.mxu0 %v93
    %1225 = vmatpush1.msra.mxu0 %v92
    %1226 = vmatprep.subr.mxu0 %v99
    %1227 = vmatpush1.msra.mxu0 %v98
    %1228 = vmatprep.subr.mxu0 %v105
    %1229 = vmatpush1.msra.mxu0 %v104
    %1230 = vmatprep.subr.mxu0 %v111
    %1231 = vmatpush1.msra.mxu0 %v110
    %1232 = vmatprep.subr.mxu0 %v117
    %1233 = vmatpush1.msra.mxu0 %v116
    %1234 = vmatprep.subr.mxu0 %v123
    %1235 = vmatpush1.msra.mxu0 %v122
    %1236 = vmatprep.subr.mxu0 %v129
    %1237 = vmatpush1.msra.mxu0 %v128
    %1238 = vmatprep.subr.mxu0 %v135
    %1239 = vmatpush1.msra.mxu0 %v134
    %1240 = vmatprep.subr.mxu0 %v141
    %1241 = vmatpush1.msra.mxu0 %v140
    %1242 = vmatprep.subr.mxu0 %v147
    %1243 = vmatpush1.msra.mxu0 %v146
    %1244 = vmatprep.subr.mxu0 %v153
    %1245 = vmatpush1.msra.mxu0 %v152
    %1246 = vmatprep.subr.mxu0 %v159
    %1247 = vmatpush1.msra.mxu0 %v158
    %1248 = vmatprep.subr.mxu0 %v165
    %1249 = vmatpush1.msra.mxu0 %v164
    %1250 = vmatprep.subr.mxu0 %v171
    %1251 = vmatpush1.msra.mxu0 %v170
    %1252 = vmatprep.subr.mxu0 %v177
    %1253 = vmatpush1.msra.mxu0 %v176
    %1254 = vmatprep.subr.mxu0 %v183
    %1255 = vmatpush1.msra.mxu0 %v182
    %1256 = vmatprep.subr.mxu0 %v189
    %1257 = vmatpush1.msra.mxu0 %v188
    %1258 = vmatprep.subr.mxu0 %v195
    %1259 = vmatpush1.msra.mxu0 %v194
    %1260 = vmatprep.subr.mxu0 %v201
    %1261 = vmatpush1.msra.mxu0 %v200
    %1262 = vmatprep.subr.mxu0 %v207
    %1263 = vmatpush1.msra.mxu0 %v206
    %1264 = vmatprep.subr.mxu0 %v213
    %1265 = vmatpush1.msra.mxu0 %v212
    %1266 = vmatprep.subr.mxu0 %v219
    %1267 = vmatpush1.msra.mxu0 %v218
    %1268 = vmatprep.subr.mxu0 %v225
    %1269 = vmatpush1.msra.mxu0 %v224
    %1270 = vmatprep.subr.mxu0 %v231
    %1271 = vmatpush1.msra.mxu0 %v230
    %1272 = vmatprep.mubr.f32.mxu0 %v1136
    %1273 = vmatmul.mubr.f32.gmra.mrb[0].mxu0 %v1135
    %v1274 = vpop.f32.mrb[0].mxu0
    %v1275 = vadd.f32 %v508, %v1274
    %v1276 = vpop.f32.mrb[0].mxu0
    %v1277 = vadd.f32 %v512, %v1276
    %1278 = vdwg.mxu0
    %1279 = vmatprep.subr.mxu0 %v47
    %1280 = vmatpush1.msra.mxu0 %v46
    %1281 = vmatprep.subr.mxu0 %v53
    %1282 = vmatpush1.msra.mxu0 %v52
    %1283 = vmatprep.subr.mxu0 %v59
    %1284 = vmatpush1.msra.mxu0 %v58
    %1285 = vmatprep.subr.mxu0 %v65
    %1286 = vmatpush1.msra.mxu0 %v64
    %1287 = vmatprep.subr.mxu0 %v71
    %1288 = vmatpush1.msra.mxu0 %v70
    %1289 = vmatprep.subr.mxu0 %v77
    %1290 = vmatpush1.msra.mxu0 %v76
    %1291 = vmatprep.subr.mxu0 %v83
    %1292 = vmatpush1.msra.mxu0 %v82
    %1293 = vmatprep.subr.mxu0 %v89
    %1294 = vmatpush1.msra.mxu0 %v88
    %1295 = vmatprep.subr.mxu0 %v95
    %1296 = vmatpush1.msra.mxu0 %v94
    %1297 = vmatprep.subr.mxu0 %v101
    %1298 = vmatpush1.msra.mxu0 %v100
    %1299 = vmatprep.subr.mxu0 %v107
    %1300 = vmatpush1.msra.mxu0 %v106
    %1301 = vmatprep.subr.mxu0 %v113
    %1302 = vmatpush1.msra.mxu0 %v112
    %1303 = vmatprep.subr.mxu0 %v119
    %1304 = vmatpush1.msra.mxu0 %v118
    %1305 = vmatprep.subr.mxu0 %v125
    %1306 = vmatpush1.msra.mxu0 %v124
    %1307 = vmatprep.subr.mxu0 %v131
    %1308 = vmatpush1.msra.mxu0 %v130
    %1309 = vmatprep.subr.mxu0 %v137
    %1310 = vmatpush1.msra.mxu0 %v136
    %1311 = vmatprep.subr.mxu0 %v143
    %1312 = vmatpush1.msra.mxu0 %v142
    %1313 = vmatprep.subr.mxu0 %v149
    %1314 = vmatpush1.msra.mxu0 %v148
    %1315 = vmatprep.subr.mxu0 %v155
    %1316 = vmatpush1.msra.mxu0 %v154
    %1317 = vmatprep.subr.mxu0 %v161
    %1318 = vmatpush1.msra.mxu0 %v160
    %1319 = vmatprep.subr.mxu0 %v167
    %1320 = vmatpush1.msra.mxu0 %v166
    %1321 = vmatprep.subr.mxu0 %v173
    %1322 = vmatpush1.msra.mxu0 %v172
    %1323 = vmatprep.subr.mxu0 %v179
    %1324 = vmatpush1.msra.mxu0 %v178
    %1325 = vmatprep.subr.mxu0 %v185
    %1326 = vmatpush1.msra.mxu0 %v184
    %1327 = vmatprep.subr.mxu0 %v191
    %1328 = vmatpush1.msra.mxu0 %v190
    %1329 = vmatprep.subr.mxu0 %v197
    %1330 = vmatpush1.msra.mxu0 %v196
    %1331 = vmatprep.subr.mxu0 %v203
    %1332 = vmatpush1.msra.mxu0 %v202
    %1333 = vmatprep.subr.mxu0 %v209
    %1334 = vmatpush1.msra.mxu0 %v208
    %1335 = vmatprep.subr.mxu0 %v215
    %1336 = vmatpush1.msra.mxu0 %v214
    %1337 = vmatprep.subr.mxu0 %v221
    %1338 = vmatpush1.msra.mxu0 %v220
    %1339 = vmatprep.subr.mxu0 %v227
    %1340 = vmatpush1.msra.mxu0 %v226
    %1341 = vmatprep.subr.mxu0 %v233
    %1342 = vmatpush1.msra.mxu0 %v232
    %1343 = vmatprep.mubr.f32.mxu0 %v1136
    %1344 = vmatmul.mubr.f32.gmra.mrb[0].mxu0 %v1135
    %v1345 = vpop.f32.mrb[0].mxu0
    %v1346 = vadd.f32 %v516, %v1345
    %v1347 = vpop.f32.mrb[0].mxu0
    %v1348 = vadd.f32 %v520, %v1347
    %1349 = vdwg.mxu0
    %1350 = vmatprep.subr.mxu0 %v235
    %1351 = vmatpush1.msra.mxu0 %v234
    %1352 = vmatprep.subr.mxu0 %v241
    %1353 = vmatpush1.msra.mxu0 %v240
    %1354 = vmatprep.subr.mxu0 %v247
    %1355 = vmatpush1.msra.mxu0 %v246
    %1356 = vmatprep.subr.mxu0 %v253
    %1357 = vmatpush1.msra.mxu0 %v252
    %1358 = vmatprep.subr.mxu0 %v259
    %1359 = vmatpush1.msra.mxu0 %v258
    %1360 = vmatprep.subr.mxu0 %v265
    %1361 = vmatpush1.msra.mxu0 %v264
    %1362 = vmatprep.subr.mxu0 %v271
    %1363 = vmatpush1.msra.mxu0 %v270
    %1364 = vmatprep.subr.mxu0 %v277
    %1365 = vmatpush1.msra.mxu0 %v276
    %1366 = vmatprep.subr.mxu0 %v283
    %1367 = vmatpush1.msra.mxu0 %v282
    %1368 = vmatprep.subr.mxu0 %v289
    %1369 = vmatpush1.msra.mxu0 %v288
    %1370 = vmatprep.subr.mxu0 %v295
    %1371 = vmatpush1.msra.mxu0 %v294
    %1372 = vmatprep.subr.mxu0 %v301
    %1373 = vmatpush1.msra.mxu0 %v300
    %1374 = vmatprep.subr.mxu0 %v307
    %1375 = vmatpush1.msra.mxu0 %v306
    %1376 = vmatprep.subr.mxu0 %v313
    %1377 = vmatpush1.msra.mxu0 %v312
    %1378 = vmatprep.subr.mxu0 %v319
    %1379 = vmatpush1.msra.mxu0 %v318
    %1380 = vmatprep.subr.mxu0 %v325
    %1381 = vmatpush1.msra.mxu0 %v324
    %1382 = vmatprep.subr.mxu0 %v331
    %1383 = vmatpush1.msra.mxu0 %v330
    %1384 = vmatprep.subr.mxu0 %v337
    %1385 = vmatpush1.msra.mxu0 %v336
    %1386 = vmatprep.subr.mxu0 %v343
    %1387 = vmatpush1.msra.mxu0 %v342
    %1388 = vmatprep.subr.mxu0 %v349
    %1389 = vmatpush1.msra.mxu0 %v348
    %1390 = vmatprep.subr.mxu0 %v355
    %1391 = vmatpush1.msra.mxu0 %v354
    %1392 = vmatprep.subr.mxu0 %v361
    %1393 = vmatpush1.msra.mxu0 %v360
    %1394 = vmatprep.subr.mxu0 %v367
    %1395 = vmatpush1.msra.mxu0 %v366
    %1396 = vmatprep.subr.mxu0 %v373
    %1397 = vmatpush1.msra.mxu0 %v372
    %1398 = vmatprep.subr.mxu0 %v379
    %1399 = vmatpush1.msra.mxu0 %v378
    %1400 = vmatprep.subr.mxu0 %v385
    %1401 = vmatpush1.msra.mxu0 %v384
    %1402 = vmatprep.subr.mxu0 %v391
    %1403 = vmatpush1.msra.mxu0 %v390
    %1404 = vmatprep.subr.mxu0 %v397
    %1405 = vmatpush1.msra.mxu0 %v396
    %1406 = vmatprep.subr.mxu0 %v403
    %1407 = vmatpush1.msra.mxu0 %v402
    %1408 = vmatprep.subr.mxu0 %v409
    %1409 = vmatpush1.msra.mxu0 %v408
    %1410 = vmatprep.subr.mxu0 %v415
    %1411 = vmatpush1.msra.mxu0 %v414
    %1412 = vmatprep.subr.mxu0 %v421
    %1413 = vmatpush1.msra.mxu0 %v420
    %1414 = vmatprep.mubr.f32.mxu0 %v1036
    %1415 = vmatmul.mubr.f32.gmra.mrb[0].mxu0 %v1035
    %v1416 = vpop.f32.mrb[0].mxu0
    %v1417 = vadd.f32 %v755, %v1416
    %v1418 = vpop.f32.mrb[0].mxu0
    %v1419 = vadd.f32 %v759, %v1418
    %1420 = vdwg.mxu0
    %1421 = vmatprep.subr.mxu0 %v237
    %1422 = vmatpush1.msra.mxu0 %v236
    %1423 = vmatprep.subr.mxu0 %v243
    %1424 = vmatpush1.msra.mxu0 %v242
    %1425 = vmatprep.subr.mxu0 %v249
    %1426 = vmatpush1.msra.mxu0 %v248
    %1427 = vmatprep.subr.mxu0 %v255
    %1428 = vmatpush1.msra.mxu0 %v254
    %1429 = vmatprep.subr.mxu0 %v261
    %1430 = vmatpush1.msra.mxu0 %v260
    %1431 = vmatprep.subr.mxu0 %v267
    %1432 = vmatpush1.msra.mxu0 %v266
    %1433 = vmatprep.subr.mxu0 %v273
    %1434 = vmatpush1.msra.mxu0 %v272
    %1435 = vmatprep.subr.mxu0 %v279
    %1436 = vmatpush1.msra.mxu0 %v278
    %1437 = vmatprep.subr.mxu0 %v285
    %1438 = vmatpush1.msra.mxu0 %v284
    %1439 = vmatprep.subr.mxu0 %v291
    %1440 = vmatpush1.msra.mxu0 %v290
    %1441 = vmatprep.subr.mxu0 %v297
    %1442 = vmatpush1.msra.mxu0 %v296
    %1443 = vmatprep.subr.mxu0 %v303
    %1444 = vmatpush1.msra.mxu0 %v302
    %1445 = vmatprep.subr.mxu0 %v309
    %1446 = vmatpush1.msra.mxu0 %v308
    %1447 = vmatprep.subr.mxu0 %v315
    %1448 = vmatpush1.msra.mxu0 %v314
    %1449 = vmatprep.subr.mxu0 %v321
    %1450 = vmatpush1.msra.mxu0 %v320
    %1451 = vmatprep.subr.mxu0 %v327
    %1452 = vmatpush1.msra.mxu0 %v326
    %1453 = vmatprep.subr.mxu0 %v333
    %1454 = vmatpush1.msra.mxu0 %v332
    %1455 = vmatprep.subr.mxu0 %v339
    %1456 = vmatpush1.msra.mxu0 %v338
    %1457 = vmatprep.subr.mxu0 %v345
    %1458 = vmatpush1.msra.mxu0 %v344
    %1459 = vmatprep.subr.mxu0 %v351
    %1460 = vmatpush1.msra.mxu0 %v350
    %1461 = vmatprep.subr.mxu0 %v357
    %1462 = vmatpush1.msra.mxu0 %v356
    %1463 = vmatprep.subr.mxu0 %v363
    %1464 = vmatpush1.msra.mxu0 %v362
    %1465 = vmatprep.subr.mxu0 %v369
    %1466 = vmatpush1.msra.mxu0 %v368
    %1467 = vmatprep.subr.mxu0 %v375
    %1468 = vmatpush1.msra.mxu0 %v374
    %1469 = vmatprep.subr.mxu0 %v381
    %1470 = vmatpush1.msra.mxu0 %v380
    %1471 = vmatprep.subr.mxu0 %v387
    %1472 = vmatpush1.msra.mxu0 %v386
    %1473 = vmatprep.subr.mxu0 %v393
    %1474 = vmatpush1.msra.mxu0 %v392
    %1475 = vmatprep.subr.mxu0 %v399
    %1476 = vmatpush1.msra.mxu0 %v398
    %1477 = vmatprep.subr.mxu0 %v405
    %1478 = vmatpush1.msra.mxu0 %v404
    %1479 = vmatprep.subr.mxu0 %v411
    %1480 = vmatpush1.msra.mxu0 %v410
    %1481 = vmatprep.subr.mxu0 %v417
    %1482 = vmatpush1.msra.mxu0 %v416
    %1483 = vmatprep.subr.mxu0 %v423
    %1484 = vmatpush1.msra.mxu0 %v422
    %1485 = vmatprep.mubr.f32.mxu0 %v1036
    %1486 = vmatmul.mubr.f32.gmra.mrb[0].mxu0 %v1035
    %v1487 = vpop.f32.mrb[0].mxu0
    %v1488 = vadd.f32 %v763, %v1487
    %v1489 = vpop.f32.mrb[0].mxu0
    %v1490 = vadd.f32 %v767, %v1489
    %1491 = vdwg.mxu0
    %1492 = vmatprep.subr.mxu0 %v239
    %1493 = vmatpush1.msra.mxu0 %v238
    %1494 = vmatprep.subr.mxu0 %v245
    %1495 = vmatpush1.msra.mxu0 %v244
    %1496 = vmatprep.subr.mxu0 %v251
    %1497 = vmatpush1.msra.mxu0 %v250
    %1498 = vmatprep.subr.mxu0 %v257
    %1499 = vmatpush1.msra.mxu0 %v256
    %1500 = vmatprep.subr.mxu0 %v263
    %1501 = vmatpush1.msra.mxu0 %v262
    %1502 = vmatprep.subr.mxu0 %v269
    %1503 = vmatpush1.msra.mxu0 %v268
    %1504 = vmatprep.subr.mxu0 %v275
    %1505 = vmatpush1.msra.mxu0 %v274
    %1506 = vmatprep.subr.mxu0 %v281
    %1507 = vmatpush1.msra.mxu0 %v280
    %1508 = vmatprep.subr.mxu0 %v287
    %1509 = vmatpush1.msra.mxu0 %v286
    %1510 = vmatprep.subr.mxu0 %v293
    %1511 = vmatpush1.msra.mxu0 %v292
    %1512 = vmatprep.subr.mxu0 %v299
    %1513 = vmatpush1.msra.mxu0 %v298
    %1514 = vmatprep.subr.mxu0 %v305
    %1515 = vmatpush1.msra.mxu0 %v304
    %1516 = vmatprep.subr.mxu0 %v311
    %1517 = vmatpush1.msra.mxu0 %v310
    %1518 = vmatprep.subr.mxu0 %v317
    %1519 = vmatpush1.msra.mxu0 %v316
    %1520 = vmatprep.subr.mxu0 %v323
    %1521 = vmatpush1.msra.mxu0 %v322
    %1522 = vmatprep.subr.mxu0 %v329
    %1523 = vmatpush1.msra.mxu0 %v328
    %1524 = vmatprep.subr.mxu0 %v335
    %1525 = vmatpush1.msra.mxu0 %v334
    %1526 = vmatprep.subr.mxu0 %v341
    %1527 = vmatpush1.msra.mxu0 %v340
    %1528 = vmatprep.subr.mxu0 %v347
    %1529 = vmatpush1.msra.mxu0 %v346
    %1530 = vmatprep.subr.mxu0 %v353
    %1531 = vmatpush1.msra.mxu0 %v352
    %1532 = vmatprep.subr.mxu0 %v359
    %1533 = vmatpush1.msra.mxu0 %v358
    %1534 = vmatprep.subr.mxu0 %v365
    %1535 = vmatpush1.msra.mxu0 %v364
    %1536 = vmatprep.subr.mxu0 %v371
    %1537 = vmatpush1.msra.mxu0 %v370
    %1538 = vmatprep.subr.mxu0 %v377
    %1539 = vmatpush1.msra.mxu0 %v376
    %1540 = vmatprep.subr.mxu0 %v383
    %1541 = vmatpush1.msra.mxu0 %v382
    %1542 = vmatprep.subr.mxu0 %v389
    %1543 = vmatpush1.msra.mxu0 %v388
    %1544 = vmatprep.subr.mxu0 %v395
    %1545 = vmatpush1.msra.mxu0 %v394
    %1546 = vmatprep.subr.mxu0 %v401
    %1547 = vmatpush1.msra.mxu0 %v400
    %1548 = vmatprep.subr.mxu0 %v407
    %1549 = vmatpush1.msra.mxu0 %v406
    %1550 = vmatprep.subr.mxu0 %v413
    %1551 = vmatpush1.msra.mxu0 %v412
    %1552 = vmatprep.subr.mxu0 %v419
    %1553 = vmatpush1.msra.mxu0 %v418
    %1554 = vmatprep.subr.mxu0 %v425
    %1555 = vmatpush1.msra.mxu0 %v424
    %1556 = vmatprep.mubr.f32.mxu0 %v1036
    %1557 = vmatmul.mubr.f32.gmra.mrb[0].mxu0 %v1035
    %v1558 = vpop.f32.mrb[0].mxu0
    %v1559 = vadd.f32 %v771, %v1558
    %v1560 = vpop.f32.mrb[0].mxu0
    %v1561 = vadd.f32 %v775, %v1560
    %1562 = vdwg.mxu0
    %v1563 = vadd.f32 %v1204, %v1417
    %v1564 = vadd.f32 %v1206, %v1419
    %v1565 = vxor.u32 %v1563, 2147483648
    %v1566 = vxor.u32 %v1564, 2147483648
    %v1567 = vmul.f32 %v1565, 1.442695
    %v1568 = vpow.pop %v1567
    %v1569 = vmul.f32 %v1566, 1.442695
    %v1570 = vpow.pop %v1569
    %v1571 = vadd.f32 %v1568, 1.0
    %v1572 = vadd.f32 %v1570, 1.0
    %v1573 = vrcp.pop %v1571
    %v1574 = vmul.f32 1.0, %v1573
    %v1575 = vrcp.pop %v1572
    %v1576 = vmul.f32 1.0, %v1575
    %v1577 = vadd.f32 %v1275, %v1488
    %v1578 = vadd.f32 %v1277, %v1490
    %v1579 = vxor.u32 %v1577, 2147483648
    %v1580 = vxor.u32 %v1578, 2147483648
    %v1581 = vmul.f32 %v1579, 1.442695
    %v1582 = vpow.pop %v1581
    %v1583 = vmul.f32 %v1580, 1.442695
    %v1584 = vpow.pop %v1583
    %v1585 = vadd.f32 %v1582, 1.0
    %v1586 = vadd.f32 %v1584, 1.0
    %v1587 = vrcp.pop %v1585
    %v1588 = vmul.f32 1.0, %v1587
    %v1589 = vrcp.pop %v1586
    %v1590 = vmul.f32 1.0, %v1589
    %v1591 = vmul.f32 %v1574, %v1559
    %v1592 = vmul.f32 %v1576, %v1561
    %v1593 = vadd.f32 %v1346, %v1591
    %v1594 = vadd.f32 %v1348, %v1592
    %v1595 = vtanh.pop %v1593
    %v1596 = vtanh.pop %v1594
    %v1597 = vsub.f32 1.0, %v1588
    %v1598 = vsub.f32 1.0, %v1590
    %v1599 = vmul.f32 %v1597, %v1595
    %v1600 = vmul.f32 %v1598, %v1596
    %v1601 = vmul.f32 %v1588, %v1035
    %v1602 = vmul.f32 %v1590, %v1036
    %v1603 = vadd.f32 %v1599, %v1601
    %v1604 = vadd.f32 %v1600, %v1602
    %1605 = vmatprep.subr.mxu0 %v429
    %1606 = vmatpush1.msra.mxu0 %v428
    %1607 = vmatprep.subr.mxu0 %v431
    %1608 = vmatpush1.msra.mxu0 %v430
    %1609 = vmatprep.subr.mxu0 %v433
    %1610 = vmatpush1.msra.mxu0 %v432
    %1611 = vmatprep.subr.mxu0 %v435
    %1612 = vmatpush1.msra.mxu0 %v434
    %1613 = vmatprep.subr.mxu0 %v437
    %1614 = vmatpush1.msra.mxu0 %v436
    %1615 = vmatprep.subr.mxu0 %v439
    %1616 = vmatpush1.msra.mxu0 %v438
    %1617 = vmatprep.subr.mxu0 %v441
    %1618 = vmatpush1.msra.mxu0 %v440
    %1619 = vmatprep.subr.mxu0 %v443
    %1620 = vmatpush1.msra.mxu0 %v442
    %1621 = vmatprep.subr.mxu0 %v445
    %1622 = vmatpush1.msra.mxu0 %v444
    %1623 = vmatprep.subr.mxu0 %v447
    %1624 = vmatpush1.msra.mxu0 %v446
    %1625 = vmatprep.subr.mxu0 %v449
    %1626 = vmatpush1.msra.mxu0 %v448
    %1627 = vmatprep.subr.mxu0 %v451
    %1628 = vmatpush1.msra.mxu0 %v450
    %1629 = vmatprep.subr.mxu0 %v453
    %1630 = vmatpush1.msra.mxu0 %v452
    %1631 = vmatprep.subr.mxu0 %v455
    %1632 = vmatpush1.msra.mxu0 %v454
    %1633 = vmatprep.subr.mxu0 %v457
    %1634 = vmatpush1.msra.mxu0 %v456
    %1635 = vmatprep.subr.mxu0 %v459
    %1636 = vmatpush1.msra.mxu0 %v458
    %1637 = vmatprep.subr.mxu0 %v461
    %1638 = vmatpush1.msra.mxu0 %v460
    %1639 = vmatprep.subr.mxu0 %v463
    %1640 = vmatpush1.msra.mxu0 %v462
    %1641 = vmatprep.subr.mxu0 %v465
    %1642 = vmatpush1.msra.mxu0 %v464
    %1643 = vmatprep.subr.mxu0 %v467
    %1644 = vmatpush1.msra.mxu0 %v466
    %1645 = vmatprep.subr.mxu0 %v469
    %1646 = vmatpush1.msra.mxu0 %v468
    %1647 = vmatprep.subr.mxu0 %v471
    %1648 = vmatpush1.msra.mxu0 %v470
    %1649 = vmatprep.subr.mxu0 %v473
    %1650 = vmatpush1.msra.mxu0 %v472
    %1651 = vmatprep.subr.mxu0 %v475
    %1652 = vmatpush1.msra.mxu0 %v474
    %1653 = vmatprep.subr.mxu0 %v477
    %1654 = vmatpush1.msra.mxu0 %v476
    %1655 = vmatprep.subr.mxu0 %v479
    %1656 = vmatpush1.msra.mxu0 %v478
    %1657 = vmatprep.subr.mxu0 %v481
    %1658 = vmatpush1.msra.mxu0 %v480
    %1659 = vmatprep.subr.mxu0 %v483
    %1660 = vmatpush1.msra.mxu0 %v482
    %1661 = vmatprep.subr.mxu0 %v485
    %1662 = vmatpush1.msra.mxu0 %v484
    %1663 = vmatprep.subr.mxu0 %v487
    %1664 = vmatpush1.msra.mxu0 %v486
    %1665 = vmatprep.subr.mxu0 %v489
    %1666 = vmatpush1.msra.mxu0 %v488
    %1667 = vmatprep.subr.mxu0 %v491
    %1668 = vmatpush1.msra.mxu0 %v490
    %1669 = vmatprep.mubr.f32.mxu0 %v1604
    %1670 = vmatmul.mubr.f32.gmra.mrb[0].mxu0 %v1603
    %v1671 = vpop.f32.mrb[0].mxu0
    %v1672 = vadd.f32 %v1041, %v1671
    %v1673 = vpop.f32.mrb[0].mxu0
    %v1674 = vadd.f32 %v1045, %v1673
    %1675 = vdwg.mxu0
    %s1676 = scalar_lea.vmem %s0, 8
    %v1677 = vld [vmem:[%s1676] sm:$0xf]
    %v1678 = vmul.f32 %v1672, 0.1
    %v1679 = vmul.f32 %v1674, 0.1
    %v1680 = vmul.f32 %v1677, 0.9
    %v1683 = vunpack.c.l.s4 1983009808
    %v1684 = vunpack.c.0.s8 %v1683
    %v1685 = vlaneseq
    %v1686 = vshrl.u32 %v1685, 7
    %v1687 = vsub.s32 %v1684, %v1686
    %v1688 = vrot.slane %v1680, %v1687
    %v1689 = vcombine.high %v1688, %v1688
    %v1692 = vadd.f32 %v1678, %v1688
    %v1693 = vadd.f32 %v1679, %v1689
    %1694 = vmatprep.subr.mxu0 %v43
    %1695 = vmatpush1.msra.mxu0 %v42
    %1696 = vmatprep.subr.mxu0 %v49
    %1697 = vmatpush1.msra.mxu0 %v48
    %1698 = vmatprep.subr.mxu0 %v55
    %1699 = vmatpush1.msra.mxu0 %v54
    %1700 = vmatprep.subr.mxu0 %v61
    %1701 = vmatpush1.msra.mxu0 %v60
    %1702 = vmatprep.subr.mxu0 %v67
    %1703 = vmatpush1.msra.mxu0 %v66
    %1704 = vmatprep.subr.mxu0 %v73
    %1705 = vmatpush1.msra.mxu0 %v72
    %1706 = vmatprep.subr.mxu0 %v79
    %1707 = vmatpush1.msra.mxu0 %v78
    %1708 = vmatprep.subr.mxu0 %v85
    %1709 = vmatpush1.msra.mxu0 %v84
    %1710 = vmatprep.subr.mxu0 %v91
    %1711 = vmatpush1.msra.mxu0 %v90
    %1712 = vmatprep.subr.mxu0 %v97
    %1713 = vmatpush1.msra.mxu0 %v96
    %1714 = vmatprep.subr.mxu0 %v103
    %1715 = vmatpush1.msra.mxu0 %v102
    %1716 = vmatprep.subr.mxu0 %v109
    %1717 = vmatpush1.msra.mxu0 %v108
    %1718 = vmatprep.subr.mxu0 %v115
    %1719 = vmatpush1.msra.mxu0 %v114
    %1720 = vmatprep.subr.mxu0 %v121
    %1721 = vmatpush1.msra.mxu0 %v120
    %1722 = vmatprep.subr.mxu0 %v127
    %1723 = vmatpush1.msra.mxu0 %v126
    %1724 = vmatprep.subr.mxu0 %v133
    %1725 = vmatpush1.msra.mxu0 %v132
    %1726 = vmatprep.subr.mxu0 %v139
    %1727 = vmatpush1.msra.mxu0 %v138
    %1728 = vmatprep.subr.mxu0 %v145
    %1729 = vmatpush1.msra.mxu0 %v144
    %1730 = vmatprep.subr.mxu0 %v151
    %1731 = vmatpush1.msra.mxu0 %v150
    %1732 = vmatprep.subr.mxu0 %v157
    %1733 = vmatpush1.msra.mxu0 %v156
    %1734 = vmatprep.subr.mxu0 %v163
    %1735 = vmatpush1.msra.mxu0 %v162
    %1736 = vmatprep.subr.mxu0 %v169
    %1737 = vmatpush1.msra.mxu0 %v168
    %1738 = vmatprep.subr.mxu0 %v175
    %1739 = vmatpush1.msra.mxu0 %v174
    %1740 = vmatprep.subr.mxu0 %v181
    %1741 = vmatpush1.msra.mxu0 %v180
    %1742 = vmatprep.subr.mxu0 %v187
    %1743 = vmatpush1.msra.mxu0 %v186
    %1744 = vmatprep.subr.mxu0 %v193
    %1745 = vmatpush1.msra.mxu0 %v192
    %1746 = vmatprep.subr.mxu0 %v199
    %1747 = vmatpush1.msra.mxu0 %v198
    %1748 = vmatprep.subr.mxu0 %v205
    %1749 = vmatpush1.msra.mxu0 %v204
    %1750 = vmatprep.subr.mxu0 %v211
    %1751 = vmatpush1.msra.mxu0 %v210
    %1752 = vmatprep.subr.mxu0 %v217
    %1753 = vmatpush1.msra.mxu0 %v216
    %1754 = vmatprep.subr.mxu0 %v223
    %1755 = vmatpush1.msra.mxu0 %v222
    %1756 = vmatprep.subr.mxu0 %v229
    %1757 = vmatpush1.msra.mxu0 %v228
    %1758 = vmatprep.mubr.f32.mxu0 %v1693
    %1759 = vmatmul.mubr.f32.gmra.mrb[0].mxu0 %v1692
    %v1760 = vpop.f32.mrb[0].mxu0
    %v1761 = vadd.f32 %v500, %v1760
    %v1762 = vpop.f32.mrb[0].mxu0
    %v1763 = vadd.f32 %v504, %v1762
    %1764 = vdwg.mxu0
    %1765 = vmatprep.subr.mxu0 %v45
    %1766 = vmatpush1.msra.mxu0 %v44
    %1767 = vmatprep.subr.mxu0 %v51
    %1768 = vmatpush1.msra.mxu0 %v50
    %1769 = vmatprep.subr.mxu0 %v57
    %1770 = vmatpush1.msra.mxu0 %v56
    %1771 = vmatprep.subr.mxu0 %v63
    %1772 = vmatpush1.msra.mxu0 %v62
    %1773 = vmatprep.subr.mxu0 %v69
    %1774 = vmatpush1.msra.mxu0 %v68
    %1775 = vmatprep.subr.mxu0 %v75
    %1776 = vmatpush1.msra.mxu0 %v74
    %1777 = vmatprep.subr.mxu0 %v81
    %1778 = vmatpush1.msra.mxu0 %v80
    %1779 = vmatprep.subr.mxu0 %v87
    %1780 = vmatpush1.msra.mxu0 %v86
    %1781 = vmatprep.subr.mxu0 %v93
    %1782 = vmatpush1.msra.mxu0 %v92
    %1783 = vmatprep.subr.mxu0 %v99
    %1784 = vmatpush1.msra.mxu0 %v98
    %1785 = vmatprep.subr.mxu0 %v105
    %1786 = vmatpush1.msra.mxu0 %v104
    %1787 = vmatprep.subr.mxu0 %v111
    %1788 = vmatpush1.msra.mxu0 %v110
    %1789 = vmatprep.subr.mxu0 %v117
    %1790 = vmatpush1.msra.mxu0 %v116
    %1791 = vmatprep.subr.mxu0 %v123
    %1792 = vmatpush1.msra.mxu0 %v122
    %1793 = vmatprep.subr.mxu0 %v129
    %1794 = vmatpush1.msra.mxu0 %v128
    %1795 = vmatprep.subr.mxu0 %v135
    %1796 = vmatpush1.msra.mxu0 %v134
    %1797 = vmatprep.subr.mxu0 %v141
    %1798 = vmatpush1.msra.mxu0 %v140
    %1799 = vmatprep.subr.mxu0 %v147
    %1800 = vmatpush1.msra.mxu0 %v146
    %1801 = vmatprep.subr.mxu0 %v153
    %1802 = vmatpush1.msra.mxu0 %v152
    %1803 = vmatprep.subr.mxu0 %v159
    %1804 = vmatpush1.msra.mxu0 %v158
    %1805 = vmatprep.subr.mxu0 %v165
    %1806 = vmatpush1.msra.mxu0 %v164
    %1807 = vmatprep.subr.mxu0 %v171
    %1808 = vmatpush1.msra.mxu0 %v170
    %1809 = vmatprep.subr.mxu0 %v177
    %1810 = vmatpush1.msra.mxu0 %v176
    %1811 = vmatprep.subr.mxu0 %v183
    %1812 = vmatpush1.msra.mxu0 %v182
    %1813 = vmatprep.subr.mxu0 %v189
    %1814 = vmatpush1.msra.mxu0 %v188
    %1815 = vmatprep.subr.mxu0 %v195
    %1816 = vmatpush1.msra.mxu0 %v194
    %1817 = vmatprep.subr.mxu0 %v201
    %1818 = vmatpush1.msra.mxu0 %v200
    %1819 = vmatprep.subr.mxu0 %v207
    %1820 = vmatpush1.msra.mxu0 %v206
    %1821 = vmatprep.subr.mxu0 %v213
    %1822 = vmatpush1.msra.mxu0 %v212
    %1823 = vmatprep.subr.mxu0 %v219
    %1824 = vmatpush1.msra.mxu0 %v218
    %1825 = vmatprep.subr.mxu0 %v225
    %1826 = vmatpush1.msra.mxu0 %v224
    %1827 = vmatprep.subr.mxu0 %v231
    %1828 = vmatpush1.msra.mxu0 %v230
    %1829 = vmatprep.mubr.f32.mxu0 %v1693
    %1830 = vmatmul.mubr.f32.gmra.mrb[0].mxu0 %v1692
    %v1831 = vpop.f32.mrb[0].mxu0
    %v1832 = vadd.f32 %v508, %v1831
    %v1833 = vpop.f32.mrb[0].mxu0
    %v1834 = vadd.f32 %v512, %v1833
    %1835 = vdwg.mxu0
    %1836 = vmatprep.subr.mxu0 %v47
    %1837 = vmatpush1.msra.mxu0 %v46
    %1838 = vmatprep.subr.mxu0 %v53
    %1839 = vmatpush1.msra.mxu0 %v52
    %1840 = vmatprep.subr.mxu0 %v59
    %1841 = vmatpush1.msra.mxu0 %v58
    %1842 = vmatprep.subr.mxu0 %v65
    %1843 = vmatpush1.msra.mxu0 %v64
    %1844 = vmatprep.subr.mxu0 %v71
    %1845 = vmatpush1.msra.mxu0 %v70
    %1846 = vmatprep.subr.mxu0 %v77
    %1847 = vmatpush1.msra.mxu0 %v76
    %1848 = vmatprep.subr.mxu0 %v83
    %1849 = vmatpush1.msra.mxu0 %v82
    %1850 = vmatprep.subr.mxu0 %v89
    %1851 = vmatpush1.msra.mxu0 %v88
    %1852 = vmatprep.subr.mxu0 %v95
    %1853 = vmatpush1.msra.mxu0 %v94
    %1854 = vmatprep.subr.mxu0 %v101
    %1855 = vmatpush1.msra.mxu0 %v100
    %1856 = vmatprep.subr.mxu0 %v107
    %1857 = vmatpush1.msra.mxu0 %v106
    %1858 = vmatprep.subr.mxu0 %v113
    %1859 = vmatpush1.msra.mxu0 %v112
    %1860 = vmatprep.subr.mxu0 %v119
    %1861 = vmatpush1.msra.mxu0 %v118
    %1862 = vmatprep.subr.mxu0 %v125
    %1863 = vmatpush1.msra.mxu0 %v124
    %1864 = vmatprep.subr.mxu0 %v131
    %1865 = vmatpush1.msra.mxu0 %v130
    %1866 = vmatprep.subr.mxu0 %v137
    %1867 = vmatpush1.msra.mxu0 %v136
    %1868 = vmatprep.subr.mxu0 %v143
    %1869 = vmatpush1.msra.mxu0 %v142
    %1870 = vmatprep.subr.mxu0 %v149
    %1871 = vmatpush1.msra.mxu0 %v148
    %1872 = vmatprep.subr.mxu0 %v155
    %1873 = vmatpush1.msra.mxu0 %v154
    %1874 = vmatprep.subr.mxu0 %v161
    %1875 = vmatpush1.msra.mxu0 %v160
    %1876 = vmatprep.subr.mxu0 %v167
    %1877 = vmatpush1.msra.mxu0 %v166
    %1878 = vmatprep.subr.mxu0 %v173
    %1879 = vmatpush1.msra.mxu0 %v172
    %1880 = vmatprep.subr.mxu0 %v179
    %1881 = vmatpush1.msra.mxu0 %v178
    %1882 = vmatprep.subr.mxu0 %v185
    %1883 = vmatpush1.msra.mxu0 %v184
    %1884 = vmatprep.subr.mxu0 %v191
    %1885 = vmatpush1.msra.mxu0 %v190
    %1886 = vmatprep.subr.mxu0 %v197
    %1887 = vmatpush1.msra.mxu0 %v196
    %1888 = vmatprep.subr.mxu0 %v203
    %1889 = vmatpush1.msra.mxu0 %v202
    %1890 = vmatprep.subr.mxu0 %v209
    %1891 = vmatpush1.msra.mxu0 %v208
    %1892 = vmatprep.subr.mxu0 %v215
    %1893 = vmatpush1.msra.mxu0 %v214
    %1894 = vmatprep.subr.mxu0 %v221
    %1895 = vmatpush1.msra.mxu0 %v220
    %1896 = vmatprep.subr.mxu0 %v227
    %1897 = vmatpush1.msra.mxu0 %v226
    %1898 = vmatprep.subr.mxu0 %v233
    %1899 = vmatpush1.msra.mxu0 %v232
    %1900 = vmatprep.mubr.f32.mxu0 %v1693
    %1901 = vmatmul.mubr.f32.gmra.mrb[0].mxu0 %v1692
    %v1902 = vpop.f32.mrb[0].mxu0
    %v1903 = vadd.f32 %v516, %v1902
    %v1904 = vpop.f32.mrb[0].mxu0
    %v1905 = vadd.f32 %v520, %v1904
    %1906 = vdwg.mxu0
    %1907 = vmatprep.subr.mxu0 %v235
    %1908 = vmatpush1.msra.mxu0 %v234
    %1909 = vmatprep.subr.mxu0 %v241
    %1910 = vmatpush1.msra.mxu0 %v240
    %1911 = vmatprep.subr.mxu0 %v247
    %1912 = vmatpush1.msra.mxu0 %v246
    %1913 = vmatprep.subr.mxu0 %v253
    %1914 = vmatpush1.msra.mxu0 %v252
    %1915 = vmatprep.subr.mxu0 %v259
    %1916 = vmatpush1.msra.mxu0 %v258
    %1917 = vmatprep.subr.mxu0 %v265
    %1918 = vmatpush1.msra.mxu0 %v264
    %1919 = vmatprep.subr.mxu0 %v271
    %1920 = vmatpush1.msra.mxu0 %v270
    %1921 = vmatprep.subr.mxu0 %v277
    %1922 = vmatpush1.msra.mxu0 %v276
    %1923 = vmatprep.subr.mxu0 %v283
    %1924 = vmatpush1.msra.mxu0 %v282
    %1925 = vmatprep.subr.mxu0 %v289
    %1926 = vmatpush1.msra.mxu0 %v288
    %1927 = vmatprep.subr.mxu0 %v295
    %1928 = vmatpush1.msra.mxu0 %v294
    %1929 = vmatprep.subr.mxu0 %v301
    %1930 = vmatpush1.msra.mxu0 %v300
    %1931 = vmatprep.subr.mxu0 %v307
    %1932 = vmatpush1.msra.mxu0 %v306
    %1933 = vmatprep.subr.mxu0 %v313
    %1934 = vmatpush1.msra.mxu0 %v312
    %1935 = vmatprep.subr.mxu0 %v319
    %1936 = vmatpush1.msra.mxu0 %v318
    %1937 = vmatprep.subr.mxu0 %v325
    %1938 = vmatpush1.msra.mxu0 %v324
    %1939 = vmatprep.subr.mxu0 %v331
    %1940 = vmatpush1.msra.mxu0 %v330
    %1941 = vmatprep.subr.mxu0 %v337
    %1942 = vmatpush1.msra.mxu0 %v336
    %1943 = vmatprep.subr.mxu0 %v343
    %1944 = vmatpush1.msra.mxu0 %v342
    %1945 = vmatprep.subr.mxu0 %v349
    %1946 = vmatpush1.msra.mxu0 %v348
    %1947 = vmatprep.subr.mxu0 %v355
    %1948 = vmatpush1.msra.mxu0 %v354
    %1949 = vmatprep.subr.mxu0 %v361
    %1950 = vmatpush1.msra.mxu0 %v360
    %1951 = vmatprep.subr.mxu0 %v367
    %1952 = vmatpush1.msra.mxu0 %v366
    %1953 = vmatprep.subr.mxu0 %v373
    %1954 = vmatpush1.msra.mxu0 %v372
    %1955 = vmatprep.subr.mxu0 %v379
    %1956 = vmatpush1.msra.mxu0 %v378
    %1957 = vmatprep.subr.mxu0 %v385
    %1958 = vmatpush1.msra.mxu0 %v384
    %1959 = vmatprep.subr.mxu0 %v391
    %1960 = vmatpush1.msra.mxu0 %v390
    %1961 = vmatprep.subr.mxu0 %v397
    %1962 = vmatpush1.msra.mxu0 %v396
    %1963 = vmatprep.subr.mxu0 %v403
    %1964 = vmatpush1.msra.mxu0 %v402
    %1965 = vmatprep.subr.mxu0 %v409
    %1966 = vmatpush1.msra.mxu0 %v408
    %1967 = vmatprep.subr.mxu0 %v415
    %1968 = vmatpush1.msra.mxu0 %v414
    %1969 = vmatprep.subr.mxu0 %v421
    %1970 = vmatpush1.msra.mxu0 %v420
    %1971 = vmatprep.mubr.f32.mxu0 %v1604
    %1972 = vmatmul.mubr.f32.gmra.mrb[0].mxu0 %v1603
    %v1973 = vpop.f32.mrb[0].mxu0
    %v1974 = vadd.f32 %v755, %v1973
    %v1975 = vpop.f32.mrb[0].mxu0
    %v1976 = vadd.f32 %v759, %v1975
    %1977 = vdwg.mxu0
    %1978 = vmatprep.subr.mxu0 %v237
    %1979 = vmatpush1.msra.mxu0 %v236
    %1980 = vmatprep.subr.mxu0 %v243
    %1981 = vmatpush1.msra.mxu0 %v242
    %1982 = vmatprep.subr.mxu0 %v249
    %1983 = vmatpush1.msra.mxu0 %v248
    %1984 = vmatprep.subr.mxu0 %v255
    %1985 = vmatpush1.msra.mxu0 %v254
    %1986 = vmatprep.subr.mxu0 %v261
    %1987 = vmatpush1.msra.mxu0 %v260
    %1988 = vmatprep.subr.mxu0 %v267
    %1989 = vmatpush1.msra.mxu0 %v266
    %1990 = vmatprep.subr.mxu0 %v273
    %1991 = vmatpush1.msra.mxu0 %v272
    %1992 = vmatprep.subr.mxu0 %v279
    %1993 = vmatpush1.msra.mxu0 %v278
    %1994 = vmatprep.subr.mxu0 %v285
    %1995 = vmatpush1.msra.mxu0 %v284
    %1996 = vmatprep.subr.mxu0 %v291
    %1997 = vmatpush1.msra.mxu0 %v290
    %1998 = vmatprep.subr.mxu0 %v297
    %1999 = vmatpush1.msra.mxu0 %v296
    %2000 = vmatprep.subr.mxu0 %v303
    %2001 = vmatpush1.msra.mxu0 %v302
    %2002 = vmatprep.subr.mxu0 %v309
    %2003 = vmatpush1.msra.mxu0 %v308
    %2004 = vmatprep.subr.mxu0 %v315
    %2005 = vmatpush1.msra.mxu0 %v314
    %2006 = vmatprep.subr.mxu0 %v321
    %2007 = vmatpush1.msra.mxu0 %v320
    %2008 = vmatprep.subr.mxu0 %v327
    %2009 = vmatpush1.msra.mxu0 %v326
    %2010 = vmatprep.subr.mxu0 %v333
    %2011 = vmatpush1.msra.mxu0 %v332
    %2012 = vmatprep.subr.mxu0 %v339
    %2013 = vmatpush1.msra.mxu0 %v338
    %2014 = vmatprep.subr.mxu0 %v345
    %2015 = vmatpush1.msra.mxu0 %v344
    %2016 = vmatprep.subr.mxu0 %v351
    %2017 = vmatpush1.msra.mxu0 %v350
    %2018 = vmatprep.subr.mxu0 %v357
    %2019 = vmatpush1.msra.mxu0 %v356
    %2020 = vmatprep.subr.mxu0 %v363
    %2021 = vmatpush1.msra.mxu0 %v362
    %2022 = vmatprep.subr.mxu0 %v369
    %2023 = vmatpush1.msra.mxu0 %v368
    %2024 = vmatprep.subr.mxu0 %v375
    %2025 = vmatpush1.msra.mxu0 %v374
    %2026 = vmatprep.subr.mxu0 %v381
    %2027 = vmatpush1.msra.mxu0 %v380
    %2028 = vmatprep.subr.mxu0 %v387
    %2029 = vmatpush1.msra.mxu0 %v386
    %2030 = vmatprep.subr.mxu0 %v393
    %2031 = vmatpush1.msra.mxu0 %v392
    %2032 = vmatprep.subr.mxu0 %v399
    %2033 = vmatpush1.msra.mxu0 %v398
    %2034 = vmatprep.subr.mxu0 %v405
    %2035 = vmatpush1.msra.mxu0 %v404
    %2036 = vmatprep.subr.mxu0 %v411
    %2037 = vmatpush1.msra.mxu0 %v410
    %2038 = vmatprep.subr.mxu0 %v417
    %2039 = vmatpush1.msra.mxu0 %v416
    %2040 = vmatprep.subr.mxu0 %v423
    %2041 = vmatpush1.msra.mxu0 %v422
    %2042 = vmatprep.mubr.f32.mxu0 %v1604
    %2043 = vmatmul.mubr.f32.gmra.mrb[0].mxu0 %v1603
    %v2044 = vpop.f32.mrb[0].mxu0
    %v2045 = vadd.f32 %v763, %v2044
    %v2046 = vpop.f32.mrb[0].mxu0
    %v2047 = vadd.f32 %v767, %v2046
    %2048 = vdwg.mxu0
    %2049 = vmatprep.subr.mxu0 %v239
    %2050 = vmatpush1.msra.mxu0 %v238
    %2051 = vmatprep.subr.mxu0 %v245
    %2052 = vmatpush1.msra.mxu0 %v244
    %2053 = vmatprep.subr.mxu0 %v251
    %2054 = vmatpush1.msra.mxu0 %v250
    %2055 = vmatprep.subr.mxu0 %v257
    %2056 = vmatpush1.msra.mxu0 %v256
    %2057 = vmatprep.subr.mxu0 %v263
    %2058 = vmatpush1.msra.mxu0 %v262
    %2059 = vmatprep.subr.mxu0 %v269
    %2060 = vmatpush1.msra.mxu0 %v268
    %2061 = vmatprep.subr.mxu0 %v275
    %2062 = vmatpush1.msra.mxu0 %v274
    %2063 = vmatprep.subr.mxu0 %v281
    %2064 = vmatpush1.msra.mxu0 %v280
    %2065 = vmatprep.subr.mxu0 %v287
    %2066 = vmatpush1.msra.mxu0 %v286
    %2067 = vmatprep.subr.mxu0 %v293
    %2068 = vmatpush1.msra.mxu0 %v292
    %2069 = vmatprep.subr.mxu0 %v299
    %2070 = vmatpush1.msra.mxu0 %v298
    %2071 = vmatprep.subr.mxu0 %v305
    %2072 = vmatpush1.msra.mxu0 %v304
    %2073 = vmatprep.subr.mxu0 %v311
    %2074 = vmatpush1.msra.mxu0 %v310
    %2075 = vmatprep.subr.mxu0 %v317
    %2076 = vmatpush1.msra.mxu0 %v316
    %2077 = vmatprep.subr.mxu0 %v323
    %2078 = vmatpush1.msra.mxu0 %v322
    %2079 = vmatprep.subr.mxu0 %v329
    %2080 = vmatpush1.msra.mxu0 %v328
    %2081 = vmatprep.subr.mxu0 %v335
    %2082 = vmatpush1.msra.mxu0 %v334
    %2083 = vmatprep.subr.mxu0 %v341
    %2084 = vmatpush1.msra.mxu0 %v340
    %2085 = vmatprep.subr.mxu0 %v347
    %2086 = vmatpush1.msra.mxu0 %v346
    %2087 = vmatprep.subr.mxu0 %v353
    %2088 = vmatpush1.msra.mxu0 %v352
    %2089 = vmatprep.subr.mxu0 %v359
    %2090 = vmatpush1.msra.mxu0 %v358
    %2091 = vmatprep.subr.mxu0 %v365
    %2092 = vmatpush1.msra.mxu0 %v364
    %2093 = vmatprep.subr.mxu0 %v371
    %2094 = vmatpush1.msra.mxu0 %v370
    %2095 = vmatprep.subr.mxu0 %v377
    %2096 = vmatpush1.msra.mxu0 %v376
    %2097 = vmatprep.subr.mxu0 %v383
    %2098 = vmatpush1.msra.mxu0 %v382
    %2099 = vmatprep.subr.mxu0 %v389
    %2100 = vmatpush1.msra.mxu0 %v388
    %2101 = vmatprep.subr.mxu0 %v395
    %2102 = vmatpush1.msra.mxu0 %v394
    %2103 = vmatprep.subr.mxu0 %v401
    %2104 = vmatpush1.msra.mxu0 %v400
    %2105 = vmatprep.subr.mxu0 %v407
    %2106 = vmatpush1.msra.mxu0 %v406
    %2107 = vmatprep.subr.mxu0 %v413
    %2108 = vmatpush1.msra.mxu0 %v412
    %2109 = vmatprep.subr.mxu0 %v419
    %2110 = vmatpush1.msra.mxu0 %v418
    %2111 = vmatprep.subr.mxu0 %v425
    %2112 = vmatpush1.msra.mxu0 %v424
    %2113 = vmatprep.mubr.f32.mxu0 %v1604
    %2114 = vmatmul.mubr.f32.gmra.mrb[0].mxu0 %v1603
    %v2115 = vpop.f32.mrb[0].mxu0
    %v2116 = vadd.f32 %v771, %v2115
    %v2117 = vpop.f32.mrb[0].mxu0
    %v2118 = vadd.f32 %v775, %v2117
    %2119 = vdwg.mxu0
    %v2120 = vadd.f32 %v1761, %v1974
    %v2121 = vadd.f32 %v1763, %v1976
    %v2122 = vxor.u32 %v2120, 2147483648
    %v2123 = vxor.u32 %v2121, 2147483648
    %v2124 = vmul.f32 %v2122, 1.442695
    %v2125 = vpow.pop %v2124
    %v2126 = vmul.f32 %v2123, 1.442695
    %v2127 = vpow.pop %v2126
    %v2128 = vadd.f32 %v2125, 1.0
    %v2129 = vadd.f32 %v2127, 1.0
    %v2130 = vrcp.pop %v2128
    %v2131 = vmul.f32 1.0, %v2130
    %v2132 = vrcp.pop %v2129
    %v2133 = vmul.f32 1.0, %v2132
    %v2134 = vadd.f32 %v1832, %v2045
    %v2135 = vadd.f32 %v1834, %v2047
    %v2136 = vxor.u32 %v2134, 2147483648
    %v2137 = vxor.u32 %v2135, 2147483648
    %v2138 = vmul.f32 %v2136, 1.442695
    %v2139 = vpow.pop %v2138
    %v2140 = vmul.f32 %v2137, 1.442695
    %v2141 = vpow.pop %v2140
    %v2142 = vadd.f32 %v2139, 1.0
    %v2143 = vadd.f32 %v2141, 1.0
    %v2144 = vrcp.pop %v2142
    %v2145 = vmul.f32 1.0, %v2144
    %v2146 = vrcp.pop %v2143
    %v2147 = vmul.f32 1.0, %v2146
    %v2148 = vmul.f32 %v2131, %v2116
    %v2149 = vmul.f32 %v2133, %v2118
    %v2150 = vadd.f32 %v1903, %v2148
    %v2151 = vadd.f32 %v1905, %v2149
    %v2152 = vtanh.pop %v2150
    %v2153 = vtanh.pop %v2151
    %v2154 = vsub.f32 1.0, %v2145
    %v2155 = vsub.f32 1.0, %v2147
    %v2156 = vmul.f32 %v2154, %v2152
    %v2157 = vmul.f32 %v2155, %v2153
    %v2158 = vmul.f32 %v2145, %v1603
    %v2159 = vmul.f32 %v2147, %v1604
    %v2160 = vadd.f32 %v2156, %v2158
    %v2161 = vadd.f32 %v2157, %v2159
    %2162 = vmatprep.subr.mxu0 %v429
    %2163 = vmatpush1.msra.mxu0 %v428
    %2164 = vmatprep.subr.mxu0 %v431
    %2165 = vmatpush1.msra.mxu0 %v430
    %2166 = vmatprep.subr.mxu0 %v433
    %2167 = vmatpush1.msra.mxu0 %v432
    %2168 = vmatprep.subr.mxu0 %v435
    %2169 = vmatpush1.msra.mxu0 %v434
    %2170 = vmatprep.subr.mxu0 %v437
    %2171 = vmatpush1.msra.mxu0 %v436
    %2172 = vmatprep.subr.mxu0 %v439
    %2173 = vmatpush1.msra.mxu0 %v438
    %2174 = vmatprep.subr.mxu0 %v441
    %2175 = vmatpush1.msra.mxu0 %v440
    %2176 = vmatprep.subr.mxu0 %v443
    %2177 = vmatpush1.msra.mxu0 %v442
    %2178 = vmatprep.subr.mxu0 %v445
    %2179 = vmatpush1.msra.mxu0 %v444
    %2180 = vmatprep.subr.mxu0 %v447
    %2181 = vmatpush1.msra.mxu0 %v446
    %2182 = vmatprep.subr.mxu0 %v449
    %2183 = vmatpush1.msra.mxu0 %v448
    %2184 = vmatprep.subr.mxu0 %v451
    %2185 = vmatpush1.msra.mxu0 %v450
    %2186 = vmatprep.subr.mxu0 %v453
    %2187 = vmatpush1.msra.mxu0 %v452
    %2188 = vmatprep.subr.mxu0 %v455
    %2189 = vmatpush1.msra.mxu0 %v454
    %2190 = vmatprep.subr.mxu0 %v457
    %2191 = vmatpush1.msra.mxu0 %v456
    %2192 = vmatprep.subr.mxu0 %v459
    %2193 = vmatpush1.msra.mxu0 %v458
    %2194 = vmatprep.subr.mxu0 %v461
    %2195 = vmatpush1.msra.mxu0 %v460
    %2196 = vmatprep.subr.mxu0 %v463
    %2197 = vmatpush1.msra.mxu0 %v462
    %2198 = vmatprep.subr.mxu0 %v465
    %2199 = vmatpush1.msra.mxu0 %v464
    %2200 = vmatprep.subr.mxu0 %v467
    %2201 = vmatpush1.msra.mxu0 %v466
    %2202 = vmatprep.subr.mxu0 %v469
    %2203 = vmatpush1.msra.mxu0 %v468
    %2204 = vmatprep.subr.mxu0 %v471
    %2205 = vmatpush1.msra.mxu0 %v470
    %2206 = vmatprep.subr.mxu0 %v473
    %2207 = vmatpush1.msra.mxu0 %v472
    %2208 = vmatprep.subr.mxu0 %v475
    %2209 = vmatpush1.msra.mxu0 %v474
    %2210 = vmatprep.subr.mxu0 %v477
    %2211 = vmatpush1.msra.mxu0 %v476
    %2212 = vmatprep.subr.mxu0 %v479
    %2213 = vmatpush1.msra.mxu0 %v478
    %2214 = vmatprep.subr.mxu0 %v481
    %2215 = vmatpush1.msra.mxu0 %v480
    %2216 = vmatprep.subr.mxu0 %v483
    %2217 = vmatpush1.msra.mxu0 %v482
    %2218 = vmatprep.subr.mxu0 %v485
    %2219 = vmatpush1.msra.mxu0 %v484
    %2220 = vmatprep.subr.mxu0 %v487
    %2221 = vmatpush1.msra.mxu0 %v486
    %2222 = vmatprep.subr.mxu0 %v489
    %2223 = vmatpush1.msra.mxu0 %v488
    %2224 = vmatprep.subr.mxu0 %v491
    %2225 = vmatpush1.msra.mxu0 %v490
    %2226 = vmatprep.mubr.f32.mxu0 %v2161
    %2227 = vmatmul.mubr.f32.gmra.mrb[0].mxu0 %v2160
    %v2228 = vpop.f32.mrb[0].mxu0
    %v2229 = vadd.f32 %v1041, %v2228
    %v2230 = vpop.f32.mrb[0].mxu0
    %v2231 = vadd.f32 %v1045, %v2230
    %2232 = vdwg.mxu0
    %s2233 = scalar_lea.vmem %s0, 12
    %v2234 = vld [vmem:[%s2233] sm:$0xf]
    %v2235 = vmul.f32 %v2229, 0.1
    %v2236 = vmul.f32 %v2231, 0.1
    %v2237 = vmul.f32 %v2234, 0.9
    %v2240 = vunpack.c.l.s4 1983009808
    %v2241 = vunpack.c.0.s8 %v2240
    %v2242 = vlaneseq
    %v2243 = vshrl.u32 %v2242, 7
    %v2244 = vsub.s32 %v2241, %v2243
    %v2245 = vrot.slane %v2237, %v2244
    %v2246 = vcombine.high %v2245, %v2245
    %v2249 = vadd.f32 %v2235, %v2245
    %v2250 = vadd.f32 %v2236, %v2246
    %2251 = vmatprep.subr.mxu0 %v43
    %2252 = vmatpush1.msra.mxu0 %v42
    %2253 = vmatprep.subr.mxu0 %v49
    %2254 = vmatpush1.msra.mxu0 %v48
    %2255 = vmatprep.subr.mxu0 %v55
    %2256 = vmatpush1.msra.mxu0 %v54
    %2257 = vmatprep.subr.mxu0 %v61
    %2258 = vmatpush1.msra.mxu0 %v60
    %2259 = vmatprep.subr.mxu0 %v67
    %2260 = vmatpush1.msra.mxu0 %v66
    %2261 = vmatprep.subr.mxu0 %v73
    %2262 = vmatpush1.msra.mxu0 %v72
    %2263 = vmatprep.subr.mxu0 %v79
    %2264 = vmatpush1.msra.mxu0 %v78
    %2265 = vmatprep.subr.mxu0 %v85
    %2266 = vmatpush1.msra.mxu0 %v84
    %2267 = vmatprep.subr.mxu0 %v91
    %2268 = vmatpush1.msra.mxu0 %v90
    %2269 = vmatprep.subr.mxu0 %v97
    %2270 = vmatpush1.msra.mxu0 %v96
    %2271 = vmatprep.subr.mxu0 %v103
    %2272 = vmatpush1.msra.mxu0 %v102
    %2273 = vmatprep.subr.mxu0 %v109
    %2274 = vmatpush1.msra.mxu0 %v108
    %2275 = vmatprep.subr.mxu0 %v115
    %2276 = vmatpush1.msra.mxu0 %v114
    %2277 = vmatprep.subr.mxu0 %v121
    %2278 = vmatpush1.msra.mxu0 %v120
    %2279 = vmatprep.subr.mxu0 %v127
    %2280 = vmatpush1.msra.mxu0 %v126
    %2281 = vmatprep.subr.mxu0 %v133
    %2282 = vmatpush1.msra.mxu0 %v132
    %2283 = vmatprep.subr.mxu0 %v139
    %2284 = vmatpush1.msra.mxu0 %v138
    %2285 = vmatprep.subr.mxu0 %v145
    %2286 = vmatpush1.msra.mxu0 %v144
    %2287 = vmatprep.subr.mxu0 %v151
    %2288 = vmatpush1.msra.mxu0 %v150
    %2289 = vmatprep.subr.mxu0 %v157
    %2290 = vmatpush1.msra.mxu0 %v156
    %2291 = vmatprep.subr.mxu0 %v163
    %2292 = vmatpush1.msra.mxu0 %v162
    %2293 = vmatprep.subr.mxu0 %v169
    %2294 = vmatpush1.msra.mxu0 %v168
    %2295 = vmatprep.subr.mxu0 %v175
    %2296 = vmatpush1.msra.mxu0 %v174
    %2297 = vmatprep.subr.mxu0 %v181
    %2298 = vmatpush1.msra.mxu0 %v180
    %2299 = vmatprep.subr.mxu0 %v187
    %2300 = vmatpush1.msra.mxu0 %v186
    %2301 = vmatprep.subr.mxu0 %v193
    %2302 = vmatpush1.msra.mxu0 %v192
    %2303 = vmatprep.subr.mxu0 %v199
    %2304 = vmatpush1.msra.mxu0 %v198
    %2305 = vmatprep.subr.mxu0 %v205
    %2306 = vmatpush1.msra.mxu0 %v204
    %2307 = vmatprep.subr.mxu0 %v211
    %2308 = vmatpush1.msra.mxu0 %v210
    %2309 = vmatprep.subr.mxu0 %v217
    %2310 = vmatpush1.msra.mxu0 %v216
    %2311 = vmatprep.subr.mxu0 %v223
    %2312 = vmatpush1.msra.mxu0 %v222
    %2313 = vmatprep.subr.mxu0 %v229
    %2314 = vmatpush1.msra.mxu0 %v228
    %2315 = vmatprep.mubr.f32.mxu0 %v2250
    %2316 = vmatmul.mubr.f32.gmra.mrb[0].mxu0 %v2249
    %v2317 = vpop.f32.mrb[0].mxu0
    %v2318 = vadd.f32 %v500, %v2317
    %v2319 = vpop.f32.mrb[0].mxu0
    %v2320 = vadd.f32 %v504, %v2319
    %2321 = vdwg.mxu0
    %2322 = vmatprep.subr.mxu0 %v45
    %2323 = vmatpush1.msra.mxu0 %v44
    %2324 = vmatprep.subr.mxu0 %v51
    %2325 = vmatpush1.msra.mxu0 %v50
    %2326 = vmatprep.subr.mxu0 %v57
    %2327 = vmatpush1.msra.mxu0 %v56
    %2328 = vmatprep.subr.mxu0 %v63
    %2329 = vmatpush1.msra.mxu0 %v62
    %2330 = vmatprep.subr.mxu0 %v69
    %2331 = vmatpush1.msra.mxu0 %v68
    %2332 = vmatprep.subr.mxu0 %v75
    %2333 = vmatpush1.msra.mxu0 %v74
    %2334 = vmatprep.subr.mxu0 %v81
    %2335 = vmatpush1.msra.mxu0 %v80
    %2336 = vmatprep.subr.mxu0 %v87
    %2337 = vmatpush1.msra.mxu0 %v86
    %2338 = vmatprep.subr.mxu0 %v93
    %2339 = vmatpush1.msra.mxu0 %v92
    %2340 = vmatprep.subr.mxu0 %v99
    %2341 = vmatpush1.msra.mxu0 %v98
    %2342 = vmatprep.subr.mxu0 %v105
    %2343 = vmatpush1.msra.mxu0 %v104
    %2344 = vmatprep.subr.mxu0 %v111
    %2345 = vmatpush1.msra.mxu0 %v110
    %2346 = vmatprep.subr.mxu0 %v117
    %2347 = vmatpush1.msra.mxu0 %v116
    %2348 = vmatprep.subr.mxu0 %v123
    %2349 = vmatpush1.msra.mxu0 %v122
    %2350 = vmatprep.subr.mxu0 %v129
    %2351 = vmatpush1.msra.mxu0 %v128
    %2352 = vmatprep.subr.mxu0 %v135
    %2353 = vmatpush1.msra.mxu0 %v134
    %2354 = vmatprep.subr.mxu0 %v141
    %2355 = vmatpush1.msra.mxu0 %v140
    %2356 = vmatprep.subr.mxu0 %v147
    %2357 = vmatpush1.msra.mxu0 %v146
    %2358 = vmatprep.subr.mxu0 %v153
    %2359 = vmatpush1.msra.mxu0 %v152
    %2360 = vmatprep.subr.mxu0 %v159
    %2361 = vmatpush1.msra.mxu0 %v158
    %2362 = vmatprep.subr.mxu0 %v165
    %2363 = vmatpush1.msra.mxu0 %v164
    %2364 = vmatprep.subr.mxu0 %v171
    %2365 = vmatpush1.msra.mxu0 %v170
    %2366 = vmatprep.subr.mxu0 %v177
    %2367 = vmatpush1.msra.mxu0 %v176
    %2368 = vmatprep.subr.mxu0 %v183
    %2369 = vmatpush1.msra.mxu0 %v182
    %2370 = vmatprep.subr.mxu0 %v189
    %2371 = vmatpush1.msra.mxu0 %v188
    %2372 = vmatprep.subr.mxu0 %v195
    %2373 = vmatpush1.msra.mxu0 %v194
    %2374 = vmatprep.subr.mxu0 %v201
    %2375 = vmatpush1.msra.mxu0 %v200
    %2376 = vmatprep.subr.mxu0 %v207
    %2377 = vmatpush1.msra.mxu0 %v206
    %2378 = vmatprep.subr.mxu0 %v213
    %2379 = vmatpush1.msra.mxu0 %v212
    %2380 = vmatprep.subr.mxu0 %v219
    %2381 = vmatpush1.msra.mxu0 %v218
    %2382 = vmatprep.subr.mxu0 %v225
    %2383 = vmatpush1.msra.mxu0 %v224
    %2384 = vmatprep.subr.mxu0 %v231
    %2385 = vmatpush1.msra.mxu0 %v230
    %2386 = vmatprep.mubr.f32.mxu0 %v2250
    %2387 = vmatmul.mubr.f32.gmra.mrb[0].mxu0 %v2249
    %v2388 = vpop.f32.mrb[0].mxu0
    %v2389 = vadd.f32 %v508, %v2388
    %v2390 = vpop.f32.mrb[0].mxu0
    %v2391 = vadd.f32 %v512, %v2390
    %2392 = vdwg.mxu0
    %2393 = vmatprep.subr.mxu0 %v47
    %2394 = vmatpush1.msra.mxu0 %v46
    %2395 = vmatprep.subr.mxu0 %v53
    %2396 = vmatpush1.msra.mxu0 %v52
    %2397 = vmatprep.subr.mxu0 %v59
    %2398 = vmatpush1.msra.mxu0 %v58
    %2399 = vmatprep.subr.mxu0 %v65
    %2400 = vmatpush1.msra.mxu0 %v64
    %2401 = vmatprep.subr.mxu0 %v71
    %2402 = vmatpush1.msra.mxu0 %v70
    %2403 = vmatprep.subr.mxu0 %v77
    %2404 = vmatpush1.msra.mxu0 %v76
    %2405 = vmatprep.subr.mxu0 %v83
    %2406 = vmatpush1.msra.mxu0 %v82
    %2407 = vmatprep.subr.mxu0 %v89
    %2408 = vmatpush1.msra.mxu0 %v88
    %2409 = vmatprep.subr.mxu0 %v95
    %2410 = vmatpush1.msra.mxu0 %v94
    %2411 = vmatprep.subr.mxu0 %v101
    %2412 = vmatpush1.msra.mxu0 %v100
    %2413 = vmatprep.subr.mxu0 %v107
    %2414 = vmatpush1.msra.mxu0 %v106
    %2415 = vmatprep.subr.mxu0 %v113
    %2416 = vmatpush1.msra.mxu0 %v112
    %2417 = vmatprep.subr.mxu0 %v119
    %2418 = vmatpush1.msra.mxu0 %v118
    %2419 = vmatprep.subr.mxu0 %v125
    %2420 = vmatpush1.msra.mxu0 %v124
    %2421 = vmatprep.subr.mxu0 %v131
    %2422 = vmatpush1.msra.mxu0 %v130
    %2423 = vmatprep.subr.mxu0 %v137
    %2424 = vmatpush1.msra.mxu0 %v136
    %2425 = vmatprep.subr.mxu0 %v143
    %2426 = vmatpush1.msra.mxu0 %v142
    %2427 = vmatprep.subr.mxu0 %v149
    %2428 = vmatpush1.msra.mxu0 %v148
    %2429 = vmatprep.subr.mxu0 %v155
    %2430 = vmatpush1.msra.mxu0 %v154
    %2431 = vmatprep.subr.mxu0 %v161
    %2432 = vmatpush1.msra.mxu0 %v160
    %2433 = vmatprep.subr.mxu0 %v167
    %2434 = vmatpush1.msra.mxu0 %v166
    %2435 = vmatprep.subr.mxu0 %v173
    %2436 = vmatpush1.msra.mxu0 %v172
    %2437 = vmatprep.subr.mxu0 %v179
    %2438 = vmatpush1.msra.mxu0 %v178
    %2439 = vmatprep.subr.mxu0 %v185
    %2440 = vmatpush1.msra.mxu0 %v184
    %2441 = vmatprep.subr.mxu0 %v191
    %2442 = vmatpush1.msra.mxu0 %v190
    %2443 = vmatprep.subr.mxu0 %v197
    %2444 = vmatpush1.msra.mxu0 %v196
    %2445 = vmatprep.subr.mxu0 %v203
    %2446 = vmatpush1.msra.mxu0 %v202
    %2447 = vmatprep.subr.mxu0 %v209
    %2448 = vmatpush1.msra.mxu0 %v208
    %2449 = vmatprep.subr.mxu0 %v215
    %2450 = vmatpush1.msra.mxu0 %v214
    %2451 = vmatprep.subr.mxu0 %v221
    %2452 = vmatpush1.msra.mxu0 %v220
    %2453 = vmatprep.subr.mxu0 %v227
    %2454 = vmatpush1.msra.mxu0 %v226
    %2455 = vmatprep.subr.mxu0 %v233
    %2456 = vmatpush1.msra.mxu0 %v232
    %2457 = vmatprep.mubr.f32.mxu0 %v2250
    %2458 = vmatmul.mubr.f32.gmra.mrb[0].mxu0 %v2249
    %v2459 = vpop.f32.mrb[0].mxu0
    %v2460 = vadd.f32 %v516, %v2459
    %v2461 = vpop.f32.mrb[0].mxu0
    %v2462 = vadd.f32 %v520, %v2461
    %2463 = vdwg.mxu0
    %2464 = vmatprep.subr.mxu0 %v235
    %2465 = vmatpush1.msra.mxu0 %v234
    %2466 = vmatprep.subr.mxu0 %v241
    %2467 = vmatpush1.msra.mxu0 %v240
    %2468 = vmatprep.subr.mxu0 %v247
    %2469 = vmatpush1.msra.mxu0 %v246
    %2470 = vmatprep.subr.mxu0 %v253
    %2471 = vmatpush1.msra.mxu0 %v252
    %2472 = vmatprep.subr.mxu0 %v259
    %2473 = vmatpush1.msra.mxu0 %v258
    %2474 = vmatprep.subr.mxu0 %v265
    %2475 = vmatpush1.msra.mxu0 %v264
    %2476 = vmatprep.subr.mxu0 %v271
    %2477 = vmatpush1.msra.mxu0 %v270
    %2478 = vmatprep.subr.mxu0 %v277
    %2479 = vmatpush1.msra.mxu0 %v276
    %2480 = vmatprep.subr.mxu0 %v283
    %2481 = vmatpush1.msra.mxu0 %v282
    %2482 = vmatprep.subr.mxu0 %v289
    %2483 = vmatpush1.msra.mxu0 %v288
    %2484 = vmatprep.subr.mxu0 %v295
    %2485 = vmatpush1.msra.mxu0 %v294
    %2486 = vmatprep.subr.mxu0 %v301
    %2487 = vmatpush1.msra.mxu0 %v300
    %2488 = vmatprep.subr.mxu0 %v307
    %2489 = vmatpush1.msra.mxu0 %v306
    %2490 = vmatprep.subr.mxu0 %v313
    %2491 = vmatpush1.msra.mxu0 %v312
    %2492 = vmatprep.subr.mxu0 %v319
    %2493 = vmatpush1.msra.mxu0 %v318
    %2494 = vmatprep.subr.mxu0 %v325
    %2495 = vmatpush1.msra.mxu0 %v324
    %2496 = vmatprep.subr.mxu0 %v331
    %2497 = vmatpush1.msra.mxu0 %v330
    %2498 = vmatprep.subr.mxu0 %v337
    %2499 = vmatpush1.msra.mxu0 %v336
    %2500 = vmatprep.subr.mxu0 %v343
    %2501 = vmatpush1.msra.mxu0 %v342
    %2502 = vmatprep.subr.mxu0 %v349
    %2503 = vmatpush1.msra.mxu0 %v348
    %2504 = vmatprep.subr.mxu0 %v355
    %2505 = vmatpush1.msra.mxu0 %v354
    %2506 = vmatprep.subr.mxu0 %v361
    %2507 = vmatpush1.msra.mxu0 %v360
    %2508 = vmatprep.subr.mxu0 %v367
    %2509 = vmatpush1.msra.mxu0 %v366
    %2510 = vmatprep.subr.mxu0 %v373
    %2511 = vmatpush1.msra.mxu0 %v372
    %2512 = vmatprep.subr.mxu0 %v379
    %2513 = vmatpush1.msra.mxu0 %v378
    %2514 = vmatprep.subr.mxu0 %v385
    %2515 = vmatpush1.msra.mxu0 %v384
    %2516 = vmatprep.subr.mxu0 %v391
    %2517 = vmatpush1.msra.mxu0 %v390
    %2518 = vmatprep.subr.mxu0 %v397
    %2519 = vmatpush1.msra.mxu0 %v396
    %2520 = vmatprep.subr.mxu0 %v403
    %2521 = vmatpush1.msra.mxu0 %v402
    %2522 = vmatprep.subr.mxu0 %v409
    %2523 = vmatpush1.msra.mxu0 %v408
    %2524 = vmatprep.subr.mxu0 %v415
    %2525 = vmatpush1.msra.mxu0 %v414
    %2526 = vmatprep.subr.mxu0 %v421
    %2527 = vmatpush1.msra.mxu0 %v420
    %2528 = vmatprep.mubr.f32.mxu0 %v2161
    %2529 = vmatmul.mubr.f32.gmra.mrb[0].mxu0 %v2160
    %v2530 = vpop.f32.mrb[0].mxu0
    %v2531 = vadd.f32 %v755, %v2530
    %v2532 = vpop.f32.mrb[0].mxu0
    %v2533 = vadd.f32 %v759, %v2532
    %2534 = vdwg.mxu0
    %2535 = vmatprep.subr.mxu0 %v237
    %2536 = vmatpush1.msra.mxu0 %v236
    %2537 = vmatprep.subr.mxu0 %v243
    %2538 = vmatpush1.msra.mxu0 %v242
    %2539 = vmatprep.subr.mxu0 %v249
    %2540 = vmatpush1.msra.mxu0 %v248
    %2541 = vmatprep.subr.mxu0 %v255
    %2542 = vmatpush1.msra.mxu0 %v254
    %2543 = vmatprep.subr.mxu0 %v261
    %2544 = vmatpush1.msra.mxu0 %v260
    %2545 = vmatprep.subr.mxu0 %v267
    %2546 = vmatpush1.msra.mxu0 %v266
    %2547 = vmatprep.subr.mxu0 %v273
    %2548 = vmatpush1.msra.mxu0 %v272
    %2549 = vmatprep.subr.mxu0 %v279
    %2550 = vmatpush1.msra.mxu0 %v278
    %2551 = vmatprep.subr.mxu0 %v285
    %2552 = vmatpush1.msra.mxu0 %v284
    %2553 = vmatprep.subr.mxu0 %v291
    %2554 = vmatpush1.msra.mxu0 %v290
    %2555 = vmatprep.subr.mxu0 %v297
    %2556 = vmatpush1.msra.mxu0 %v296
    %2557 = vmatprep.subr.mxu0 %v303
    %2558 = vmatpush1.msra.mxu0 %v302
    %2559 = vmatprep.subr.mxu0 %v309
    %2560 = vmatpush1.msra.mxu0 %v308
    %2561 = vmatprep.subr.mxu0 %v315
    %2562 = vmatpush1.msra.mxu0 %v314
    %2563 = vmatprep.subr.mxu0 %v321
    %2564 = vmatpush1.msra.mxu0 %v320
    %2565 = vmatprep.subr.mxu0 %v327
    %2566 = vmatpush1.msra.mxu0 %v326
    %2567 = vmatprep.subr.mxu0 %v333
    %2568 = vmatpush1.msra.mxu0 %v332
    %2569 = vmatprep.subr.mxu0 %v339
    %2570 = vmatpush1.msra.mxu0 %v338
    %2571 = vmatprep.subr.mxu0 %v345
    %2572 = vmatpush1.msra.mxu0 %v344
    %2573 = vmatprep.subr.mxu0 %v351
    %2574 = vmatpush1.msra.mxu0 %v350
    %2575 = vmatprep.subr.mxu0 %v357
    %2576 = vmatpush1.msra.mxu0 %v356
    %2577 = vmatprep.subr.mxu0 %v363
    %2578 = vmatpush1.msra.mxu0 %v362
    %2579 = vmatprep.subr.mxu0 %v369
    %2580 = vmatpush1.msra.mxu0 %v368
    %2581 = vmatprep.subr.mxu0 %v375
    %2582 = vmatpush1.msra.mxu0 %v374
    %2583 = vmatprep.subr.mxu0 %v381
    %2584 = vmatpush1.msra.mxu0 %v380
    %2585 = vmatprep.subr.mxu0 %v387
    %2586 = vmatpush1.msra.mxu0 %v386
    %2587 = vmatprep.subr.mxu0 %v393
    %2588 = vmatpush1.msra.mxu0 %v392
    %2589 = vmatprep.subr.mxu0 %v399
    %2590 = vmatpush1.msra.mxu0 %v398
    %2591 = vmatprep.subr.mxu0 %v405
    %2592 = vmatpush1.msra.mxu0 %v404
    %2593 = vmatprep.subr.mxu0 %v411
    %2594 = vmatpush1.msra.mxu0 %v410
    %2595 = vmatprep.subr.mxu0 %v417
    %2596 = vmatpush1.msra.mxu0 %v416
    %2597 = vmatprep.subr.mxu0 %v423
    %2598 = vmatpush1.msra.mxu0 %v422
    %2599 = vmatprep.mubr.f32.mxu0 %v2161
    %2600 = vmatmul.mubr.f32.gmra.mrb[0].mxu0 %v2160
    %v2601 = vpop.f32.mrb[0].mxu0
    %v2602 = vadd.f32 %v763, %v2601
    %v2603 = vpop.f32.mrb[0].mxu0
    %v2604 = vadd.f32 %v767, %v2603
    %2605 = vdwg.mxu0
    %2606 = vmatprep.subr.mxu0 %v239
    %2607 = vmatpush1.msra.mxu0 %v238
    %2608 = vmatprep.subr.mxu0 %v245
    %2609 = vmatpush1.msra.mxu0 %v244
    %2610 = vmatprep.subr.mxu0 %v251
    %2611 = vmatpush1.msra.mxu0 %v250
    %2612 = vmatprep.subr.mxu0 %v257
    %2613 = vmatpush1.msra.mxu0 %v256
    %2614 = vmatprep.subr.mxu0 %v263
    %2615 = vmatpush1.msra.mxu0 %v262
    %2616 = vmatprep.subr.mxu0 %v269
    %2617 = vmatpush1.msra.mxu0 %v268
    %2618 = vmatprep.subr.mxu0 %v275
    %2619 = vmatpush1.msra.mxu0 %v274
    %2620 = vmatprep.subr.mxu0 %v281
    %2621 = vmatpush1.msra.mxu0 %v280
    %2622 = vmatprep.subr.mxu0 %v287
    %2623 = vmatpush1.msra.mxu0 %v286
    %2624 = vmatprep.subr.mxu0 %v293
    %2625 = vmatpush1.msra.mxu0 %v292
    %2626 = vmatprep.subr.mxu0 %v299
    %2627 = vmatpush1.msra.mxu0 %v298
    %2628 = vmatprep.subr.mxu0 %v305
    %2629 = vmatpush1.msra.mxu0 %v304
    %2630 = vmatprep.subr.mxu0 %v311
    %2631 = vmatpush1.msra.mxu0 %v310
    %2632 = vmatprep.subr.mxu0 %v317
    %2633 = vmatpush1.msra.mxu0 %v316
    %2634 = vmatprep.subr.mxu0 %v323
    %2635 = vmatpush1.msra.mxu0 %v322
    %2636 = vmatprep.subr.mxu0 %v329
    %2637 = vmatpush1.msra.mxu0 %v328
    %2638 = vmatprep.subr.mxu0 %v335
    %2639 = vmatpush1.msra.mxu0 %v334
    %2640 = vmatprep.subr.mxu0 %v341
    %2641 = vmatpush1.msra.mxu0 %v340
    %2642 = vmatprep.subr.mxu0 %v347
    %2643 = vmatpush1.msra.mxu0 %v346
    %2644 = vmatprep.subr.mxu0 %v353
    %2645 = vmatpush1.msra.mxu0 %v352
    %2646 = vmatprep.subr.mxu0 %v359
    %2647 = vmatpush1.msra.mxu0 %v358
    %2648 = vmatprep.subr.mxu0 %v365
    %2649 = vmatpush1.msra.mxu0 %v364
    %2650 = vmatprep.subr.mxu0 %v371
    %2651 = vmatpush1.msra.mxu0 %v370
    %2652 = vmatprep.subr.mxu0 %v377
    %2653 = vmatpush1.msra.mxu0 %v376
    %2654 = vmatprep.subr.mxu0 %v383
    %2655 = vmatpush1.msra.mxu0 %v382
    %2656 = vmatprep.subr.mxu0 %v389
    %2657 = vmatpush1.msra.mxu0 %v388
    %2658 = vmatprep.subr.mxu0 %v395
    %2659 = vmatpush1.msra.mxu0 %v394
    %2660 = vmatprep.subr.mxu0 %v401
    %2661 = vmatpush1.msra.mxu0 %v400
    %2662 = vmatprep.subr.mxu0 %v407
    %2663 = vmatpush1.msra.mxu0 %v406
    %2664 = vmatprep.subr.mxu0 %v413
    %2665 = vmatpush1.msra.mxu0 %v412
    %2666 = vmatprep.subr.mxu0 %v419
    %2667 = vmatpush1.msra.mxu0 %v418
    %2668 = vmatprep.subr.mxu0 %v425
    %2669 = vmatpush1.msra.mxu0 %v424
    %2670 = vmatprep.mubr.f32.mxu0 %v2161
    %2671 = vmatmul.mubr.f32.gmra.mrb[0].mxu0 %v2160
    %v2672 = vpop.f32.mrb[0].mxu0
    %v2673 = vadd.f32 %v771, %v2672
    %v2674 = vpop.f32.mrb[0].mxu0
    %v2675 = vadd.f32 %v775, %v2674
    %2676 = vdwg.mxu0
    %v2677 = vadd.f32 %v2318, %v2531
    %v2678 = vadd.f32 %v2320, %v2533
    %v2679 = vxor.u32 %v2677, 2147483648
    %v2680 = vxor.u32 %v2678, 2147483648
    %v2681 = vmul.f32 %v2679, 1.442695
    %v2682 = vpow.pop %v2681
    %v2683 = vmul.f32 %v2680, 1.442695
    %v2684 = vpow.pop %v2683
    %v2685 = vadd.f32 %v2682, 1.0
    %v2686 = vadd.f32 %v2684, 1.0
    %v2687 = vrcp.pop %v2685
    %v2688 = vmul.f32 1.0, %v2687
    %v2689 = vrcp.pop %v2686
    %v2690 = vmul.f32 1.0, %v2689
    %v2691 = vadd.f32 %v2389, %v2602
    %v2692 = vadd.f32 %v2391, %v2604
    %v2693 = vxor.u32 %v2691, 2147483648
    %v2694 = vxor.u32 %v2692, 2147483648
    %v2695 = vmul.f32 %v2693, 1.442695
    %v2696 = vpow.pop %v2695
    %v2697 = vmul.f32 %v2694, 1.442695
    %v2698 = vpow.pop %v2697
    %v2699 = vadd.f32 %v2696, 1.0
    %v2700 = vadd.f32 %v2698, 1.0
    %v2701 = vrcp.pop %v2699
    %v2702 = vmul.f32 1.0, %v2701
    %v2703 = vrcp.pop %v2700
    %v2704 = vmul.f32 1.0, %v2703
    %v2705 = vmul.f32 %v2688, %v2673
    %v2706 = vmul.f32 %v2690, %v2675
    %v2707 = vadd.f32 %v2460, %v2705
    %v2708 = vadd.f32 %v2462, %v2706
    %v2709 = vtanh.pop %v2707
    %v2710 = vtanh.pop %v2708
    %v2711 = vsub.f32 1.0, %v2702
    %v2712 = vsub.f32 1.0, %v2704
    %v2713 = vmul.f32 %v2711, %v2709
    %v2714 = vmul.f32 %v2712, %v2710
    %v2715 = vmul.f32 %v2702, %v2160
    %v2716 = vmul.f32 %v2704, %v2161
    %v2717 = vadd.f32 %v2713, %v2715
    %v2718 = vadd.f32 %v2714, %v2716
    %v2721 = vcombine.low %v2717, %v2718
    %v2723 = vunpack.c.l.s4 1983009808
    %v2724 = vunpack.c.0.s8 %v2723
    %v2725 = vlaneseq
    %v2726 = vshrl.u32 %v2725, 7
    %v2727 = vsub.s32 %v2724, %v2726
    %v2728 = vrot.slane %v2721, %v2727
    %2730 = vst [vmem:[#allocation4] sm:$0xf] %v2728
    %vm2731 = vcmask 1041408
    %v2732 = vsel %vm2731, %v2717, 0.0
    %v2733 = vrot.slane %v2732, 4
    %v2734 = vadd.f32 %v2732, %v2733
    %v2735 = vrot.slane %v2734, 2
    %v2736 = vadd.f32 %v2734, %v2735
    %v2737 = vrot.slane %v2736, 1
    %v2738 = vadd.f32 %v2736, %v2737
    %v2739 = vsel %vm2731, %v2718, 0.0
    %v2740 = vrot.slane %v2739, 4
    %v2741 = vadd.f32 %v2739, %v2740
    %v2742 = vrot.slane %v2741, 2
    %v2743 = vadd.f32 %v2741, %v2742
    %v2744 = vrot.slane %v2743, 1
    %v2745 = vadd.f32 %v2743, %v2744
    %v2746 = vrcp.pop 2.0
    %v2747 = vmul.f32 %v2738, %v2746
    %v2748 = vmul.f32 %v2745, %v2746
    %v2749 = vmul.f32 %v2717, %v2717
    %v2750 = vmul.f32 %v2718, %v2718
    %v2751 = vsel %vm2731, %v2749, 0.0
    %v2752 = vrot.slane %v2751, 4
    %v2753 = vadd.f32 %v2751, %v2752
    %v2754 = vrot.slane %v2753, 2
    %v2755 = vadd.f32 %v2753, %v2754
    %v2756 = vrot.slane %v2755, 1
    %v2757 = vadd.f32 %v2755, %v2756
    %v2758 = vsel %vm2731, %v2750, 0.0
    %v2759 = vrot.slane %v2758, 4
    %v2760 = vadd.f32 %v2758, %v2759
    %v2761 = vrot.slane %v2760, 2
    %v2762 = vadd.f32 %v2760, %v2761
    %v2763 = vrot.slane %v2762, 1
    %v2764 = vadd.f32 %v2762, %v2763
    %v2765 = vmul.f32 %v2757, %v2746
    %v2766 = vmul.f32 %v2764, %v2746
    %v2767 = vmul.f32 %v2747, %v2747
    %v2768 = vmul.f32 %v2748, %v2748
    %v2769 = vsub.f32 %v2765, %v2767
    %v2770 = vsub.f32 %v2766, %v2768
    %v2771 = vmax.f32 %v2769, 0.0
    %v2772 = vmax.f32 %v2770, 0.0
    %v2773 = vld [vmem:[%s7] sm:$0x3]
    %v2774 = vadd.f32 %v2771, 1e-05
    %v2775 = vadd.f32 %v2772, 1e-05
    %v2776 = vrsqrt.pop %v2774
    %v2777 = vmul.f32 %v2774, %v2776
    %vm2778 = vcmp.eq.f32.partialorder %v2774, inf
    %v2779 = vsel %vm2778, %v2774, %v2777
    %vm2780 = vcmp.eq.f32.partialorder %v2774, 0.0
    %v2781 = vand.u32 %v2774, 2147483648
    %v2782 = vsel %vm2780, %v2781, %v2779
    %v2783 = vrsqrt.pop %v2775
    %v2784 = vmul.f32 %v2775, %v2783
    %vm2785 = vcmp.eq.f32.partialorder %v2775, inf
    %v2786 = vsel %vm2785, %v2775, %v2784
    %vm2787 = vcmp.eq.f32.partialorder %v2775, 0.0
    %v2788 = vand.u32 %v2775, 2147483648
    %v2789 = vsel %vm2787, %v2788, %v2786
    %v2792 = vcombine.low %v2782, %v2789
    %v2794 = vunpack.c.l.s4 1966171168
    %v2795 = vunpack.c.0.s8 %v2794
    %v2796 = vlaneseq
    %v2797 = vshrl.u32 %v2796, 7
    %v2798 = vsub.s32 %v2795, %v2797
    %v2799 = vrot.slane %v2792, %v2798
    %v2801 = vunpack.c.l.s4 1966171168
    %v2802 = vunpack.c.0.s8 %v2801
    %v2803 = vlaneseq
    %v2804 = vshrl.u32 %v2803, 7
    %v2805 = vsub.s32 %v2802, %v2804
    %v2806 = vrot.slane %v2799, %v2805
    %v2808 = vrcp.pop %v2806
    %v2809 = vmul.f32 %v2773, %v2808
    %v2810 = vld [vmem:[%s8] sm:$0x3]
    %v2812 = vlaneseq
    %v2813 = vshrl.u32 %v2812, 7
    %v2814 = vsub.s32 0, %v2813
    %v2815 = vrot.slane %v2809, %v2814
    %v2816 = vlaneseq
    %v2817 = vshrl.u32 %v2816, 7
    %v2818 = vsub.s32 1, %v2817
    %v2819 = vrot.slane %v2809, %v2818
    %v2822 = vmul.f32 %v2747, %v2815
    %v2823 = vmul.f32 %v2748, %v2819
    %v2826 = vcombine.low %v2822, %v2823
    %v2828 = vunpack.c.l.s4 1966171168
    %v2829 = vunpack.c.0.s8 %v2828
    %v2830 = vlaneseq
    %v2831 = vshrl.u32 %v2830, 7
    %v2832 = vsub.s32 %v2829, %v2831
    %v2833 = vrot.slane %v2826, %v2832
    %v2835 = vunpack.c.l.s4 1966171168
    %v2836 = vunpack.c.0.s8 %v2835
    %v2837 = vlaneseq
    %v2838 = vshrl.u32 %v2837, 7
    %v2839 = vsub.s32 %v2836, %v2838
    %v2840 = vrot.slane %v2833, %v2839
    %v2842 = vsub.f32 %v2810, %v2840
    %v2843 = vmul.f32 %v2717, %v2815
    %v2844 = vmul.f32 %v2718, %v2819
    %v2846 = vlaneseq
    %v2847 = vshrl.u32 %v2846, 7
    %v2848 = vsub.s32 0, %v2847
    %v2849 = vrot.slane %v2842, %v2848
    %v2850 = vlaneseq
    %v2851 = vshrl.u32 %v2850, 7
    %v2852 = vsub.s32 1, %v2851
    %v2853 = vrot.slane %v2842, %v2852
    %v2856 = vadd.f32 %v2843, %v2849
    %v2857 = vadd.f32 %v2844, %v2853
    %v2858 = vld [vmem:[%s9] sm:$0xff]
    %v2859 = vld [vmem:[%s9 + $0x8] sm:$0xff]
    %v2860 = vld [vmem:[%s9 + $0x10] sm:$0xff]
    %v2861 = vld [vmem:[%s9 + $0x18] sm:$0xff]
    %v2862 = vld [vmem:[%s9 + $0x20] sm:$0xff]
    %v2863 = vld [vmem:[%s9 + $0x28] sm:$0xff]
    %v2864 = vld [vmem:[%s9 + $0x30] sm:$0xff]
    %v2865 = vld [vmem:[%s9 + $0x38] sm:$0xff]
    %v2866 = vld [vmem:[%s9 + $0x40] sm:$0xff]
    %v2867 = vld [vmem:[%s9 + $0x48] sm:$0xff]
    %v2868 = vld [vmem:[%s9 + $0x50] sm:$0xff]
    %v2869 = vld [vmem:[%s9 + $0x58] sm:$0xff]
    %v2870 = vld [vmem:[%s9 + $0x60] sm:$0xff]
    %v2871 = vld [vmem:[%s9 + $0x68] sm:$0xff]
    %v2872 = vld [vmem:[%s9 + $0x70] sm:$0xff]
    %v2873 = vld [vmem:[%s9 + $0x78] sm:$0xff]
    %v2874 = vld [vmem:[%s9 + $0x80] sm:$0xff]
    %v2875 = vld [vmem:[%s9 + $0x88] sm:$0xff]
    %v2876 = vld [vmem:[%s9 + $0x90] sm:$0xff]
    %v2877 = vld [vmem:[%s9 + $0x98] sm:$0xff]
    %v2878 = vld [vmem:[%s9 + $0xa0] sm:$0xff]
    %v2879 = vld [vmem:[%s9 + $0xa8] sm:$0xff]
    %v2880 = vld [vmem:[%s9 + $0xb0] sm:$0xff]
    %v2881 = vld [vmem:[%s9 + $0xb8] sm:$0xff]
    %v2882 = vld [vmem:[%s9 + $0xc0] sm:$0xff]
    %v2883 = vld [vmem:[%s9 + $0xc8] sm:$0xff]
    %v2884 = vld [vmem:[%s9 + $0xd0] sm:$0xff]
    %v2885 = vld [vmem:[%s9 + $0xd8] sm:$0xff]
    %v2886 = vld [vmem:[%s9 + $0xe0] sm:$0xff]
    %v2887 = vld [vmem:[%s9 + $0xe8] sm:$0xff]
    %v2888 = vld [vmem:[%s9 + $0xf0] sm:$0xff]
    %v2889 = vld [vmem:[%s9 + $0xf8] sm:$0xff]
    %v2890 = vld [vmem:[%s10] sm:$0x1]
    %v2892 = vlaneseq
    %v2893 = vshrl.u32 %v2892, 7
    %v2894 = vsub.s32 0, %v2893
    %v2895 = vrot.slane %v2890, %v2894
    %2897 = vmatprep.subr.mxu0 0.0
    %2898 = vmatpush1.msra.mxu0 %v2858
    %2899 = vmatprep.subr.mxu0 0.0
    %2900 = vmatpush1.msra.mxu0 %v2859
    %2901 = vmatprep.subr.mxu0 0.0
    %2902 = vmatpush1.msra.mxu0 %v2860
    %2903 = vmatprep.subr.mxu0 0.0
    %2904 = vmatpush1.msra.mxu0 %v2861
    %2905 = vmatprep.subr.mxu0 0.0
    %2906 = vmatpush1.msra.mxu0 %v2862
    %2907 = vmatprep.subr.mxu0 0.0
    %2908 = vmatpush1.msra.mxu0 %v2863
    %2909 = vmatprep.subr.mxu0 0.0
    %2910 = vmatpush1.msra.mxu0 %v2864
    %2911 = vmatprep.subr.mxu0 0.0
    %2912 = vmatpush1.msra.mxu0 %v2865
    %2913 = vmatprep.subr.mxu0 0.0
    %2914 = vmatpush1.msra.mxu0 %v2866
    %2915 = vmatprep.subr.mxu0 0.0
    %2916 = vmatpush1.msra.mxu0 %v2867
    %2917 = vmatprep.subr.mxu0 0.0
    %2918 = vmatpush1.msra.mxu0 %v2868
    %2919 = vmatprep.subr.mxu0 0.0
    %2920 = vmatpush1.msra.mxu0 %v2869
    %2921 = vmatprep.subr.mxu0 0.0
    %2922 = vmatpush1.msra.mxu0 %v2870
    %2923 = vmatprep.subr.mxu0 0.0
    %2924 = vmatpush1.msra.mxu0 %v2871
    %2925 = vmatprep.subr.mxu0 0.0
    %2926 = vmatpush1.msra.mxu0 %v2872
    %2927 = vmatprep.subr.mxu0 0.0
    %2928 = vmatpush1.msra.mxu0 %v2873
    %2929 = vmatprep.subr.mxu0 0.0
    %2930 = vmatpush1.msra.mxu0 %v2874
    %2931 = vmatprep.subr.mxu0 0.0
    %2932 = vmatpush1.msra.mxu0 %v2875
    %2933 = vmatprep.subr.mxu0 0.0
    %2934 = vmatpush1.msra.mxu0 %v2876
    %2935 = vmatprep.subr.mxu0 0.0
    %2936 = vmatpush1.msra.mxu0 %v2877
    %2937 = vmatprep.subr.mxu0 0.0
    %2938 = vmatpush1.msra.mxu0 %v2878
    %2939 = vmatprep.subr.mxu0 0.0
    %2940 = vmatpush1.msra.mxu0 %v2879
    %2941 = vmatprep.subr.mxu0 0.0
    %2942 = vmatpush1.msra.mxu0 %v2880
    %2943 = vmatprep.subr.mxu0 0.0
    %2944 = vmatpush1.msra.mxu0 %v2881
    %2945 = vmatprep.subr.mxu0 0.0
    %2946 = vmatpush1.msra.mxu0 %v2882
    %2947 = vmatprep.subr.mxu0 0.0
    %2948 = vmatpush1.msra.mxu0 %v2883
    %2949 = vmatprep.subr.mxu0 0.0
    %2950 = vmatpush1.msra.mxu0 %v2884
    %2951 = vmatprep.subr.mxu0 0.0
    %2952 = vmatpush1.msra.mxu0 %v2885
    %2953 = vmatprep.subr.mxu0 0.0
    %2954 = vmatpush1.msra.mxu0 %v2886
    %2955 = vmatprep.subr.mxu0 0.0
    %2956 = vmatpush1.msra.mxu0 %v2887
    %2957 = vmatprep.subr.mxu0 0.0
    %2958 = vmatpush1.msra.mxu0 %v2888
    %2959 = vmatprep.subr.mxu0 0.0
    %2960 = vmatpush1.msra.mxu0 %v2889
    %2961 = vmatprep.mubr.f32.mxu0 %v2857
    %2962 = vmatmul.mubr.f32.gmra.mrb[0].mxu0 %v2856
    %v2963 = vpop.f32.mrb[0].mxu0
    %v2964 = vadd.f32 %v2895, %v2963
    %v2965 = vpop.f32.mrb[0].mxu0
    %2966 = vdwg.mxu0
    %2967 = vst [vmem:[#allocation2] sm:$0x3] %v2964
    // Predicated region
    $region46: #{forward.19} parent=1 // pred_check
      _
    $region47: #{forward.19} parent=1 // pred_check_branch
      %2969 = sbr.rel (0) target = $region49
    $region48: #{forward.19} parent=1 // pred_region
      %s2971 = ssub.s32 32, 32
      %2972 = vsyncadd [#allocation3], %s2971
      %s2974 = sshll.u32 [#allocation2], 4
      %s2975 = int_to_ptr.vmem [resolvable:$true] %s2974
      %2977 = dma.vmem_to_hbm [thread:$0]  %s2975, 32, %s11, [#allocation3]
    $region49: #{forward.19} parent=1 // pred_fallthru
      _
    // Predicated region
    $region50: #{forward.19} parent=1 // pred_check
      _
    $region51: #{forward.19} parent=1 // pred_check_branch
      %2979 = sbr.rel (0) target = $region53
    $region52: #{forward.19} parent=1 // pred_region
      %s2981 = ssub.s32 64, 64
      %2982 = vsyncadd [#allocation5], %s2981
      %s2984 = sshll.u32 [#allocation4], 4
      %s2985 = int_to_ptr.vmem [resolvable:$true] %s2984
      %2987 = dma.vmem_to_hbm [thread:$0]  %s2985, 64, %s12, [#allocation5]
    $region53: #{forward.19} parent=1 // pred_fallthru
      _
    // Predicated region
    $region54: #{forward.19} parent=1 // pred_check
      _
    $region55: #{forward.19} parent=1 // pred_check_branch
      %2989 = sbr.rel (0) target = $region57
    $region56: #{forward.19} parent=1 // pred_region
      %2990 = dma.done [#allocation3], 32
    $region57: #{forward.19} parent=1 // pred_fallthru
      _
    // Predicated region
    $region58: #{forward.19} parent=1 // pred_check
      _
    $region59: #{forward.19} parent=1 // pred_check_branch
      %2992 = sbr.rel (0) target = $region61
    $region60: #{forward.19} parent=1 // pred_region
      %2993 = dma.done [#allocation5], 64
    $region61: #{forward.19} parent=1 // pred_fallthru
      _
    %2994 = vsyncpa [#allocation3], 1
    %2995 = vsyncpa [#allocation5], 1

</llo_original>
